<compile_context>
chip_gen: v5e
topology: v5e:2x2
jax: 0.10.0
libtpu: 0.0.40
codegen_flags: <defaults>
</compile_context>

<pallas_src>
import functools
import math

import jax
import jax.numpy as jnp
from jax import lax
from jax.experimental import pallas as pl
from jax.experimental.pallas import tpu as pltpu


_LANE = 128     # hidden dim padded to this (lane-dense stores, aligned gates)
_SUBLANE = 8    # f32 sublane width (batch padding)


def _sigmoid(x):
    # sigmoid(x) = 0.5*(1 + tanh(x/2)): single EUP push, shares the tanh path.
    return 0.5 * (jnp.tanh(0.5 * x) + 1.0)


# ----------------------------------------------------------------------------
# Fused bidirectional LSTM layer kernel (one grid step = one time chunk for
# the forward direction and the mirrored chunk for the backward direction).
#
# Inputs (refs), in order:
#   n_streams fwd-chunk views of the input stream(s)    (Tt, Bp, Din_s) bf16
#   n_streams bwd-chunk views of the input stream(s)    (Tt, Bp, Din_s) bf16
#   n_streams Wih^T (fwd), n_streams Wih^T (bwd)         (Din_s, 4Hp)    bf16
#   Whh^T fwd, Whh^T bwd                                 (Hp, 4Hp)       bf16
#   bias fwd, bias bwd (b_ih + b_hh, gate-packed)        (1, 4Hp)        f32
# Outputs: y_fwd, y_bwd                                  (Tt, Bp, Hp)    bf16
# Scratch: xp_f, xp_b chunk projections (f32) + persistent h/c carries (f32).
# Gate order along 4Hp (PyTorch): [i, f, g, o], each gate in its own Hp block.
# ----------------------------------------------------------------------------
def _make_bilstm_kernel(n_streams, Tt, Bp, Hp):
    G = 4 * Hp

    def kernel(*refs):
        k = 0
        xf = refs[k:k + n_streams]; k += n_streams
        xb = refs[k:k + n_streams]; k += n_streams
        wif = refs[k:k + n_streams]; k += n_streams
        wib = refs[k:k + n_streams]; k += n_streams
        whh_f_ref, whh_b_ref, b_f_ref, b_b_ref = refs[k:k + 4]; k += 4
        y_f_ref, y_b_ref = refs[k:k + 2]; k += 2
        xp_f_sc, xp_b_sc, h_f_sc, c_f_sc, h_b_sc, c_b_sc = refs[k:k + 6]

        t = pl.program_id(0)

        @pl.when(t == 0)
        def _():
            h_f_sc[...] = jnp.zeros_like(h_f_sc)
            c_f_sc[...] = jnp.zeros_like(c_f_sc)
            h_b_sc[...] = jnp.zeros_like(h_b_sc)
            c_b_sc[...] = jnp.zeros_like(c_b_sc)

        # Chunk-wide input projection: one MXU matmul per stream per
        # direction, amortized over all Tt timesteps of the chunk.
        def proj(stream_refs, w_refs, bias_ref):
            acc = None
            for s_ref, w_ref in zip(stream_refs, w_refs):
                x2d = s_ref[...].reshape(Tt * Bp, s_ref.shape[-1])
                d = jnp.dot(x2d, w_ref[...],
                            preferred_element_type=jnp.float32)
                acc = d if acc is None else acc + d
            acc = acc + bias_ref[...].astype(jnp.float32)       # (1, G) bcast
            return acc.reshape(Tt, Bp, G)

        xp_f_sc[...] = proj(xf, wif, b_f_ref)
        xp_b_sc[...] = proj(xb, wib, b_b_ref)

        # Hoist the recurrent weights out of the serial loop.
        whh_f = whh_f_ref[...]
        whh_b = whh_b_ref[...]

        def cell(pre, h, c, whh):
            gates = pre + jnp.dot(h.astype(whh.dtype), whh,
                                  preferred_element_type=jnp.float32)
            i_g = _sigmoid(gates[:, 0 * Hp:1 * Hp])   # lane-aligned Hp blocks
            f_g = _sigmoid(gates[:, 1 * Hp:2 * Hp])
            g_g = jnp.tanh(gates[:, 2 * Hp:3 * Hp])
            o_g = _sigmoid(gates[:, 3 * Hp:4 * Hp])
            c_new = f_g * c + i_g * g_g
            h_new = o_g * jnp.tanh(c_new)
            return h_new, c_new

        def step(s, carry):
            h_f, c_f, h_b, c_b = carry
            # forward: local row s of the forward chunk
            h_f, c_f = cell(xp_f_sc[s], h_f, c_f, whh_f)
            y_f_ref[s] = h_f.astype(y_f_ref.dtype)
            # backward: local row Tt-1-s of the mirrored chunk
            rb = Tt - 1 - s
            h_b, c_b = cell(xp_b_sc[rb], h_b, c_b, whh_b)
            y_b_ref[rb] = h_b.astype(y_b_ref.dtype)
            return (h_f, c_f, h_b, c_b)

        carry0 = (h_f_sc[...], c_f_sc[...], h_b_sc[...], c_b_sc[...])
        h_f, c_f, h_b, c_b = lax.fori_loop(0, Tt, step, carry0, unroll=True)

        # Persist the carries for the next time chunk.
        h_f_sc[...] = h_f
        c_f_sc[...] = c_f
        h_b_sc[...] = h_b
        c_b_sc[...] = c_b

    return kernel


def _bilstm_layer(streams, lp, *, T, Bp, time_chunk):
    """Run one bidirectional layer. streams: list of (T, Bp, Din) bf16."""
    Hp = lp["whh_f"].shape[0]
    G = 4 * Hp
    n_streams = len(streams)
    Tt = time_chunk if (0 < time_chunk <= T and T % time_chunk == 0) else T
    nc = T // Tt

    fwd_specs = [pl.BlockSpec((Tt, Bp, s.shape[-1]), lambda t: (t, 0, 0))
                 for s in streams]
    bwd_specs = [pl.BlockSpec((Tt, Bp, s.shape[-1]),
                              lambda t: (nc - 1 - t, 0, 0))
                 for s in streams]
    w_specs = [pl.BlockSpec(w.shape, lambda t: (0, 0))
               for w in (*lp["wih_f"], *lp["wih_b"],
                         lp["whh_f"], lp["whh_b"], lp["b_f"], lp["b_b"])]

    in_specs = fwd_specs + bwd_specs + w_specs
    inputs = (list(streams) + list(streams)
              + list(lp["wih_f"]) + list(lp["wih_b"])
              + [lp["whh_f"], lp["whh_b"], lp["b_f"], lp["b_b"]])

    out_specs = (pl.BlockSpec((Tt, Bp, Hp), lambda t: (t, 0, 0)),
                 pl.BlockSpec((Tt, Bp, Hp), lambda t: (nc - 1 - t, 0, 0)))
    out_shape = (jax.ShapeDtypeStruct((T, Bp, Hp), jnp.bfloat16),
                 jax.ShapeDtypeStruct((T, Bp, Hp), jnp.bfloat16))

    y_f, y_b = pl.pallas_call(
        _make_bilstm_kernel(n_streams, Tt, Bp, Hp),
        grid=(nc,),
        in_specs=in_specs,
        out_specs=out_specs,
        out_shape=out_shape,
        scratch_shapes=[
            pltpu.VMEM((Tt, Bp, G), jnp.float32),   # fwd chunk x-projection
            pltpu.VMEM((Tt, Bp, G), jnp.float32),   # bwd chunk x-projection
            pltpu.VMEM((Bp, Hp), jnp.float32),      # h_fwd carry (persistent)
            pltpu.VMEM((Bp, Hp), jnp.float32),      # c_fwd carry
            pltpu.VMEM((Bp, Hp), jnp.float32),      # h_bwd carry
            pltpu.VMEM((Bp, Hp), jnp.float32),      # c_bwd carry
        ],
        compiler_params=pltpu.CompilerParams(
            dimension_semantics=("arbitrary",),     # sequential carry in time
            vmem_limit_bytes=48 * 1024 * 1024),     # > 16/32 MiB scoped
                                                    # default, < 64 MiB v7x
    )(*inputs)
    return y_f, y_b


# ----------------------------------------------------------------------------
# Parameter construction (PyTorch layout) and one-time packing for the kernel.
# ----------------------------------------------------------------------------
def init_lstm_head_params(key, layer_size, feature_size, intermediate_size):
    H = intermediate_size
    params = []
    for layer in range(layer_size):
        in_dim = feature_size if layer == 0 else 2 * H
        layer_params = []
        for _direction in range(2):  # forward, reverse
            key, k1, k2, k3, k4 = jax.random.split(key, 5)
            bound_ih = math.sqrt(6.0 / in_dim)
            bound_hh = math.sqrt(6.0 / H)
            bound_b = 1.0 / math.sqrt(H)
            w_ih = jax.random.uniform(k1, (4 * H, in_dim), jnp.float32,
                                      -bound_ih, bound_ih)
            w_hh = jax.random.uniform(k2, (4 * H, H), jnp.float32,
                                      -bound_hh, bound_hh)
            b_ih = jax.random.uniform(k3, (4 * H,), jnp.float32,
                                      -bound_b, bound_b)
            b_hh = jax.random.uniform(k4, (4 * H,), jnp.float32,
                                      -bound_b, bound_b)
            layer_params.append((w_ih, w_hh, b_ih, b_hh))
        params.append(tuple(layer_params))
    return params


def _pack_gate_cols(wt, H, Hp):
    # (Din, 4H) -> (Din, 4Hp): each gate's H real columns at the start of its
    # 128-lane block (padded gate lanes stay exactly zero through the LSTM).
    out = jnp.zeros((wt.shape[0], 4 * Hp), wt.dtype)
    for g in range(4):
        out = out.at[:, g * Hp:g * Hp + H].set(wt[:, g * H:(g + 1) * H])
    return out


def _pad_rows(w, rows):
    return jnp.pad(w, ((0, rows - w.shape[0]), (0, 0)))


def prepare_lstm_head_params(raw_params, intermediate_size):
    """Pre-transpose / gate-pack / pad / bf16-cast the weights once."""
    H = intermediate_size
    Hp = ((H + _LANE - 1) // _LANE) * _LANE
    prepared = []
    for layer_idx, directions in enumerate(raw_params):
        lp = {}
        for name, (w_ih, w_hh, b_ih, b_hh) in zip(("f", "b"), directions):
            wih_t = _pack_gate_cols(w_ih.T, H, Hp)                 # (Din, 4Hp)
            whh_t = _pad_rows(_pack_gate_cols(w_hh.T, H, Hp), Hp)  # (Hp, 4Hp)
            bias = _pack_gate_cols((b_ih + b_hh).reshape(1, 4 * H), H, Hp)
            if layer_idx == 0:
                parts = [wih_t]                                    # [x]
            else:
                # previous layer streams are [y_fwd, y_bwd], each padded to Hp
                parts = [_pad_rows(wih_t[:H], Hp),
                         _pad_rows(wih_t[H:2 * H], Hp)]
            lp["wih_" + name] = [p.astype(jnp.bfloat16) for p in parts]
            lp["whh_" + name] = whh_t.astype(jnp.bfloat16)
            lp["b_" + name] = bias.astype(jnp.float32)
        prepared.append(lp)
    return prepared


# ----------------------------------------------------------------------------
# Full LSTMHead forward: returns y (B, T, 2H), matching the PyTorch module.
# ----------------------------------------------------------------------------
@functools.partial(jax.jit, static_argnames=("hidden_size", "time_chunk"))
def lstm_head_forward(x, params, *, hidden_size, time_chunk=8):
    B, T, _ = x.shape
    Bp = ((B + _SUBLANE - 1) // _SUBLANE) * _SUBLANE
    xt = jnp.transpose(x, (1, 0, 2)).astype(jnp.bfloat16)          # (T, B, F)
    if Bp != B:
        xt = jnp.pad(xt, ((0, 0), (0, Bp - B), (0, 0)))
    streams = [xt]
    for lp in params:
        y_f, y_b = _bilstm_layer(streams, lp, T=T, Bp=Bp,
                                 time_chunk=time_chunk)
        streams = [y_f, y_b]   # fed as two padded streams to the next layer
    H = hidden_size
    y = jnp.concatenate([streams[0][..., :H], streams[1][..., :H]], axis=-1)
    return jnp.transpose(y[:, :B, :], (1, 0, 2)).astype(jnp.float32)


# ----------------------------------------------------------------------------
# Pure-JAX float32 reference (matches torch.nn.LSTM bidirectional forward).
# ----------------------------------------------------------------------------
def lstm_head_reference(x, raw_params):
    cur = jnp.transpose(x, (1, 0, 2)).astype(jnp.float32)          # (T, B, F)
    _, Bn, _ = cur.shape
    for fwd, bwd in raw_params:
        outs = []
        for d, (w_ih, w_hh, b_ih, b_hh) in enumerate((fwd, bwd)):
            H = w_hh.shape[1]
            xs = cur if d == 0 else cur[::-1]

            def step(carry, x_t, w_ih=w_ih, w_hh=w_hh, b=b_ih + b_hh, H=H):
                h, c = carry
                g = x_t @ w_ih.T + h @ w_hh.T + b
                i = jax.nn.sigmoid(g[:, :H])
                f = jax.nn.sigmoid(g[:, H:2 * H])
                gg = jnp.tanh(g[:, 2 * H:3 * H])
                o = jax.nn.sigmoid(g[:, 3 * H:])
                c = f * c + i * gg
                h = o * jnp.tanh(c)
                return (h, c), h

            init = (jnp.zeros((Bn, H), jnp.float32),
                    jnp.zeros((Bn, H), jnp.float32))
            _, ys = lax.scan(step, init, xs)
            outs.append(ys if d == 0 else ys[::-1])
        cur = jnp.concatenate(outs, axis=-1)
    return jnp.transpose(cur, (1, 0, 2))


if __name__ == "__main__":
    layer_size = 2
    feature_size = 32
    intermediate_size = 32
    batch = 2
    seq = 8

    key = jax.random.PRNGKey(0)
    key, xkey = jax.random.split(key)
    x = jax.random.normal(xkey, (batch, seq, feature_size), dtype=jnp.float32)

    raw_params = init_lstm_head_params(key, layer_size, feature_size,
                                       intermediate_size)
    params = prepare_lstm_head_params(raw_params, intermediate_size)

    y = lstm_head_forward(x, params, hidden_size=intermediate_size,
                          time_chunk=4)   # seq=8 -> 2 time chunks per layer
    y = jax.block_until_ready(y)

    assert y.shape == (batch, seq, 2 * intermediate_size), y.shape
    assert bool(jnp.all(jnp.isfinite(y)))

    y_ref = lstm_head_reference(x, raw_params)
    max_err = float(jnp.max(jnp.abs(y - y_ref)))
    assert max_err < 0.1, max_err   # bf16 MXU operands, f32 accumulation

    print("KERNEL_OK")
</pallas_src>

<mosaic_0001>
module attributes {stable_mosaic.version = 11 : i64} {
  func.func @kernel(%arg0: i32, %arg1: memref<4x8x128xbf16, #tpu.memory_space<vmem>>, %arg2: memref<4x8x128xbf16, #tpu.memory_space<vmem>>, %arg3: memref<4x8x128xbf16, #tpu.memory_space<vmem>>, %arg4: memref<4x8x128xbf16, #tpu.memory_space<vmem>>, %arg5: memref<128x512xbf16, #tpu.memory_space<vmem>>, %arg6: memref<128x512xbf16, #tpu.memory_space<vmem>>, %arg7: memref<128x512xbf16, #tpu.memory_space<vmem>>, %arg8: memref<128x512xbf16, #tpu.memory_space<vmem>>, %arg9: memref<128x512xbf16, #tpu.memory_space<vmem>>, %arg10: memref<128x512xbf16, #tpu.memory_space<vmem>>, %arg11: memref<1x512xf32, #tpu.memory_space<vmem>>, %arg12: memref<1x512xf32, #tpu.memory_space<vmem>>, %arg13: memref<4x8x128xbf16, #tpu.memory_space<vmem>>, %arg14: memref<4x8x128xbf16, #tpu.memory_space<vmem>>, %arg15: memref<4x8x512xf32, #tpu.memory_space<vmem>>, %arg16: memref<4x8x512xf32, #tpu.memory_space<vmem>>, %arg17: memref<8x128xf32, #tpu.memory_space<vmem>>, %arg18: memref<8x128xf32, #tpu.memory_space<vmem>>, %arg19: memref<8x128xf32, #tpu.memory_space<vmem>>, %arg20: memref<8x128xf32, #tpu.memory_space<vmem>>) attributes {dimension_semantics = [#tpu.dimension_semantics<arbitrary>], iteration_bounds = array<i64: 2>, scalar_prefetch = 0 : i64, scratch_operands = 6 : i64, tpu.core_type = #tpu.core_type<tc>, window_params = [{transform_indices = @transform_0, window_bounds = array<i64: 4, 8, 128>}, {transform_indices = @transform_1, window_bounds = array<i64: 4, 8, 128>}, {transform_indices = @transform_2, window_bounds = array<i64: 4, 8, 128>}, {transform_indices = @transform_3, window_bounds = array<i64: 4, 8, 128>}, {pipeline_mode = #tpu.pipeline_mode<synchronous>, transform_indices = @transform_4, window_bounds = array<i64: 128, 512>}, {pipeline_mode = #tpu.pipeline_mode<synchronous>, transform_indices = @transform_5, window_bounds = array<i64: 128, 512>}, {pipeline_mode = #tpu.pipeline_mode<synchronous>, transform_indices = @transform_6, window_bounds = array<i64: 128, 512>}, {pipeline_mode = #tpu.pipeline_mode<synchronous>, transform_indices = @transform_7, window_bounds = array<i64: 128, 512>}, {pipeline_mode = #tpu.pipeline_mode<synchronous>, transform_indices = @transform_8, window_bounds = array<i64: 128, 512>}, {pipeline_mode = #tpu.pipeline_mode<synchronous>, transform_indices = @transform_9, window_bounds = array<i64: 128, 512>}, {pipeline_mode = #tpu.pipeline_mode<synchronous>, transform_indices = @transform_10, window_bounds = array<i64: 1, 512>}, {pipeline_mode = #tpu.pipeline_mode<synchronous>, transform_indices = @transform_11, window_bounds = array<i64: 1, 512>}, {transform_indices = @transform_12, window_bounds = array<i64: 4, 8, 128>}, {transform_indices = @transform_13, window_bounds = array<i64: 4, 8, 128>}]} {
    %c0_i32 = arith.constant 0 : i32
    %0 = arith.cmpi eq, %arg0, %c0_i32 : i32
    %1 = arith.extui %0 : i1 to i32
    %c0_i32_0 = arith.constant 0 : i32
    %2 = arith.cmpi ne, %1, %c0_i32_0 : i32
    scf.if %2 {
      %cst_170 = arith.constant 0.000000e+00 : f32
      %381 = vector.broadcast %cst_170 : f32 to vector<8x128xf32>
      %c0_171 = arith.constant 0 : index
      %c0_172 = arith.constant 0 : index
      %382 = vector.load %arg17[%c0_171, %c0_172] : memref<8x128xf32, #tpu.memory_space<vmem>>, vector<8x128xf32>
      tpu.vector_store %arg17[%c0_171, %c0_172], %381 {strides = array<i32>} : memref<8x128xf32, #tpu.memory_space<vmem>>, vector<8x128xf32>,
      %cst_173 = arith.constant 0.000000e+00 : f32
      %383 = vector.broadcast %cst_173 : f32 to vector<8x128xf32>
      %c0_174 = arith.constant 0 : index
      %c0_175 = arith.constant 0 : index
      %384 = vector.load %arg18[%c0_174, %c0_175] : memref<8x128xf32, #tpu.memory_space<vmem>>, vector<8x128xf32>
      tpu.vector_store %arg18[%c0_174, %c0_175], %383 {strides = array<i32>} : memref<8x128xf32, #tpu.memory_space<vmem>>, vector<8x128xf32>,
      %cst_176 = arith.constant 0.000000e+00 : f32
      %385 = vector.broadcast %cst_176 : f32 to vector<8x128xf32>
      %c0_177 = arith.constant 0 : index
      %c0_178 = arith.constant 0 : index
      %386 = vector.load %arg19[%c0_177, %c0_178] : memref<8x128xf32, #tpu.memory_space<vmem>>, vector<8x128xf32>
      tpu.vector_store %arg19[%c0_177, %c0_178], %385 {strides = array<i32>} : memref<8x128xf32, #tpu.memory_space<vmem>>, vector<8x128xf32>,
      %cst_179 = arith.constant 0.000000e+00 : f32
      %387 = vector.broadcast %cst_179 : f32 to vector<8x128xf32>
      %c0_180 = arith.constant 0 : index
      %c0_181 = arith.constant 0 : index
      %388 = vector.load %arg20[%c0_180, %c0_181] : memref<8x128xf32, #tpu.memory_space<vmem>>, vector<8x128xf32>
      tpu.vector_store %arg20[%c0_180, %c0_181], %387 {strides = array<i32>} : memref<8x128xf32, #tpu.memory_space<vmem>>, vector<8x128xf32>,
    } else {
    }
    %c0 = arith.constant 0 : index
    %c0_1 = arith.constant 0 : index
    %c0_2 = arith.constant 0 : index
    %3 = vector.load %arg1[%c0, %c0_1, %c0_2] : memref<4x8x128xbf16, #tpu.memory_space<vmem>>, vector<4x8x128xbf16>
    %4 = vector.shape_cast %3 : vector<4x8x128xbf16> to vector<32x128xbf16>
    %c0_3 = arith.constant 0 : index
    %c0_4 = arith.constant 0 : index
    %5 = vector.load %arg5[%c0_3, %c0_4] : memref<128x512xbf16, #tpu.memory_space<vmem>>, vector<128x512xbf16>
    %cst = arith.constant dense<0.000000e+00> : vector<32x512xf32>
    %6 = tpu.matmul %4, %5, %cst {dimension_numbers = #tpu.dot_dimension_numbers<[1], [0], [0], [1], [0, 0, 1, 1], [], []>} : vector<32x128xbf16>, vector<128x512xbf16>, vector<32x512xf32> -> vector<32x512xf32>
    %c0_5 = arith.constant 0 : index
    %c0_6 = arith.constant 0 : index
    %c0_7 = arith.constant 0 : index
    %7 = vector.load %arg2[%c0_5, %c0_6, %c0_7] : memref<4x8x128xbf16, #tpu.memory_space<vmem>>, vector<4x8x128xbf16>
    %8 = vector.shape_cast %7 : vector<4x8x128xbf16> to vector<32x128xbf16>
    %c0_8 = arith.constant 0 : index
    %c0_9 = arith.constant 0 : index
    %9 = vector.load %arg6[%c0_8, %c0_9] : memref<128x512xbf16, #tpu.memory_space<vmem>>, vector<128x512xbf16>
    %cst_10 = arith.constant dense<0.000000e+00> : vector<32x512xf32>
    %10 = tpu.matmul %8, %9, %cst_10 {dimension_numbers = #tpu.dot_dimension_numbers<[1], [0], [0], [1], [0, 0, 1, 1], [], []>} : vector<32x128xbf16>, vector<128x512xbf16>, vector<32x512xf32> -> vector<32x512xf32>
    %11 = arith.addf %6, %10 : vector<32x512xf32>
    %c0_11 = arith.constant 0 : index
    %c0_12 = arith.constant 0 : index
    %12 = vector.load %arg11[%c0_11, %c0_12] : memref<1x512xf32, #tpu.memory_space<vmem>>, vector<1x512xf32>
    %13 = vector.broadcast %12 : vector<1x512xf32> to vector<32x512xf32>
    %14 = arith.addf %11, %13 : vector<32x512xf32>
    %15 = vector.shape_cast %14 : vector<32x512xf32> to vector<4x8x512xf32>
    %c0_13 = arith.constant 0 : index
    %c0_14 = arith.constant 0 : index
    %c0_15 = arith.constant 0 : index
    %16 = vector.load %arg15[%c0_13, %c0_14, %c0_15] : memref<4x8x512xf32, #tpu.memory_space<vmem>>, vector<4x8x512xf32>
    tpu.vector_store %arg15[%c0_13, %c0_14, %c0_15], %15 {strides = array<i32>} : memref<4x8x512xf32, #tpu.memory_space<vmem>>, vector<4x8x512xf32>,
    %c0_16 = arith.constant 0 : index
    %c0_17 = arith.constant 0 : index
    %c0_18 = arith.constant 0 : index
    %17 = vector.load %arg3[%c0_16, %c0_17, %c0_18] : memref<4x8x128xbf16, #tpu.memory_space<vmem>>, vector<4x8x128xbf16>
    %18 = vector.shape_cast %17 : vector<4x8x128xbf16> to vector<32x128xbf16>
    %c0_19 = arith.constant 0 : index
    %c0_20 = arith.constant 0 : index
    %19 = vector.load %arg7[%c0_19, %c0_20] : memref<128x512xbf16, #tpu.memory_space<vmem>>, vector<128x512xbf16>
    %cst_21 = arith.constant dense<0.000000e+00> : vector<32x512xf32>
    %20 = tpu.matmul %18, %19, %cst_21 {dimension_numbers = #tpu.dot_dimension_numbers<[1], [0], [0], [1], [0, 0, 1, 1], [], []>} : vector<32x128xbf16>, vector<128x512xbf16>, vector<32x512xf32> -> vector<32x512xf32>
    %c0_22 = arith.constant 0 : index
    %c0_23 = arith.constant 0 : index
    %c0_24 = arith.constant 0 : index
    %21 = vector.load %arg4[%c0_22, %c0_23, %c0_24] : memref<4x8x128xbf16, #tpu.memory_space<vmem>>, vector<4x8x128xbf16>
    %22 = vector.shape_cast %21 : vector<4x8x128xbf16> to vector<32x128xbf16>
    %c0_25 = arith.constant 0 : index
    %c0_26 = arith.constant 0 : index
    %23 = vector.load %arg8[%c0_25, %c0_26] : memref<128x512xbf16, #tpu.memory_space<vmem>>, vector<128x512xbf16>
    %cst_27 = arith.constant dense<0.000000e+00> : vector<32x512xf32>
    %24 = tpu.matmul %22, %23, %cst_27 {dimension_numbers = #tpu.dot_dimension_numbers<[1], [0], [0], [1], [0, 0, 1, 1], [], []>} : vector<32x128xbf16>, vector<128x512xbf16>, vector<32x512xf32> -> vector<32x512xf32>
    %25 = arith.addf %20, %24 : vector<32x512xf32>
    %c0_28 = arith.constant 0 : index
    %c0_29 = arith.constant 0 : index
    %26 = vector.load %arg12[%c0_28, %c0_29] : memref<1x512xf32, #tpu.memory_space<vmem>>, vector<1x512xf32>
    %27 = vector.broadcast %26 : vector<1x512xf32> to vector<32x512xf32>
    %28 = arith.addf %25, %27 : vector<32x512xf32>
    %29 = vector.shape_cast %28 : vector<32x512xf32> to vector<4x8x512xf32>
    %c0_30 = arith.constant 0 : index
    %c0_31 = arith.constant 0 : index
    %c0_32 = arith.constant 0 : index
    %30 = vector.load %arg16[%c0_30, %c0_31, %c0_32] : memref<4x8x512xf32, #tpu.memory_space<vmem>>, vector<4x8x512xf32>
    tpu.vector_store %arg16[%c0_30, %c0_31, %c0_32], %29 {strides = array<i32>} : memref<4x8x512xf32, #tpu.memory_space<vmem>>, vector<4x8x512xf32>,
    %c0_33 = arith.constant 0 : index
    %c0_34 = arith.constant 0 : index
    %31 = vector.load %arg9[%c0_33, %c0_34] : memref<128x512xbf16, #tpu.memory_space<vmem>>, vector<128x512xbf16>
    %c0_35 = arith.constant 0 : index
    %c0_36 = arith.constant 0 : index
    %32 = vector.load %arg10[%c0_35, %c0_36] : memref<128x512xbf16, #tpu.memory_space<vmem>>, vector<128x512xbf16>
    %c0_37 = arith.constant 0 : index
    %c0_38 = arith.constant 0 : index
    %33 = vector.load %arg17[%c0_37, %c0_38] : memref<8x128xf32, #tpu.memory_space<vmem>>, vector<8x128xf32>
    %c0_39 = arith.constant 0 : index
    %c0_40 = arith.constant 0 : index
    %34 = vector.load %arg18[%c0_39, %c0_40] : memref<8x128xf32, #tpu.memory_space<vmem>>, vector<8x128xf32>
    %c0_41 = arith.constant 0 : index
    %c0_42 = arith.constant 0 : index
    %35 = vector.load %arg19[%c0_41, %c0_42] : memref<8x128xf32, #tpu.memory_space<vmem>>, vector<8x128xf32>
    %c0_43 = arith.constant 0 : index
    %c0_44 = arith.constant 0 : index
    %36 = vector.load %arg20[%c0_43, %c0_44] : memref<8x128xf32, #tpu.memory_space<vmem>>, vector<8x128xf32>
    %c0_i32_45 = arith.constant 0 : i32
    %37 = arith.index_cast %c0_i32_45 : i32 to index
    %c0_46 = arith.constant 0 : index
    %c0_47 = arith.constant 0 : index
    %38 = vector.load %arg15[%37, %c0_46, %c0_47] : memref<4x8x512xf32, #tpu.memory_space<vmem>>, vector<1x8x512xf32>
    %39 = vector.shape_cast %38 : vector<1x8x512xf32> to vector<8x512xf32>
    %40 = arith.truncf %33 : vector<8x128xf32> to vector<8x128xbf16>
    %cst_48 = arith.constant dense<0.000000e+00> : vector<8x512xf32>
    %41 = tpu.matmul %40, %31, %cst_48 {dimension_numbers = #tpu.dot_dimension_numbers<[1], [0], [0], [1], [0, 0, 1, 1], [], []>} : vector<8x128xbf16>, vector<128x512xbf16>, vector<8x512xf32> -> vector<8x512xf32>
    %42 = arith.addf %39, %41 : vector<8x512xf32>
    %43 = vector.extract_strided_slice %42 {offsets = [0, 0], sizes = [8, 128], strides = [1, 1]} : vector<8x512xf32> to vector<8x128xf32>
    %cst_49 = arith.constant 5.000000e-01 : f32
    %44 = vector.broadcast %cst_49 : f32 to vector<8x128xf32>
    %45 = arith.mulf %44, %43 : vector<8x128xf32>
    %46 = math.tanh %45 : vector<8x128xf32>
    %cst_50 = arith.constant 1.000000e+00 : f32
    %47 = vector.broadcast %cst_50 : f32 to vector<8x128xf32>
    %48 = arith.addf %46, %47 : vector<8x128xf32>
    %cst_51 = arith.constant 5.000000e-01 : f32
    %49 = vector.broadcast %cst_51 : f32 to vector<8x128xf32>
    %50 = arith.mulf %49, %48 : vector<8x128xf32>
    %51 = vector.extract_strided_slice %42 {offsets = [0, 128], sizes = [8, 128], strides = [1, 1]} : vector<8x512xf32> to vector<8x128xf32>
    %cst_52 = arith.constant 5.000000e-01 : f32
    %52 = vector.broadcast %cst_52 : f32 to vector<8x128xf32>
    %53 = arith.mulf %52, %51 : vector<8x128xf32>
    %54 = math.tanh %53 : vector<8x128xf32>
    %cst_53 = arith.constant 1.000000e+00 : f32
    %55 = vector.broadcast %cst_53 : f32 to vector<8x128xf32>
    %56 = arith.addf %54, %55 : vector<8x128xf32>
    %cst_54 = arith.constant 5.000000e-01 : f32
    %57 = vector.broadcast %cst_54 : f32 to vector<8x128xf32>
    %58 = arith.mulf %57, %56 : vector<8x128xf32>
    %59 = vector.extract_strided_slice %42 {offsets = [0, 256], sizes = [8, 128], strides = [1, 1]} : vector<8x512xf32> to vector<8x128xf32>
    %60 = math.tanh %59 : vector<8x128xf32>
    %61 = vector.extract_strided_slice %42 {offsets = [0, 384], sizes = [8, 128], strides = [1, 1]} : vector<8x512xf32> to vector<8x128xf32>
    %cst_55 = arith.constant 5.000000e-01 : f32
    %62 = vector.broadcast %cst_55 : f32 to vector<8x128xf32>
    %63 = arith.mulf %62, %61 : vector<8x128xf32>
    %64 = math.tanh %63 : vector<8x128xf32>
    %cst_56 = arith.constant 1.000000e+00 : f32
    %65 = vector.broadcast %cst_56 : f32 to vector<8x128xf32>
    %66 = arith.addf %64, %65 : vector<8x128xf32>
    %cst_57 = arith.constant 5.000000e-01 : f32
    %67 = vector.broadcast %cst_57 : f32 to vector<8x128xf32>
    %68 = arith.mulf %67, %66 : vector<8x128xf32>
    %69 = arith.mulf %58, %34 : vector<8x128xf32>
    %70 = arith.mulf %50, %60 : vector<8x128xf32>
    %71 = arith.addf %69, %70 : vector<8x128xf32>
    %72 = math.tanh %71 : vector<8x128xf32>
    %73 = arith.mulf %68, %72 : vector<8x128xf32>
    %74 = arith.truncf %73 : vector<8x128xf32> to vector<8x128xbf16>
    %75 = arith.index_cast %c0_i32_45 : i32 to index
    %c0_58 = arith.constant 0 : index
    %c0_59 = arith.constant 0 : index
    %76 = vector.load %arg13[%75, %c0_58, %c0_59] : memref<4x8x128xbf16, #tpu.memory_space<vmem>>, vector<1x8x128xbf16>
    %77 = vector.shape_cast %76 : vector<1x8x128xbf16> to vector<8x128xbf16>
    %78 = vector.shape_cast %74 : vector<8x128xbf16> to vector<1x8x128xbf16>
    tpu.vector_store %arg13[%75, %c0_58, %c0_59], %78 {strides = array<i32>} : memref<4x8x128xbf16, #tpu.memory_space<vmem>>, vector<1x8x128xbf16>,
    %c3_i32 = arith.constant 3 : i32
    %79 = arith.subi %c3_i32, %c0_i32_45 : i32
    %80 = arith.index_cast %79 : i32 to index
    %c0_60 = arith.constant 0 : index
    %c0_61 = arith.constant 0 : index
    %81 = vector.load %arg16[%80, %c0_60, %c0_61] : memref<4x8x512xf32, #tpu.memory_space<vmem>>, vector<1x8x512xf32>
    %82 = vector.shape_cast %81 : vector<1x8x512xf32> to vector<8x512xf32>
    %83 = arith.truncf %35 : vector<8x128xf32> to vector<8x128xbf16>
    %cst_62 = arith.constant dense<0.000000e+00> : vector<8x512xf32>
    %84 = tpu.matmul %83, %32, %cst_62 {dimension_numbers = #tpu.dot_dimension_numbers<[1], [0], [0], [1], [0, 0, 1, 1], [], []>} : vector<8x128xbf16>, vector<128x512xbf16>, vector<8x512xf32> -> vector<8x512xf32>
    %85 = arith.addf %82, %84 : vector<8x512xf32>
    %86 = vector.extract_strided_slice %85 {offsets = [0, 0], sizes = [8, 128], strides = [1, 1]} : vector<8x512xf32> to vector<8x128xf32>
    %cst_63 = arith.constant 5.000000e-01 : f32
    %87 = vector.broadcast %cst_63 : f32 to vector<8x128xf32>
    %88 = arith.mulf %87, %86 : vector<8x128xf32>
    %89 = math.tanh %88 : vector<8x128xf32>
    %cst_64 = arith.constant 1.000000e+00 : f32
    %90 = vector.broadcast %cst_64 : f32 to vector<8x128xf32>
    %91 = arith.addf %89, %90 : vector<8x128xf32>
    %cst_65 = arith.constant 5.000000e-01 : f32
    %92 = vector.broadcast %cst_65 : f32 to vector<8x128xf32>
    %93 = arith.mulf %92, %91 : vector<8x128xf32>
    %94 = vector.extract_strided_slice %85 {offsets = [0, 128], sizes = [8, 128], strides = [1, 1]} : vector<8x512xf32> to vector<8x128xf32>
    %cst_66 = arith.constant 5.000000e-01 : f32
    %95 = vector.broadcast %cst_66 : f32 to vector<8x128xf32>
    %96 = arith.mulf %95, %94 : vector<8x128xf32>
    %97 = math.tanh %96 : vector<8x128xf32>
    %cst_67 = arith.constant 1.000000e+00 : f32
    %98 = vector.broadcast %cst_67 : f32 to vector<8x128xf32>
    %99 = arith.addf %97, %98 : vector<8x128xf32>
    %cst_68 = arith.constant 5.000000e-01 : f32
    %100 = vector.broadcast %cst_68 : f32 to vector<8x128xf32>
    %101 = arith.mulf %100, %99 : vector<8x128xf32>
    %102 = vector.extract_strided_slice %85 {offsets = [0, 256], sizes = [8, 128], strides = [1, 1]} : vector<8x512xf32> to vector<8x128xf32>
    %103 = math.tanh %102 : vector<8x128xf32>
    %104 = vector.extract_strided_slice %85 {offsets = [0, 384], sizes = [8, 128], strides = [1, 1]} : vector<8x512xf32> to vector<8x128xf32>
    %cst_69 = arith.constant 5.000000e-01 : f32
    %105 = vector.broadcast %cst_69 : f32 to vector<8x128xf32>
    %106 = arith.mulf %105, %104 : vector<8x128xf32>
    %107 = math.tanh %106 : vector<8x128xf32>
    %cst_70 = arith.constant 1.000000e+00 : f32
    %108 = vector.broadcast %cst_70 : f32 to vector<8x128xf32>
    %109 = arith.addf %107, %108 : vector<8x128xf32>
    %cst_71 = arith.constant 5.000000e-01 : f32
    %110 = vector.broadcast %cst_71 : f32 to vector<8x128xf32>
    %111 = arith.mulf %110, %109 : vector<8x128xf32>
    %112 = arith.mulf %101, %36 : vector<8x128xf32>
    %113 = arith.mulf %93, %103 : vector<8x128xf32>
    %114 = arith.addf %112, %113 : vector<8x128xf32>
    %115 = math.tanh %114 : vector<8x128xf32>
    %116 = arith.mulf %111, %115 : vector<8x128xf32>
    %117 = arith.truncf %116 : vector<8x128xf32> to vector<8x128xbf16>
    %118 = arith.index_cast %79 : i32 to index
    %c0_72 = arith.constant 0 : index
    %c0_73 = arith.constant 0 : index
    %119 = vector.load %arg14[%118, %c0_72, %c0_73] : memref<4x8x128xbf16, #tpu.memory_space<vmem>>, vector<1x8x128xbf16>
    %120 = vector.shape_cast %119 : vector<1x8x128xbf16> to vector<8x128xbf16>
    %121 = vector.shape_cast %117 : vector<8x128xbf16> to vector<1x8x128xbf16>
    tpu.vector_store %arg14[%118, %c0_72, %c0_73], %121 {strides = array<i32>} : memref<4x8x128xbf16, #tpu.memory_space<vmem>>, vector<1x8x128xbf16>,
    %c1_i32 = arith.constant 1 : i32
    %122 = arith.index_cast %c1_i32 : i32 to index
    %c0_74 = arith.constant 0 : index
    %c0_75 = arith.constant 0 : index
    %123 = vector.load %arg15[%122, %c0_74, %c0_75] : memref<4x8x512xf32, #tpu.memory_space<vmem>>, vector<1x8x512xf32>
    %124 = vector.shape_cast %123 : vector<1x8x512xf32> to vector<8x512xf32>
    %125 = arith.truncf %73 : vector<8x128xf32> to vector<8x128xbf16>
    %cst_76 = arith.constant dense<0.000000e+00> : vector<8x512xf32>
    %126 = tpu.matmul %125, %31, %cst_76 {dimension_numbers = #tpu.dot_dimension_numbers<[1], [0], [0], [1], [0, 0, 1, 1], [], []>} : vector<8x128xbf16>, vector<128x512xbf16>, vector<8x512xf32> -> vector<8x512xf32>
    %127 = arith.addf %124, %126 : vector<8x512xf32>
    %128 = vector.extract_strided_slice %127 {offsets = [0, 0], sizes = [8, 128], strides = [1, 1]} : vector<8x512xf32> to vector<8x128xf32>
    %cst_77 = arith.constant 5.000000e-01 : f32
    %129 = vector.broadcast %cst_77 : f32 to vector<8x128xf32>
    %130 = arith.mulf %129, %128 : vector<8x128xf32>
    %131 = math.tanh %130 : vector<8x128xf32>
    %cst_78 = arith.constant 1.000000e+00 : f32
    %132 = vector.broadcast %cst_78 : f32 to vector<8x128xf32>
    %133 = arith.addf %131, %132 : vector<8x128xf32>
    %cst_79 = arith.constant 5.000000e-01 : f32
    %134 = vector.broadcast %cst_79 : f32 to vector<8x128xf32>
    %135 = arith.mulf %134, %133 : vector<8x128xf32>
    %136 = vector.extract_strided_slice %127 {offsets = [0, 128], sizes = [8, 128], strides = [1, 1]} : vector<8x512xf32> to vector<8x128xf32>
    %cst_80 = arith.constant 5.000000e-01 : f32
    %137 = vector.broadcast %cst_80 : f32 to vector<8x128xf32>
    %138 = arith.mulf %137, %136 : vector<8x128xf32>
    %139 = math.tanh %138 : vector<8x128xf32>
    %cst_81 = arith.constant 1.000000e+00 : f32
    %140 = vector.broadcast %cst_81 : f32 to vector<8x128xf32>
    %141 = arith.addf %139, %140 : vector<8x128xf32>
    %cst_82 = arith.constant 5.000000e-01 : f32
    %142 = vector.broadcast %cst_82 : f32 to vector<8x128xf32>
    %143 = arith.mulf %142, %141 : vector<8x128xf32>
    %144 = vector.extract_strided_slice %127 {offsets = [0, 256], sizes = [8, 128], strides = [1, 1]} : vector<8x512xf32> to vector<8x128xf32>
    %145 = math.tanh %144 : vector<8x128xf32>
    %146 = vector.extract_strided_slice %127 {offsets = [0, 384], sizes = [8, 128], strides = [1, 1]} : vector<8x512xf32> to vector<8x128xf32>
    %cst_83 = arith.constant 5.000000e-01 : f32
    %147 = vector.broadcast %cst_83 : f32 to vector<8x128xf32>
    %148 = arith.mulf %147, %146 : vector<8x128xf32>
    %149 = math.tanh %148 : vector<8x128xf32>
    %cst_84 = arith.constant 1.000000e+00 : f32
    %150 = vector.broadcast %cst_84 : f32 to vector<8x128xf32>
    %151 = arith.addf %149, %150 : vector<8x128xf32>
    %cst_85 = arith.constant 5.000000e-01 : f32
    %152 = vector.broadcast %cst_85 : f32 to vector<8x128xf32>
    %153 = arith.mulf %152, %151 : vector<8x128xf32>
    %154 = arith.mulf %143, %71 : vector<8x128xf32>
    %155 = arith.mulf %135, %145 : vector<8x128xf32>
    %156 = arith.addf %154, %155 : vector<8x128xf32>
    %157 = math.tanh %156 : vector<8x128xf32>
    %158 = arith.mulf %153, %157 : vector<8x128xf32>
    %159 = arith.truncf %158 : vector<8x128xf32> to vector<8x128xbf16>
    %160 = arith.index_cast %c1_i32 : i32 to index
    %c0_86 = arith.constant 0 : index
    %c0_87 = arith.constant 0 : index
    %161 = vector.load %arg13[%160, %c0_86, %c0_87] : memref<4x8x128xbf16, #tpu.memory_space<vmem>>, vector<1x8x128xbf16>
    %162 = vector.shape_cast %161 : vector<1x8x128xbf16> to vector<8x128xbf16>
    %163 = vector.shape_cast %159 : vector<8x128xbf16> to vector<1x8x128xbf16>
    tpu.vector_store %arg13[%160, %c0_86, %c0_87], %163 {strides = array<i32>} : memref<4x8x128xbf16, #tpu.memory_space<vmem>>, vector<1x8x128xbf16>,
    %c3_i32_88 = arith.constant 3 : i32
    %164 = arith.subi %c3_i32_88, %c1_i32 : i32
    %165 = arith.index_cast %164 : i32 to index
    %c0_89 = arith.constant 0 : index
    %c0_90 = arith.constant 0 : index
    %166 = vector.load %arg16[%165, %c0_89, %c0_90] : memref<4x8x512xf32, #tpu.memory_space<vmem>>, vector<1x8x512xf32>
    %167 = vector.shape_cast %166 : vector<1x8x512xf32> to vector<8x512xf32>
    %168 = arith.truncf %116 : vector<8x128xf32> to vector<8x128xbf16>
    %cst_91 = arith.constant dense<0.000000e+00> : vector<8x512xf32>
    %169 = tpu.matmul %168, %32, %cst_91 {dimension_numbers = #tpu.dot_dimension_numbers<[1], [0], [0], [1], [0, 0, 1, 1], [], []>} : vector<8x128xbf16>, vector<128x512xbf16>, vector<8x512xf32> -> vector<8x512xf32>
    %170 = arith.addf %167, %169 : vector<8x512xf32>
    %171 = vector.extract_strided_slice %170 {offsets = [0, 0], sizes = [8, 128], strides = [1, 1]} : vector<8x512xf32> to vector<8x128xf32>
    %cst_92 = arith.constant 5.000000e-01 : f32
    %172 = vector.broadcast %cst_92 : f32 to vector<8x128xf32>
    %173 = arith.mulf %172, %171 : vector<8x128xf32>
    %174 = math.tanh %173 : vector<8x128xf32>
    %cst_93 = arith.constant 1.000000e+00 : f32
    %175 = vector.broadcast %cst_93 : f32 to vector<8x128xf32>
    %176 = arith.addf %174, %175 : vector<8x128xf32>
    %cst_94 = arith.constant 5.000000e-01 : f32
    %177 = vector.broadcast %cst_94 : f32 to vector<8x128xf32>
    %178 = arith.mulf %177, %176 : vector<8x128xf32>
    %179 = vector.extract_strided_slice %170 {offsets = [0, 128], sizes = [8, 128], strides = [1, 1]} : vector<8x512xf32> to vector<8x128xf32>
    %cst_95 = arith.constant 5.000000e-01 : f32
    %180 = vector.broadcast %cst_95 : f32 to vector<8x128xf32>
    %181 = arith.mulf %180, %179 : vector<8x128xf32>
    %182 = math.tanh %181 : vector<8x128xf32>
    %cst_96 = arith.constant 1.000000e+00 : f32
    %183 = vector.broadcast %cst_96 : f32 to vector<8x128xf32>
    %184 = arith.addf %182, %183 : vector<8x128xf32>
    %cst_97 = arith.constant 5.000000e-01 : f32
    %185 = vector.broadcast %cst_97 : f32 to vector<8x128xf32>
    %186 = arith.mulf %185, %184 : vector<8x128xf32>
    %187 = vector.extract_strided_slice %170 {offsets = [0, 256], sizes = [8, 128], strides = [1, 1]} : vector<8x512xf32> to vector<8x128xf32>
    %188 = math.tanh %187 : vector<8x128xf32>
    %189 = vector.extract_strided_slice %170 {offsets = [0, 384], sizes = [8, 128], strides = [1, 1]} : vector<8x512xf32> to vector<8x128xf32>
    %cst_98 = arith.constant 5.000000e-01 : f32
    %190 = vector.broadcast %cst_98 : f32 to vector<8x128xf32>
    %191 = arith.mulf %190, %189 : vector<8x128xf32>
    %192 = math.tanh %191 : vector<8x128xf32>
    %cst_99 = arith.constant 1.000000e+00 : f32
    %193 = vector.broadcast %cst_99 : f32 to vector<8x128xf32>
    %194 = arith.addf %192, %193 : vector<8x128xf32>
    %cst_100 = arith.constant 5.000000e-01 : f32
    %195 = vector.broadcast %cst_100 : f32 to vector<8x128xf32>
    %196 = arith.mulf %195, %194 : vector<8x128xf32>
    %197 = arith.mulf %186, %114 : vector<8x128xf32>
    %198 = arith.mulf %178, %188 : vector<8x128xf32>
    %199 = arith.addf %197, %198 : vector<8x128xf32>
    %200 = math.tanh %199 : vector<8x128xf32>
    %201 = arith.mulf %196, %200 : vector<8x128xf32>
    %202 = arith.truncf %201 : vector<8x128xf32> to vector<8x128xbf16>
    %203 = arith.index_cast %164 : i32 to index
    %c0_101 = arith.constant 0 : index
    %c0_102 = arith.constant 0 : index
    %204 = vector.load %arg14[%203, %c0_101, %c0_102] : memref<4x8x128xbf16, #tpu.memory_space<vmem>>, vector<1x8x128xbf16>
    %205 = vector.shape_cast %204 : vector<1x8x128xbf16> to vector<8x128xbf16>
    %206 = vector.shape_cast %202 : vector<8x128xbf16> to vector<1x8x128xbf16>
    tpu.vector_store %arg14[%203, %c0_101, %c0_102], %206 {strides = array<i32>} : memref<4x8x128xbf16, #tpu.memory_space<vmem>>, vector<1x8x128xbf16>,
    %c2_i32 = arith.constant 2 : i32
    %207 = arith.index_cast %c2_i32 : i32 to index
    %c0_103 = arith.constant 0 : index
    %c0_104 = arith.constant 0 : index
    %208 = vector.load %arg15[%207, %c0_103, %c0_104] : memref<4x8x512xf32, #tpu.memory_space<vmem>>, vector<1x8x512xf32>
    %209 = vector.shape_cast %208 : vector<1x8x512xf32> to vector<8x512xf32>
    %210 = arith.truncf %158 : vector<8x128xf32> to vector<8x128xbf16>
    %cst_105 = arith.constant dense<0.000000e+00> : vector<8x512xf32>
    %211 = tpu.matmul %210, %31, %cst_105 {dimension_numbers = #tpu.dot_dimension_numbers<[1], [0], [0], [1], [0, 0, 1, 1], [], []>} : vector<8x128xbf16>, vector<128x512xbf16>, vector<8x512xf32> -> vector<8x512xf32>
    %212 = arith.addf %209, %211 : vector<8x512xf32>
    %213 = vector.extract_strided_slice %212 {offsets = [0, 0], sizes = [8, 128], strides = [1, 1]} : vector<8x512xf32> to vector<8x128xf32>
    %cst_106 = arith.constant 5.000000e-01 : f32
    %214 = vector.broadcast %cst_106 : f32 to vector<8x128xf32>
    %215 = arith.mulf %214, %213 : vector<8x128xf32>
    %216 = math.tanh %215 : vector<8x128xf32>
    %cst_107 = arith.constant 1.000000e+00 : f32
    %217 = vector.broadcast %cst_107 : f32 to vector<8x128xf32>
    %218 = arith.addf %216, %217 : vector<8x128xf32>
    %cst_108 = arith.constant 5.000000e-01 : f32
    %219 = vector.broadcast %cst_108 : f32 to vector<8x128xf32>
    %220 = arith.mulf %219, %218 : vector<8x128xf32>
    %221 = vector.extract_strided_slice %212 {offsets = [0, 128], sizes = [8, 128], strides = [1, 1]} : vector<8x512xf32> to vector<8x128xf32>
    %cst_109 = arith.constant 5.000000e-01 : f32
    %222 = vector.broadcast %cst_109 : f32 to vector<8x128xf32>
    %223 = arith.mulf %222, %221 : vector<8x128xf32>
    %224 = math.tanh %223 : vector<8x128xf32>
    %cst_110 = arith.constant 1.000000e+00 : f32
    %225 = vector.broadcast %cst_110 : f32 to vector<8x128xf32>
    %226 = arith.addf %224, %225 : vector<8x128xf32>
    %cst_111 = arith.constant 5.000000e-01 : f32
    %227 = vector.broadcast %cst_111 : f32 to vector<8x128xf32>
    %228 = arith.mulf %227, %226 : vector<8x128xf32>
    %229 = vector.extract_strided_slice %212 {offsets = [0, 256], sizes = [8, 128], strides = [1, 1]} : vector<8x512xf32> to vector<8x128xf32>
    %230 = math.tanh %229 : vector<8x128xf32>
    %231 = vector.extract_strided_slice %212 {offsets = [0, 384], sizes = [8, 128], strides = [1, 1]} : vector<8x512xf32> to vector<8x128xf32>
    %cst_112 = arith.constant 5.000000e-01 : f32
    %232 = vector.broadcast %cst_112 : f32 to vector<8x128xf32>
    %233 = arith.mulf %232, %231 : vector<8x128xf32>
    %234 = math.tanh %233 : vector<8x128xf32>
    %cst_113 = arith.constant 1.000000e+00 : f32
    %235 = vector.broadcast %cst_113 : f32 to vector<8x128xf32>
    %236 = arith.addf %234, %235 : vector<8x128xf32>
    %cst_114 = arith.constant 5.000000e-01 : f32
    %237 = vector.broadcast %cst_114 : f32 to vector<8x128xf32>
    %238 = arith.mulf %237, %236 : vector<8x128xf32>
    %239 = arith.mulf %228, %156 : vector<8x128xf32>
    %240 = arith.mulf %220, %230 : vector<8x128xf32>
    %241 = arith.addf %239, %240 : vector<8x128xf32>
    %242 = math.tanh %241 : vector<8x128xf32>
    %243 = arith.mulf %238, %242 : vector<8x128xf32>
    %244 = arith.truncf %243 : vector<8x128xf32> to vector<8x128xbf16>
    %245 = arith.index_cast %c2_i32 : i32 to index
    %c0_115 = arith.constant 0 : index
    %c0_116 = arith.constant 0 : index
    %246 = vector.load %arg13[%245, %c0_115, %c0_116] : memref<4x8x128xbf16, #tpu.memory_space<vmem>>, vector<1x8x128xbf16>
    %247 = vector.shape_cast %246 : vector<1x8x128xbf16> to vector<8x128xbf16>
    %248 = vector.shape_cast %244 : vector<8x128xbf16> to vector<1x8x128xbf16>
    tpu.vector_store %arg13[%245, %c0_115, %c0_116], %248 {strides = array<i32>} : memref<4x8x128xbf16, #tpu.memory_space<vmem>>, vector<1x8x128xbf16>,
    %c3_i32_117 = arith.constant 3 : i32
    %249 = arith.subi %c3_i32_117, %c2_i32 : i32
    %250 = arith.index_cast %249 : i32 to index
    %c0_118 = arith.constant 0 : index
    %c0_119 = arith.constant 0 : index
    %251 = vector.load %arg16[%250, %c0_118, %c0_119] : memref<4x8x512xf32, #tpu.memory_space<vmem>>, vector<1x8x512xf32>
    %252 = vector.shape_cast %251 : vector<1x8x512xf32> to vector<8x512xf32>
    %253 = arith.truncf %201 : vector<8x128xf32> to vector<8x128xbf16>
    %cst_120 = arith.constant dense<0.000000e+00> : vector<8x512xf32>
    %254 = tpu.matmul %253, %32, %cst_120 {dimension_numbers = #tpu.dot_dimension_numbers<[1], [0], [0], [1], [0, 0, 1, 1], [], []>} : vector<8x128xbf16>, vector<128x512xbf16>, vector<8x512xf32> -> vector<8x512xf32>
    %255 = arith.addf %252, %254 : vector<8x512xf32>
    %256 = vector.extract_strided_slice %255 {offsets = [0, 0], sizes = [8, 128], strides = [1, 1]} : vector<8x512xf32> to vector<8x128xf32>
    %cst_121 = arith.constant 5.000000e-01 : f32
    %257 = vector.broadcast %cst_121 : f32 to vector<8x128xf32>
    %258 = arith.mulf %257, %256 : vector<8x128xf32>
    %259 = math.tanh %258 : vector<8x128xf32>
    %cst_122 = arith.constant 1.000000e+00 : f32
    %260 = vector.broadcast %cst_122 : f32 to vector<8x128xf32>
    %261 = arith.addf %259, %260 : vector<8x128xf32>
    %cst_123 = arith.constant 5.000000e-01 : f32
    %262 = vector.broadcast %cst_123 : f32 to vector<8x128xf32>
    %263 = arith.mulf %262, %261 : vector<8x128xf32>
    %264 = vector.extract_strided_slice %255 {offsets = [0, 128], sizes = [8, 128], strides = [1, 1]} : vector<8x512xf32> to vector<8x128xf32>
    %cst_124 = arith.constant 5.000000e-01 : f32
    %265 = vector.broadcast %cst_124 : f32 to vector<8x128xf32>
    %266 = arith.mulf %265, %264 : vector<8x128xf32>
    %267 = math.tanh %266 : vector<8x128xf32>
    %cst_125 = arith.constant 1.000000e+00 : f32
    %268 = vector.broadcast %cst_125 : f32 to vector<8x128xf32>
    %269 = arith.addf %267, %268 : vector<8x128xf32>
    %cst_126 = arith.constant 5.000000e-01 : f32
    %270 = vector.broadcast %cst_126 : f32 to vector<8x128xf32>
    %271 = arith.mulf %270, %269 : vector<8x128xf32>
    %272 = vector.extract_strided_slice %255 {offsets = [0, 256], sizes = [8, 128], strides = [1, 1]} : vector<8x512xf32> to vector<8x128xf32>
    %273 = math.tanh %272 : vector<8x128xf32>
    %274 = vector.extract_strided_slice %255 {offsets = [0, 384], sizes = [8, 128], strides = [1, 1]} : vector<8x512xf32> to vector<8x128xf32>
    %cst_127 = arith.constant 5.000000e-01 : f32
    %275 = vector.broadcast %cst_127 : f32 to vector<8x128xf32>
    %276 = arith.mulf %275, %274 : vector<8x128xf32>
    %277 = math.tanh %276 : vector<8x128xf32>
    %cst_128 = arith.constant 1.000000e+00 : f32
    %278 = vector.broadcast %cst_128 : f32 to vector<8x128xf32>
    %279 = arith.addf %277, %278 : vector<8x128xf32>
    %cst_129 = arith.constant 5.000000e-01 : f32
    %280 = vector.broadcast %cst_129 : f32 to vector<8x128xf32>
    %281 = arith.mulf %280, %279 : vector<8x128xf32>
    %282 = arith.mulf %271, %199 : vector<8x128xf32>
    %283 = arith.mulf %263, %273 : vector<8x128xf32>
    %284 = arith.addf %282, %283 : vector<8x128xf32>
    %285 = math.tanh %284 : vector<8x128xf32>
    %286 = arith.mulf %281, %285 : vector<8x128xf32>
    %287 = arith.truncf %286 : vector<8x128xf32> to vector<8x128xbf16>
    %288 = arith.index_cast %249 : i32 to index
    %c0_130 = arith.constant 0 : index
    %c0_131 = arith.constant 0 : index
    %289 = vector.load %arg14[%288, %c0_130, %c0_131] : memref<4x8x128xbf16, #tpu.memory_space<vmem>>, vector<1x8x128xbf16>
    %290 = vector.shape_cast %289 : vector<1x8x128xbf16> to vector<8x128xbf16>
    %291 = vector.shape_cast %287 : vector<8x128xbf16> to vector<1x8x128xbf16>
    tpu.vector_store %arg14[%288, %c0_130, %c0_131], %291 {strides = array<i32>} : memref<4x8x128xbf16, #tpu.memory_space<vmem>>, vector<1x8x128xbf16>,
    %c3_i32_132 = arith.constant 3 : i32
    %292 = arith.index_cast %c3_i32_132 : i32 to index
    %c0_133 = arith.constant 0 : index
    %c0_134 = arith.constant 0 : index
    %293 = vector.load %arg15[%292, %c0_133, %c0_134] : memref<4x8x512xf32, #tpu.memory_space<vmem>>, vector<1x8x512xf32>
    %294 = vector.shape_cast %293 : vector<1x8x512xf32> to vector<8x512xf32>
    %295 = arith.truncf %243 : vector<8x128xf32> to vector<8x128xbf16>
    %cst_135 = arith.constant dense<0.000000e+00> : vector<8x512xf32>
    %296 = tpu.matmul %295, %31, %cst_135 {dimension_numbers = #tpu.dot_dimension_numbers<[1], [0], [0], [1], [0, 0, 1, 1], [], []>} : vector<8x128xbf16>, vector<128x512xbf16>, vector<8x512xf32> -> vector<8x512xf32>
    %297 = arith.addf %294, %296 : vector<8x512xf32>
    %298 = vector.extract_strided_slice %297 {offsets = [0, 0], sizes = [8, 128], strides = [1, 1]} : vector<8x512xf32> to vector<8x128xf32>
    %cst_136 = arith.constant 5.000000e-01 : f32
    %299 = vector.broadcast %cst_136 : f32 to vector<8x128xf32>
    %300 = arith.mulf %299, %298 : vector<8x128xf32>
    %301 = math.tanh %300 : vector<8x128xf32>
    %cst_137 = arith.constant 1.000000e+00 : f32
    %302 = vector.broadcast %cst_137 : f32 to vector<8x128xf32>
    %303 = arith.addf %301, %302 : vector<8x128xf32>
    %cst_138 = arith.constant 5.000000e-01 : f32
    %304 = vector.broadcast %cst_138 : f32 to vector<8x128xf32>
    %305 = arith.mulf %304, %303 : vector<8x128xf32>
    %306 = vector.extract_strided_slice %297 {offsets = [0, 128], sizes = [8, 128], strides = [1, 1]} : vector<8x512xf32> to vector<8x128xf32>
    %cst_139 = arith.constant 5.000000e-01 : f32
    %307 = vector.broadcast %cst_139 : f32 to vector<8x128xf32>
    %308 = arith.mulf %307, %306 : vector<8x128xf32>
    %309 = math.tanh %308 : vector<8x128xf32>
    %cst_140 = arith.constant 1.000000e+00 : f32
    %310 = vector.broadcast %cst_140 : f32 to vector<8x128xf32>
    %311 = arith.addf %309, %310 : vector<8x128xf32>
    %cst_141 = arith.constant 5.000000e-01 : f32
    %312 = vector.broadcast %cst_141 : f32 to vector<8x128xf32>
    %313 = arith.mulf %312, %311 : vector<8x128xf32>
    %314 = vector.extract_strided_slice %297 {offsets = [0, 256], sizes = [8, 128], strides = [1, 1]} : vector<8x512xf32> to vector<8x128xf32>
    %315 = math.tanh %314 : vector<8x128xf32>
    %316 = vector.extract_strided_slice %297 {offsets = [0, 384], sizes = [8, 128], strides = [1, 1]} : vector<8x512xf32> to vector<8x128xf32>
    %cst_142 = arith.constant 5.000000e-01 : f32
    %317 = vector.broadcast %cst_142 : f32 to vector<8x128xf32>
    %318 = arith.mulf %317, %316 : vector<8x128xf32>
    %319 = math.tanh %318 : vector<8x128xf32>
    %cst_143 = arith.constant 1.000000e+00 : f32
    %320 = vector.broadcast %cst_143 : f32 to vector<8x128xf32>
    %321 = arith.addf %319, %320 : vector<8x128xf32>
    %cst_144 = arith.constant 5.000000e-01 : f32
    %322 = vector.broadcast %cst_144 : f32 to vector<8x128xf32>
    %323 = arith.mulf %322, %321 : vector<8x128xf32>
    %324 = arith.mulf %313, %241 : vector<8x128xf32>
    %325 = arith.mulf %305, %315 : vector<8x128xf32>
    %326 = arith.addf %324, %325 : vector<8x128xf32>
    %327 = math.tanh %326 : vector<8x128xf32>
    %328 = arith.mulf %323, %327 : vector<8x128xf32>
    %329 = arith.truncf %328 : vector<8x128xf32> to vector<8x128xbf16>
    %330 = arith.index_cast %c3_i32_132 : i32 to index
    %c0_145 = arith.constant 0 : index
    %c0_146 = arith.constant 0 : index
    %331 = vector.load %arg13[%330, %c0_145, %c0_146] : memref<4x8x128xbf16, #tpu.memory_space<vmem>>, vector<1x8x128xbf16>
    %332 = vector.shape_cast %331 : vector<1x8x128xbf16> to vector<8x128xbf16>
    %333 = vector.shape_cast %329 : vector<8x128xbf16> to vector<1x8x128xbf16>
    tpu.vector_store %arg13[%330, %c0_145, %c0_146], %333 {strides = array<i32>} : memref<4x8x128xbf16, #tpu.memory_space<vmem>>, vector<1x8x128xbf16>,
    %c3_i32_147 = arith.constant 3 : i32
    %334 = arith.subi %c3_i32_147, %c3_i32_132 : i32
    %335 = arith.index_cast %334 : i32 to index
    %c0_148 = arith.constant 0 : index
    %c0_149 = arith.constant 0 : index
    %336 = vector.load %arg16[%335, %c0_148, %c0_149] : memref<4x8x512xf32, #tpu.memory_space<vmem>>, vector<1x8x512xf32>
    %337 = vector.shape_cast %336 : vector<1x8x512xf32> to vector<8x512xf32>
    %338 = arith.truncf %286 : vector<8x128xf32> to vector<8x128xbf16>
    %cst_150 = arith.constant dense<0.000000e+00> : vector<8x512xf32>
    %339 = tpu.matmul %338, %32, %cst_150 {dimension_numbers = #tpu.dot_dimension_numbers<[1], [0], [0], [1], [0, 0, 1, 1], [], []>} : vector<8x128xbf16>, vector<128x512xbf16>, vector<8x512xf32> -> vector<8x512xf32>
    %340 = arith.addf %337, %339 : vector<8x512xf32>
    %341 = vector.extract_strided_slice %340 {offsets = [0, 0], sizes = [8, 128], strides = [1, 1]} : vector<8x512xf32> to vector<8x128xf32>
    %cst_151 = arith.constant 5.000000e-01 : f32
    %342 = vector.broadcast %cst_151 : f32 to vector<8x128xf32>
    %343 = arith.mulf %342, %341 : vector<8x128xf32>
    %344 = math.tanh %343 : vector<8x128xf32>
    %cst_152 = arith.constant 1.000000e+00 : f32
    %345 = vector.broadcast %cst_152 : f32 to vector<8x128xf32>
    %346 = arith.addf %344, %345 : vector<8x128xf32>
    %cst_153 = arith.constant 5.000000e-01 : f32
    %347 = vector.broadcast %cst_153 : f32 to vector<8x128xf32>
    %348 = arith.mulf %347, %346 : vector<8x128xf32>
    %349 = vector.extract_strided_slice %340 {offsets = [0, 128], sizes = [8, 128], strides = [1, 1]} : vector<8x512xf32> to vector<8x128xf32>
    %cst_154 = arith.constant 5.000000e-01 : f32
    %350 = vector.broadcast %cst_154 : f32 to vector<8x128xf32>
    %351 = arith.mulf %350, %349 : vector<8x128xf32>
    %352 = math.tanh %351 : vector<8x128xf32>
    %cst_155 = arith.constant 1.000000e+00 : f32
    %353 = vector.broadcast %cst_155 : f32 to vector<8x128xf32>
    %354 = arith.addf %352, %353 : vector<8x128xf32>
    %cst_156 = arith.constant 5.000000e-01 : f32
    %355 = vector.broadcast %cst_156 : f32 to vector<8x128xf32>
    %356 = arith.mulf %355, %354 : vector<8x128xf32>
    %357 = vector.extract_strided_slice %340 {offsets = [0, 256], sizes = [8, 128], strides = [1, 1]} : vector<8x512xf32> to vector<8x128xf32>
    %358 = math.tanh %357 : vector<8x128xf32>
    %359 = vector.extract_strided_slice %340 {offsets = [0, 384], sizes = [8, 128], strides = [1, 1]} : vector<8x512xf32> to vector<8x128xf32>
    %cst_157 = arith.constant 5.000000e-01 : f32
    %360 = vector.broadcast %cst_157 : f32 to vector<8x128xf32>
    %361 = arith.mulf %360, %359 : vector<8x128xf32>
    %362 = math.tanh %361 : vector<8x128xf32>
    %cst_158 = arith.constant 1.000000e+00 : f32
    %363 = vector.broadcast %cst_158 : f32 to vector<8x128xf32>
    %364 = arith.addf %362, %363 : vector<8x128xf32>
    %cst_159 = arith.constant 5.000000e-01 : f32
    %365 = vector.broadcast %cst_159 : f32 to vector<8x128xf32>
    %366 = arith.mulf %365, %364 : vector<8x128xf32>
    %367 = arith.mulf %356, %284 : vector<8x128xf32>
    %368 = arith.mulf %348, %358 : vector<8x128xf32>
    %369 = arith.addf %367, %368 : vector<8x128xf32>
    %370 = math.tanh %369 : vector<8x128xf32>
    %371 = arith.mulf %366, %370 : vector<8x128xf32>
    %372 = arith.truncf %371 : vector<8x128xf32> to vector<8x128xbf16>
    %373 = arith.index_cast %334 : i32 to index
    %c0_160 = arith.constant 0 : index
    %c0_161 = arith.constant 0 : index
    %374 = vector.load %arg14[%373, %c0_160, %c0_161] : memref<4x8x128xbf16, #tpu.memory_space<vmem>>, vector<1x8x128xbf16>
    %375 = vector.shape_cast %374 : vector<1x8x128xbf16> to vector<8x128xbf16>
    %376 = vector.shape_cast %372 : vector<8x128xbf16> to vector<1x8x128xbf16>
    tpu.vector_store %arg14[%373, %c0_160, %c0_161], %376 {strides = array<i32>} : memref<4x8x128xbf16, #tpu.memory_space<vmem>>, vector<1x8x128xbf16>,
    %c4_i32 = arith.constant 4 : i32
    %c0_162 = arith.constant 0 : index
    %c0_163 = arith.constant 0 : index
    %377 = vector.load %arg17[%c0_162, %c0_163] : memref<8x128xf32, #tpu.memory_space<vmem>>, vector<8x128xf32>
    tpu.vector_store %arg17[%c0_162, %c0_163], %328 {strides = array<i32>} : memref<8x128xf32, #tpu.memory_space<vmem>>, vector<8x128xf32>,
    %c0_164 = arith.constant 0 : index
    %c0_165 = arith.constant 0 : index
    %378 = vector.load %arg18[%c0_164, %c0_165] : memref<8x128xf32, #tpu.memory_space<vmem>>, vector<8x128xf32>
    tpu.vector_store %arg18[%c0_164, %c0_165], %326 {strides = array<i32>} : memref<8x128xf32, #tpu.memory_space<vmem>>, vector<8x128xf32>,
    %c0_166 = arith.constant 0 : index
    %c0_167 = arith.constant 0 : index
    %379 = vector.load %arg19[%c0_166, %c0_167] : memref<8x128xf32, #tpu.memory_space<vmem>>, vector<8x128xf32>
    tpu.vector_store %arg19[%c0_166, %c0_167], %371 {strides = array<i32>} : memref<8x128xf32, #tpu.memory_space<vmem>>, vector<8x128xf32>,
    %c0_168 = arith.constant 0 : index
    %c0_169 = arith.constant 0 : index
    %380 = vector.load %arg20[%c0_168, %c0_169] : memref<8x128xf32, #tpu.memory_space<vmem>>, vector<8x128xf32>
    tpu.vector_store %arg20[%c0_168, %c0_169], %369 {strides = array<i32>} : memref<8x128xf32, #tpu.memory_space<vmem>>, vector<8x128xf32>,
    return
  }
  func.func @transform_0(%arg0: i32) -> (i32, i32, i32) {
    %c0_i32 = arith.constant 0 : i32
    %c0_i32_0 = arith.constant 0 : i32
    %c0_i32_1 = arith.constant 0 : i32
    return %arg0, %c0_i32, %c0_i32_0 : i32, i32, i32
  }
  func.func @transform_1(%arg0: i32) -> (i32, i32, i32) {
    %c0_i32 = arith.constant 0 : i32
    %c0_i32_0 = arith.constant 0 : i32
    %c0_i32_1 = arith.constant 0 : i32
    return %arg0, %c0_i32, %c0_i32_0 : i32, i32, i32
  }
  func.func @transform_2(%arg0: i32) -> (i32, i32, i32) {
    %c1_i32 = arith.constant 1 : i32
    %0 = arith.subi %c1_i32, %arg0 : i32
    %c0_i32 = arith.constant 0 : i32
    %c0_i32_0 = arith.constant 0 : i32
    %c0_i32_1 = arith.constant 0 : i32
    return %0, %c0_i32, %c0_i32_0 : i32, i32, i32
  }
  func.func @transform_3(%arg0: i32) -> (i32, i32, i32) {
    %c1_i32 = arith.constant 1 : i32
    %0 = arith.subi %c1_i32, %arg0 : i32
    %c0_i32 = arith.constant 0 : i32
    %c0_i32_0 = arith.constant 0 : i32
    %c0_i32_1 = arith.constant 0 : i32
    return %0, %c0_i32, %c0_i32_0 : i32, i32, i32
  }
  func.func @transform_4(%arg0: i32) -> (i32, i32) {
    %c0_i32 = arith.constant 0 : i32
    %c0_i32_0 = arith.constant 0 : i32
    %c0_i32_1 = arith.constant 0 : i32
    return %c0_i32, %c0_i32_0 : i32, i32
  }
  func.func @transform_5(%arg0: i32) -> (i32, i32) {
    %c0_i32 = arith.constant 0 : i32
    %c0_i32_0 = arith.constant 0 : i32
    %c0_i32_1 = arith.constant 0 : i32
    return %c0_i32, %c0_i32_0 : i32, i32
  }
  func.func @transform_6(%arg0: i32) -> (i32, i32) {
    %c0_i32 = arith.constant 0 : i32
    %c0_i32_0 = arith.constant 0 : i32
    %c0_i32_1 = arith.constant 0 : i32
    return %c0_i32, %c0_i32_0 : i32, i32
  }
  func.func @transform_7(%arg0: i32) -> (i32, i32) {
    %c0_i32 = arith.constant 0 : i32
    %c0_i32_0 = arith.constant 0 : i32
    %c0_i32_1 = arith.constant 0 : i32
    return %c0_i32, %c0_i32_0 : i32, i32
  }
  func.func @transform_8(%arg0: i32) -> (i32, i32) {
    %c0_i32 = arith.constant 0 : i32
    %c0_i32_0 = arith.constant 0 : i32
    %c0_i32_1 = arith.constant 0 : i32
    return %c0_i32, %c0_i32_0 : i32, i32
  }
  func.func @transform_9(%arg0: i32) -> (i32, i32) {
    %c0_i32 = arith.constant 0 : i32
    %c0_i32_0 = arith.constant 0 : i32
    %c0_i32_1 = arith.constant 0 : i32
    return %c0_i32, %c0_i32_0 : i32, i32
  }
  func.func @transform_10(%arg0: i32) -> (i32, i32) {
    %c0_i32 = arith.constant 0 : i32
    %c0_i32_0 = arith.constant 0 : i32
    %c0_i32_1 = arith.constant 0 : i32
    return %c0_i32, %c0_i32_0 : i32, i32
  }
  func.func @transform_11(%arg0: i32) -> (i32, i32) {
    %c0_i32 = arith.constant 0 : i32
    %c0_i32_0 = arith.constant 0 : i32
    %c0_i32_1 = arith.constant 0 : i32
    return %c0_i32, %c0_i32_0 : i32, i32
  }
  func.func @transform_12(%arg0: i32) -> (i32, i32, i32) {
    %c0_i32 = arith.constant 0 : i32
    %c0_i32_0 = arith.constant 0 : i32
    %c0_i32_1 = arith.constant 0 : i32
    return %arg0, %c0_i32, %c0_i32_0 : i32, i32, i32
  }
  func.func @transform_13(%arg0: i32) -> (i32, i32, i32) {
    %c1_i32 = arith.constant 1 : i32
    %0 = arith.subi %c1_i32, %arg0 : i32
    %c0_i32 = arith.constant 0 : i32
    %c0_i32_0 = arith.constant 0 : i32
    %c0_i32_1 = arith.constant 0 : i32
    return %0, %c0_i32, %c0_i32_0 : i32, i32, i32
  }
}

module attributes {stable_mosaic.version = 11 : i64} {
  func.func @kernel(%arg0: i32, %arg1: memref<4x8x32xbf16, #tpu.memory_space<vmem>>, %arg2: memref<4x8x32xbf16, #tpu.memory_space<vmem>>, %arg3: memref<32x512xbf16, #tpu.memory_space<vmem>>, %arg4: memref<32x512xbf16, #tpu.memory_space<vmem>>, %arg5: memref<128x512xbf16, #tpu.memory_space<vmem>>, %arg6: memref<128x512xbf16, #tpu.memory_space<vmem>>, %arg7: memref<1x512xf32, #tpu.memory_space<vmem>>, %arg8: memref<1x512xf32, #tpu.memory_space<vmem>>, %arg9: memref<4x8x128xbf16, #tpu.memory_space<vmem>>, %arg10: memref<4x8x128xbf16, #tpu.memory_space<vmem>>, %arg11: memref<4x8x512xf32, #tpu.memory_space<vmem>>, %arg12: memref<4x8x512xf32, #tpu.memory_space<vmem>>, %arg13: memref<8x128xf32, #tpu.memory_space<vmem>>, %arg14: memref<8x128xf32, #tpu.memory_space<vmem>>, %arg15: memref<8x128xf32, #tpu.memory_space<vmem>>, %arg16: memref<8x128xf32, #tpu.memory_space<vmem>>) attributes {dimension_semantics = [#tpu.dimension_semantics<arbitrary>], iteration_bounds = array<i64: 2>, scalar_prefetch = 0 : i64, scratch_operands = 6 : i64, tpu.core_type = #tpu.core_type<tc>, window_params = [{transform_indices = @transform_0, window_bounds = array<i64: 4, 8, 32>}, {transform_indices = @transform_1, window_bounds = array<i64: 4, 8, 32>}, {pipeline_mode = #tpu.pipeline_mode<synchronous>, transform_indices = @transform_2, window_bounds = array<i64: 32, 512>}, {pipeline_mode = #tpu.pipeline_mode<synchronous>, transform_indices = @transform_3, window_bounds = array<i64: 32, 512>}, {pipeline_mode = #tpu.pipeline_mode<synchronous>, transform_indices = @transform_4, window_bounds = array<i64: 128, 512>}, {pipeline_mode = #tpu.pipeline_mode<synchronous>, transform_indices = @transform_5, window_bounds = array<i64: 128, 512>}, {pipeline_mode = #tpu.pipeline_mode<synchronous>, transform_indices = @transform_6, window_bounds = array<i64: 1, 512>}, {pipeline_mode = #tpu.pipeline_mode<synchronous>, transform_indices = @transform_7, window_bounds = array<i64: 1, 512>}, {transform_indices = @transform_8, window_bounds = array<i64: 4, 8, 128>}, {transform_indices = @transform_9, window_bounds = array<i64: 4, 8, 128>}]} {
    %c0_i32 = arith.constant 0 : i32
    %0 = arith.cmpi eq, %arg0, %c0_i32 : i32
    %1 = arith.extui %0 : i1 to i32
    %c0_i32_0 = arith.constant 0 : i32
    %2 = arith.cmpi ne, %1, %c0_i32_0 : i32
    scf.if %2 {
      %cst_158 = arith.constant 0.000000e+00 : f32
      %371 = vector.broadcast %cst_158 : f32 to vector<8x128xf32>
      %c0_159 = arith.constant 0 : index
      %c0_160 = arith.constant 0 : index
      %372 = vector.load %arg13[%c0_159, %c0_160] : memref<8x128xf32, #tpu.memory_space<vmem>>, vector<8x128xf32>
      tpu.vector_store %arg13[%c0_159, %c0_160], %371 {strides = array<i32>} : memref<8x128xf32, #tpu.memory_space<vmem>>, vector<8x128xf32>,
      %cst_161 = arith.constant 0.000000e+00 : f32
      %373 = vector.broadcast %cst_161 : f32 to vector<8x128xf32>
      %c0_162 = arith.constant 0 : index
      %c0_163 = arith.constant 0 : index
      %374 = vector.load %arg14[%c0_162, %c0_163] : memref<8x128xf32, #tpu.memory_space<vmem>>, vector<8x128xf32>
      tpu.vector_store %arg14[%c0_162, %c0_163], %373 {strides = array<i32>} : memref<8x128xf32, #tpu.memory_space<vmem>>, vector<8x128xf32>,
      %cst_164 = arith.constant 0.000000e+00 : f32
      %375 = vector.broadcast %cst_164 : f32 to vector<8x128xf32>
      %c0_165 = arith.constant 0 : index
      %c0_166 = arith.constant 0 : index
      %376 = vector.load %arg15[%c0_165, %c0_166] : memref<8x128xf32, #tpu.memory_space<vmem>>, vector<8x128xf32>
      tpu.vector_store %arg15[%c0_165, %c0_166], %375 {strides = array<i32>} : memref<8x128xf32, #tpu.memory_space<vmem>>, vector<8x128xf32>,
      %cst_167 = arith.constant 0.000000e+00 : f32
      %377 = vector.broadcast %cst_167 : f32 to vector<8x128xf32>
      %c0_168 = arith.constant 0 : index
      %c0_169 = arith.constant 0 : index
      %378 = vector.load %arg16[%c0_168, %c0_169] : memref<8x128xf32, #tpu.memory_space<vmem>>, vector<8x128xf32>
      tpu.vector_store %arg16[%c0_168, %c0_169], %377 {strides = array<i32>} : memref<8x128xf32, #tpu.memory_space<vmem>>, vector<8x128xf32>,
    } else {
    }
    %c0 = arith.constant 0 : index
    %c0_1 = arith.constant 0 : index
    %c0_2 = arith.constant 0 : index
    %3 = vector.load %arg1[%c0, %c0_1, %c0_2] : memref<4x8x32xbf16, #tpu.memory_space<vmem>>, vector<4x8x32xbf16>
    %4 = vector.shape_cast %3 : vector<4x8x32xbf16> to vector<32x32xbf16>
    %c0_3 = arith.constant 0 : index
    %c0_4 = arith.constant 0 : index
    %5 = vector.load %arg3[%c0_3, %c0_4] : memref<32x512xbf16, #tpu.memory_space<vmem>>, vector<32x512xbf16>
    %cst = arith.constant dense<0.000000e+00> : vector<32x512xf32>
    %6 = tpu.matmul %4, %5, %cst {dimension_numbers = #tpu.dot_dimension_numbers<[1], [0], [0], [1], [0, 0, 1, 1], [], []>} : vector<32x32xbf16>, vector<32x512xbf16>, vector<32x512xf32> -> vector<32x512xf32>
    %c0_5 = arith.constant 0 : index
    %c0_6 = arith.constant 0 : index
    %7 = vector.load %arg7[%c0_5, %c0_6] : memref<1x512xf32, #tpu.memory_space<vmem>>, vector<1x512xf32>
    %8 = vector.broadcast %7 : vector<1x512xf32> to vector<32x512xf32>
    %9 = arith.addf %6, %8 : vector<32x512xf32>
    %10 = vector.shape_cast %9 : vector<32x512xf32> to vector<4x8x512xf32>
    %c0_7 = arith.constant 0 : index
    %c0_8 = arith.constant 0 : index
    %c0_9 = arith.constant 0 : index
    %11 = vector.load %arg11[%c0_7, %c0_8, %c0_9] : memref<4x8x512xf32, #tpu.memory_space<vmem>>, vector<4x8x512xf32>
    tpu.vector_store %arg11[%c0_7, %c0_8, %c0_9], %10 {strides = array<i32>} : memref<4x8x512xf32, #tpu.memory_space<vmem>>, vector<4x8x512xf32>,
    %c0_10 = arith.constant 0 : index
    %c0_11 = arith.constant 0 : index
    %c0_12 = arith.constant 0 : index
    %12 = vector.load %arg2[%c0_10, %c0_11, %c0_12] : memref<4x8x32xbf16, #tpu.memory_space<vmem>>, vector<4x8x32xbf16>
    %13 = vector.shape_cast %12 : vector<4x8x32xbf16> to vector<32x32xbf16>
    %c0_13 = arith.constant 0 : index
    %c0_14 = arith.constant 0 : index
    %14 = vector.load %arg4[%c0_13, %c0_14] : memref<32x512xbf16, #tpu.memory_space<vmem>>, vector<32x512xbf16>
    %cst_15 = arith.constant dense<0.000000e+00> : vector<32x512xf32>
    %15 = tpu.matmul %13, %14, %cst_15 {dimension_numbers = #tpu.dot_dimension_numbers<[1], [0], [0], [1], [0, 0, 1, 1], [], []>} : vector<32x32xbf16>, vector<32x512xbf16>, vector<32x512xf32> -> vector<32x512xf32>
    %c0_16 = arith.constant 0 : index
    %c0_17 = arith.constant 0 : index
    %16 = vector.load %arg8[%c0_16, %c0_17] : memref<1x512xf32, #tpu.memory_space<vmem>>, vector<1x512xf32>
    %17 = vector.broadcast %16 : vector<1x512xf32> to vector<32x512xf32>
    %18 = arith.addf %15, %17 : vector<32x512xf32>
    %19 = vector.shape_cast %18 : vector<32x512xf32> to vector<4x8x512xf32>
    %c0_18 = arith.constant 0 : index
    %c0_19 = arith.constant 0 : index
    %c0_20 = arith.constant 0 : index
    %20 = vector.load %arg12[%c0_18, %c0_19, %c0_20] : memref<4x8x512xf32, #tpu.memory_space<vmem>>, vector<4x8x512xf32>
    tpu.vector_store %arg12[%c0_18, %c0_19, %c0_20], %19 {strides = array<i32>} : memref<4x8x512xf32, #tpu.memory_space<vmem>>, vector<4x8x512xf32>,
    %c0_21 = arith.constant 0 : index
    %c0_22 = arith.constant 0 : index
    %21 = vector.load %arg5[%c0_21, %c0_22] : memref<128x512xbf16, #tpu.memory_space<vmem>>, vector<128x512xbf16>
    %c0_23 = arith.constant 0 : index
    %c0_24 = arith.constant 0 : index
    %22 = vector.load %arg6[%c0_23, %c0_24] : memref<128x512xbf16, #tpu.memory_space<vmem>>, vector<128x512xbf16>
    %c0_25 = arith.constant 0 : index
    %c0_26 = arith.constant 0 : index
    %23 = vector.load %arg13[%c0_25, %c0_26] : memref<8x128xf32, #tpu.memory_space<vmem>>, vector<8x128xf32>
    %c0_27 = arith.constant 0 : index
    %c0_28 = arith.constant 0 : index
    %24 = vector.load %arg14[%c0_27, %c0_28] : memref<8x128xf32, #tpu.memory_space<vmem>>, vector<8x128xf32>
    %c0_29 = arith.constant 0 : index
    %c0_30 = arith.constant 0 : index
    %25 = vector.load %arg15[%c0_29, %c0_30] : memref<8x128xf32, #tpu.memory_space<vmem>>, vector<8x128xf32>
    %c0_31 = arith.constant 0 : index
    %c0_32 = arith.constant 0 : index
    %26 = vector.load %arg16[%c0_31, %c0_32] : memref<8x128xf32, #tpu.memory_space<vmem>>, vector<8x128xf32>
    %c0_i32_33 = arith.constant 0 : i32
    %27 = arith.index_cast %c0_i32_33 : i32 to index
    %c0_34 = arith.constant 0 : index
    %c0_35 = arith.constant 0 : index
    %28 = vector.load %arg11[%27, %c0_34, %c0_35] : memref<4x8x512xf32, #tpu.memory_space<vmem>>, vector<1x8x512xf32>
    %29 = vector.shape_cast %28 : vector<1x8x512xf32> to vector<8x512xf32>
    %30 = arith.truncf %23 : vector<8x128xf32> to vector<8x128xbf16>
    %cst_36 = arith.constant dense<0.000000e+00> : vector<8x512xf32>
    %31 = tpu.matmul %30, %21, %cst_36 {dimension_numbers = #tpu.dot_dimension_numbers<[1], [0], [0], [1], [0, 0, 1, 1], [], []>} : vector<8x128xbf16>, vector<128x512xbf16>, vector<8x512xf32> -> vector<8x512xf32>
    %32 = arith.addf %29, %31 : vector<8x512xf32>
    %33 = vector.extract_strided_slice %32 {offsets = [0, 0], sizes = [8, 128], strides = [1, 1]} : vector<8x512xf32> to vector<8x128xf32>
    %cst_37 = arith.constant 5.000000e-01 : f32
    %34 = vector.broadcast %cst_37 : f32 to vector<8x128xf32>
    %35 = arith.mulf %34, %33 : vector<8x128xf32>
    %36 = math.tanh %35 : vector<8x128xf32>
    %cst_38 = arith.constant 1.000000e+00 : f32
    %37 = vector.broadcast %cst_38 : f32 to vector<8x128xf32>
    %38 = arith.addf %36, %37 : vector<8x128xf32>
    %cst_39 = arith.constant 5.000000e-01 : f32
    %39 = vector.broadcast %cst_39 : f32 to vector<8x128xf32>
    %40 = arith.mulf %39, %38 : vector<8x128xf32>
    %41 = vector.extract_strided_slice %32 {offsets = [0, 128], sizes = [8, 128], strides = [1, 1]} : vector<8x512xf32> to vector<8x128xf32>
    %cst_40 = arith.constant 5.000000e-01 : f32
    %42 = vector.broadcast %cst_40 : f32 to vector<8x128xf32>
    %43 = arith.mulf %42, %41 : vector<8x128xf32>
    %44 = math.tanh %43 : vector<8x128xf32>
    %cst_41 = arith.constant 1.000000e+00 : f32
    %45 = vector.broadcast %cst_41 : f32 to vector<8x128xf32>
    %46 = arith.addf %44, %45 : vector<8x128xf32>
    %cst_42 = arith.constant 5.000000e-01 : f32
    %47 = vector.broadcast %cst_42 : f32 to vector<8x128xf32>
    %48 = arith.mulf %47, %46 : vector<8x128xf32>
    %49 = vector.extract_strided_slice %32 {offsets = [0, 256], sizes = [8, 128], strides = [1, 1]} : vector<8x512xf32> to vector<8x128xf32>
    %50 = math.tanh %49 : vector<8x128xf32>
    %51 = vector.extract_strided_slice %32 {offsets = [0, 384], sizes = [8, 128], strides = [1, 1]} : vector<8x512xf32> to vector<8x128xf32>
    %cst_43 = arith.constant 5.000000e-01 : f32
    %52 = vector.broadcast %cst_43 : f32 to vector<8x128xf32>
    %53 = arith.mulf %52, %51 : vector<8x128xf32>
    %54 = math.tanh %53 : vector<8x128xf32>
    %cst_44 = arith.constant 1.000000e+00 : f32
    %55 = vector.broadcast %cst_44 : f32 to vector<8x128xf32>
    %56 = arith.addf %54, %55 : vector<8x128xf32>
    %cst_45 = arith.constant 5.000000e-01 : f32
    %57 = vector.broadcast %cst_45 : f32 to vector<8x128xf32>
    %58 = arith.mulf %57, %56 : vector<8x128xf32>
    %59 = arith.mulf %48, %24 : vector<8x128xf32>
    %60 = arith.mulf %40, %50 : vector<8x128xf32>
    %61 = arith.addf %59, %60 : vector<8x128xf32>
    %62 = math.tanh %61 : vector<8x128xf32>
    %63 = arith.mulf %58, %62 : vector<8x128xf32>
    %64 = arith.truncf %63 : vector<8x128xf32> to vector<8x128xbf16>
    %65 = arith.index_cast %c0_i32_33 : i32 to index
    %c0_46 = arith.constant 0 : index
    %c0_47 = arith.constant 0 : index
    %66 = vector.load %arg9[%65, %c0_46, %c0_47] : memref<4x8x128xbf16, #tpu.memory_space<vmem>>, vector<1x8x128xbf16>
    %67 = vector.shape_cast %66 : vector<1x8x128xbf16> to vector<8x128xbf16>
    %68 = vector.shape_cast %64 : vector<8x128xbf16> to vector<1x8x128xbf16>
    tpu.vector_store %arg9[%65, %c0_46, %c0_47], %68 {strides = array<i32>} : memref<4x8x128xbf16, #tpu.memory_space<vmem>>, vector<1x8x128xbf16>,
    %c3_i32 = arith.constant 3 : i32
    %69 = arith.subi %c3_i32, %c0_i32_33 : i32
    %70 = arith.index_cast %69 : i32 to index
    %c0_48 = arith.constant 0 : index
    %c0_49 = arith.constant 0 : index
    %71 = vector.load %arg12[%70, %c0_48, %c0_49] : memref<4x8x512xf32, #tpu.memory_space<vmem>>, vector<1x8x512xf32>
    %72 = vector.shape_cast %71 : vector<1x8x512xf32> to vector<8x512xf32>
    %73 = arith.truncf %25 : vector<8x128xf32> to vector<8x128xbf16>
    %cst_50 = arith.constant dense<0.000000e+00> : vector<8x512xf32>
    %74 = tpu.matmul %73, %22, %cst_50 {dimension_numbers = #tpu.dot_dimension_numbers<[1], [0], [0], [1], [0, 0, 1, 1], [], []>} : vector<8x128xbf16>, vector<128x512xbf16>, vector<8x512xf32> -> vector<8x512xf32>
    %75 = arith.addf %72, %74 : vector<8x512xf32>
    %76 = vector.extract_strided_slice %75 {offsets = [0, 0], sizes = [8, 128], strides = [1, 1]} : vector<8x512xf32> to vector<8x128xf32>
    %cst_51 = arith.constant 5.000000e-01 : f32
    %77 = vector.broadcast %cst_51 : f32 to vector<8x128xf32>
    %78 = arith.mulf %77, %76 : vector<8x128xf32>
    %79 = math.tanh %78 : vector<8x128xf32>
    %cst_52 = arith.constant 1.000000e+00 : f32
    %80 = vector.broadcast %cst_52 : f32 to vector<8x128xf32>
    %81 = arith.addf %79, %80 : vector<8x128xf32>
    %cst_53 = arith.constant 5.000000e-01 : f32
    %82 = vector.broadcast %cst_53 : f32 to vector<8x128xf32>
    %83 = arith.mulf %82, %81 : vector<8x128xf32>
    %84 = vector.extract_strided_slice %75 {offsets = [0, 128], sizes = [8, 128], strides = [1, 1]} : vector<8x512xf32> to vector<8x128xf32>
    %cst_54 = arith.constant 5.000000e-01 : f32
    %85 = vector.broadcast %cst_54 : f32 to vector<8x128xf32>
    %86 = arith.mulf %85, %84 : vector<8x128xf32>
    %87 = math.tanh %86 : vector<8x128xf32>
    %cst_55 = arith.constant 1.000000e+00 : f32
    %88 = vector.broadcast %cst_55 : f32 to vector<8x128xf32>
    %89 = arith.addf %87, %88 : vector<8x128xf32>
    %cst_56 = arith.constant 5.000000e-01 : f32
    %90 = vector.broadcast %cst_56 : f32 to vector<8x128xf32>
    %91 = arith.mulf %90, %89 : vector<8x128xf32>
    %92 = vector.extract_strided_slice %75 {offsets = [0, 256], sizes = [8, 128], strides = [1, 1]} : vector<8x512xf32> to vector<8x128xf32>
    %93 = math.tanh %92 : vector<8x128xf32>
    %94 = vector.extract_strided_slice %75 {offsets = [0, 384], sizes = [8, 128], strides = [1, 1]} : vector<8x512xf32> to vector<8x128xf32>
    %cst_57 = arith.constant 5.000000e-01 : f32
    %95 = vector.broadcast %cst_57 : f32 to vector<8x128xf32>
    %96 = arith.mulf %95, %94 : vector<8x128xf32>
    %97 = math.tanh %96 : vector<8x128xf32>
    %cst_58 = arith.constant 1.000000e+00 : f32
    %98 = vector.broadcast %cst_58 : f32 to vector<8x128xf32>
    %99 = arith.addf %97, %98 : vector<8x128xf32>
    %cst_59 = arith.constant 5.000000e-01 : f32
    %100 = vector.broadcast %cst_59 : f32 to vector<8x128xf32>
    %101 = arith.mulf %100, %99 : vector<8x128xf32>
    %102 = arith.mulf %91, %26 : vector<8x128xf32>
    %103 = arith.mulf %83, %93 : vector<8x128xf32>
    %104 = arith.addf %102, %103 : vector<8x128xf32>
    %105 = math.tanh %104 : vector<8x128xf32>
    %106 = arith.mulf %101, %105 : vector<8x128xf32>
    %107 = arith.truncf %106 : vector<8x128xf32> to vector<8x128xbf16>
    %108 = arith.index_cast %69 : i32 to index
    %c0_60 = arith.constant 0 : index
    %c0_61 = arith.constant 0 : index
    %109 = vector.load %arg10[%108, %c0_60, %c0_61] : memref<4x8x128xbf16, #tpu.memory_space<vmem>>, vector<1x8x128xbf16>
    %110 = vector.shape_cast %109 : vector<1x8x128xbf16> to vector<8x128xbf16>
    %111 = vector.shape_cast %107 : vector<8x128xbf16> to vector<1x8x128xbf16>
    tpu.vector_store %arg10[%108, %c0_60, %c0_61], %111 {strides = array<i32>} : memref<4x8x128xbf16, #tpu.memory_space<vmem>>, vector<1x8x128xbf16>,
    %c1_i32 = arith.constant 1 : i32
    %112 = arith.index_cast %c1_i32 : i32 to index
    %c0_62 = arith.constant 0 : index
    %c0_63 = arith.constant 0 : index
    %113 = vector.load %arg11[%112, %c0_62, %c0_63] : memref<4x8x512xf32, #tpu.memory_space<vmem>>, vector<1x8x512xf32>
    %114 = vector.shape_cast %113 : vector<1x8x512xf32> to vector<8x512xf32>
    %115 = arith.truncf %63 : vector<8x128xf32> to vector<8x128xbf16>
    %cst_64 = arith.constant dense<0.000000e+00> : vector<8x512xf32>
    %116 = tpu.matmul %115, %21, %cst_64 {dimension_numbers = #tpu.dot_dimension_numbers<[1], [0], [0], [1], [0, 0, 1, 1], [], []>} : vector<8x128xbf16>, vector<128x512xbf16>, vector<8x512xf32> -> vector<8x512xf32>
    %117 = arith.addf %114, %116 : vector<8x512xf32>
    %118 = vector.extract_strided_slice %117 {offsets = [0, 0], sizes = [8, 128], strides = [1, 1]} : vector<8x512xf32> to vector<8x128xf32>
    %cst_65 = arith.constant 5.000000e-01 : f32
    %119 = vector.broadcast %cst_65 : f32 to vector<8x128xf32>
    %120 = arith.mulf %119, %118 : vector<8x128xf32>
    %121 = math.tanh %120 : vector<8x128xf32>
    %cst_66 = arith.constant 1.000000e+00 : f32
    %122 = vector.broadcast %cst_66 : f32 to vector<8x128xf32>
    %123 = arith.addf %121, %122 : vector<8x128xf32>
    %cst_67 = arith.constant 5.000000e-01 : f32
    %124 = vector.broadcast %cst_67 : f32 to vector<8x128xf32>
    %125 = arith.mulf %124, %123 : vector<8x128xf32>
    %126 = vector.extract_strided_slice %117 {offsets = [0, 128], sizes = [8, 128], strides = [1, 1]} : vector<8x512xf32> to vector<8x128xf32>
    %cst_68 = arith.constant 5.000000e-01 : f32
    %127 = vector.broadcast %cst_68 : f32 to vector<8x128xf32>
    %128 = arith.mulf %127, %126 : vector<8x128xf32>
    %129 = math.tanh %128 : vector<8x128xf32>
    %cst_69 = arith.constant 1.000000e+00 : f32
    %130 = vector.broadcast %cst_69 : f32 to vector<8x128xf32>
    %131 = arith.addf %129, %130 : vector<8x128xf32>
    %cst_70 = arith.constant 5.000000e-01 : f32
    %132 = vector.broadcast %cst_70 : f32 to vector<8x128xf32>
    %133 = arith.mulf %132, %131 : vector<8x128xf32>
    %134 = vector.extract_strided_slice %117 {offsets = [0, 256], sizes = [8, 128], strides = [1, 1]} : vector<8x512xf32> to vector<8x128xf32>
    %135 = math.tanh %134 : vector<8x128xf32>
    %136 = vector.extract_strided_slice %117 {offsets = [0, 384], sizes = [8, 128], strides = [1, 1]} : vector<8x512xf32> to vector<8x128xf32>
    %cst_71 = arith.constant 5.000000e-01 : f32
    %137 = vector.broadcast %cst_71 : f32 to vector<8x128xf32>
    %138 = arith.mulf %137, %136 : vector<8x128xf32>
    %139 = math.tanh %138 : vector<8x128xf32>
    %cst_72 = arith.constant 1.000000e+00 : f32
    %140 = vector.broadcast %cst_72 : f32 to vector<8x128xf32>
    %141 = arith.addf %139, %140 : vector<8x128xf32>
    %cst_73 = arith.constant 5.000000e-01 : f32
    %142 = vector.broadcast %cst_73 : f32 to vector<8x128xf32>
    %143 = arith.mulf %142, %141 : vector<8x128xf32>
    %144 = arith.mulf %133, %61 : vector<8x128xf32>
    %145 = arith.mulf %125, %135 : vector<8x128xf32>
    %146 = arith.addf %144, %145 : vector<8x128xf32>
    %147 = math.tanh %146 : vector<8x128xf32>
    %148 = arith.mulf %143, %147 : vector<8x128xf32>
    %149 = arith.truncf %148 : vector<8x128xf32> to vector<8x128xbf16>
    %150 = arith.index_cast %c1_i32 : i32 to index
    %c0_74 = arith.constant 0 : index
    %c0_75 = arith.constant 0 : index
    %151 = vector.load %arg9[%150, %c0_74, %c0_75] : memref<4x8x128xbf16, #tpu.memory_space<vmem>>, vector<1x8x128xbf16>
    %152 = vector.shape_cast %151 : vector<1x8x128xbf16> to vector<8x128xbf16>
    %153 = vector.shape_cast %149 : vector<8x128xbf16> to vector<1x8x128xbf16>
    tpu.vector_store %arg9[%150, %c0_74, %c0_75], %153 {strides = array<i32>} : memref<4x8x128xbf16, #tpu.memory_space<vmem>>, vector<1x8x128xbf16>,
    %c3_i32_76 = arith.constant 3 : i32
    %154 = arith.subi %c3_i32_76, %c1_i32 : i32
    %155 = arith.index_cast %154 : i32 to index
    %c0_77 = arith.constant 0 : index
    %c0_78 = arith.constant 0 : index
    %156 = vector.load %arg12[%155, %c0_77, %c0_78] : memref<4x8x512xf32, #tpu.memory_space<vmem>>, vector<1x8x512xf32>
    %157 = vector.shape_cast %156 : vector<1x8x512xf32> to vector<8x512xf32>
    %158 = arith.truncf %106 : vector<8x128xf32> to vector<8x128xbf16>
    %cst_79 = arith.constant dense<0.000000e+00> : vector<8x512xf32>
    %159 = tpu.matmul %158, %22, %cst_79 {dimension_numbers = #tpu.dot_dimension_numbers<[1], [0], [0], [1], [0, 0, 1, 1], [], []>} : vector<8x128xbf16>, vector<128x512xbf16>, vector<8x512xf32> -> vector<8x512xf32>
    %160 = arith.addf %157, %159 : vector<8x512xf32>
    %161 = vector.extract_strided_slice %160 {offsets = [0, 0], sizes = [8, 128], strides = [1, 1]} : vector<8x512xf32> to vector<8x128xf32>
    %cst_80 = arith.constant 5.000000e-01 : f32
    %162 = vector.broadcast %cst_80 : f32 to vector<8x128xf32>
    %163 = arith.mulf %162, %161 : vector<8x128xf32>
    %164 = math.tanh %163 : vector<8x128xf32>
    %cst_81 = arith.constant 1.000000e+00 : f32
    %165 = vector.broadcast %cst_81 : f32 to vector<8x128xf32>
    %166 = arith.addf %164, %165 : vector<8x128xf32>
    %cst_82 = arith.constant 5.000000e-01 : f32
    %167 = vector.broadcast %cst_82 : f32 to vector<8x128xf32>
    %168 = arith.mulf %167, %166 : vector<8x128xf32>
    %169 = vector.extract_strided_slice %160 {offsets = [0, 128], sizes = [8, 128], strides = [1, 1]} : vector<8x512xf32> to vector<8x128xf32>
    %cst_83 = arith.constant 5.000000e-01 : f32
    %170 = vector.broadcast %cst_83 : f32 to vector<8x128xf32>
    %171 = arith.mulf %170, %169 : vector<8x128xf32>
    %172 = math.tanh %171 : vector<8x128xf32>
    %cst_84 = arith.constant 1.000000e+00 : f32
    %173 = vector.broadcast %cst_84 : f32 to vector<8x128xf32>
    %174 = arith.addf %172, %173 : vector<8x128xf32>
    %cst_85 = arith.constant 5.000000e-01 : f32
    %175 = vector.broadcast %cst_85 : f32 to vector<8x128xf32>
    %176 = arith.mulf %175, %174 : vector<8x128xf32>
    %177 = vector.extract_strided_slice %160 {offsets = [0, 256], sizes = [8, 128], strides = [1, 1]} : vector<8x512xf32> to vector<8x128xf32>
    %178 = math.tanh %177 : vector<8x128xf32>
    %179 = vector.extract_strided_slice %160 {offsets = [0, 384], sizes = [8, 128], strides = [1, 1]} : vector<8x512xf32> to vector<8x128xf32>
    %cst_86 = arith.constant 5.000000e-01 : f32
    %180 = vector.broadcast %cst_86 : f32 to vector<8x128xf32>
    %181 = arith.mulf %180, %179 : vector<8x128xf32>
    %182 = math.tanh %181 : vector<8x128xf32>
    %cst_87 = arith.constant 1.000000e+00 : f32
    %183 = vector.broadcast %cst_87 : f32 to vector<8x128xf32>
    %184 = arith.addf %182, %183 : vector<8x128xf32>
    %cst_88 = arith.constant 5.000000e-01 : f32
    %185 = vector.broadcast %cst_88 : f32 to vector<8x128xf32>
    %186 = arith.mulf %185, %184 : vector<8x128xf32>
    %187 = arith.mulf %176, %104 : vector<8x128xf32>
    %188 = arith.mulf %168, %178 : vector<8x128xf32>
    %189 = arith.addf %187, %188 : vector<8x128xf32>
    %190 = math.tanh %189 : vector<8x128xf32>
    %191 = arith.mulf %186, %190 : vector<8x128xf32>
    %192 = arith.truncf %191 : vector<8x128xf32> to vector<8x128xbf16>
    %193 = arith.index_cast %154 : i32 to index
    %c0_89 = arith.constant 0 : index
    %c0_90 = arith.constant 0 : index
    %194 = vector.load %arg10[%193, %c0_89, %c0_90] : memref<4x8x128xbf16, #tpu.memory_space<vmem>>, vector<1x8x128xbf16>
    %195 = vector.shape_cast %194 : vector<1x8x128xbf16> to vector<8x128xbf16>
    %196 = vector.shape_cast %192 : vector<8x128xbf16> to vector<1x8x128xbf16>
    tpu.vector_store %arg10[%193, %c0_89, %c0_90], %196 {strides = array<i32>} : memref<4x8x128xbf16, #tpu.memory_space<vmem>>, vector<1x8x128xbf16>,
    %c2_i32 = arith.constant 2 : i32
    %197 = arith.index_cast %c2_i32 : i32 to index
    %c0_91 = arith.constant 0 : index
    %c0_92 = arith.constant 0 : index
    %198 = vector.load %arg11[%197, %c0_91, %c0_92] : memref<4x8x512xf32, #tpu.memory_space<vmem>>, vector<1x8x512xf32>
    %199 = vector.shape_cast %198 : vector<1x8x512xf32> to vector<8x512xf32>
    %200 = arith.truncf %148 : vector<8x128xf32> to vector<8x128xbf16>
    %cst_93 = arith.constant dense<0.000000e+00> : vector<8x512xf32>
    %201 = tpu.matmul %200, %21, %cst_93 {dimension_numbers = #tpu.dot_dimension_numbers<[1], [0], [0], [1], [0, 0, 1, 1], [], []>} : vector<8x128xbf16>, vector<128x512xbf16>, vector<8x512xf32> -> vector<8x512xf32>
    %202 = arith.addf %199, %201 : vector<8x512xf32>
    %203 = vector.extract_strided_slice %202 {offsets = [0, 0], sizes = [8, 128], strides = [1, 1]} : vector<8x512xf32> to vector<8x128xf32>
    %cst_94 = arith.constant 5.000000e-01 : f32
    %204 = vector.broadcast %cst_94 : f32 to vector<8x128xf32>
    %205 = arith.mulf %204, %203 : vector<8x128xf32>
    %206 = math.tanh %205 : vector<8x128xf32>
    %cst_95 = arith.constant 1.000000e+00 : f32
    %207 = vector.broadcast %cst_95 : f32 to vector<8x128xf32>
    %208 = arith.addf %206, %207 : vector<8x128xf32>
    %cst_96 = arith.constant 5.000000e-01 : f32
    %209 = vector.broadcast %cst_96 : f32 to vector<8x128xf32>
    %210 = arith.mulf %209, %208 : vector<8x128xf32>
    %211 = vector.extract_strided_slice %202 {offsets = [0, 128], sizes = [8, 128], strides = [1, 1]} : vector<8x512xf32> to vector<8x128xf32>
    %cst_97 = arith.constant 5.000000e-01 : f32
    %212 = vector.broadcast %cst_97 : f32 to vector<8x128xf32>
    %213 = arith.mulf %212, %211 : vector<8x128xf32>
    %214 = math.tanh %213 : vector<8x128xf32>
    %cst_98 = arith.constant 1.000000e+00 : f32
    %215 = vector.broadcast %cst_98 : f32 to vector<8x128xf32>
    %216 = arith.addf %214, %215 : vector<8x128xf32>
    %cst_99 = arith.constant 5.000000e-01 : f32
    %217 = vector.broadcast %cst_99 : f32 to vector<8x128xf32>
    %218 = arith.mulf %217, %216 : vector<8x128xf32>
    %219 = vector.extract_strided_slice %202 {offsets = [0, 256], sizes = [8, 128], strides = [1, 1]} : vector<8x512xf32> to vector<8x128xf32>
    %220 = math.tanh %219 : vector<8x128xf32>
    %221 = vector.extract_strided_slice %202 {offsets = [0, 384], sizes = [8, 128], strides = [1, 1]} : vector<8x512xf32> to vector<8x128xf32>
    %cst_100 = arith.constant 5.000000e-01 : f32
    %222 = vector.broadcast %cst_100 : f32 to vector<8x128xf32>
    %223 = arith.mulf %222, %221 : vector<8x128xf32>
    %224 = math.tanh %223 : vector<8x128xf32>
    %cst_101 = arith.constant 1.000000e+00 : f32
    %225 = vector.broadcast %cst_101 : f32 to vector<8x128xf32>
    %226 = arith.addf %224, %225 : vector<8x128xf32>
    %cst_102 = arith.constant 5.000000e-01 : f32
    %227 = vector.broadcast %cst_102 : f32 to vector<8x128xf32>
    %228 = arith.mulf %227, %226 : vector<8x128xf32>
    %229 = arith.mulf %218, %146 : vector<8x128xf32>
    %230 = arith.mulf %210, %220 : vector<8x128xf32>
    %231 = arith.addf %229, %230 : vector<8x128xf32>
    %232 = math.tanh %231 : vector<8x128xf32>
    %233 = arith.mulf %228, %232 : vector<8x128xf32>
    %234 = arith.truncf %233 : vector<8x128xf32> to vector<8x128xbf16>
    %235 = arith.index_cast %c2_i32 : i32 to index
    %c0_103 = arith.constant 0 : index
    %c0_104 = arith.constant 0 : index
    %236 = vector.load %arg9[%235, %c0_103, %c0_104] : memref<4x8x128xbf16, #tpu.memory_space<vmem>>, vector<1x8x128xbf16>
    %237 = vector.shape_cast %236 : vector<1x8x128xbf16> to vector<8x128xbf16>
    %238 = vector.shape_cast %234 : vector<8x128xbf16> to vector<1x8x128xbf16>
    tpu.vector_store %arg9[%235, %c0_103, %c0_104], %238 {strides = array<i32>} : memref<4x8x128xbf16, #tpu.memory_space<vmem>>, vector<1x8x128xbf16>,
    %c3_i32_105 = arith.constant 3 : i32
    %239 = arith.subi %c3_i32_105, %c2_i32 : i32
    %240 = arith.index_cast %239 : i32 to index
    %c0_106 = arith.constant 0 : index
    %c0_107 = arith.constant 0 : index
    %241 = vector.load %arg12[%240, %c0_106, %c0_107] : memref<4x8x512xf32, #tpu.memory_space<vmem>>, vector<1x8x512xf32>
    %242 = vector.shape_cast %241 : vector<1x8x512xf32> to vector<8x512xf32>
    %243 = arith.truncf %191 : vector<8x128xf32> to vector<8x128xbf16>
    %cst_108 = arith.constant dense<0.000000e+00> : vector<8x512xf32>
    %244 = tpu.matmul %243, %22, %cst_108 {dimension_numbers = #tpu.dot_dimension_numbers<[1], [0], [0], [1], [0, 0, 1, 1], [], []>} : vector<8x128xbf16>, vector<128x512xbf16>, vector<8x512xf32> -> vector<8x512xf32>
    %245 = arith.addf %242, %244 : vector<8x512xf32>
    %246 = vector.extract_strided_slice %245 {offsets = [0, 0], sizes = [8, 128], strides = [1, 1]} : vector<8x512xf32> to vector<8x128xf32>
    %cst_109 = arith.constant 5.000000e-01 : f32
    %247 = vector.broadcast %cst_109 : f32 to vector<8x128xf32>
    %248 = arith.mulf %247, %246 : vector<8x128xf32>
    %249 = math.tanh %248 : vector<8x128xf32>
    %cst_110 = arith.constant 1.000000e+00 : f32
    %250 = vector.broadcast %cst_110 : f32 to vector<8x128xf32>
    %251 = arith.addf %249, %250 : vector<8x128xf32>
    %cst_111 = arith.constant 5.000000e-01 : f32
    %252 = vector.broadcast %cst_111 : f32 to vector<8x128xf32>
    %253 = arith.mulf %252, %251 : vector<8x128xf32>
    %254 = vector.extract_strided_slice %245 {offsets = [0, 128], sizes = [8, 128], strides = [1, 1]} : vector<8x512xf32> to vector<8x128xf32>
    %cst_112 = arith.constant 5.000000e-01 : f32
    %255 = vector.broadcast %cst_112 : f32 to vector<8x128xf32>
    %256 = arith.mulf %255, %254 : vector<8x128xf32>
    %257 = math.tanh %256 : vector<8x128xf32>
    %cst_113 = arith.constant 1.000000e+00 : f32
    %258 = vector.broadcast %cst_113 : f32 to vector<8x128xf32>
    %259 = arith.addf %257, %258 : vector<8x128xf32>
    %cst_114 = arith.constant 5.000000e-01 : f32
    %260 = vector.broadcast %cst_114 : f32 to vector<8x128xf32>
    %261 = arith.mulf %260, %259 : vector<8x128xf32>
    %262 = vector.extract_strided_slice %245 {offsets = [0, 256], sizes = [8, 128], strides = [1, 1]} : vector<8x512xf32> to vector<8x128xf32>
    %263 = math.tanh %262 : vector<8x128xf32>
    %264 = vector.extract_strided_slice %245 {offsets = [0, 384], sizes = [8, 128], strides = [1, 1]} : vector<8x512xf32> to vector<8x128xf32>
    %cst_115 = arith.constant 5.000000e-01 : f32
    %265 = vector.broadcast %cst_115 : f32 to vector<8x128xf32>
    %266 = arith.mulf %265, %264 : vector<8x128xf32>
    %267 = math.tanh %266 : vector<8x128xf32>
    %cst_116 = arith.constant 1.000000e+00 : f32
    %268 = vector.broadcast %cst_116 : f32 to vector<8x128xf32>
    %269 = arith.addf %267, %268 : vector<8x128xf32>
    %cst_117 = arith.constant 5.000000e-01 : f32
    %270 = vector.broadcast %cst_117 : f32 to vector<8x128xf32>
    %271 = arith.mulf %270, %269 : vector<8x128xf32>
    %272 = arith.mulf %261, %189 : vector<8x128xf32>
    %273 = arith.mulf %253, %263 : vector<8x128xf32>
    %274 = arith.addf %272, %273 : vector<8x128xf32>
    %275 = math.tanh %274 : vector<8x128xf32>
    %276 = arith.mulf %271, %275 : vector<8x128xf32>
    %277 = arith.truncf %276 : vector<8x128xf32> to vector<8x128xbf16>
    %278 = arith.index_cast %239 : i32 to index
    %c0_118 = arith.constant 0 : index
    %c0_119 = arith.constant 0 : index
    %279 = vector.load %arg10[%278, %c0_118, %c0_119] : memref<4x8x128xbf16, #tpu.memory_space<vmem>>, vector<1x8x128xbf16>
    %280 = vector.shape_cast %279 : vector<1x8x128xbf16> to vector<8x128xbf16>
    %281 = vector.shape_cast %277 : vector<8x128xbf16> to vector<1x8x128xbf16>
    tpu.vector_store %arg10[%278, %c0_118, %c0_119], %281 {strides = array<i32>} : memref<4x8x128xbf16, #tpu.memory_space<vmem>>, vector<1x8x128xbf16>,
    %c3_i32_120 = arith.constant 3 : i32
    %282 = arith.index_cast %c3_i32_120 : i32 to index
    %c0_121 = arith.constant 0 : index
    %c0_122 = arith.constant 0 : index
    %283 = vector.load %arg11[%282, %c0_121, %c0_122] : memref<4x8x512xf32, #tpu.memory_space<vmem>>, vector<1x8x512xf32>
    %284 = vector.shape_cast %283 : vector<1x8x512xf32> to vector<8x512xf32>
    %285 = arith.truncf %233 : vector<8x128xf32> to vector<8x128xbf16>
    %cst_123 = arith.constant dense<0.000000e+00> : vector<8x512xf32>
    %286 = tpu.matmul %285, %21, %cst_123 {dimension_numbers = #tpu.dot_dimension_numbers<[1], [0], [0], [1], [0, 0, 1, 1], [], []>} : vector<8x128xbf16>, vector<128x512xbf16>, vector<8x512xf32> -> vector<8x512xf32>
    %287 = arith.addf %284, %286 : vector<8x512xf32>
    %288 = vector.extract_strided_slice %287 {offsets = [0, 0], sizes = [8, 128], strides = [1, 1]} : vector<8x512xf32> to vector<8x128xf32>
    %cst_124 = arith.constant 5.000000e-01 : f32
    %289 = vector.broadcast %cst_124 : f32 to vector<8x128xf32>
    %290 = arith.mulf %289, %288 : vector<8x128xf32>
    %291 = math.tanh %290 : vector<8x128xf32>
    %cst_125 = arith.constant 1.000000e+00 : f32
    %292 = vector.broadcast %cst_125 : f32 to vector<8x128xf32>
    %293 = arith.addf %291, %292 : vector<8x128xf32>
    %cst_126 = arith.constant 5.000000e-01 : f32
    %294 = vector.broadcast %cst_126 : f32 to vector<8x128xf32>
    %295 = arith.mulf %294, %293 : vector<8x128xf32>
    %296 = vector.extract_strided_slice %287 {offsets = [0, 128], sizes = [8, 128], strides = [1, 1]} : vector<8x512xf32> to vector<8x128xf32>
    %cst_127 = arith.constant 5.000000e-01 : f32
    %297 = vector.broadcast %cst_127 : f32 to vector<8x128xf32>
    %298 = arith.mulf %297, %296 : vector<8x128xf32>
    %299 = math.tanh %298 : vector<8x128xf32>
    %cst_128 = arith.constant 1.000000e+00 : f32
    %300 = vector.broadcast %cst_128 : f32 to vector<8x128xf32>
    %301 = arith.addf %299, %300 : vector<8x128xf32>
    %cst_129 = arith.constant 5.000000e-01 : f32
    %302 = vector.broadcast %cst_129 : f32 to vector<8x128xf32>
    %303 = arith.mulf %302, %301 : vector<8x128xf32>
    %304 = vector.extract_strided_slice %287 {offsets = [0, 256], sizes = [8, 128], strides = [1, 1]} : vector<8x512xf32> to vector<8x128xf32>
    %305 = math.tanh %304 : vector<8x128xf32>
    %306 = vector.extract_strided_slice %287 {offsets = [0, 384], sizes = [8, 128], strides = [1, 1]} : vector<8x512xf32> to vector<8x128xf32>
    %cst_130 = arith.constant 5.000000e-01 : f32
    %307 = vector.broadcast %cst_130 : f32 to vector<8x128xf32>
    %308 = arith.mulf %307, %306 : vector<8x128xf32>
    %309 = math.tanh %308 : vector<8x128xf32>
    %cst_131 = arith.constant 1.000000e+00 : f32
    %310 = vector.broadcast %cst_131 : f32 to vector<8x128xf32>
    %311 = arith.addf %309, %310 : vector<8x128xf32>
    %cst_132 = arith.constant 5.000000e-01 : f32
    %312 = vector.broadcast %cst_132 : f32 to vector<8x128xf32>
    %313 = arith.mulf %312, %311 : vector<8x128xf32>
    %314 = arith.mulf %303, %231 : vector<8x128xf32>
    %315 = arith.mulf %295, %305 : vector<8x128xf32>
    %316 = arith.addf %314, %315 : vector<8x128xf32>
    %317 = math.tanh %316 : vector<8x128xf32>
    %318 = arith.mulf %313, %317 : vector<8x128xf32>
    %319 = arith.truncf %318 : vector<8x128xf32> to vector<8x128xbf16>
    %320 = arith.index_cast %c3_i32_120 : i32 to index
    %c0_133 = arith.constant 0 : index
    %c0_134 = arith.constant 0 : index
    %321 = vector.load %arg9[%320, %c0_133, %c0_134] : memref<4x8x128xbf16, #tpu.memory_space<vmem>>, vector<1x8x128xbf16>
    %322 = vector.shape_cast %321 : vector<1x8x128xbf16> to vector<8x128xbf16>
    %323 = vector.shape_cast %319 : vector<8x128xbf16> to vector<1x8x128xbf16>
    tpu.vector_store %arg9[%320, %c0_133, %c0_134], %323 {strides = array<i32>} : memref<4x8x128xbf16, #tpu.memory_space<vmem>>, vector<1x8x128xbf16>,
    %c3_i32_135 = arith.constant 3 : i32
    %324 = arith.subi %c3_i32_135, %c3_i32_120 : i32
    %325 = arith.index_cast %324 : i32 to index
    %c0_136 = arith.constant 0 : index
    %c0_137 = arith.constant 0 : index
    %326 = vector.load %arg12[%325, %c0_136, %c0_137] : memref<4x8x512xf32, #tpu.memory_space<vmem>>, vector<1x8x512xf32>
    %327 = vector.shape_cast %326 : vector<1x8x512xf32> to vector<8x512xf32>
    %328 = arith.truncf %276 : vector<8x128xf32> to vector<8x128xbf16>
    %cst_138 = arith.constant dense<0.000000e+00> : vector<8x512xf32>
    %329 = tpu.matmul %328, %22, %cst_138 {dimension_numbers = #tpu.dot_dimension_numbers<[1], [0], [0], [1], [0, 0, 1, 1], [], []>} : vector<8x128xbf16>, vector<128x512xbf16>, vector<8x512xf32> -> vector<8x512xf32>
    %330 = arith.addf %327, %329 : vector<8x512xf32>
    %331 = vector.extract_strided_slice %330 {offsets = [0, 0], sizes = [8, 128], strides = [1, 1]} : vector<8x512xf32> to vector<8x128xf32>
    %cst_139 = arith.constant 5.000000e-01 : f32
    %332 = vector.broadcast %cst_139 : f32 to vector<8x128xf32>
    %333 = arith.mulf %332, %331 : vector<8x128xf32>
    %334 = math.tanh %333 : vector<8x128xf32>
    %cst_140 = arith.constant 1.000000e+00 : f32
    %335 = vector.broadcast %cst_140 : f32 to vector<8x128xf32>
    %336 = arith.addf %334, %335 : vector<8x128xf32>
    %cst_141 = arith.constant 5.000000e-01 : f32
    %337 = vector.broadcast %cst_141 : f32 to vector<8x128xf32>
    %338 = arith.mulf %337, %336 : vector<8x128xf32>
    %339 = vector.extract_strided_slice %330 {offsets = [0, 128], sizes = [8, 128], strides = [1, 1]} : vector<8x512xf32> to vector<8x128xf32>
    %cst_142 = arith.constant 5.000000e-01 : f32
    %340 = vector.broadcast %cst_142 : f32 to vector<8x128xf32>
    %341 = arith.mulf %340, %339 : vector<8x128xf32>
    %342 = math.tanh %341 : vector<8x128xf32>
    %cst_143 = arith.constant 1.000000e+00 : f32
    %343 = vector.broadcast %cst_143 : f32 to vector<8x128xf32>
    %344 = arith.addf %342, %343 : vector<8x128xf32>
    %cst_144 = arith.constant 5.000000e-01 : f32
    %345 = vector.broadcast %cst_144 : f32 to vector<8x128xf32>
    %346 = arith.mulf %345, %344 : vector<8x128xf32>
    %347 = vector.extract_strided_slice %330 {offsets = [0, 256], sizes = [8, 128], strides = [1, 1]} : vector<8x512xf32> to vector<8x128xf32>
    %348 = math.tanh %347 : vector<8x128xf32>
    %349 = vector.extract_strided_slice %330 {offsets = [0, 384], sizes = [8, 128], strides = [1, 1]} : vector<8x512xf32> to vector<8x128xf32>
    %cst_145 = arith.constant 5.000000e-01 : f32
    %350 = vector.broadcast %cst_145 : f32 to vector<8x128xf32>
    %351 = arith.mulf %350, %349 : vector<8x128xf32>
    %352 = math.tanh %351 : vector<8x128xf32>
    %cst_146 = arith.constant 1.000000e+00 : f32
    %353 = vector.broadcast %cst_146 : f32 to vector<8x128xf32>
    %354 = arith.addf %352, %353 : vector<8x128xf32>
    %cst_147 = arith.constant 5.000000e-01 : f32
    %355 = vector.broadcast %cst_147 : f32 to vector<8x128xf32>
    %356 = arith.mulf %355, %354 : vector<8x128xf32>
    %357 = arith.mulf %346, %274 : vector<8x128xf32>
    %358 = arith.mulf %338, %348 : vector<8x128xf32>
    %359 = arith.addf %357, %358 : vector<8x128xf32>
    %360 = math.tanh %359 : vector<8x128xf32>
    %361 = arith.mulf %356, %360 : vector<8x128xf32>
    %362 = arith.truncf %361 : vector<8x128xf32> to vector<8x128xbf16>
    %363 = arith.index_cast %324 : i32 to index
    %c0_148 = arith.constant 0 : index
    %c0_149 = arith.constant 0 : index
    %364 = vector.load %arg10[%363, %c0_148, %c0_149] : memref<4x8x128xbf16, #tpu.memory_space<vmem>>, vector<1x8x128xbf16>
    %365 = vector.shape_cast %364 : vector<1x8x128xbf16> to vector<8x128xbf16>
    %366 = vector.shape_cast %362 : vector<8x128xbf16> to vector<1x8x128xbf16>
    tpu.vector_store %arg10[%363, %c0_148, %c0_149], %366 {strides = array<i32>} : memref<4x8x128xbf16, #tpu.memory_space<vmem>>, vector<1x8x128xbf16>,
    %c4_i32 = arith.constant 4 : i32
    %c0_150 = arith.constant 0 : index
    %c0_151 = arith.constant 0 : index
    %367 = vector.load %arg13[%c0_150, %c0_151] : memref<8x128xf32, #tpu.memory_space<vmem>>, vector<8x128xf32>
    tpu.vector_store %arg13[%c0_150, %c0_151], %318 {strides = array<i32>} : memref<8x128xf32, #tpu.memory_space<vmem>>, vector<8x128xf32>,
    %c0_152 = arith.constant 0 : index
    %c0_153 = arith.constant 0 : index
    %368 = vector.load %arg14[%c0_152, %c0_153] : memref<8x128xf32, #tpu.memory_space<vmem>>, vector<8x128xf32>
    tpu.vector_store %arg14[%c0_152, %c0_153], %316 {strides = array<i32>} : memref<8x128xf32, #tpu.memory_space<vmem>>, vector<8x128xf32>,
    %c0_154 = arith.constant 0 : index
    %c0_155 = arith.constant 0 : index
    %369 = vector.load %arg15[%c0_154, %c0_155] : memref<8x128xf32, #tpu.memory_space<vmem>>, vector<8x128xf32>
    tpu.vector_store %arg15[%c0_154, %c0_155], %361 {strides = array<i32>} : memref<8x128xf32, #tpu.memory_space<vmem>>, vector<8x128xf32>,
    %c0_156 = arith.constant 0 : index
    %c0_157 = arith.constant 0 : index
    %370 = vector.load %arg16[%c0_156, %c0_157] : memref<8x128xf32, #tpu.memory_space<vmem>>, vector<8x128xf32>
    tpu.vector_store %arg16[%c0_156, %c0_157], %359 {strides = array<i32>} : memref<8x128xf32, #tpu.memory_space<vmem>>, vector<8x128xf32>,
    return
  }
  func.func @transform_0(%arg0: i32) -> (i32, i32, i32) {
    %c0_i32 = arith.constant 0 : i32
    %c0_i32_0 = arith.constant 0 : i32
    %c0_i32_1 = arith.constant 0 : i32
    return %arg0, %c0_i32, %c0_i32_0 : i32, i32, i32
  }
  func.func @transform_1(%arg0: i32) -> (i32, i32, i32) {
    %c1_i32 = arith.constant 1 : i32
    %0 = arith.subi %c1_i32, %arg0 : i32
    %c0_i32 = arith.constant 0 : i32
    %c0_i32_0 = arith.constant 0 : i32
    %c0_i32_1 = arith.constant 0 : i32
    return %0, %c0_i32, %c0_i32_0 : i32, i32, i32
  }
  func.func @transform_2(%arg0: i32) -> (i32, i32) {
    %c0_i32 = arith.constant 0 : i32
    %c0_i32_0 = arith.constant 0 : i32
    %c0_i32_1 = arith.constant 0 : i32
    return %c0_i32, %c0_i32_0 : i32, i32
  }
  func.func @transform_3(%arg0: i32) -> (i32, i32) {
    %c0_i32 = arith.constant 0 : i32
    %c0_i32_0 = arith.constant 0 : i32
    %c0_i32_1 = arith.constant 0 : i32
    return %c0_i32, %c0_i32_0 : i32, i32
  }
  func.func @transform_4(%arg0: i32) -> (i32, i32) {
    %c0_i32 = arith.constant 0 : i32
    %c0_i32_0 = arith.constant 0 : i32
    %c0_i32_1 = arith.constant 0 : i32
    return %c0_i32, %c0_i32_0 : i32, i32
  }
  func.func @transform_5(%arg0: i32) -> (i32, i32) {
    %c0_i32 = arith.constant 0 : i32
    %c0_i32_0 = arith.constant 0 : i32
    %c0_i32_1 = arith.constant 0 : i32
    return %c0_i32, %c0_i32_0 : i32, i32
  }
  func.func @transform_6(%arg0: i32) -> (i32, i32) {
    %c0_i32 = arith.constant 0 : i32
    %c0_i32_0 = arith.constant 0 : i32
    %c0_i32_1 = arith.constant 0 : i32
    return %c0_i32, %c0_i32_0 : i32, i32
  }
  func.func @transform_7(%arg0: i32) -> (i32, i32) {
    %c0_i32 = arith.constant 0 : i32
    %c0_i32_0 = arith.constant 0 : i32
    %c0_i32_1 = arith.constant 0 : i32
    return %c0_i32, %c0_i32_0 : i32, i32
  }
  func.func @transform_8(%arg0: i32) -> (i32, i32, i32) {
    %c0_i32 = arith.constant 0 : i32
    %c0_i32_0 = arith.constant 0 : i32
    %c0_i32_1 = arith.constant 0 : i32
    return %arg0, %c0_i32, %c0_i32_0 : i32, i32, i32
  }
  func.func @transform_9(%arg0: i32) -> (i32, i32, i32) {
    %c1_i32 = arith.constant 1 : i32
    %0 = arith.subi %c1_i32, %arg0 : i32
    %c0_i32 = arith.constant 0 : i32
    %c0_i32_0 = arith.constant 0 : i32
    %c0_i32_1 = arith.constant 0 : i32
    return %0, %c0_i32, %c0_i32_0 : i32, i32, i32
  }
}

</mosaic_0001>

<llo_original>
// kernel: lstm_head_forward.2
$region0: #{lstm_head_forward.2}
  #allocation0 [shape = 'u32[]', space=smem, size = 0x4, offset = 0x4, fixed_abs, tag = 'smem constant byte address 0x4 - core index']
  #allocation1 [shape = 'u32[72,128]{1,0:T(1,128)}', space=vmem, size = 0x9000, scoped, tag = 'internal scratch']
  #allocation2 [shape = 'f32[4,8,512]{2,1,0:T(8,128)}', space=vmem, size = 0x10000, scoped, tag = 'scratch operand']
  #allocation3 [shape = 'f32[4,8,512]{2,1,0:T(8,128)}', space=vmem, size = 0x10000, scoped, tag = 'scratch operand']
  #allocation4 [shape = 'f32[8,128]{1,0:T(8,128)}', space=vmem, size = 0x1000, scoped, tag = 'scratch operand']
  #allocation5 [shape = 'f32[8,128]{1,0:T(8,128)}', space=vmem, size = 0x1000, scoped, tag = 'scratch operand']
  #allocation6 [shape = 'f32[8,128]{1,0:T(8,128)}', space=vmem, size = 0x1000, scoped, tag = 'scratch operand']
  #allocation7 [shape = 'f32[8,128]{1,0:T(8,128)}', space=vmem, size = 0x1000, scoped, tag = 'scratch operand']
  %s0 = inlined_call_operand.vmem [shape: bf16[8,8,32], index: 0, kind: input, shape index: {}, may-alias: {0,1}]
  %s1 = inlined_call_operand.vmem [shape: bf16[8,8,32], index: 1, kind: input, shape index: {}, may-alias: {0,1}]
  %s2 = inlined_call_operand.vmem [shape: bf16[32,512], index: 2, kind: input, shape index: {}]
  %s3 = inlined_call_operand.hbm [shape: bf16[32,512], index: 3, kind: input, shape index: {}]
  %s4 = inlined_call_operand.hbm [shape: bf16[128,512], index: 4, kind: input, shape index: {}]
  %s5 = inlined_call_operand.hbm [shape: bf16[128,512], index: 5, kind: input, shape index: {}]
  %s6 = inlined_call_operand.vmem [shape: f32[1,512], index: 6, kind: input, shape index: {}]
  %s7 = inlined_call_operand.hbm [shape: f32[1,512], index: 7, kind: input, shape index: {}]
  %s8 = inlined_call_operand.vmem [shape: bf16[8,8,128], index: 8, kind: output, shape index: {0}]
  %s9 = inlined_call_operand.vmem [shape: bf16[8,8,128], index: 9, kind: output, shape index: {1}]
  %10 = xla_tuple %s8, %s9
  %s11 = sld [smem:[#allocation0]]
  $region93: #{lstm_head_forward.2} parent=0
    _
  %s13 = ssub.s32 1, %s11
  %s14 = scalar_select 0, %s13, %s11
  $region1: #{lstm_head_forward.2} parent=0
    #allocation8 [shape = 'u8[32768]{0}', space=vmem, size = 0x8000, scoped, tag = 'input window, operand 3, single buffered']
    #allocation9 [shape = 's32[2]{0}', space=sflag, size = 0x8, scoped, tag = 'scoped memory for lstm_head_forward.2']
    #allocation10 [shape = 'u8[131072]{0}', space=vmem, size = 0x20000, scoped, tag = 'input window, operand 4, single buffered']
    #allocation11 [shape = 's32[1]{0}', space=sflag, size = 0x4, scoped, tag = 'scoped memory for lstm_head_forward.2']
    #allocation12 [shape = 'u8[131072]{0}', space=vmem, size = 0x20000, scoped, tag = 'input window, operand 5, single buffered']
    #allocation13 [shape = 'u8[2048]{0}', space=vmem, size = 0x800, scoped, tag = 'input window, operand 7, single buffered']
    #allocation14 [shape = 's32[1]{0}', space=sflag, size = 0x4, scoped, tag = 'scoped memory for lstm_head_forward.2']
    %15 = vsyncpa [#allocation9], 0
    %16 = vsyncpa [#allocation11], 0
    %17 = vsyncpa [#allocation14], 0
    loop: start=0, step=1, limit=4
    $region2: #{lstm_head_forward.2} parent=1 // loop_pre_header
      _
    $region3: #{lstm_head_forward.2} parent=1 // loop_header
      %s19 = sphi 0, %s23
      %p20 = scmp.ge.s32.totalorder %s19, 4
      %s29 = sphi 0, %s31
      %s32 = sphi 0, %s29
      %s33 = sphi 0, %s32
      %s49 = sphi 0, %s33
      %s57 = sphi 0, %s59
      %s60 = sphi 0, %s57
      %s61 = sphi 0, %s60
      %s77 = sphi 0, %s61
      %s81 = sphi 0, %s81
      %s83 = sphi 0, %s81
      %s84 = sphi 0, %s83
      %s98 = sphi 0, %s84
      %s102 = sphi 0, %s102
      %s104 = sphi 0, %s102
      %s105 = sphi 0, %s104
      %s119 = sphi 0, %s105
      %s123 = sphi 0, %s123
      %s125 = sphi 0, %s123
      %s126 = sphi 0, %s125
      %s140 = sphi 0, %s126
      %s144 = sphi 0, %s144
      %s146 = sphi 0, %s144
      %s147 = sphi 0, %s146
      %s161 = sphi 0, %s147
      %s165 = sphi 0, %s165
      %s167 = sphi 0, %s165
      %s168 = sphi 0, %s167
      %s182 = sphi 0, %s168
      %s186 = sphi 0, %s186
      %s188 = sphi 0, %s186
      %s189 = sphi 0, %s188
      %s203 = sphi 0, %s189
      %s209 = sphi 0, %s211
      %s212 = sphi 0, %s209
      %s213 = sphi 0, %s212
      %s229 = sphi 0, %s213
      %s237 = sphi 0, %s239
      %s240 = sphi 0, %s237
      %s241 = sphi 0, %s240
      %s257 = sphi 0, %s241
    $region4: #{lstm_head_forward.2} parent=1 // loop_header_branch
      %22 = sbr.rel (%p20) target = $region8
    $region5: #{lstm_head_forward.2} parent=1 // loop_body
      %s24 = ssub.s32 %s19, 1
      %s25 = ssub.s32 %s19, 2
      %s26 = sadd.s32 %s19, 1
      %s27 = ssub.s32 %s19, %s26
      %p28 = scmp.eq.s32.totalorder %s27, 0
      %s30 = sadd.s32 %s29, 1
      %s31 = scalar_select %p28, %s29, %s30
      %p34 = pneg %p28
      %p35 = scmp.eq.s32.totalorder %s19, 1
      %p36 = por %p34, %p35
      %p37 = scmp.ne.s32.totalorder %s29, %s32
      %p38 = scmp.eq.s32.totalorder %s19, 0
      %p39 = por %p37, %p38
      %p40 = scmp.ne.s32.totalorder %s29, %s32
      %p41 = scmp.eq.s32.totalorder %s24, 1
      %p42 = por %p40, %p41
      %p43 = scmp.ne.s32.totalorder %s32, %s33
      %p44 = scmp.eq.s32.totalorder %s24, 0
      %p45 = por %p43, %p44
      %p46 = scmp.ne.s32.totalorder %s32, %s33
      %p47 = scmp.eq.s32.totalorder %s25, 1
      %p48 = por %p46, %p47
      %p50 = scmp.ne.s32.totalorder %s33, %s49
      %p51 = scmp.eq.s32.totalorder %s25, 0
      %p52 = por %p50, %p51
      %s53 = ssub.s32 1, %s19
      %s54 = ssub.s32 1, %s26
      %s55 = ssub.s32 %s53, %s54
      %p56 = scmp.eq.s32.totalorder %s55, 0
      %s58 = sadd.s32 %s57, 1
      %s59 = scalar_select %p56, %s57, %s58
      %p62 = pneg %p56
      %p63 = scmp.eq.s32.totalorder %s19, 1
      %p64 = por %p62, %p63
      %p65 = scmp.ne.s32.totalorder %s57, %s60
      %p66 = scmp.eq.s32.totalorder %s19, 0
      %p67 = por %p65, %p66
      %p68 = scmp.ne.s32.totalorder %s57, %s60
      %p69 = scmp.eq.s32.totalorder %s24, 1
      %p70 = por %p68, %p69
      %p71 = scmp.ne.s32.totalorder %s60, %s61
      %p72 = scmp.eq.s32.totalorder %s24, 0
      %p73 = por %p71, %p72
      %p74 = scmp.ne.s32.totalorder %s60, %s61
      %p75 = scmp.eq.s32.totalorder %s25, 1
      %p76 = por %p74, %p75
      %p78 = scmp.ne.s32.totalorder %s61, %s77
      %p79 = scmp.eq.s32.totalorder %s25, 0
      %p80 = por %p78, %p79
      %s82 = sadd.s32 %s81, 1
      %p85 = scmp.eq.s32.totalorder %s19, 1
      %p86 = scmp.ne.s32.totalorder %s81, %s83
      %p87 = scmp.eq.s32.totalorder %s19, 0
      %p88 = por %p86, %p87
      %p89 = scmp.ne.s32.totalorder %s81, %s83
      %p90 = scmp.eq.s32.totalorder %s24, 1
      %p91 = por %p89, %p90
      %p92 = scmp.ne.s32.totalorder %s83, %s84
      %p93 = scmp.eq.s32.totalorder %s24, 0
      %p94 = por %p92, %p93
      %p95 = scmp.ne.s32.totalorder %s83, %s84
      %p96 = scmp.eq.s32.totalorder %s25, 1
      %p97 = por %p95, %p96
      %p99 = scmp.ne.s32.totalorder %s84, %s98
      %p100 = scmp.eq.s32.totalorder %s25, 0
      %p101 = por %p99, %p100
      %s103 = sadd.s32 %s102, 1
      %p106 = scmp.eq.s32.totalorder %s19, 1
      %p107 = scmp.ne.s32.totalorder %s102, %s104
      %p108 = scmp.eq.s32.totalorder %s19, 0
      %p109 = por %p107, %p108
      %p110 = scmp.ne.s32.totalorder %s102, %s104
      %p111 = scmp.eq.s32.totalorder %s24, 1
      %p112 = por %p110, %p111
      %p113 = scmp.ne.s32.totalorder %s104, %s105
      %p114 = scmp.eq.s32.totalorder %s24, 0
      %p115 = por %p113, %p114
      %p116 = scmp.ne.s32.totalorder %s104, %s105
      %p117 = scmp.eq.s32.totalorder %s25, 1
      %p118 = por %p116, %p117
      %p120 = scmp.ne.s32.totalorder %s105, %s119
      %p121 = scmp.eq.s32.totalorder %s25, 0
      %p122 = por %p120, %p121
      %s124 = sadd.s32 %s123, 1
      %p127 = scmp.eq.s32.totalorder %s19, 1
      %p128 = scmp.ne.s32.totalorder %s123, %s125
      %p129 = scmp.eq.s32.totalorder %s19, 0
      %p130 = por %p128, %p129
      %p131 = scmp.ne.s32.totalorder %s123, %s125
      %p132 = scmp.eq.s32.totalorder %s24, 1
      %p133 = por %p131, %p132
      %p134 = scmp.ne.s32.totalorder %s125, %s126
      %p135 = scmp.eq.s32.totalorder %s24, 0
      %p136 = por %p134, %p135
      %p137 = scmp.ne.s32.totalorder %s125, %s126
      %p138 = scmp.eq.s32.totalorder %s25, 1
      %p139 = por %p137, %p138
      %p141 = scmp.ne.s32.totalorder %s126, %s140
      %p142 = scmp.eq.s32.totalorder %s25, 0
      %p143 = por %p141, %p142
      %s145 = sadd.s32 %s144, 1
      %p148 = scmp.eq.s32.totalorder %s19, 1
      %p149 = scmp.ne.s32.totalorder %s144, %s146
      %p150 = scmp.eq.s32.totalorder %s19, 0
      %p151 = por %p149, %p150
      %p152 = scmp.ne.s32.totalorder %s144, %s146
      %p153 = scmp.eq.s32.totalorder %s24, 1
      %p154 = por %p152, %p153
      %p155 = scmp.ne.s32.totalorder %s146, %s147
      %p156 = scmp.eq.s32.totalorder %s24, 0
      %p157 = por %p155, %p156
      %p158 = scmp.ne.s32.totalorder %s146, %s147
      %p159 = scmp.eq.s32.totalorder %s25, 1
      %p160 = por %p158, %p159
      %p162 = scmp.ne.s32.totalorder %s147, %s161
      %p163 = scmp.eq.s32.totalorder %s25, 0
      %p164 = por %p162, %p163
      %s166 = sadd.s32 %s165, 1
      %p169 = scmp.eq.s32.totalorder %s19, 1
      %p170 = scmp.ne.s32.totalorder %s165, %s167
      %p171 = scmp.eq.s32.totalorder %s19, 0
      %p172 = por %p170, %p171
      %p173 = scmp.ne.s32.totalorder %s165, %s167
      %p174 = scmp.eq.s32.totalorder %s24, 1
      %p175 = por %p173, %p174
      %p176 = scmp.ne.s32.totalorder %s167, %s168
      %p177 = scmp.eq.s32.totalorder %s24, 0
      %p178 = por %p176, %p177
      %p179 = scmp.ne.s32.totalorder %s167, %s168
      %p180 = scmp.eq.s32.totalorder %s25, 1
      %p181 = por %p179, %p180
      %p183 = scmp.ne.s32.totalorder %s168, %s182
      %p184 = scmp.eq.s32.totalorder %s25, 0
      %p185 = por %p183, %p184
      %s187 = sadd.s32 %s186, 1
      %p190 = scmp.eq.s32.totalorder %s19, 1
      %p191 = scmp.ne.s32.totalorder %s186, %s188
      %p192 = scmp.eq.s32.totalorder %s19, 0
      %p193 = por %p191, %p192
      %p194 = scmp.ne.s32.totalorder %s186, %s188
      %p195 = scmp.eq.s32.totalorder %s24, 1
      %p196 = por %p194, %p195
      %p197 = scmp.ne.s32.totalorder %s188, %s189
      %p198 = scmp.eq.s32.totalorder %s24, 0
      %p199 = por %p197, %p198
      %p200 = scmp.ne.s32.totalorder %s188, %s189
      %p201 = scmp.eq.s32.totalorder %s25, 1
      %p202 = por %p200, %p201
      %p204 = scmp.ne.s32.totalorder %s189, %s203
      %p205 = scmp.eq.s32.totalorder %s25, 0
      %p206 = por %p204, %p205
      %s207 = ssub.s32 %s19, %s26
      %p208 = scmp.eq.s32.totalorder %s207, 0
      %s210 = sadd.s32 %s209, 1
      %s211 = scalar_select %p208, %s209, %s210
      %p214 = pneg %p208
      %p215 = scmp.eq.s32.totalorder %s19, 1
      %p216 = por %p214, %p215
      %p217 = scmp.ne.s32.totalorder %s209, %s212
      %p218 = scmp.eq.s32.totalorder %s19, 0
      %p219 = por %p217, %p218
      %p220 = scmp.ne.s32.totalorder %s209, %s212
      %p221 = scmp.eq.s32.totalorder %s24, 1
      %p222 = por %p220, %p221
      %p223 = scmp.ne.s32.totalorder %s212, %s213
      %p224 = scmp.eq.s32.totalorder %s24, 0
      %p225 = por %p223, %p224
      %p226 = scmp.ne.s32.totalorder %s212, %s213
      %p227 = scmp.eq.s32.totalorder %s25, 1
      %p228 = por %p226, %p227
      %p230 = scmp.ne.s32.totalorder %s213, %s229
      %p231 = scmp.eq.s32.totalorder %s25, 0
      %p232 = por %p230, %p231
      %s233 = ssub.s32 1, %s19
      %s234 = ssub.s32 1, %s26
      %s235 = ssub.s32 %s233, %s234
      %p236 = scmp.eq.s32.totalorder %s235, 0
      %s238 = sadd.s32 %s237, 1
      %s239 = scalar_select %p236, %s237, %s238
      %p242 = pneg %p236
      %p243 = scmp.eq.s32.totalorder %s19, 1
      %p244 = por %p242, %p243
      %p245 = scmp.ne.s32.totalorder %s237, %s240
      %p246 = scmp.eq.s32.totalorder %s19, 0
      %p247 = por %p245, %p246
      %p248 = scmp.ne.s32.totalorder %s237, %s240
      %p249 = scmp.eq.s32.totalorder %s24, 1
      %p250 = por %p248, %p249
      %p251 = scmp.ne.s32.totalorder %s240, %s241
      %p252 = scmp.eq.s32.totalorder %s24, 0
      %p253 = por %p251, %p252
      %p254 = scmp.ne.s32.totalorder %s240, %s241
      %p255 = scmp.eq.s32.totalorder %s25, 1
      %p256 = por %p254, %p255
      %p258 = scmp.ne.s32.totalorder %s241, %s257
      %p259 = scmp.eq.s32.totalorder %s25, 0
      %p260 = por %p258, %p259
      %p261 = scmp.le.s32.totalorder 1, %s19
      %p262 = scmp.lt.s32.totalorder %s19, 3
      %p263 = pnand %p261, %p262
      %p264 = pneg %p263
      // Predicated region
      $region9: #{lstm_head_forward.2} parent=5 // pred_check
        _
      $region10: #{lstm_head_forward.2} parent=5 // pred_check_branch
        %266 = sbr.rel (%p263) target = $region12
      $region11: #{lstm_head_forward.2} parent=5 // pred_region
        %s267 = ssub.s32 %s19, 1
        // Predicated region
        $region13: #{lstm_head_forward.2} parent=11 // pred_check
          %p268 = pneg %p94
        $region14: #{lstm_head_forward.2} parent=11 // pred_check_branch
          %270 = sbr.rel (%p268) target = $region16
        $region15: #{lstm_head_forward.2} parent=11 // pred_region
          _
        $region16: #{lstm_head_forward.2} parent=11 // pred_fallthru
          _
        // Predicated region
        $region17: #{lstm_head_forward.2} parent=11 // pred_check
          %p271 = pneg %p115
        $region18: #{lstm_head_forward.2} parent=11 // pred_check_branch
          %273 = sbr.rel (%p271) target = $region20
        $region19: #{lstm_head_forward.2} parent=11 // pred_region
          %275 = vsyncadd [#allocation9], 0
          %s276 = sshll.u32 %s3, 4
          %s277 = int_to_ptr.hbm [resolvable:$true] %s276
          %s278 = sshll.u32 [#allocation8], 4
          %s279 = int_to_ptr.vmem [resolvable:$true] %s278
          %284 = dma.hbm_to_vmem [thread:$0]  %s277, 1024, %s279, [#allocation9], 256, 256, 16
        $region20: #{lstm_head_forward.2} parent=11 // pred_fallthru
          _
        // Predicated region
        $region21: #{lstm_head_forward.2} parent=11 // pred_check
          %p285 = pneg %p136
        $region22: #{lstm_head_forward.2} parent=11 // pred_check_branch
          %287 = sbr.rel (%p285) target = $region24
        $region23: #{lstm_head_forward.2} parent=11 // pred_region
          %289 = vsyncadd [#allocation11], 0
          %s290 = sshll.u32 %s4, 4
          %s291 = int_to_ptr.hbm [resolvable:$true] %s290
          %s292 = sshll.u32 [#allocation10], 4
          %s293 = int_to_ptr.vmem [resolvable:$true] %s292
          %298 = dma.hbm_to_vmem [thread:$0]  %s291, 4096, %s293, [#allocation11], 256, 256, 16
        $region24: #{lstm_head_forward.2} parent=11 // pred_fallthru
          _
        // Predicated region
        $region25: #{lstm_head_forward.2} parent=11 // pred_check
          %p299 = pneg %p157
        $region26: #{lstm_head_forward.2} parent=11 // pred_check_branch
          %301 = sbr.rel (%p299) target = $region28
        $region27: #{lstm_head_forward.2} parent=11 // pred_region
          %303 = vsyncadd [#allocation11], 0
          %s304 = sshll.u32 %s5, 4
          %s305 = int_to_ptr.hbm [resolvable:$true] %s304
          %s306 = sshll.u32 [#allocation12], 4
          %s307 = int_to_ptr.vmem [resolvable:$true] %s306
          %312 = dma.hbm_to_vmem [thread:$0]  %s305, 4096, %s307, [#allocation11], 256, 256, 16
        $region28: #{lstm_head_forward.2} parent=11 // pred_fallthru
          _
        // Predicated region
        $region29: #{lstm_head_forward.2} parent=11 // pred_check
          %p313 = pneg %p178
        $region30: #{lstm_head_forward.2} parent=11 // pred_check_branch
          %315 = sbr.rel (%p313) target = $region32
        $region31: #{lstm_head_forward.2} parent=11 // pred_region
          _
        $region32: #{lstm_head_forward.2} parent=11 // pred_fallthru
          _
        // Predicated region
        $region33: #{lstm_head_forward.2} parent=11 // pred_check
          %p316 = pneg %p199
        $region34: #{lstm_head_forward.2} parent=11 // pred_check_branch
          %318 = sbr.rel (%p316) target = $region36
        $region35: #{lstm_head_forward.2} parent=11 // pred_region
          %320 = vsyncadd [#allocation14], 0
          %s322 = sshll.u32 %s7, 4
          %s323 = int_to_ptr.hbm [resolvable:$true] %s322
          %s324 = sshll.u32 [#allocation13], 4
          %s325 = int_to_ptr.vmem [resolvable:$true] %s324
          %327 = dma.hbm_to_vmem [thread:$0]  %s323, 64, %s325, [#allocation14]
        $region36: #{lstm_head_forward.2} parent=11 // pred_fallthru
          _
      $region12: #{lstm_head_forward.2} parent=5 // pred_fallthru
        _
      %p328 = scmp.lt.s32.totalorder %s19, 2
      // Predicated region
      $region37: #{lstm_head_forward.2} parent=5 // pred_check
        %p329 = pneg %p328
      $region38: #{lstm_head_forward.2} parent=5 // pred_check_branch
        %331 = sbr.rel (%p329) target = $region40
      $region39: #{lstm_head_forward.2} parent=5 // pred_region
        // Predicated region
        $region41: #{lstm_head_forward.2} parent=39 // pred_check
          %p332 = pneg %p39
        $region42: #{lstm_head_forward.2} parent=39 // pred_check_branch
          %334 = sbr.rel (%p332) target = $region44
        $region43: #{lstm_head_forward.2} parent=39 // pred_region
          %s335 = smul.u32 4, %s19
          %p336 = scmp.lt.s32.totalorder %s335, 7
          %s337 = scalar_select %p336, %s335, 7
          %s338 = smul.addr %s337, 4
          %s339 = scalar_lea.vmem %s0, %s338
          %s340 = smul.u32 4, %s19
        $region44: #{lstm_head_forward.2} parent=39 // pred_fallthru
          _
        // Predicated region
        $region45: #{lstm_head_forward.2} parent=39 // pred_check
          %p341 = pneg %p67
        $region46: #{lstm_head_forward.2} parent=39 // pred_check_branch
          %343 = sbr.rel (%p341) target = $region48
        $region47: #{lstm_head_forward.2} parent=39 // pred_region
          %s344 = ssub.s32 1, %s19
          %s345 = smul.u32 4, %s344
          %p346 = scmp.lt.s32.totalorder %s345, 7
          %s347 = scalar_select %p346, %s345, 7
          %s348 = smul.addr %s347, 4
          %s349 = scalar_lea.vmem %s1, %s348
          %s350 = ssub.s32 1, %s19
          %s351 = smul.u32 4, %s350
        $region48: #{lstm_head_forward.2} parent=39 // pred_fallthru
          _
      $region40: #{lstm_head_forward.2} parent=5 // pred_fallthru
        _
      %p352 = scmp.le.s32.totalorder 1, %s19
      %p353 = scmp.lt.s32.totalorder %s19, 3
      %p354 = pnand %p352, %p353
      %p355 = pneg %p354
      // Predicated region
      $region49: #{lstm_head_forward.2} parent=5 // pred_check
        _
      $region50: #{lstm_head_forward.2} parent=5 // pred_check_branch
        %357 = sbr.rel (%p354) target = $region52
      $region51: #{lstm_head_forward.2} parent=5 // pred_region
        %s358 = ssub.s32 %s19, 1
        // Predicated region
        $region53: #{lstm_head_forward.2} parent=51 // pred_check
          %p359 = pneg %p115
        $region54: #{lstm_head_forward.2} parent=51 // pred_check_branch
          %361 = sbr.rel (%p359) target = $region56
        $region55: #{lstm_head_forward.2} parent=51 // pred_region
          %363 = dma.done [#allocation9], 1024
        $region56: #{lstm_head_forward.2} parent=51 // pred_fallthru
          _
        // Predicated region
        $region57: #{lstm_head_forward.2} parent=51 // pred_check
          %p364 = pneg %p136
        $region58: #{lstm_head_forward.2} parent=51 // pred_check_branch
          %366 = sbr.rel (%p364) target = $region60
        $region59: #{lstm_head_forward.2} parent=51 // pred_region
          %368 = dma.done [#allocation11], 4096
        $region60: #{lstm_head_forward.2} parent=51 // pred_fallthru
          _
        // Predicated region
        $region61: #{lstm_head_forward.2} parent=51 // pred_check
          %p369 = pneg %p157
        $region62: #{lstm_head_forward.2} parent=51 // pred_check_branch
          %371 = sbr.rel (%p369) target = $region64
        $region63: #{lstm_head_forward.2} parent=51 // pred_region
          %373 = dma.done [#allocation11], 4096
        $region64: #{lstm_head_forward.2} parent=51 // pred_fallthru
          _
        // Predicated region
        $region65: #{lstm_head_forward.2} parent=51 // pred_check
          %p374 = pneg %p199
        $region66: #{lstm_head_forward.2} parent=51 // pred_check_branch
          %376 = sbr.rel (%p374) target = $region68
        $region67: #{lstm_head_forward.2} parent=51 // pred_region
          %378 = dma.done [#allocation14], 64
        $region68: #{lstm_head_forward.2} parent=51 // pred_fallthru
          _
        %s379 = smul.u32 4, %s24
        %p380 = scmp.lt.s32.totalorder %s379, 7
        %s381 = scalar_select %p380, %s379, 7
        %s382 = smul.addr %s381, 4
        %s383 = scalar_lea.vmem %s0, %s382
        %p384 = pneg %p45
        %p385 = pneg %p42
        %s386 = ssub.s32 1, %s24
        %s387 = smul.u32 4, %s386
        %p388 = scmp.lt.s32.totalorder %s387, 7
        %s389 = scalar_select %p388, %s387, 7
        %s390 = smul.addr %s389, 4
        %s391 = scalar_lea.vmem %s1, %s390
        %p392 = pneg %p73
        %p393 = pneg %p70
        %p394 = pneg %p94
        %p395 = pneg %p91
        %p396 = pneg %p115
        %p397 = pneg %p112
        %p398 = pneg %p136
        %p399 = pneg %p133
        %p400 = pneg %p157
        %p401 = pneg %p154
        %p402 = pneg %p178
        %p403 = pneg %p175
        %p404 = pneg %p199
        %p405 = pneg %p196
        %p406 = pneg %p225
        %p407 = pneg %p222
        %s408 = smul.u32 4, %s24
        %p409 = scmp.lt.s32.totalorder %s408, 7
        %s410 = scalar_select %p409, %s408, 7
        %s411 = smul.addr %s410, 4
        %s412 = scalar_lea.vmem %s8, %s411
        %p413 = pneg %p253
        %p414 = pneg %p250
        %s415 = ssub.s32 1, %s24
        %s416 = smul.u32 4, %s415
        %p417 = scmp.lt.s32.totalorder %s416, 7
        %s418 = scalar_select %p417, %s416, 7
        %s419 = smul.addr %s418, 4
        %s420 = scalar_lea.vmem %s9, %s419
        %s421 = smul.u32 4, %s24
        %p422 = scmp.lt.s32.totalorder %s421, 7
        %s423 = scalar_select %p422, %s421, 7
        %s424 = smul.addr %s423, 4
        %s425 = scalar_lea.vmem %s0, %s424
        %s426 = smul.u32 4, %s24
        %s427 = ssub.s32 1, %s24
        %s428 = smul.u32 4, %s427
        %p429 = scmp.lt.s32.totalorder %s428, 7
        %s430 = scalar_select %p429, %s428, 7
        %s431 = smul.addr %s430, 4
        %s432 = scalar_lea.vmem %s1, %s431
        %s433 = ssub.s32 1, %s24
        %s434 = smul.u32 4, %s433
        %s435 = smul.u32 4, %s24
        %p436 = scmp.lt.s32.totalorder %s435, 7
        %s437 = scalar_select %p436, %s435, 7
        %s438 = smul.addr %s437, 4
        %s439 = scalar_lea.vmem %s8, %s438
        %s440 = smul.u32 4, %s24
        %s441 = ssub.s32 1, %s24
        %s442 = smul.u32 4, %s441
        %p443 = scmp.lt.s32.totalorder %s442, 7
        %s444 = scalar_select %p443, %s442, 7
        %s445 = smul.addr %s444, 4
        %s446 = scalar_lea.vmem %s9, %s445
        %s447 = ssub.s32 1, %s24
        %s448 = smul.u32 4, %s447
        %p450 = scmp.eq.s32.totalorder %s24, 0
        // Predicated region
        $region69: #{lstm_head_forward.2} parent=51 // pred_check
          %p451 = pneg %p450
        $region70: #{lstm_head_forward.2} parent=51 // pred_check_branch
          %453 = sbr.rel (%p451) target = $region72
        $region71: #{lstm_head_forward.2} parent=51 // pred_region
          %454 = vst [vmem:[#allocation4] sm:$0xff] 0.0
          %455 = vst [vmem:[#allocation5] sm:$0xff] 0.0
          %456 = vst [vmem:[#allocation6] sm:$0xff] 0.0
          %457 = vst [vmem:[#allocation7] sm:$0xff] 0.0
        $region72: #{lstm_head_forward.2} parent=51 // pred_fallthru
          _
        %v458 = vld [vmem:[%s425] sm:$0xf]
        %v459 = vld [vmem:[%s425 + $0x4] sm:$0xf]
        %v460 = vld [vmem:[%s425 + $0x8] sm:$0xf]
        %v461 = vld [vmem:[%s425 + $0xc] sm:$0xf]
        %v462 = vld [vmem:[%s2] sm:$0xff]
        %v463 = vld [vmem:[%s2 + $0x8] sm:$0xff]
        %v464 = vld [vmem:[%s2 + $0x10] sm:$0xff]
        %v465 = vld [vmem:[%s2 + $0x18] sm:$0xff]
        %v466 = vld [vmem:[%s2 + $0x20] sm:$0xff]
        %v467 = vld [vmem:[%s2 + $0x28] sm:$0xff]
        %v468 = vld [vmem:[%s2 + $0x30] sm:$0xff]
        %v469 = vld [vmem:[%s2 + $0x38] sm:$0xff]
        %v470 = vld [vmem:[%s6] sm:$0xf]
        %v472 = vperm.slane %v470, 0
        %v473 = vperm.slane %v470, 1
        %v474 = vperm.slane %v470, 2
        %v475 = vperm.slane %v470, 3
        %v484 = vunpack.c.l.b16 %v458
        %v485 = vunpack.c.l.b16 %v459
        %v486 = vunpack.c.l.b16 %v460
        %v487 = vunpack.c.l.b16 %v461
        %v488 = vpack.c.b16 %v485, %v484
        %v489 = vpack.c.b16 %v487, %v486
        %v498 = vunpack.c.l.b16 %v462
        %v499 = vunpack.c.h.b16 %v462
        %v500 = vunpack.c.l.b16 %v463
        %v501 = vunpack.c.h.b16 %v463
        %v502 = vunpack.c.l.b16 %v464
        %v503 = vunpack.c.h.b16 %v464
        %v504 = vunpack.c.l.b16 %v465
        %v505 = vunpack.c.h.b16 %v465
        %v506 = vunpack.c.l.b16 %v466
        %v507 = vunpack.c.h.b16 %v466
        %v508 = vunpack.c.l.b16 %v467
        %v509 = vunpack.c.h.b16 %v467
        %v510 = vunpack.c.l.b16 %v468
        %v511 = vunpack.c.h.b16 %v468
        %v512 = vunpack.c.l.b16 %v469
        %v513 = vunpack.c.h.b16 %v469
        %v514 = vpack.c.b16 %v502, %v498
        %v515 = vpack.c.b16 %v503, %v499
        %v516 = vpack.c.b16 %v504, %v500
        %v517 = vpack.c.b16 %v505, %v501
        %v518 = vpack.c.b16 %v510, %v506
        %v519 = vpack.c.b16 %v511, %v507
        %v520 = vpack.c.b16 %v512, %v508
        %v521 = vpack.c.b16 %v513, %v509
        %vm530 = vcmask 261120
        %v532 = vsel %vm530, %v488, 0
        %v535 = vsel %vm530, %v489, 0
        %537 = vmatpush.bf16.msra.mxu0 0
        %538 = vmatpush.bf16.msra.mxu0 0
        %539 = vmatpush.bf16.msra.mxu0 0
        %540 = vmatpush.bf16.msra.mxu0 0
        %541 = vmatpush.bf16.msra.mxu0 0
        %542 = vmatpush.bf16.msra.mxu0 0
        %543 = vmatpush.bf16.msra.mxu0 %v518
        %544 = vmatpush.bf16.msra.mxu0 %v514
        %545 = vmatmul.bf16.gmra.mxu0 %v532
        %v546 = vpop.f32.mrf.mxu0
        %v547 = vadd.f32 %v472, %v546
        %v548 = vpop.f32.mrf.mxu0
        %v549 = vadd.f32 %v472, %v548
        %550 = vmatmul.bf16.gmra.mxu0 %v535
        %v551 = vpop.f32.mrf.mxu0
        %v552 = vadd.f32 %v472, %v551
        %v553 = vpop.f32.mrf.mxu0
        %v554 = vadd.f32 %v472, %v553
        %555 = vdwg.mxu0
        %556 = vmatpush.bf16.msra.mxu0 0
        %557 = vmatpush.bf16.msra.mxu0 0
        %558 = vmatpush.bf16.msra.mxu0 0
        %559 = vmatpush.bf16.msra.mxu0 0
        %560 = vmatpush.bf16.msra.mxu0 0
        %561 = vmatpush.bf16.msra.mxu0 0
        %562 = vmatpush.bf16.msra.mxu0 %v519
        %563 = vmatpush.bf16.msra.mxu0 %v515
        %564 = vmatmul.bf16.gmra.mxu0 %v532
        %v565 = vpop.f32.mrf.mxu0
        %v566 = vadd.f32 %v473, %v565
        %v567 = vpop.f32.mrf.mxu0
        %v568 = vadd.f32 %v473, %v567
        %569 = vmatmul.bf16.gmra.mxu0 %v535
        %v570 = vpop.f32.mrf.mxu0
        %v571 = vadd.f32 %v473, %v570
        %v572 = vpop.f32.mrf.mxu0
        %v573 = vadd.f32 %v473, %v572
        %574 = vdwg.mxu0
        %575 = vmatpush.bf16.msra.mxu0 0
        %576 = vmatpush.bf16.msra.mxu0 0
        %577 = vmatpush.bf16.msra.mxu0 0
        %578 = vmatpush.bf16.msra.mxu0 0
        %579 = vmatpush.bf16.msra.mxu0 0
        %580 = vmatpush.bf16.msra.mxu0 0
        %581 = vmatpush.bf16.msra.mxu0 %v520
        %582 = vmatpush.bf16.msra.mxu0 %v516
        %583 = vmatmul.bf16.gmra.mxu0 %v532
        %v584 = vpop.f32.mrf.mxu0
        %v585 = vadd.f32 %v474, %v584
        %v586 = vpop.f32.mrf.mxu0
        %v587 = vadd.f32 %v474, %v586
        %588 = vmatmul.bf16.gmra.mxu0 %v535
        %v589 = vpop.f32.mrf.mxu0
        %v590 = vadd.f32 %v474, %v589
        %v591 = vpop.f32.mrf.mxu0
        %v592 = vadd.f32 %v474, %v591
        %593 = vdwg.mxu0
        %594 = vmatpush.bf16.msra.mxu0 0
        %595 = vmatpush.bf16.msra.mxu0 0
        %596 = vmatpush.bf16.msra.mxu0 0
        %597 = vmatpush.bf16.msra.mxu0 0
        %598 = vmatpush.bf16.msra.mxu0 0
        %599 = vmatpush.bf16.msra.mxu0 0
        %600 = vmatpush.bf16.msra.mxu0 %v521
        %601 = vmatpush.bf16.msra.mxu0 %v517
        %602 = vmatmul.bf16.gmra.mxu0 %v532
        %v603 = vpop.f32.mrf.mxu0
        %v604 = vadd.f32 %v475, %v603
        %v605 = vpop.f32.mrf.mxu0
        %v606 = vadd.f32 %v475, %v605
        %607 = vmatmul.bf16.gmra.mxu0 %v535
        %v608 = vpop.f32.mrf.mxu0
        %v609 = vadd.f32 %v475, %v608
        %v610 = vpop.f32.mrf.mxu0
        %v611 = vadd.f32 %v475, %v610
        %612 = vdwg.mxu0
        %613 = vst [vmem:[#allocation2] sm:$0xff] %v547
        %614 = vst [vmem:[#allocation2 + $0x8] sm:$0xff] %v566
        %615 = vst [vmem:[#allocation2 + $0x10] sm:$0xff] %v585
        %616 = vst [vmem:[#allocation2 + $0x18] sm:$0xff] %v604
        %617 = vst [vmem:[#allocation2 + $0x20] sm:$0xff] %v549
        %618 = vst [vmem:[#allocation2 + $0x28] sm:$0xff] %v568
        %619 = vst [vmem:[#allocation2 + $0x30] sm:$0xff] %v587
        %620 = vst [vmem:[#allocation2 + $0x38] sm:$0xff] %v606
        %621 = vst [vmem:[#allocation2 + $0x40] sm:$0xff] %v552
        %622 = vst [vmem:[#allocation2 + $0x48] sm:$0xff] %v571
        %623 = vst [vmem:[#allocation2 + $0x50] sm:$0xff] %v590
        %624 = vst [vmem:[#allocation2 + $0x58] sm:$0xff] %v609
        %625 = vst [vmem:[#allocation2 + $0x60] sm:$0xff] %v554
        %626 = vst [vmem:[#allocation2 + $0x68] sm:$0xff] %v573
        %627 = vst [vmem:[#allocation2 + $0x70] sm:$0xff] %v592
        %628 = vst [vmem:[#allocation2 + $0x78] sm:$0xff] %v611
        %v629 = vld [vmem:[%s432] sm:$0xf]
        %v630 = vld [vmem:[%s432 + $0x4] sm:$0xf]
        %v631 = vld [vmem:[%s432 + $0x8] sm:$0xf]
        %v632 = vld [vmem:[%s432 + $0xc] sm:$0xf]
        %v633 = vld [vmem:[#allocation8] sm:$0xff]
        %v634 = vld [vmem:[#allocation8 + $0x8] sm:$0xff]
        %v635 = vld [vmem:[#allocation8 + $0x10] sm:$0xff]
        %v636 = vld [vmem:[#allocation8 + $0x18] sm:$0xff]
        %v637 = vld [vmem:[#allocation8 + $0x20] sm:$0xff]
        %v638 = vld [vmem:[#allocation8 + $0x28] sm:$0xff]
        %v639 = vld [vmem:[#allocation8 + $0x30] sm:$0xff]
        %v640 = vld [vmem:[#allocation8 + $0x38] sm:$0xff]
        %v641 = vld [vmem:[#allocation13] sm:$0xf]
        %v643 = vperm.slane %v641, 0
        %v644 = vperm.slane %v641, 1
        %v645 = vperm.slane %v641, 2
        %v646 = vperm.slane %v641, 3
        %v655 = vunpack.c.l.b16 %v629
        %v656 = vunpack.c.l.b16 %v630
        %v657 = vunpack.c.l.b16 %v631
        %v658 = vunpack.c.l.b16 %v632
        %v659 = vpack.c.b16 %v656, %v655
        %v660 = vpack.c.b16 %v658, %v657
        %v669 = vunpack.c.l.b16 %v633
        %v670 = vunpack.c.h.b16 %v633
        %v671 = vunpack.c.l.b16 %v634
        %v672 = vunpack.c.h.b16 %v634
        %v673 = vunpack.c.l.b16 %v635
        %v674 = vunpack.c.h.b16 %v635
        %v675 = vunpack.c.l.b16 %v636
        %v676 = vunpack.c.h.b16 %v636
        %v677 = vunpack.c.l.b16 %v637
        %v678 = vunpack.c.h.b16 %v637
        %v679 = vunpack.c.l.b16 %v638
        %v680 = vunpack.c.h.b16 %v638
        %v681 = vunpack.c.l.b16 %v639
        %v682 = vunpack.c.h.b16 %v639
        %v683 = vunpack.c.l.b16 %v640
        %v684 = vunpack.c.h.b16 %v640
        %v685 = vpack.c.b16 %v673, %v669
        %v686 = vpack.c.b16 %v674, %v670
        %v687 = vpack.c.b16 %v675, %v671
        %v688 = vpack.c.b16 %v676, %v672
        %v689 = vpack.c.b16 %v681, %v677
        %v690 = vpack.c.b16 %v682, %v678
        %v691 = vpack.c.b16 %v683, %v679
        %v692 = vpack.c.b16 %v684, %v680
        %v702 = vsel %vm530, %v659, 0
        %v705 = vsel %vm530, %v660, 0
        %707 = vmatpush.bf16.msra.mxu0 0
        %708 = vmatpush.bf16.msra.mxu0 0
        %709 = vmatpush.bf16.msra.mxu0 0
        %710 = vmatpush.bf16.msra.mxu0 0
        %711 = vmatpush.bf16.msra.mxu0 0
        %712 = vmatpush.bf16.msra.mxu0 0
        %713 = vmatpush.bf16.msra.mxu0 %v689
        %714 = vmatpush.bf16.msra.mxu0 %v685
        %715 = vmatmul.bf16.gmra.mxu0 %v702
        %v716 = vpop.f32.mrf.mxu0
        %v717 = vadd.f32 %v643, %v716
        %v718 = vpop.f32.mrf.mxu0
        %v719 = vadd.f32 %v643, %v718
        %720 = vmatmul.bf16.gmra.mxu0 %v705
        %v721 = vpop.f32.mrf.mxu0
        %v722 = vadd.f32 %v643, %v721
        %v723 = vpop.f32.mrf.mxu0
        %v724 = vadd.f32 %v643, %v723
        %725 = vdwg.mxu0
        %726 = vmatpush.bf16.msra.mxu0 0
        %727 = vmatpush.bf16.msra.mxu0 0
        %728 = vmatpush.bf16.msra.mxu0 0
        %729 = vmatpush.bf16.msra.mxu0 0
        %730 = vmatpush.bf16.msra.mxu0 0
        %731 = vmatpush.bf16.msra.mxu0 0
        %732 = vmatpush.bf16.msra.mxu0 %v690
        %733 = vmatpush.bf16.msra.mxu0 %v686
        %734 = vmatmul.bf16.gmra.mxu0 %v702
        %v735 = vpop.f32.mrf.mxu0
        %v736 = vadd.f32 %v644, %v735
        %v737 = vpop.f32.mrf.mxu0
        %v738 = vadd.f32 %v644, %v737
        %739 = vmatmul.bf16.gmra.mxu0 %v705
        %v740 = vpop.f32.mrf.mxu0
        %v741 = vadd.f32 %v644, %v740
        %v742 = vpop.f32.mrf.mxu0
        %v743 = vadd.f32 %v644, %v742
        %744 = vdwg.mxu0
        %745 = vmatpush.bf16.msra.mxu0 0
        %746 = vmatpush.bf16.msra.mxu0 0
        %747 = vmatpush.bf16.msra.mxu0 0
        %748 = vmatpush.bf16.msra.mxu0 0
        %749 = vmatpush.bf16.msra.mxu0 0
        %750 = vmatpush.bf16.msra.mxu0 0
        %751 = vmatpush.bf16.msra.mxu0 %v691
        %752 = vmatpush.bf16.msra.mxu0 %v687
        %753 = vmatmul.bf16.gmra.mxu0 %v702
        %v754 = vpop.f32.mrf.mxu0
        %v755 = vadd.f32 %v645, %v754
        %v756 = vpop.f32.mrf.mxu0
        %v757 = vadd.f32 %v645, %v756
        %758 = vmatmul.bf16.gmra.mxu0 %v705
        %v759 = vpop.f32.mrf.mxu0
        %v760 = vadd.f32 %v645, %v759
        %v761 = vpop.f32.mrf.mxu0
        %v762 = vadd.f32 %v645, %v761
        %763 = vdwg.mxu0
        %764 = vmatpush.bf16.msra.mxu0 0
        %765 = vmatpush.bf16.msra.mxu0 0
        %766 = vmatpush.bf16.msra.mxu0 0
        %767 = vmatpush.bf16.msra.mxu0 0
        %768 = vmatpush.bf16.msra.mxu0 0
        %769 = vmatpush.bf16.msra.mxu0 0
        %770 = vmatpush.bf16.msra.mxu0 %v692
        %771 = vmatpush.bf16.msra.mxu0 %v688
        %772 = vmatmul.bf16.gmra.mxu0 %v702
        %v773 = vpop.f32.mrf.mxu0
        %v774 = vadd.f32 %v646, %v773
        %v775 = vpop.f32.mrf.mxu0
        %v776 = vadd.f32 %v646, %v775
        %777 = vmatmul.bf16.gmra.mxu0 %v705
        %v778 = vpop.f32.mrf.mxu0
        %v779 = vadd.f32 %v646, %v778
        %v780 = vpop.f32.mrf.mxu0
        %v781 = vadd.f32 %v646, %v780
        %782 = vdwg.mxu0
        %783 = vst [vmem:[#allocation3] sm:$0xff] %v717
        %784 = vst [vmem:[#allocation3 + $0x8] sm:$0xff] %v736
        %785 = vst [vmem:[#allocation3 + $0x10] sm:$0xff] %v755
        %786 = vst [vmem:[#allocation3 + $0x18] sm:$0xff] %v774
        %787 = vst [vmem:[#allocation3 + $0x20] sm:$0xff] %v719
        %788 = vst [vmem:[#allocation3 + $0x28] sm:$0xff] %v738
        %789 = vst [vmem:[#allocation3 + $0x30] sm:$0xff] %v757
        %790 = vst [vmem:[#allocation3 + $0x38] sm:$0xff] %v776
        %791 = vst [vmem:[#allocation3 + $0x40] sm:$0xff] %v722
        %792 = vst [vmem:[#allocation3 + $0x48] sm:$0xff] %v741
        %793 = vst [vmem:[#allocation3 + $0x50] sm:$0xff] %v760
        %794 = vst [vmem:[#allocation3 + $0x58] sm:$0xff] %v779
        %795 = vst [vmem:[#allocation3 + $0x60] sm:$0xff] %v724
        %796 = vst [vmem:[#allocation3 + $0x68] sm:$0xff] %v743
        %797 = vst [vmem:[#allocation3 + $0x70] sm:$0xff] %v762
        %798 = vst [vmem:[#allocation3 + $0x78] sm:$0xff] %v781
        %v799 = vld [vmem:[#allocation10] sm:$0xff]
        %v800 = vld [vmem:[#allocation10 + $0x8] sm:$0xff]
        %v801 = vld [vmem:[#allocation10 + $0x10] sm:$0xff]
        %v802 = vld [vmem:[#allocation10 + $0x18] sm:$0xff]
        %v803 = vld [vmem:[#allocation10 + $0x20] sm:$0xff]
        %v804 = vld [vmem:[#allocation10 + $0x28] sm:$0xff]
        %v805 = vld [vmem:[#allocation10 + $0x30] sm:$0xff]
        %v806 = vld [vmem:[#allocation10 + $0x38] sm:$0xff]
        %v807 = vld [vmem:[#allocation10 + $0x40] sm:$0xff]
        %v808 = vld [vmem:[#allocation10 + $0x48] sm:$0xff]
        %v809 = vld [vmem:[#allocation10 + $0x50] sm:$0xff]
        %v810 = vld [vmem:[#allocation10 + $0x58] sm:$0xff]
        %v811 = vld [vmem:[#allocation10 + $0x60] sm:$0xff]
        %v812 = vld [vmem:[#allocation10 + $0x68] sm:$0xff]
        %v813 = vld [vmem:[#allocation10 + $0x70] sm:$0xff]
        %v814 = vld [vmem:[#allocation10 + $0x78] sm:$0xff]
        %v815 = vld [vmem:[#allocation10 + $0x80] sm:$0xff]
        %v816 = vld [vmem:[#allocation10 + $0x88] sm:$0xff]
        %v817 = vld [vmem:[#allocation10 + $0x90] sm:$0xff]
        %v818 = vld [vmem:[#allocation10 + $0x98] sm:$0xff]
        %v819 = vld [vmem:[#allocation10 + $0xa0] sm:$0xff]
        %v820 = vld [vmem:[#allocation10 + $0xa8] sm:$0xff]
        %v821 = vld [vmem:[#allocation10 + $0xb0] sm:$0xff]
        %v822 = vld [vmem:[#allocation10 + $0xb8] sm:$0xff]
        %v823 = vld [vmem:[#allocation10 + $0xc0] sm:$0xff]
        %v824 = vld [vmem:[#allocation10 + $0xc8] sm:$0xff]
        %v825 = vld [vmem:[#allocation10 + $0xd0] sm:$0xff]
        %v826 = vld [vmem:[#allocation10 + $0xd8] sm:$0xff]
        %v827 = vld [vmem:[#allocation10 + $0xe0] sm:$0xff]
        %v828 = vld [vmem:[#allocation10 + $0xe8] sm:$0xff]
        %v829 = vld [vmem:[#allocation10 + $0xf0] sm:$0xff]
        %v830 = vld [vmem:[#allocation10 + $0xf8] sm:$0xff]
        %v831 = vld [vmem:[#allocation12] sm:$0xff]
        %v832 = vld [vmem:[#allocation12 + $0x8] sm:$0xff]
        %v833 = vld [vmem:[#allocation12 + $0x10] sm:$0xff]
        %v834 = vld [vmem:[#allocation12 + $0x18] sm:$0xff]
        %v835 = vld [vmem:[#allocation12 + $0x20] sm:$0xff]
        %v836 = vld [vmem:[#allocation12 + $0x28] sm:$0xff]
        %v837 = vld [vmem:[#allocation12 + $0x30] sm:$0xff]
        %v838 = vld [vmem:[#allocation12 + $0x38] sm:$0xff]
        %v839 = vld [vmem:[#allocation12 + $0x40] sm:$0xff]
        %v840 = vld [vmem:[#allocation12 + $0x48] sm:$0xff]
        %v841 = vld [vmem:[#allocation12 + $0x50] sm:$0xff]
        %v842 = vld [vmem:[#allocation12 + $0x58] sm:$0xff]
        %v843 = vld [vmem:[#allocation12 + $0x60] sm:$0xff]
        %v844 = vld [vmem:[#allocation12 + $0x68] sm:$0xff]
        %v845 = vld [vmem:[#allocation12 + $0x70] sm:$0xff]
        %v846 = vld [vmem:[#allocation12 + $0x78] sm:$0xff]
        %v847 = vld [vmem:[#allocation12 + $0x80] sm:$0xff]
        %v848 = vld [vmem:[#allocation12 + $0x88] sm:$0xff]
        %v849 = vld [vmem:[#allocation12 + $0x90] sm:$0xff]
        %v850 = vld [vmem:[#allocation12 + $0x98] sm:$0xff]
        %v851 = vld [vmem:[#allocation12 + $0xa0] sm:$0xff]
        %v852 = vld [vmem:[#allocation12 + $0xa8] sm:$0xff]
        %v853 = vld [vmem:[#allocation12 + $0xb0] sm:$0xff]
        %v854 = vld [vmem:[#allocation12 + $0xb8] sm:$0xff]
        %v855 = vld [vmem:[#allocation12 + $0xc0] sm:$0xff]
        %v856 = vld [vmem:[#allocation12 + $0xc8] sm:$0xff]
        %v857 = vld [vmem:[#allocation12 + $0xd0] sm:$0xff]
        %v858 = vld [vmem:[#allocation12 + $0xd8] sm:$0xff]
        %v859 = vld [vmem:[#allocation12 + $0xe0] sm:$0xff]
        %v860 = vld [vmem:[#allocation12 + $0xe8] sm:$0xff]
        %v861 = vld [vmem:[#allocation12 + $0xf0] sm:$0xff]
        %v862 = vld [vmem:[#allocation12 + $0xf8] sm:$0xff]
        %v863 = vld [vmem:[#allocation4] sm:$0xff]
        %v864 = vld [vmem:[#allocation5] sm:$0xff]
        %v865 = vld [vmem:[#allocation6] sm:$0xff]
        %v866 = vld [vmem:[#allocation7] sm:$0xff]
        %v867 = vld [vmem:[#allocation2] sm:$0xff]
        %v868 = vld [vmem:[#allocation2 + $0x8] sm:$0xff]
        %v869 = vld [vmem:[#allocation2 + $0x10] sm:$0xff]
        %v870 = vld [vmem:[#allocation2 + $0x18] sm:$0xff]
        %v871 = vpack.c.bf16 %v863, %v863
        %v904 = vunpack.c.l.b16 %v799
        %v905 = vunpack.c.h.b16 %v799
        %v906 = vunpack.c.l.b16 %v800
        %v907 = vunpack.c.h.b16 %v800
        %v908 = vunpack.c.l.b16 %v801
        %v909 = vunpack.c.h.b16 %v801
        %v910 = vunpack.c.l.b16 %v802
        %v911 = vunpack.c.h.b16 %v802
        %v912 = vunpack.c.l.b16 %v803
        %v913 = vunpack.c.h.b16 %v803
        %v914 = vunpack.c.l.b16 %v804
        %v915 = vunpack.c.h.b16 %v804
        %v916 = vunpack.c.l.b16 %v805
        %v917 = vunpack.c.h.b16 %v805
        %v918 = vunpack.c.l.b16 %v806
        %v919 = vunpack.c.h.b16 %v806
        %v920 = vunpack.c.l.b16 %v807
        %v921 = vunpack.c.h.b16 %v807
        %v922 = vunpack.c.l.b16 %v808
        %v923 = vunpack.c.h.b16 %v808
        %v924 = vunpack.c.l.b16 %v809
        %v925 = vunpack.c.h.b16 %v809
        %v926 = vunpack.c.l.b16 %v810
        %v927 = vunpack.c.h.b16 %v810
        %v928 = vunpack.c.l.b16 %v811
        %v929 = vunpack.c.h.b16 %v811
        %v930 = vunpack.c.l.b16 %v812
        %v931 = vunpack.c.h.b16 %v812
        %v932 = vunpack.c.l.b16 %v813
        %v933 = vunpack.c.h.b16 %v813
        %v934 = vunpack.c.l.b16 %v814
        %v935 = vunpack.c.h.b16 %v814
        %v936 = vunpack.c.l.b16 %v815
        %v937 = vunpack.c.h.b16 %v815
        %v938 = vunpack.c.l.b16 %v816
        %v939 = vunpack.c.h.b16 %v816
        %v940 = vunpack.c.l.b16 %v817
        %v941 = vunpack.c.h.b16 %v817
        %v942 = vunpack.c.l.b16 %v818
        %v943 = vunpack.c.h.b16 %v818
        %v944 = vunpack.c.l.b16 %v819
        %v945 = vunpack.c.h.b16 %v819
        %v946 = vunpack.c.l.b16 %v820
        %v947 = vunpack.c.h.b16 %v820
        %v948 = vunpack.c.l.b16 %v821
        %v949 = vunpack.c.h.b16 %v821
        %v950 = vunpack.c.l.b16 %v822
        %v951 = vunpack.c.h.b16 %v822
        %v952 = vunpack.c.l.b16 %v823
        %v953 = vunpack.c.h.b16 %v823
        %v954 = vunpack.c.l.b16 %v824
        %v955 = vunpack.c.h.b16 %v824
        %v956 = vunpack.c.l.b16 %v825
        %v957 = vunpack.c.h.b16 %v825
        %v958 = vunpack.c.l.b16 %v826
        %v959 = vunpack.c.h.b16 %v826
        %v960 = vunpack.c.l.b16 %v827
        %v961 = vunpack.c.h.b16 %v827
        %v962 = vunpack.c.l.b16 %v828
        %v963 = vunpack.c.h.b16 %v828
        %v964 = vunpack.c.l.b16 %v829
        %v965 = vunpack.c.h.b16 %v829
        %v966 = vunpack.c.l.b16 %v830
        %v967 = vunpack.c.h.b16 %v830
        %v968 = vpack.c.b16 %v908, %v904
        %v969 = vpack.c.b16 %v909, %v905
        %v970 = vpack.c.b16 %v910, %v906
        %v971 = vpack.c.b16 %v911, %v907
        %v972 = vpack.c.b16 %v916, %v912
        %v973 = vpack.c.b16 %v917, %v913
        %v974 = vpack.c.b16 %v918, %v914
        %v975 = vpack.c.b16 %v919, %v915
        %v976 = vpack.c.b16 %v924, %v920
        %v977 = vpack.c.b16 %v925, %v921
        %v978 = vpack.c.b16 %v926, %v922
        %v979 = vpack.c.b16 %v927, %v923
        %v980 = vpack.c.b16 %v932, %v928
        %v981 = vpack.c.b16 %v933, %v929
        %v982 = vpack.c.b16 %v934, %v930
        %v983 = vpack.c.b16 %v935, %v931
        %v984 = vpack.c.b16 %v940, %v936
        %v985 = vpack.c.b16 %v941, %v937
        %v986 = vpack.c.b16 %v942, %v938
        %v987 = vpack.c.b16 %v943, %v939
        %v988 = vpack.c.b16 %v948, %v944
        %v989 = vpack.c.b16 %v949, %v945
        %v990 = vpack.c.b16 %v950, %v946
        %v991 = vpack.c.b16 %v951, %v947
        %v992 = vpack.c.b16 %v956, %v952
        %v993 = vpack.c.b16 %v957, %v953
        %v994 = vpack.c.b16 %v958, %v954
        %v995 = vpack.c.b16 %v959, %v955
        %v996 = vpack.c.b16 %v964, %v960
        %v997 = vpack.c.b16 %v965, %v961
        %v998 = vpack.c.b16 %v966, %v962
        %v999 = vpack.c.b16 %v967, %v963
        %1032 = vmatpush.bf16.msra.mxu0 %v996
        %1033 = vmatpush.bf16.msra.mxu0 %v992
        %1034 = vmatpush.bf16.msra.mxu0 %v988
        %1035 = vmatpush.bf16.msra.mxu0 %v984
        %1036 = vmatpush.bf16.msra.mxu0 %v980
        %1037 = vmatpush.bf16.msra.mxu0 %v976
        %1038 = vmatpush.bf16.msra.mxu0 %v972
        %1039 = vmatpush.bf16.msra.mxu0 %v968
        %1040 = vmatmul.bf16.gmra.mxu0 %v871
        %v1041 = vpop.f32.mrf.mxu0
        %v1042 = vadd.f32 0.0, %v1041
        %v1043 = vpop.f32.mrf.mxu0
        %1044 = vdwg.mxu0
        %1045 = vmatpush.bf16.msra.mxu0 %v997
        %1046 = vmatpush.bf16.msra.mxu0 %v993
        %1047 = vmatpush.bf16.msra.mxu0 %v989
        %1048 = vmatpush.bf16.msra.mxu0 %v985
        %1049 = vmatpush.bf16.msra.mxu0 %v981
        %1050 = vmatpush.bf16.msra.mxu0 %v977
        %1051 = vmatpush.bf16.msra.mxu0 %v973
        %1052 = vmatpush.bf16.msra.mxu0 %v969
        %1053 = vmatmul.bf16.gmra.mxu0 %v871
        %v1054 = vpop.f32.mrf.mxu0
        %v1055 = vadd.f32 0.0, %v1054
        %v1056 = vpop.f32.mrf.mxu0
        %1057 = vdwg.mxu0
        %1058 = vmatpush.bf16.msra.mxu0 %v998
        %1059 = vmatpush.bf16.msra.mxu0 %v994
        %1060 = vmatpush.bf16.msra.mxu0 %v990
        %1061 = vmatpush.bf16.msra.mxu0 %v986
        %1062 = vmatpush.bf16.msra.mxu0 %v982
        %1063 = vmatpush.bf16.msra.mxu0 %v978
        %1064 = vmatpush.bf16.msra.mxu0 %v974
        %1065 = vmatpush.bf16.msra.mxu0 %v970
        %1066 = vmatmul.bf16.gmra.mxu0 %v871
        %v1067 = vpop.f32.mrf.mxu0
        %v1068 = vadd.f32 0.0, %v1067
        %v1069 = vpop.f32.mrf.mxu0
        %1070 = vdwg.mxu0
        %1071 = vmatpush.bf16.msra.mxu0 %v999
        %1072 = vmatpush.bf16.msra.mxu0 %v995
        %1073 = vmatpush.bf16.msra.mxu0 %v991
        %1074 = vmatpush.bf16.msra.mxu0 %v987
        %1075 = vmatpush.bf16.msra.mxu0 %v983
        %1076 = vmatpush.bf16.msra.mxu0 %v979
        %1077 = vmatpush.bf16.msra.mxu0 %v975
        %1078 = vmatpush.bf16.msra.mxu0 %v971
        %1079 = vmatmul.bf16.gmra.mxu0 %v871
        %v1080 = vpop.f32.mrf.mxu0
        %v1081 = vadd.f32 0.0, %v1080
        %v1082 = vpop.f32.mrf.mxu0
        %1083 = vdwg.mxu0
        %v1084 = vadd.f32 %v867, %v1042
        %v1085 = vadd.f32 %v868, %v1055
        %v1086 = vadd.f32 %v869, %v1068
        %v1087 = vadd.f32 %v870, %v1081
        %v1088 = vmul.f32 %v1084, 0.5
        %v1089 = vtanh.pop %v1088
        %v1090 = vadd.f32 %v1089, 1.0
        %v1091 = vmul.f32 %v1090, 0.5
        %v1092 = vmul.f32 %v1085, 0.5
        %v1093 = vtanh.pop %v1092
        %v1094 = vadd.f32 %v1093, 1.0
        %v1095 = vmul.f32 %v1094, 0.5
        %v1096 = vtanh.pop %v1086
        %v1097 = vmul.f32 %v1087, 0.5
        %v1098 = vtanh.pop %v1097
        %v1099 = vadd.f32 %v1098, 1.0
        %v1100 = vmul.f32 %v1099, 0.5
        %v1101 = vmul.f32 %v1095, %v864
        %v1102 = vmul.f32 %v1091, %v1096
        %v1103 = vadd.f32 %v1101, %v1102
        %v1104 = vtanh.pop %v1103
        %v1105 = vmul.f32 %v1100, %v1104
        %v1106 = vpack.c.bf16 %v1105, %v1105
        %1107 = vst [vmem:[%s439] sm:$0xf] %v1106
        %s1108 = scalar_lea.vmem [#allocation3], 96
        %v1109 = vld [vmem:[%s1108] sm:$0xff]
        %v1110 = vld [vmem:[%s1108 + $0x8] sm:$0xff]
        %v1111 = vld [vmem:[%s1108 + $0x10] sm:$0xff]
        %v1112 = vld [vmem:[%s1108 + $0x18] sm:$0xff]
        %v1113 = vpack.c.bf16 %v865, %v865
        %v1146 = vunpack.c.l.b16 %v831
        %v1147 = vunpack.c.h.b16 %v831
        %v1148 = vunpack.c.l.b16 %v832
        %v1149 = vunpack.c.h.b16 %v832
        %v1150 = vunpack.c.l.b16 %v833
        %v1151 = vunpack.c.h.b16 %v833
        %v1152 = vunpack.c.l.b16 %v834
        %v1153 = vunpack.c.h.b16 %v834
        %v1154 = vunpack.c.l.b16 %v835
        %v1155 = vunpack.c.h.b16 %v835
        %v1156 = vunpack.c.l.b16 %v836
        %v1157 = vunpack.c.h.b16 %v836
        %v1158 = vunpack.c.l.b16 %v837
        %v1159 = vunpack.c.h.b16 %v837
        %v1160 = vunpack.c.l.b16 %v838
        %v1161 = vunpack.c.h.b16 %v838
        %v1162 = vunpack.c.l.b16 %v839
        %v1163 = vunpack.c.h.b16 %v839
        %v1164 = vunpack.c.l.b16 %v840
        %v1165 = vunpack.c.h.b16 %v840
        %v1166 = vunpack.c.l.b16 %v841
        %v1167 = vunpack.c.h.b16 %v841
        %v1168 = vunpack.c.l.b16 %v842
        %v1169 = vunpack.c.h.b16 %v842
        %v1170 = vunpack.c.l.b16 %v843
        %v1171 = vunpack.c.h.b16 %v843
        %v1172 = vunpack.c.l.b16 %v844
        %v1173 = vunpack.c.h.b16 %v844
        %v1174 = vunpack.c.l.b16 %v845
        %v1175 = vunpack.c.h.b16 %v845
        %v1176 = vunpack.c.l.b16 %v846
        %v1177 = vunpack.c.h.b16 %v846
        %v1178 = vunpack.c.l.b16 %v847
        %v1179 = vunpack.c.h.b16 %v847
        %v1180 = vunpack.c.l.b16 %v848
        %v1181 = vunpack.c.h.b16 %v848
        %v1182 = vunpack.c.l.b16 %v849
        %v1183 = vunpack.c.h.b16 %v849
        %v1184 = vunpack.c.l.b16 %v850
        %v1185 = vunpack.c.h.b16 %v850
        %v1186 = vunpack.c.l.b16 %v851
        %v1187 = vunpack.c.h.b16 %v851
        %v1188 = vunpack.c.l.b16 %v852
        %v1189 = vunpack.c.h.b16 %v852
        %v1190 = vunpack.c.l.b16 %v853
        %v1191 = vunpack.c.h.b16 %v853
        %v1192 = vunpack.c.l.b16 %v854
        %v1193 = vunpack.c.h.b16 %v854
        %v1194 = vunpack.c.l.b16 %v855
        %v1195 = vunpack.c.h.b16 %v855
        %v1196 = vunpack.c.l.b16 %v856
        %v1197 = vunpack.c.h.b16 %v856
        %v1198 = vunpack.c.l.b16 %v857
        %v1199 = vunpack.c.h.b16 %v857
        %v1200 = vunpack.c.l.b16 %v858
        %v1201 = vunpack.c.h.b16 %v858
        %v1202 = vunpack.c.l.b16 %v859
        %v1203 = vunpack.c.h.b16 %v859
        %v1204 = vunpack.c.l.b16 %v860
        %v1205 = vunpack.c.h.b16 %v860
        %v1206 = vunpack.c.l.b16 %v861
        %v1207 = vunpack.c.h.b16 %v861
        %v1208 = vunpack.c.l.b16 %v862
        %v1209 = vunpack.c.h.b16 %v862
        %v1210 = vpack.c.b16 %v1150, %v1146
        %v1211 = vpack.c.b16 %v1151, %v1147
        %v1212 = vpack.c.b16 %v1152, %v1148
        %v1213 = vpack.c.b16 %v1153, %v1149
        %v1214 = vpack.c.b16 %v1158, %v1154
        %v1215 = vpack.c.b16 %v1159, %v1155
        %v1216 = vpack.c.b16 %v1160, %v1156
        %v1217 = vpack.c.b16 %v1161, %v1157
        %v1218 = vpack.c.b16 %v1166, %v1162
        %v1219 = vpack.c.b16 %v1167, %v1163
        %v1220 = vpack.c.b16 %v1168, %v1164
        %v1221 = vpack.c.b16 %v1169, %v1165
        %v1222 = vpack.c.b16 %v1174, %v1170
        %v1223 = vpack.c.b16 %v1175, %v1171
        %v1224 = vpack.c.b16 %v1176, %v1172
        %v1225 = vpack.c.b16 %v1177, %v1173
        %v1226 = vpack.c.b16 %v1182, %v1178
        %v1227 = vpack.c.b16 %v1183, %v1179
        %v1228 = vpack.c.b16 %v1184, %v1180
        %v1229 = vpack.c.b16 %v1185, %v1181
        %v1230 = vpack.c.b16 %v1190, %v1186
        %v1231 = vpack.c.b16 %v1191, %v1187
        %v1232 = vpack.c.b16 %v1192, %v1188
        %v1233 = vpack.c.b16 %v1193, %v1189
        %v1234 = vpack.c.b16 %v1198, %v1194
        %v1235 = vpack.c.b16 %v1199, %v1195
        %v1236 = vpack.c.b16 %v1200, %v1196
        %v1237 = vpack.c.b16 %v1201, %v1197
        %v1238 = vpack.c.b16 %v1206, %v1202
        %v1239 = vpack.c.b16 %v1207, %v1203
        %v1240 = vpack.c.b16 %v1208, %v1204
        %v1241 = vpack.c.b16 %v1209, %v1205
        %1274 = vmatpush.bf16.msra.mxu0 %v1238
        %1275 = vmatpush.bf16.msra.mxu0 %v1234
        %1276 = vmatpush.bf16.msra.mxu0 %v1230
        %1277 = vmatpush.bf16.msra.mxu0 %v1226
        %1278 = vmatpush.bf16.msra.mxu0 %v1222
        %1279 = vmatpush.bf16.msra.mxu0 %v1218
        %1280 = vmatpush.bf16.msra.mxu0 %v1214
        %1281 = vmatpush.bf16.msra.mxu0 %v1210
        %1282 = vmatmul.bf16.gmra.mxu0 %v1113
        %v1283 = vpop.f32.mrf.mxu0
        %v1284 = vadd.f32 0.0, %v1283
        %v1285 = vpop.f32.mrf.mxu0
        %1286 = vdwg.mxu0
        %1287 = vmatpush.bf16.msra.mxu0 %v1239
        %1288 = vmatpush.bf16.msra.mxu0 %v1235
        %1289 = vmatpush.bf16.msra.mxu0 %v1231
        %1290 = vmatpush.bf16.msra.mxu0 %v1227
        %1291 = vmatpush.bf16.msra.mxu0 %v1223
        %1292 = vmatpush.bf16.msra.mxu0 %v1219
        %1293 = vmatpush.bf16.msra.mxu0 %v1215
        %1294 = vmatpush.bf16.msra.mxu0 %v1211
        %1295 = vmatmul.bf16.gmra.mxu0 %v1113
        %v1296 = vpop.f32.mrf.mxu0
        %v1297 = vadd.f32 0.0, %v1296
        %v1298 = vpop.f32.mrf.mxu0
        %1299 = vdwg.mxu0
        %1300 = vmatpush.bf16.msra.mxu0 %v1240
        %1301 = vmatpush.bf16.msra.mxu0 %v1236
        %1302 = vmatpush.bf16.msra.mxu0 %v1232
        %1303 = vmatpush.bf16.msra.mxu0 %v1228
        %1304 = vmatpush.bf16.msra.mxu0 %v1224
        %1305 = vmatpush.bf16.msra.mxu0 %v1220
        %1306 = vmatpush.bf16.msra.mxu0 %v1216
        %1307 = vmatpush.bf16.msra.mxu0 %v1212
        %1308 = vmatmul.bf16.gmra.mxu0 %v1113
        %v1309 = vpop.f32.mrf.mxu0
        %v1310 = vadd.f32 0.0, %v1309
        %v1311 = vpop.f32.mrf.mxu0
        %1312 = vdwg.mxu0
        %1313 = vmatpush.bf16.msra.mxu0 %v1241
        %1314 = vmatpush.bf16.msra.mxu0 %v1237
        %1315 = vmatpush.bf16.msra.mxu0 %v1233
        %1316 = vmatpush.bf16.msra.mxu0 %v1229
        %1317 = vmatpush.bf16.msra.mxu0 %v1225
        %1318 = vmatpush.bf16.msra.mxu0 %v1221
        %1319 = vmatpush.bf16.msra.mxu0 %v1217
        %1320 = vmatpush.bf16.msra.mxu0 %v1213
        %1321 = vmatmul.bf16.gmra.mxu0 %v1113
        %v1322 = vpop.f32.mrf.mxu0
        %v1323 = vadd.f32 0.0, %v1322
        %v1324 = vpop.f32.mrf.mxu0
        %1325 = vdwg.mxu0
        %v1326 = vadd.f32 %v1109, %v1284
        %v1327 = vadd.f32 %v1110, %v1297
        %v1328 = vadd.f32 %v1111, %v1310
        %v1329 = vadd.f32 %v1112, %v1323
        %v1330 = vmul.f32 %v1326, 0.5
        %v1331 = vtanh.pop %v1330
        %v1332 = vadd.f32 %v1331, 1.0
        %v1333 = vmul.f32 %v1332, 0.5
        %v1334 = vmul.f32 %v1327, 0.5
        %v1335 = vtanh.pop %v1334
        %v1336 = vadd.f32 %v1335, 1.0
        %v1337 = vmul.f32 %v1336, 0.5
        %v1338 = vtanh.pop %v1328
        %v1339 = vmul.f32 %v1329, 0.5
        %v1340 = vtanh.pop %v1339
        %v1341 = vadd.f32 %v1340, 1.0
        %v1342 = vmul.f32 %v1341, 0.5
        %v1343 = vmul.f32 %v1337, %v866
        %v1344 = vmul.f32 %v1333, %v1338
        %v1345 = vadd.f32 %v1343, %v1344
        %v1346 = vtanh.pop %v1345
        %v1347 = vmul.f32 %v1342, %v1346
        %v1348 = vpack.c.bf16 %v1347, %v1347
        %s1349 = scalar_lea.vmem %s446, 12
        %1350 = vst [vmem:[%s1349] sm:$0xf] %v1348
        %s1351 = scalar_lea.vmem [#allocation2], 32
        %v1352 = vld [vmem:[%s1351] sm:$0xff]
        %v1353 = vld [vmem:[%s1351 + $0x8] sm:$0xff]
        %v1354 = vld [vmem:[%s1351 + $0x10] sm:$0xff]
        %v1355 = vld [vmem:[%s1351 + $0x18] sm:$0xff]
        %1356 = vmatpush.bf16.msra.mxu0 %v996
        %1357 = vmatpush.bf16.msra.mxu0 %v992
        %1358 = vmatpush.bf16.msra.mxu0 %v988
        %1359 = vmatpush.bf16.msra.mxu0 %v984
        %1360 = vmatpush.bf16.msra.mxu0 %v980
        %1361 = vmatpush.bf16.msra.mxu0 %v976
        %1362 = vmatpush.bf16.msra.mxu0 %v972
        %1363 = vmatpush.bf16.msra.mxu0 %v968
        %1364 = vmatmul.bf16.gmra.mxu0 %v1106
        %v1365 = vpop.f32.mrf.mxu0
        %v1366 = vadd.f32 0.0, %v1365
        %v1367 = vpop.f32.mrf.mxu0
        %1368 = vdwg.mxu0
        %1369 = vmatpush.bf16.msra.mxu0 %v997
        %1370 = vmatpush.bf16.msra.mxu0 %v993
        %1371 = vmatpush.bf16.msra.mxu0 %v989
        %1372 = vmatpush.bf16.msra.mxu0 %v985
        %1373 = vmatpush.bf16.msra.mxu0 %v981
        %1374 = vmatpush.bf16.msra.mxu0 %v977
        %1375 = vmatpush.bf16.msra.mxu0 %v973
        %1376 = vmatpush.bf16.msra.mxu0 %v969
        %1377 = vmatmul.bf16.gmra.mxu0 %v1106
        %v1378 = vpop.f32.mrf.mxu0
        %v1379 = vadd.f32 0.0, %v1378
        %v1380 = vpop.f32.mrf.mxu0
        %1381 = vdwg.mxu0
        %1382 = vmatpush.bf16.msra.mxu0 %v998
        %1383 = vmatpush.bf16.msra.mxu0 %v994
        %1384 = vmatpush.bf16.msra.mxu0 %v990
        %1385 = vmatpush.bf16.msra.mxu0 %v986
        %1386 = vmatpush.bf16.msra.mxu0 %v982
        %1387 = vmatpush.bf16.msra.mxu0 %v978
        %1388 = vmatpush.bf16.msra.mxu0 %v974
        %1389 = vmatpush.bf16.msra.mxu0 %v970
        %1390 = vmatmul.bf16.gmra.mxu0 %v1106
        %v1391 = vpop.f32.mrf.mxu0
        %v1392 = vadd.f32 0.0, %v1391
        %v1393 = vpop.f32.mrf.mxu0
        %1394 = vdwg.mxu0
        %1395 = vmatpush.bf16.msra.mxu0 %v999
        %1396 = vmatpush.bf16.msra.mxu0 %v995
        %1397 = vmatpush.bf16.msra.mxu0 %v991
        %1398 = vmatpush.bf16.msra.mxu0 %v987
        %1399 = vmatpush.bf16.msra.mxu0 %v983
        %1400 = vmatpush.bf16.msra.mxu0 %v979
        %1401 = vmatpush.bf16.msra.mxu0 %v975
        %1402 = vmatpush.bf16.msra.mxu0 %v971
        %1403 = vmatmul.bf16.gmra.mxu0 %v1106
        %v1404 = vpop.f32.mrf.mxu0
        %v1405 = vadd.f32 0.0, %v1404
        %v1406 = vpop.f32.mrf.mxu0
        %1407 = vdwg.mxu0
        %v1408 = vadd.f32 %v1352, %v1366
        %v1409 = vadd.f32 %v1353, %v1379
        %v1410 = vadd.f32 %v1354, %v1392
        %v1411 = vadd.f32 %v1355, %v1405
        %v1412 = vmul.f32 %v1408, 0.5
        %v1413 = vtanh.pop %v1412
        %v1414 = vadd.f32 %v1413, 1.0
        %v1415 = vmul.f32 %v1414, 0.5
        %v1416 = vmul.f32 %v1409, 0.5
        %v1417 = vtanh.pop %v1416
        %v1418 = vadd.f32 %v1417, 1.0
        %v1419 = vmul.f32 %v1418, 0.5
        %v1420 = vtanh.pop %v1410
        %v1421 = vmul.f32 %v1411, 0.5
        %v1422 = vtanh.pop %v1421
        %v1423 = vadd.f32 %v1422, 1.0
        %v1424 = vmul.f32 %v1423, 0.5
        %v1425 = vmul.f32 %v1419, %v1103
        %v1426 = vmul.f32 %v1415, %v1420
        %v1427 = vadd.f32 %v1425, %v1426
        %v1428 = vtanh.pop %v1427
        %v1429 = vmul.f32 %v1424, %v1428
        %v1430 = vpack.c.bf16 %v1429, %v1429
        %s1431 = scalar_lea.vmem %s439, 4
        %1432 = vst [vmem:[%s1431] sm:$0xf] %v1430
        %s1433 = scalar_lea.vmem [#allocation3], 64
        %v1434 = vld [vmem:[%s1433] sm:$0xff]
        %v1435 = vld [vmem:[%s1433 + $0x8] sm:$0xff]
        %v1436 = vld [vmem:[%s1433 + $0x10] sm:$0xff]
        %v1437 = vld [vmem:[%s1433 + $0x18] sm:$0xff]
        %1438 = vmatpush.bf16.msra.mxu0 %v1238
        %1439 = vmatpush.bf16.msra.mxu0 %v1234
        %1440 = vmatpush.bf16.msra.mxu0 %v1230
        %1441 = vmatpush.bf16.msra.mxu0 %v1226
        %1442 = vmatpush.bf16.msra.mxu0 %v1222
        %1443 = vmatpush.bf16.msra.mxu0 %v1218
        %1444 = vmatpush.bf16.msra.mxu0 %v1214
        %1445 = vmatpush.bf16.msra.mxu0 %v1210
        %1446 = vmatmul.bf16.gmra.mxu0 %v1348
        %v1447 = vpop.f32.mrf.mxu0
        %v1448 = vadd.f32 0.0, %v1447
        %v1449 = vpop.f32.mrf.mxu0
        %1450 = vdwg.mxu0
        %1451 = vmatpush.bf16.msra.mxu0 %v1239
        %1452 = vmatpush.bf16.msra.mxu0 %v1235
        %1453 = vmatpush.bf16.msra.mxu0 %v1231
        %1454 = vmatpush.bf16.msra.mxu0 %v1227
        %1455 = vmatpush.bf16.msra.mxu0 %v1223
        %1456 = vmatpush.bf16.msra.mxu0 %v1219
        %1457 = vmatpush.bf16.msra.mxu0 %v1215
        %1458 = vmatpush.bf16.msra.mxu0 %v1211
        %1459 = vmatmul.bf16.gmra.mxu0 %v1348
        %v1460 = vpop.f32.mrf.mxu0
        %v1461 = vadd.f32 0.0, %v1460
        %v1462 = vpop.f32.mrf.mxu0
        %1463 = vdwg.mxu0
        %1464 = vmatpush.bf16.msra.mxu0 %v1240
        %1465 = vmatpush.bf16.msra.mxu0 %v1236
        %1466 = vmatpush.bf16.msra.mxu0 %v1232
        %1467 = vmatpush.bf16.msra.mxu0 %v1228
        %1468 = vmatpush.bf16.msra.mxu0 %v1224
        %1469 = vmatpush.bf16.msra.mxu0 %v1220
        %1470 = vmatpush.bf16.msra.mxu0 %v1216
        %1471 = vmatpush.bf16.msra.mxu0 %v1212
        %1472 = vmatmul.bf16.gmra.mxu0 %v1348
        %v1473 = vpop.f32.mrf.mxu0
        %v1474 = vadd.f32 0.0, %v1473
        %v1475 = vpop.f32.mrf.mxu0
        %1476 = vdwg.mxu0
        %1477 = vmatpush.bf16.msra.mxu0 %v1241
        %1478 = vmatpush.bf16.msra.mxu0 %v1237
        %1479 = vmatpush.bf16.msra.mxu0 %v1233
        %1480 = vmatpush.bf16.msra.mxu0 %v1229
        %1481 = vmatpush.bf16.msra.mxu0 %v1225
        %1482 = vmatpush.bf16.msra.mxu0 %v1221
        %1483 = vmatpush.bf16.msra.mxu0 %v1217
        %1484 = vmatpush.bf16.msra.mxu0 %v1213
        %1485 = vmatmul.bf16.gmra.mxu0 %v1348
        %v1486 = vpop.f32.mrf.mxu0
        %v1487 = vadd.f32 0.0, %v1486
        %v1488 = vpop.f32.mrf.mxu0
        %1489 = vdwg.mxu0
        %v1490 = vadd.f32 %v1434, %v1448
        %v1491 = vadd.f32 %v1435, %v1461
        %v1492 = vadd.f32 %v1436, %v1474
        %v1493 = vadd.f32 %v1437, %v1487
        %v1494 = vmul.f32 %v1490, 0.5
        %v1495 = vtanh.pop %v1494
        %v1496 = vadd.f32 %v1495, 1.0
        %v1497 = vmul.f32 %v1496, 0.5
        %v1498 = vmul.f32 %v1491, 0.5
        %v1499 = vtanh.pop %v1498
        %v1500 = vadd.f32 %v1499, 1.0
        %v1501 = vmul.f32 %v1500, 0.5
        %v1502 = vtanh.pop %v1492
        %v1503 = vmul.f32 %v1493, 0.5
        %v1504 = vtanh.pop %v1503
        %v1505 = vadd.f32 %v1504, 1.0
        %v1506 = vmul.f32 %v1505, 0.5
        %v1507 = vmul.f32 %v1501, %v1345
        %v1508 = vmul.f32 %v1497, %v1502
        %v1509 = vadd.f32 %v1507, %v1508
        %v1510 = vtanh.pop %v1509
        %v1511 = vmul.f32 %v1506, %v1510
        %v1512 = vpack.c.bf16 %v1511, %v1511
        %s1513 = scalar_lea.vmem %s446, 8
        %1514 = vst [vmem:[%s1513] sm:$0xf] %v1512
        %s1515 = scalar_lea.vmem [#allocation2], 64
        %v1516 = vld [vmem:[%s1515] sm:$0xff]
        %v1517 = vld [vmem:[%s1515 + $0x8] sm:$0xff]
        %v1518 = vld [vmem:[%s1515 + $0x10] sm:$0xff]
        %v1519 = vld [vmem:[%s1515 + $0x18] sm:$0xff]
        %1520 = vmatpush.bf16.msra.mxu0 %v996
        %1521 = vmatpush.bf16.msra.mxu0 %v992
        %1522 = vmatpush.bf16.msra.mxu0 %v988
        %1523 = vmatpush.bf16.msra.mxu0 %v984
        %1524 = vmatpush.bf16.msra.mxu0 %v980
        %1525 = vmatpush.bf16.msra.mxu0 %v976
        %1526 = vmatpush.bf16.msra.mxu0 %v972
        %1527 = vmatpush.bf16.msra.mxu0 %v968
        %1528 = vmatmul.bf16.gmra.mxu0 %v1430
        %v1529 = vpop.f32.mrf.mxu0
        %v1530 = vadd.f32 0.0, %v1529
        %v1531 = vpop.f32.mrf.mxu0
        %1532 = vdwg.mxu0
        %1533 = vmatpush.bf16.msra.mxu0 %v997
        %1534 = vmatpush.bf16.msra.mxu0 %v993
        %1535 = vmatpush.bf16.msra.mxu0 %v989
        %1536 = vmatpush.bf16.msra.mxu0 %v985
        %1537 = vmatpush.bf16.msra.mxu0 %v981
        %1538 = vmatpush.bf16.msra.mxu0 %v977
        %1539 = vmatpush.bf16.msra.mxu0 %v973
        %1540 = vmatpush.bf16.msra.mxu0 %v969
        %1541 = vmatmul.bf16.gmra.mxu0 %v1430
        %v1542 = vpop.f32.mrf.mxu0
        %v1543 = vadd.f32 0.0, %v1542
        %v1544 = vpop.f32.mrf.mxu0
        %1545 = vdwg.mxu0
        %1546 = vmatpush.bf16.msra.mxu0 %v998
        %1547 = vmatpush.bf16.msra.mxu0 %v994
        %1548 = vmatpush.bf16.msra.mxu0 %v990
        %1549 = vmatpush.bf16.msra.mxu0 %v986
        %1550 = vmatpush.bf16.msra.mxu0 %v982
        %1551 = vmatpush.bf16.msra.mxu0 %v978
        %1552 = vmatpush.bf16.msra.mxu0 %v974
        %1553 = vmatpush.bf16.msra.mxu0 %v970
        %1554 = vmatmul.bf16.gmra.mxu0 %v1430
        %v1555 = vpop.f32.mrf.mxu0
        %v1556 = vadd.f32 0.0, %v1555
        %v1557 = vpop.f32.mrf.mxu0
        %1558 = vdwg.mxu0
        %1559 = vmatpush.bf16.msra.mxu0 %v999
        %1560 = vmatpush.bf16.msra.mxu0 %v995
        %1561 = vmatpush.bf16.msra.mxu0 %v991
        %1562 = vmatpush.bf16.msra.mxu0 %v987
        %1563 = vmatpush.bf16.msra.mxu0 %v983
        %1564 = vmatpush.bf16.msra.mxu0 %v979
        %1565 = vmatpush.bf16.msra.mxu0 %v975
        %1566 = vmatpush.bf16.msra.mxu0 %v971
        %1567 = vmatmul.bf16.gmra.mxu0 %v1430
        %v1568 = vpop.f32.mrf.mxu0
        %v1569 = vadd.f32 0.0, %v1568
        %v1570 = vpop.f32.mrf.mxu0
        %1571 = vdwg.mxu0
        %v1572 = vadd.f32 %v1516, %v1530
        %v1573 = vadd.f32 %v1517, %v1543
        %v1574 = vadd.f32 %v1518, %v1556
        %v1575 = vadd.f32 %v1519, %v1569
        %v1576 = vmul.f32 %v1572, 0.5
        %v1577 = vtanh.pop %v1576
        %v1578 = vadd.f32 %v1577, 1.0
        %v1579 = vmul.f32 %v1578, 0.5
        %v1580 = vmul.f32 %v1573, 0.5
        %v1581 = vtanh.pop %v1580
        %v1582 = vadd.f32 %v1581, 1.0
        %v1583 = vmul.f32 %v1582, 0.5
        %v1584 = vtanh.pop %v1574
        %v1585 = vmul.f32 %v1575, 0.5
        %v1586 = vtanh.pop %v1585
        %v1587 = vadd.f32 %v1586, 1.0
        %v1588 = vmul.f32 %v1587, 0.5
        %v1589 = vmul.f32 %v1583, %v1427
        %v1590 = vmul.f32 %v1579, %v1584
        %v1591 = vadd.f32 %v1589, %v1590
        %v1592 = vtanh.pop %v1591
        %v1593 = vmul.f32 %v1588, %v1592
        %v1594 = vpack.c.bf16 %v1593, %v1593
        %s1595 = scalar_lea.vmem %s439, 8
        %1596 = vst [vmem:[%s1595] sm:$0xf] %v1594
        %s1597 = scalar_lea.vmem [#allocation3], 32
        %v1598 = vld [vmem:[%s1597] sm:$0xff]
        %v1599 = vld [vmem:[%s1597 + $0x8] sm:$0xff]
        %v1600 = vld [vmem:[%s1597 + $0x10] sm:$0xff]
        %v1601 = vld [vmem:[%s1597 + $0x18] sm:$0xff]
        %1602 = vmatpush.bf16.msra.mxu0 %v1238
        %1603 = vmatpush.bf16.msra.mxu0 %v1234
        %1604 = vmatpush.bf16.msra.mxu0 %v1230
        %1605 = vmatpush.bf16.msra.mxu0 %v1226
        %1606 = vmatpush.bf16.msra.mxu0 %v1222
        %1607 = vmatpush.bf16.msra.mxu0 %v1218
        %1608 = vmatpush.bf16.msra.mxu0 %v1214
        %1609 = vmatpush.bf16.msra.mxu0 %v1210
        %1610 = vmatmul.bf16.gmra.mxu0 %v1512
        %v1611 = vpop.f32.mrf.mxu0
        %v1612 = vadd.f32 0.0, %v1611
        %v1613 = vpop.f32.mrf.mxu0
        %1614 = vdwg.mxu0
        %1615 = vmatpush.bf16.msra.mxu0 %v1239
        %1616 = vmatpush.bf16.msra.mxu0 %v1235
        %1617 = vmatpush.bf16.msra.mxu0 %v1231
        %1618 = vmatpush.bf16.msra.mxu0 %v1227
        %1619 = vmatpush.bf16.msra.mxu0 %v1223
        %1620 = vmatpush.bf16.msra.mxu0 %v1219
        %1621 = vmatpush.bf16.msra.mxu0 %v1215
        %1622 = vmatpush.bf16.msra.mxu0 %v1211
        %1623 = vmatmul.bf16.gmra.mxu0 %v1512
        %v1624 = vpop.f32.mrf.mxu0
        %v1625 = vadd.f32 0.0, %v1624
        %v1626 = vpop.f32.mrf.mxu0
        %1627 = vdwg.mxu0
        %1628 = vmatpush.bf16.msra.mxu0 %v1240
        %1629 = vmatpush.bf16.msra.mxu0 %v1236
        %1630 = vmatpush.bf16.msra.mxu0 %v1232
        %1631 = vmatpush.bf16.msra.mxu0 %v1228
        %1632 = vmatpush.bf16.msra.mxu0 %v1224
        %1633 = vmatpush.bf16.msra.mxu0 %v1220
        %1634 = vmatpush.bf16.msra.mxu0 %v1216
        %1635 = vmatpush.bf16.msra.mxu0 %v1212
        %1636 = vmatmul.bf16.gmra.mxu0 %v1512
        %v1637 = vpop.f32.mrf.mxu0
        %v1638 = vadd.f32 0.0, %v1637
        %v1639 = vpop.f32.mrf.mxu0
        %1640 = vdwg.mxu0
        %1641 = vmatpush.bf16.msra.mxu0 %v1241
        %1642 = vmatpush.bf16.msra.mxu0 %v1237
        %1643 = vmatpush.bf16.msra.mxu0 %v1233
        %1644 = vmatpush.bf16.msra.mxu0 %v1229
        %1645 = vmatpush.bf16.msra.mxu0 %v1225
        %1646 = vmatpush.bf16.msra.mxu0 %v1221
        %1647 = vmatpush.bf16.msra.mxu0 %v1217
        %1648 = vmatpush.bf16.msra.mxu0 %v1213
        %1649 = vmatmul.bf16.gmra.mxu0 %v1512
        %v1650 = vpop.f32.mrf.mxu0
        %v1651 = vadd.f32 0.0, %v1650
        %v1652 = vpop.f32.mrf.mxu0
        %1653 = vdwg.mxu0
        %v1654 = vadd.f32 %v1598, %v1612
        %v1655 = vadd.f32 %v1599, %v1625
        %v1656 = vadd.f32 %v1600, %v1638
        %v1657 = vadd.f32 %v1601, %v1651
        %v1658 = vmul.f32 %v1654, 0.5
        %v1659 = vtanh.pop %v1658
        %v1660 = vadd.f32 %v1659, 1.0
        %v1661 = vmul.f32 %v1660, 0.5
        %v1662 = vmul.f32 %v1655, 0.5
        %v1663 = vtanh.pop %v1662
        %v1664 = vadd.f32 %v1663, 1.0
        %v1665 = vmul.f32 %v1664, 0.5
        %v1666 = vtanh.pop %v1656
        %v1667 = vmul.f32 %v1657, 0.5
        %v1668 = vtanh.pop %v1667
        %v1669 = vadd.f32 %v1668, 1.0
        %v1670 = vmul.f32 %v1669, 0.5
        %v1671 = vmul.f32 %v1665, %v1509
        %v1672 = vmul.f32 %v1661, %v1666
        %v1673 = vadd.f32 %v1671, %v1672
        %v1674 = vtanh.pop %v1673
        %v1675 = vmul.f32 %v1670, %v1674
        %v1676 = vpack.c.bf16 %v1675, %v1675
        %s1677 = scalar_lea.vmem %s446, 4
        %1678 = vst [vmem:[%s1677] sm:$0xf] %v1676
        %s1679 = scalar_lea.vmem [#allocation2], 96
        %v1680 = vld [vmem:[%s1679] sm:$0xff]
        %v1681 = vld [vmem:[%s1679 + $0x8] sm:$0xff]
        %v1682 = vld [vmem:[%s1679 + $0x10] sm:$0xff]
        %v1683 = vld [vmem:[%s1679 + $0x18] sm:$0xff]
        %1684 = vmatpush.bf16.msra.mxu0 %v996
        %1685 = vmatpush.bf16.msra.mxu0 %v992
        %1686 = vmatpush.bf16.msra.mxu0 %v988
        %1687 = vmatpush.bf16.msra.mxu0 %v984
        %1688 = vmatpush.bf16.msra.mxu0 %v980
        %1689 = vmatpush.bf16.msra.mxu0 %v976
        %1690 = vmatpush.bf16.msra.mxu0 %v972
        %1691 = vmatpush.bf16.msra.mxu0 %v968
        %1692 = vmatmul.bf16.gmra.mxu0 %v1594
        %v1693 = vpop.f32.mrf.mxu0
        %v1694 = vadd.f32 0.0, %v1693
        %v1695 = vpop.f32.mrf.mxu0
        %1696 = vdwg.mxu0
        %1697 = vmatpush.bf16.msra.mxu0 %v997
        %1698 = vmatpush.bf16.msra.mxu0 %v993
        %1699 = vmatpush.bf16.msra.mxu0 %v989
        %1700 = vmatpush.bf16.msra.mxu0 %v985
        %1701 = vmatpush.bf16.msra.mxu0 %v981
        %1702 = vmatpush.bf16.msra.mxu0 %v977
        %1703 = vmatpush.bf16.msra.mxu0 %v973
        %1704 = vmatpush.bf16.msra.mxu0 %v969
        %1705 = vmatmul.bf16.gmra.mxu0 %v1594
        %v1706 = vpop.f32.mrf.mxu0
        %v1707 = vadd.f32 0.0, %v1706
        %v1708 = vpop.f32.mrf.mxu0
        %1709 = vdwg.mxu0
        %1710 = vmatpush.bf16.msra.mxu0 %v998
        %1711 = vmatpush.bf16.msra.mxu0 %v994
        %1712 = vmatpush.bf16.msra.mxu0 %v990
        %1713 = vmatpush.bf16.msra.mxu0 %v986
        %1714 = vmatpush.bf16.msra.mxu0 %v982
        %1715 = vmatpush.bf16.msra.mxu0 %v978
        %1716 = vmatpush.bf16.msra.mxu0 %v974
        %1717 = vmatpush.bf16.msra.mxu0 %v970
        %1718 = vmatmul.bf16.gmra.mxu0 %v1594
        %v1719 = vpop.f32.mrf.mxu0
        %v1720 = vadd.f32 0.0, %v1719
        %v1721 = vpop.f32.mrf.mxu0
        %1722 = vdwg.mxu0
        %1723 = vmatpush.bf16.msra.mxu0 %v999
        %1724 = vmatpush.bf16.msra.mxu0 %v995
        %1725 = vmatpush.bf16.msra.mxu0 %v991
        %1726 = vmatpush.bf16.msra.mxu0 %v987
        %1727 = vmatpush.bf16.msra.mxu0 %v983
        %1728 = vmatpush.bf16.msra.mxu0 %v979
        %1729 = vmatpush.bf16.msra.mxu0 %v975
        %1730 = vmatpush.bf16.msra.mxu0 %v971
        %1731 = vmatmul.bf16.gmra.mxu0 %v1594
        %v1732 = vpop.f32.mrf.mxu0
        %v1733 = vadd.f32 0.0, %v1732
        %v1734 = vpop.f32.mrf.mxu0
        %1735 = vdwg.mxu0
        %v1736 = vadd.f32 %v1680, %v1694
        %v1737 = vadd.f32 %v1681, %v1707
        %v1738 = vadd.f32 %v1682, %v1720
        %v1739 = vadd.f32 %v1683, %v1733
        %v1740 = vmul.f32 %v1736, 0.5
        %v1741 = vtanh.pop %v1740
        %v1742 = vadd.f32 %v1741, 1.0
        %v1743 = vmul.f32 %v1742, 0.5
        %v1744 = vmul.f32 %v1737, 0.5
        %v1745 = vtanh.pop %v1744
        %v1746 = vadd.f32 %v1745, 1.0
        %v1747 = vmul.f32 %v1746, 0.5
        %v1748 = vtanh.pop %v1738
        %v1749 = vmul.f32 %v1739, 0.5
        %v1750 = vtanh.pop %v1749
        %v1751 = vadd.f32 %v1750, 1.0
        %v1752 = vmul.f32 %v1751, 0.5
        %v1753 = vmul.f32 %v1747, %v1591
        %v1754 = vmul.f32 %v1743, %v1748
        %v1755 = vadd.f32 %v1753, %v1754
        %v1756 = vtanh.pop %v1755
        %v1757 = vmul.f32 %v1752, %v1756
        %v1758 = vpack.c.bf16 %v1757, %v1757
        %s1759 = scalar_lea.vmem %s439, 12
        %1760 = vst [vmem:[%s1759] sm:$0xf] %v1758
        %v1761 = vld [vmem:[#allocation3] sm:$0xff]
        %v1762 = vld [vmem:[#allocation3 + $0x8] sm:$0xff]
        %v1763 = vld [vmem:[#allocation3 + $0x10] sm:$0xff]
        %v1764 = vld [vmem:[#allocation3 + $0x18] sm:$0xff]
        %1765 = vmatpush.bf16.msra.mxu0 %v1238
        %1766 = vmatpush.bf16.msra.mxu0 %v1234
        %1767 = vmatpush.bf16.msra.mxu0 %v1230
        %1768 = vmatpush.bf16.msra.mxu0 %v1226
        %1769 = vmatpush.bf16.msra.mxu0 %v1222
        %1770 = vmatpush.bf16.msra.mxu0 %v1218
        %1771 = vmatpush.bf16.msra.mxu0 %v1214
        %1772 = vmatpush.bf16.msra.mxu0 %v1210
        %1773 = vmatmul.bf16.gmra.mxu0 %v1676
        %v1774 = vpop.f32.mrf.mxu0
        %v1775 = vadd.f32 0.0, %v1774
        %v1776 = vpop.f32.mrf.mxu0
        %1777 = vdwg.mxu0
        %1778 = vmatpush.bf16.msra.mxu0 %v1239
        %1779 = vmatpush.bf16.msra.mxu0 %v1235
        %1780 = vmatpush.bf16.msra.mxu0 %v1231
        %1781 = vmatpush.bf16.msra.mxu0 %v1227
        %1782 = vmatpush.bf16.msra.mxu0 %v1223
        %1783 = vmatpush.bf16.msra.mxu0 %v1219
        %1784 = vmatpush.bf16.msra.mxu0 %v1215
        %1785 = vmatpush.bf16.msra.mxu0 %v1211
        %1786 = vmatmul.bf16.gmra.mxu0 %v1676
        %v1787 = vpop.f32.mrf.mxu0
        %v1788 = vadd.f32 0.0, %v1787
        %v1789 = vpop.f32.mrf.mxu0
        %1790 = vdwg.mxu0
        %1791 = vmatpush.bf16.msra.mxu0 %v1240
        %1792 = vmatpush.bf16.msra.mxu0 %v1236
        %1793 = vmatpush.bf16.msra.mxu0 %v1232
        %1794 = vmatpush.bf16.msra.mxu0 %v1228
        %1795 = vmatpush.bf16.msra.mxu0 %v1224
        %1796 = vmatpush.bf16.msra.mxu0 %v1220
        %1797 = vmatpush.bf16.msra.mxu0 %v1216
        %1798 = vmatpush.bf16.msra.mxu0 %v1212
        %1799 = vmatmul.bf16.gmra.mxu0 %v1676
        %v1800 = vpop.f32.mrf.mxu0
        %v1801 = vadd.f32 0.0, %v1800
        %v1802 = vpop.f32.mrf.mxu0
        %1803 = vdwg.mxu0
        %1804 = vmatpush.bf16.msra.mxu0 %v1241
        %1805 = vmatpush.bf16.msra.mxu0 %v1237
        %1806 = vmatpush.bf16.msra.mxu0 %v1233
        %1807 = vmatpush.bf16.msra.mxu0 %v1229
        %1808 = vmatpush.bf16.msra.mxu0 %v1225
        %1809 = vmatpush.bf16.msra.mxu0 %v1221
        %1810 = vmatpush.bf16.msra.mxu0 %v1217
        %1811 = vmatpush.bf16.msra.mxu0 %v1213
        %1812 = vmatmul.bf16.gmra.mxu0 %v1676
        %v1813 = vpop.f32.mrf.mxu0
        %v1814 = vadd.f32 0.0, %v1813
        %v1815 = vpop.f32.mrf.mxu0
        %1816 = vdwg.mxu0
        %v1817 = vadd.f32 %v1761, %v1775
        %v1818 = vadd.f32 %v1762, %v1788
        %v1819 = vadd.f32 %v1763, %v1801
        %v1820 = vadd.f32 %v1764, %v1814
        %v1821 = vmul.f32 %v1817, 0.5
        %v1822 = vtanh.pop %v1821
        %v1823 = vadd.f32 %v1822, 1.0
        %v1824 = vmul.f32 %v1823, 0.5
        %v1825 = vmul.f32 %v1818, 0.5
        %v1826 = vtanh.pop %v1825
        %v1827 = vadd.f32 %v1826, 1.0
        %v1828 = vmul.f32 %v1827, 0.5
        %v1829 = vtanh.pop %v1819
        %v1830 = vmul.f32 %v1820, 0.5
        %v1831 = vtanh.pop %v1830
        %v1832 = vadd.f32 %v1831, 1.0
        %v1833 = vmul.f32 %v1832, 0.5
        %v1834 = vmul.f32 %v1828, %v1673
        %v1835 = vmul.f32 %v1824, %v1829
        %v1836 = vadd.f32 %v1834, %v1835
        %v1837 = vtanh.pop %v1836
        %v1838 = vmul.f32 %v1833, %v1837
        %v1839 = vpack.c.bf16 %v1838, %v1838
        %1840 = vst [vmem:[%s446] sm:$0xf] %v1839
        %1841 = vst [vmem:[#allocation4] sm:$0xff] %v1757
        %1842 = vst [vmem:[#allocation5] sm:$0xff] %v1755
        %1843 = vst [vmem:[#allocation6] sm:$0xff] %v1838
        %1844 = vst [vmem:[#allocation7] sm:$0xff] %v1836
        %s1845 = smul.u32 4, %s24
        %p1846 = scmp.lt.s32.totalorder %s1845, 7
        %s1847 = scalar_select %p1846, %s1845, 7
        %s1848 = smul.addr %s1847, 4
        %s1849 = scalar_lea.vmem %s8, %s1848
        %s1850 = ssub.s32 1, %s24
        %s1851 = smul.u32 4, %s1850
        %p1852 = scmp.lt.s32.totalorder %s1851, 7
        %s1853 = scalar_select %p1852, %s1851, 7
        %s1854 = smul.addr %s1853, 4
        %s1855 = scalar_lea.vmem %s9, %s1854
        // Predicated region
        $region73: #{lstm_head_forward.2} parent=51 // pred_check
          %p1856 = pneg %p222
        $region74: #{lstm_head_forward.2} parent=51 // pred_check_branch
          %1858 = sbr.rel (%p1856) target = $region76
        $region75: #{lstm_head_forward.2} parent=51 // pred_region
          %s1859 = smul.u32 4, %s24
        $region76: #{lstm_head_forward.2} parent=51 // pred_fallthru
          _
        // Predicated region
        $region77: #{lstm_head_forward.2} parent=51 // pred_check
          %p1860 = pneg %p250
        $region78: #{lstm_head_forward.2} parent=51 // pred_check_branch
          %1862 = sbr.rel (%p1860) target = $region80
        $region79: #{lstm_head_forward.2} parent=51 // pred_region
          %s1863 = ssub.s32 1, %s24
          %s1864 = smul.u32 4, %s1863
        $region80: #{lstm_head_forward.2} parent=51 // pred_fallthru
          _
      $region52: #{lstm_head_forward.2} parent=5 // pred_fallthru
        _
      %p1865 = scmp.le.s32.totalorder 2, %s19
      // Predicated region
      $region81: #{lstm_head_forward.2} parent=5 // pred_check
        %p1866 = pneg %p1865
      $region82: #{lstm_head_forward.2} parent=5 // pred_check_branch
        %1868 = sbr.rel (%p1866) target = $region84
      $region83: #{lstm_head_forward.2} parent=5 // pred_region
        %s1869 = ssub.s32 %s19, 2
        // Predicated region
        $region85: #{lstm_head_forward.2} parent=83 // pred_check
          %p1870 = pneg %p228
        $region86: #{lstm_head_forward.2} parent=83 // pred_check_branch
          %1872 = sbr.rel (%p1870) target = $region88
        $region87: #{lstm_head_forward.2} parent=83 // pred_region
          %s1873 = smul.u32 4, %s25
          %p1874 = scmp.lt.s32.totalorder %s1873, 7
          %s1875 = scalar_select %p1874, %s1873, 7
          %s1876 = smul.addr %s1875, 4
          %s1877 = scalar_lea.vmem %s8, %s1876
        $region88: #{lstm_head_forward.2} parent=83 // pred_fallthru
          _
        // Predicated region
        $region89: #{lstm_head_forward.2} parent=83 // pred_check
          %p1878 = pneg %p256
        $region90: #{lstm_head_forward.2} parent=83 // pred_check_branch
          %1880 = sbr.rel (%p1878) target = $region92
        $region91: #{lstm_head_forward.2} parent=83 // pred_region
          %s1881 = ssub.s32 1, %s25
          %s1882 = smul.u32 4, %s1881
          %p1883 = scmp.lt.s32.totalorder %s1882, 7
          %s1884 = scalar_select %p1883, %s1882, 7
          %s1885 = smul.addr %s1884, 4
          %s1886 = scalar_lea.vmem %s9, %s1885
        $region92: #{lstm_head_forward.2} parent=83 // pred_fallthru
          _
      $region84: #{lstm_head_forward.2} parent=5 // pred_fallthru
        _
    $region6: #{lstm_head_forward.2} parent=1 // loop_footer
      %s23 = sadd.s32 1, %s19
    $region7: #{lstm_head_forward.2} parent=1 // loop_footer_branch
      %18 = sbr.rel target = $region3
    $region8: #{lstm_head_forward.2} parent=1 // loop_exit
      _
    %1887 = vsyncpa [#allocation9], 1
    %s1888 = scalar_lea.sflag [#allocation9], 1
    %1889 = vsyncpa %s1888, 1
    %1890 = vsyncpa [#allocation11], 1
    %1891 = vsyncpa [#allocation14], 1

// kernel: lstm_head_forward.3
$region0: #{lstm_head_forward.3}
  #allocation0 [shape = 'u32[]', space=smem, size = 0x4, offset = 0x4, fixed_abs, tag = 'smem constant byte address 0x4 - core index']
  #allocation1 [shape = 'u32[72,128]{1,0:T(1,128)}', space=vmem, size = 0x9000, scoped, tag = 'internal scratch']
  #allocation2 [shape = 'f32[4,8,512]{2,1,0:T(8,128)}', space=vmem, size = 0x10000, scoped, tag = 'scratch operand']
  #allocation3 [shape = 'f32[4,8,512]{2,1,0:T(8,128)}', space=vmem, size = 0x10000, scoped, tag = 'scratch operand']
  #allocation4 [shape = 'f32[8,128]{1,0:T(8,128)}', space=vmem, size = 0x1000, scoped, tag = 'scratch operand']
  #allocation5 [shape = 'f32[8,128]{1,0:T(8,128)}', space=vmem, size = 0x1000, scoped, tag = 'scratch operand']
  #allocation6 [shape = 'f32[8,128]{1,0:T(8,128)}', space=vmem, size = 0x1000, scoped, tag = 'scratch operand']
  #allocation7 [shape = 'f32[8,128]{1,0:T(8,128)}', space=vmem, size = 0x1000, scoped, tag = 'scratch operand']
  %s0 = inlined_call_operand.vmem [shape: bf16[8,8,128], index: 0, kind: input, shape index: {}, may-alias: {0,2}]
  %s1 = inlined_call_operand.vmem [shape: bf16[8,8,128], index: 1, kind: input, shape index: {}, may-alias: {1,3}]
  %s2 = inlined_call_operand.vmem [shape: bf16[8,8,128], index: 2, kind: input, shape index: {}, may-alias: {0,2}]
  %s3 = inlined_call_operand.vmem [shape: bf16[8,8,128], index: 3, kind: input, shape index: {}, may-alias: {1,3}]
  %s4 = inlined_call_operand.hbm [shape: bf16[128,512], index: 4, kind: input, shape index: {}]
  %s5 = inlined_call_operand.hbm [shape: bf16[128,512], index: 5, kind: input, shape index: {}]
  %s6 = inlined_call_operand.hbm [shape: bf16[128,512], index: 6, kind: input, shape index: {}]
  %s7 = inlined_call_operand.hbm [shape: bf16[128,512], index: 7, kind: input, shape index: {}]
  %s8 = inlined_call_operand.hbm [shape: bf16[128,512], index: 8, kind: input, shape index: {}]
  %s9 = inlined_call_operand.hbm [shape: bf16[128,512], index: 9, kind: input, shape index: {}]
  %s10 = inlined_call_operand.vmem [shape: f32[1,512], index: 10, kind: input, shape index: {}]
  %s11 = inlined_call_operand.hbm [shape: f32[1,512], index: 11, kind: input, shape index: {}]
  %s12 = inlined_call_operand.vmem [shape: bf16[8,8,128], index: 12, kind: output, shape index: {0}]
  %s13 = inlined_call_operand.vmem [shape: bf16[8,8,128], index: 13, kind: output, shape index: {1}]
  %14 = xla_tuple %s12, %s13
  %s15 = sld [smem:[#allocation0]]
  $region121: #{lstm_head_forward.3} parent=0
    _
  %s17 = ssub.s32 1, %s15
  %s18 = scalar_select 0, %s17, %s15
  $region1: #{lstm_head_forward.3} parent=0
    #allocation8 [shape = 'u8[131072]{0}', space=vmem, size = 0x20000, scoped, tag = 'input window, operand 4, single buffered']
    #allocation9 [shape = 's32[2]{0}', space=sflag, size = 0x8, scoped, tag = 'scoped memory for lstm_head_forward.3']
    #allocation10 [shape = 'u8[131072]{0}', space=vmem, size = 0x20000, scoped, tag = 'input window, operand 5, single buffered']
    #allocation11 [shape = 's32[1]{0}', space=sflag, size = 0x4, scoped, tag = 'scoped memory for lstm_head_forward.3']
    #allocation12 [shape = 'u8[131072]{0}', space=vmem, size = 0x20000, scoped, tag = 'input window, operand 6, single buffered']
    #allocation13 [shape = 'u8[131072]{0}', space=vmem, size = 0x20000, scoped, tag = 'input window, operand 7, single buffered']
    #allocation14 [shape = 's32[1]{0}', space=sflag, size = 0x4, scoped, tag = 'scoped memory for lstm_head_forward.3']
    #allocation15 [shape = 'u8[131072]{0}', space=vmem, size = 0x20000, scoped, tag = 'input window, operand 8, single buffered']
    #allocation16 [shape = 'u8[131072]{0}', space=vmem, size = 0x20000, scoped, tag = 'input window, operand 9, single buffered']
    #allocation17 [shape = 's32[1]{0}', space=sflag, size = 0x4, scoped, tag = 'scoped memory for lstm_head_forward.3']
    #allocation18 [shape = 'u8[2048]{0}', space=vmem, size = 0x800, scoped, tag = 'input window, operand 11, single buffered']
    %19 = vsyncpa [#allocation9], 0
    %20 = vsyncpa [#allocation11], 0
    %21 = vsyncpa [#allocation14], 0
    %22 = vsyncpa [#allocation17], 0
    loop: start=0, step=1, limit=4
    $region2: #{lstm_head_forward.3} parent=1 // loop_pre_header
      _
    $region3: #{lstm_head_forward.3} parent=1 // loop_header
      %s24 = sphi 0, %s28
      %p25 = scmp.ge.s32.totalorder %s24, 4
      %s34 = sphi 0, %s36
      %s37 = sphi 0, %s34
      %s38 = sphi 0, %s37
      %s54 = sphi 0, %s38
      %s60 = sphi 0, %s62
      %s63 = sphi 0, %s60
      %s64 = sphi 0, %s63
      %s80 = sphi 0, %s64
      %s88 = sphi 0, %s90
      %s91 = sphi 0, %s88
      %s92 = sphi 0, %s91
      %s108 = sphi 0, %s92
      %s116 = sphi 0, %s118
      %s119 = sphi 0, %s116
      %s120 = sphi 0, %s119
      %s136 = sphi 0, %s120
      %s140 = sphi 0, %s140
      %s142 = sphi 0, %s140
      %s143 = sphi 0, %s142
      %s157 = sphi 0, %s143
      %s161 = sphi 0, %s161
      %s163 = sphi 0, %s161
      %s164 = sphi 0, %s163
      %s178 = sphi 0, %s164
      %s182 = sphi 0, %s182
      %s184 = sphi 0, %s182
      %s185 = sphi 0, %s184
      %s199 = sphi 0, %s185
      %s203 = sphi 0, %s203
      %s205 = sphi 0, %s203
      %s206 = sphi 0, %s205
      %s220 = sphi 0, %s206
      %s224 = sphi 0, %s224
      %s226 = sphi 0, %s224
      %s227 = sphi 0, %s226
      %s241 = sphi 0, %s227
      %s245 = sphi 0, %s245
      %s247 = sphi 0, %s245
      %s248 = sphi 0, %s247
      %s262 = sphi 0, %s248
      %s266 = sphi 0, %s266
      %s268 = sphi 0, %s266
      %s269 = sphi 0, %s268
      %s283 = sphi 0, %s269
      %s287 = sphi 0, %s287
      %s289 = sphi 0, %s287
      %s290 = sphi 0, %s289
      %s304 = sphi 0, %s290
      %s310 = sphi 0, %s312
      %s313 = sphi 0, %s310
      %s314 = sphi 0, %s313
      %s330 = sphi 0, %s314
      %s338 = sphi 0, %s340
      %s341 = sphi 0, %s338
      %s342 = sphi 0, %s341
      %s358 = sphi 0, %s342
    $region4: #{lstm_head_forward.3} parent=1 // loop_header_branch
      %27 = sbr.rel (%p25) target = $region8
    $region5: #{lstm_head_forward.3} parent=1 // loop_body
      %s29 = ssub.s32 %s24, 1
      %s30 = ssub.s32 %s24, 2
      %s31 = sadd.s32 %s24, 1
      %s32 = ssub.s32 %s24, %s31
      %p33 = scmp.eq.s32.totalorder %s32, 0
      %s35 = sadd.s32 %s34, 1
      %s36 = scalar_select %p33, %s34, %s35
      %p39 = pneg %p33
      %p40 = scmp.eq.s32.totalorder %s24, 1
      %p41 = por %p39, %p40
      %p42 = scmp.ne.s32.totalorder %s34, %s37
      %p43 = scmp.eq.s32.totalorder %s24, 0
      %p44 = por %p42, %p43
      %p45 = scmp.ne.s32.totalorder %s34, %s37
      %p46 = scmp.eq.s32.totalorder %s29, 1
      %p47 = por %p45, %p46
      %p48 = scmp.ne.s32.totalorder %s37, %s38
      %p49 = scmp.eq.s32.totalorder %s29, 0
      %p50 = por %p48, %p49
      %p51 = scmp.ne.s32.totalorder %s37, %s38
      %p52 = scmp.eq.s32.totalorder %s30, 1
      %p53 = por %p51, %p52
      %p55 = scmp.ne.s32.totalorder %s38, %s54
      %p56 = scmp.eq.s32.totalorder %s30, 0
      %p57 = por %p55, %p56
      %s58 = ssub.s32 %s24, %s31
      %p59 = scmp.eq.s32.totalorder %s58, 0
      %s61 = sadd.s32 %s60, 1
      %s62 = scalar_select %p59, %s60, %s61
      %p65 = pneg %p59
      %p66 = scmp.eq.s32.totalorder %s24, 1
      %p67 = por %p65, %p66
      %p68 = scmp.ne.s32.totalorder %s60, %s63
      %p69 = scmp.eq.s32.totalorder %s24, 0
      %p70 = por %p68, %p69
      %p71 = scmp.ne.s32.totalorder %s60, %s63
      %p72 = scmp.eq.s32.totalorder %s29, 1
      %p73 = por %p71, %p72
      %p74 = scmp.ne.s32.totalorder %s63, %s64
      %p75 = scmp.eq.s32.totalorder %s29, 0
      %p76 = por %p74, %p75
      %p77 = scmp.ne.s32.totalorder %s63, %s64
      %p78 = scmp.eq.s32.totalorder %s30, 1
      %p79 = por %p77, %p78
      %p81 = scmp.ne.s32.totalorder %s64, %s80
      %p82 = scmp.eq.s32.totalorder %s30, 0
      %p83 = por %p81, %p82
      %s84 = ssub.s32 1, %s24
      %s85 = ssub.s32 1, %s31
      %s86 = ssub.s32 %s84, %s85
      %p87 = scmp.eq.s32.totalorder %s86, 0
      %s89 = sadd.s32 %s88, 1
      %s90 = scalar_select %p87, %s88, %s89
      %p93 = pneg %p87
      %p94 = scmp.eq.s32.totalorder %s24, 1
      %p95 = por %p93, %p94
      %p96 = scmp.ne.s32.totalorder %s88, %s91
      %p97 = scmp.eq.s32.totalorder %s24, 0
      %p98 = por %p96, %p97
      %p99 = scmp.ne.s32.totalorder %s88, %s91
      %p100 = scmp.eq.s32.totalorder %s29, 1
      %p101 = por %p99, %p100
      %p102 = scmp.ne.s32.totalorder %s91, %s92
      %p103 = scmp.eq.s32.totalorder %s29, 0
      %p104 = por %p102, %p103
      %p105 = scmp.ne.s32.totalorder %s91, %s92
      %p106 = scmp.eq.s32.totalorder %s30, 1
      %p107 = por %p105, %p106
      %p109 = scmp.ne.s32.totalorder %s92, %s108
      %p110 = scmp.eq.s32.totalorder %s30, 0
      %p111 = por %p109, %p110
      %s112 = ssub.s32 1, %s24
      %s113 = ssub.s32 1, %s31
      %s114 = ssub.s32 %s112, %s113
      %p115 = scmp.eq.s32.totalorder %s114, 0
      %s117 = sadd.s32 %s116, 1
      %s118 = scalar_select %p115, %s116, %s117
      %p121 = pneg %p115
      %p122 = scmp.eq.s32.totalorder %s24, 1
      %p123 = por %p121, %p122
      %p124 = scmp.ne.s32.totalorder %s116, %s119
      %p125 = scmp.eq.s32.totalorder %s24, 0
      %p126 = por %p124, %p125
      %p127 = scmp.ne.s32.totalorder %s116, %s119
      %p128 = scmp.eq.s32.totalorder %s29, 1
      %p129 = por %p127, %p128
      %p130 = scmp.ne.s32.totalorder %s119, %s120
      %p131 = scmp.eq.s32.totalorder %s29, 0
      %p132 = por %p130, %p131
      %p133 = scmp.ne.s32.totalorder %s119, %s120
      %p134 = scmp.eq.s32.totalorder %s30, 1
      %p135 = por %p133, %p134
      %p137 = scmp.ne.s32.totalorder %s120, %s136
      %p138 = scmp.eq.s32.totalorder %s30, 0
      %p139 = por %p137, %p138
      %s141 = sadd.s32 %s140, 1
      %p144 = scmp.eq.s32.totalorder %s24, 1
      %p145 = scmp.ne.s32.totalorder %s140, %s142
      %p146 = scmp.eq.s32.totalorder %s24, 0
      %p147 = por %p145, %p146
      %p148 = scmp.ne.s32.totalorder %s140, %s142
      %p149 = scmp.eq.s32.totalorder %s29, 1
      %p150 = por %p148, %p149
      %p151 = scmp.ne.s32.totalorder %s142, %s143
      %p152 = scmp.eq.s32.totalorder %s29, 0
      %p153 = por %p151, %p152
      %p154 = scmp.ne.s32.totalorder %s142, %s143
      %p155 = scmp.eq.s32.totalorder %s30, 1
      %p156 = por %p154, %p155
      %p158 = scmp.ne.s32.totalorder %s143, %s157
      %p159 = scmp.eq.s32.totalorder %s30, 0
      %p160 = por %p158, %p159
      %s162 = sadd.s32 %s161, 1
      %p165 = scmp.eq.s32.totalorder %s24, 1
      %p166 = scmp.ne.s32.totalorder %s161, %s163
      %p167 = scmp.eq.s32.totalorder %s24, 0
      %p168 = por %p166, %p167
      %p169 = scmp.ne.s32.totalorder %s161, %s163
      %p170 = scmp.eq.s32.totalorder %s29, 1
      %p171 = por %p169, %p170
      %p172 = scmp.ne.s32.totalorder %s163, %s164
      %p173 = scmp.eq.s32.totalorder %s29, 0
      %p174 = por %p172, %p173
      %p175 = scmp.ne.s32.totalorder %s163, %s164
      %p176 = scmp.eq.s32.totalorder %s30, 1
      %p177 = por %p175, %p176
      %p179 = scmp.ne.s32.totalorder %s164, %s178
      %p180 = scmp.eq.s32.totalorder %s30, 0
      %p181 = por %p179, %p180
      %s183 = sadd.s32 %s182, 1
      %p186 = scmp.eq.s32.totalorder %s24, 1
      %p187 = scmp.ne.s32.totalorder %s182, %s184
      %p188 = scmp.eq.s32.totalorder %s24, 0
      %p189 = por %p187, %p188
      %p190 = scmp.ne.s32.totalorder %s182, %s184
      %p191 = scmp.eq.s32.totalorder %s29, 1
      %p192 = por %p190, %p191
      %p193 = scmp.ne.s32.totalorder %s184, %s185
      %p194 = scmp.eq.s32.totalorder %s29, 0
      %p195 = por %p193, %p194
      %p196 = scmp.ne.s32.totalorder %s184, %s185
      %p197 = scmp.eq.s32.totalorder %s30, 1
      %p198 = por %p196, %p197
      %p200 = scmp.ne.s32.totalorder %s185, %s199
      %p201 = scmp.eq.s32.totalorder %s30, 0
      %p202 = por %p200, %p201
      %s204 = sadd.s32 %s203, 1
      %p207 = scmp.eq.s32.totalorder %s24, 1
      %p208 = scmp.ne.s32.totalorder %s203, %s205
      %p209 = scmp.eq.s32.totalorder %s24, 0
      %p210 = por %p208, %p209
      %p211 = scmp.ne.s32.totalorder %s203, %s205
      %p212 = scmp.eq.s32.totalorder %s29, 1
      %p213 = por %p211, %p212
      %p214 = scmp.ne.s32.totalorder %s205, %s206
      %p215 = scmp.eq.s32.totalorder %s29, 0
      %p216 = por %p214, %p215
      %p217 = scmp.ne.s32.totalorder %s205, %s206
      %p218 = scmp.eq.s32.totalorder %s30, 1
      %p219 = por %p217, %p218
      %p221 = scmp.ne.s32.totalorder %s206, %s220
      %p222 = scmp.eq.s32.totalorder %s30, 0
      %p223 = por %p221, %p222
      %s225 = sadd.s32 %s224, 1
      %p228 = scmp.eq.s32.totalorder %s24, 1
      %p229 = scmp.ne.s32.totalorder %s224, %s226
      %p230 = scmp.eq.s32.totalorder %s24, 0
      %p231 = por %p229, %p230
      %p232 = scmp.ne.s32.totalorder %s224, %s226
      %p233 = scmp.eq.s32.totalorder %s29, 1
      %p234 = por %p232, %p233
      %p235 = scmp.ne.s32.totalorder %s226, %s227
      %p236 = scmp.eq.s32.totalorder %s29, 0
      %p237 = por %p235, %p236
      %p238 = scmp.ne.s32.totalorder %s226, %s227
      %p239 = scmp.eq.s32.totalorder %s30, 1
      %p240 = por %p238, %p239
      %p242 = scmp.ne.s32.totalorder %s227, %s241
      %p243 = scmp.eq.s32.totalorder %s30, 0
      %p244 = por %p242, %p243
      %s246 = sadd.s32 %s245, 1
      %p249 = scmp.eq.s32.totalorder %s24, 1
      %p250 = scmp.ne.s32.totalorder %s245, %s247
      %p251 = scmp.eq.s32.totalorder %s24, 0
      %p252 = por %p250, %p251
      %p253 = scmp.ne.s32.totalorder %s245, %s247
      %p254 = scmp.eq.s32.totalorder %s29, 1
      %p255 = por %p253, %p254
      %p256 = scmp.ne.s32.totalorder %s247, %s248
      %p257 = scmp.eq.s32.totalorder %s29, 0
      %p258 = por %p256, %p257
      %p259 = scmp.ne.s32.totalorder %s247, %s248
      %p260 = scmp.eq.s32.totalorder %s30, 1
      %p261 = por %p259, %p260
      %p263 = scmp.ne.s32.totalorder %s248, %s262
      %p264 = scmp.eq.s32.totalorder %s30, 0
      %p265 = por %p263, %p264
      %s267 = sadd.s32 %s266, 1
      %p270 = scmp.eq.s32.totalorder %s24, 1
      %p271 = scmp.ne.s32.totalorder %s266, %s268
      %p272 = scmp.eq.s32.totalorder %s24, 0
      %p273 = por %p271, %p272
      %p274 = scmp.ne.s32.totalorder %s266, %s268
      %p275 = scmp.eq.s32.totalorder %s29, 1
      %p276 = por %p274, %p275
      %p277 = scmp.ne.s32.totalorder %s268, %s269
      %p278 = scmp.eq.s32.totalorder %s29, 0
      %p279 = por %p277, %p278
      %p280 = scmp.ne.s32.totalorder %s268, %s269
      %p281 = scmp.eq.s32.totalorder %s30, 1
      %p282 = por %p280, %p281
      %p284 = scmp.ne.s32.totalorder %s269, %s283
      %p285 = scmp.eq.s32.totalorder %s30, 0
      %p286 = por %p284, %p285
      %s288 = sadd.s32 %s287, 1
      %p291 = scmp.eq.s32.totalorder %s24, 1
      %p292 = scmp.ne.s32.totalorder %s287, %s289
      %p293 = scmp.eq.s32.totalorder %s24, 0
      %p294 = por %p292, %p293
      %p295 = scmp.ne.s32.totalorder %s287, %s289
      %p296 = scmp.eq.s32.totalorder %s29, 1
      %p297 = por %p295, %p296
      %p298 = scmp.ne.s32.totalorder %s289, %s290
      %p299 = scmp.eq.s32.totalorder %s29, 0
      %p300 = por %p298, %p299
      %p301 = scmp.ne.s32.totalorder %s289, %s290
      %p302 = scmp.eq.s32.totalorder %s30, 1
      %p303 = por %p301, %p302
      %p305 = scmp.ne.s32.totalorder %s290, %s304
      %p306 = scmp.eq.s32.totalorder %s30, 0
      %p307 = por %p305, %p306
      %s308 = ssub.s32 %s24, %s31
      %p309 = scmp.eq.s32.totalorder %s308, 0
      %s311 = sadd.s32 %s310, 1
      %s312 = scalar_select %p309, %s310, %s311
      %p315 = pneg %p309
      %p316 = scmp.eq.s32.totalorder %s24, 1
      %p317 = por %p315, %p316
      %p318 = scmp.ne.s32.totalorder %s310, %s313
      %p319 = scmp.eq.s32.totalorder %s24, 0
      %p320 = por %p318, %p319
      %p321 = scmp.ne.s32.totalorder %s310, %s313
      %p322 = scmp.eq.s32.totalorder %s29, 1
      %p323 = por %p321, %p322
      %p324 = scmp.ne.s32.totalorder %s313, %s314
      %p325 = scmp.eq.s32.totalorder %s29, 0
      %p326 = por %p324, %p325
      %p327 = scmp.ne.s32.totalorder %s313, %s314
      %p328 = scmp.eq.s32.totalorder %s30, 1
      %p329 = por %p327, %p328
      %p331 = scmp.ne.s32.totalorder %s314, %s330
      %p332 = scmp.eq.s32.totalorder %s30, 0
      %p333 = por %p331, %p332
      %s334 = ssub.s32 1, %s24
      %s335 = ssub.s32 1, %s31
      %s336 = ssub.s32 %s334, %s335
      %p337 = scmp.eq.s32.totalorder %s336, 0
      %s339 = sadd.s32 %s338, 1
      %s340 = scalar_select %p337, %s338, %s339
      %p343 = pneg %p337
      %p344 = scmp.eq.s32.totalorder %s24, 1
      %p345 = por %p343, %p344
      %p346 = scmp.ne.s32.totalorder %s338, %s341
      %p347 = scmp.eq.s32.totalorder %s24, 0
      %p348 = por %p346, %p347
      %p349 = scmp.ne.s32.totalorder %s338, %s341
      %p350 = scmp.eq.s32.totalorder %s29, 1
      %p351 = por %p349, %p350
      %p352 = scmp.ne.s32.totalorder %s341, %s342
      %p353 = scmp.eq.s32.totalorder %s29, 0
      %p354 = por %p352, %p353
      %p355 = scmp.ne.s32.totalorder %s341, %s342
      %p356 = scmp.eq.s32.totalorder %s30, 1
      %p357 = por %p355, %p356
      %p359 = scmp.ne.s32.totalorder %s342, %s358
      %p360 = scmp.eq.s32.totalorder %s30, 0
      %p361 = por %p359, %p360
      %p362 = scmp.le.s32.totalorder 1, %s24
      %p363 = scmp.lt.s32.totalorder %s24, 3
      %p364 = pnand %p362, %p363
      %p365 = pneg %p364
      // Predicated region
      $region9: #{lstm_head_forward.3} parent=5 // pred_check
        _
      $region10: #{lstm_head_forward.3} parent=5 // pred_check_branch
        %367 = sbr.rel (%p364) target = $region12
      $region11: #{lstm_head_forward.3} parent=5 // pred_region
        %s368 = ssub.s32 %s24, 1
        // Predicated region
        $region13: #{lstm_head_forward.3} parent=11 // pred_check
          %p369 = pneg %p153
        $region14: #{lstm_head_forward.3} parent=11 // pred_check_branch
          %371 = sbr.rel (%p369) target = $region16
        $region15: #{lstm_head_forward.3} parent=11 // pred_region
          %373 = vsyncadd [#allocation9], 0
          %s374 = sshll.u32 %s4, 4
          %s375 = int_to_ptr.hbm [resolvable:$true] %s374
          %s376 = sshll.u32 [#allocation8], 4
          %s377 = int_to_ptr.vmem [resolvable:$true] %s376
          %382 = dma.hbm_to_vmem [thread:$0]  %s375, 4096, %s377, [#allocation9], 256, 256, 16
        $region16: #{lstm_head_forward.3} parent=11 // pred_fallthru
          _
        // Predicated region
        $region17: #{lstm_head_forward.3} parent=11 // pred_check
          %p383 = pneg %p174
        $region18: #{lstm_head_forward.3} parent=11 // pred_check_branch
          %385 = sbr.rel (%p383) target = $region20
        $region19: #{lstm_head_forward.3} parent=11 // pred_region
          %387 = vsyncadd [#allocation11], 0
          %s388 = sshll.u32 %s5, 4
          %s389 = int_to_ptr.hbm [resolvable:$true] %s388
          %s390 = sshll.u32 [#allocation10], 4
          %s391 = int_to_ptr.vmem [resolvable:$true] %s390
          %396 = dma.hbm_to_vmem [thread:$0]  %s389, 4096, %s391, [#allocation11], 256, 256, 16
        $region20: #{lstm_head_forward.3} parent=11 // pred_fallthru
          _
        // Predicated region
        $region21: #{lstm_head_forward.3} parent=11 // pred_check
          %p397 = pneg %p195
        $region22: #{lstm_head_forward.3} parent=11 // pred_check_branch
          %399 = sbr.rel (%p397) target = $region24
        $region23: #{lstm_head_forward.3} parent=11 // pred_region
          %401 = vsyncadd [#allocation11], 0
          %s402 = sshll.u32 %s6, 4
          %s403 = int_to_ptr.hbm [resolvable:$true] %s402
          %s404 = sshll.u32 [#allocation12], 4
          %s405 = int_to_ptr.vmem [resolvable:$true] %s404
          %410 = dma.hbm_to_vmem [thread:$0]  %s403, 4096, %s405, [#allocation11], 256, 256, 16
        $region24: #{lstm_head_forward.3} parent=11 // pred_fallthru
          _
        // Predicated region
        $region25: #{lstm_head_forward.3} parent=11 // pred_check
          %p411 = pneg %p216
        $region26: #{lstm_head_forward.3} parent=11 // pred_check_branch
          %413 = sbr.rel (%p411) target = $region28
        $region27: #{lstm_head_forward.3} parent=11 // pred_region
          %415 = vsyncadd [#allocation14], 0
          %s416 = sshll.u32 %s7, 4
          %s417 = int_to_ptr.hbm [resolvable:$true] %s416
          %s418 = sshll.u32 [#allocation13], 4
          %s419 = int_to_ptr.vmem [resolvable:$true] %s418
          %424 = dma.hbm_to_vmem [thread:$0]  %s417, 4096, %s419, [#allocation14], 256, 256, 16
        $region28: #{lstm_head_forward.3} parent=11 // pred_fallthru
          _
        // Predicated region
        $region29: #{lstm_head_forward.3} parent=11 // pred_check
          %p425 = pneg %p237
        $region30: #{lstm_head_forward.3} parent=11 // pred_check_branch
          %427 = sbr.rel (%p425) target = $region32
        $region31: #{lstm_head_forward.3} parent=11 // pred_region
          %429 = vsyncadd [#allocation14], 0
          %s430 = sshll.u32 %s8, 4
          %s431 = int_to_ptr.hbm [resolvable:$true] %s430
          %s432 = sshll.u32 [#allocation15], 4
          %s433 = int_to_ptr.vmem [resolvable:$true] %s432
          %438 = dma.hbm_to_vmem [thread:$0]  %s431, 4096, %s433, [#allocation14], 256, 256, 16
        $region32: #{lstm_head_forward.3} parent=11 // pred_fallthru
          _
        // Predicated region
        $region33: #{lstm_head_forward.3} parent=11 // pred_check
          %p439 = pneg %p258
        $region34: #{lstm_head_forward.3} parent=11 // pred_check_branch
          %441 = sbr.rel (%p439) target = $region36
        $region35: #{lstm_head_forward.3} parent=11 // pred_region
          %443 = vsyncadd [#allocation17], 0
          %s444 = sshll.u32 %s9, 4
          %s445 = int_to_ptr.hbm [resolvable:$true] %s444
          %s446 = sshll.u32 [#allocation16], 4
          %s447 = int_to_ptr.vmem [resolvable:$true] %s446
          %452 = dma.hbm_to_vmem [thread:$0]  %s445, 4096, %s447, [#allocation17], 256, 256, 16
        $region36: #{lstm_head_forward.3} parent=11 // pred_fallthru
          _
        // Predicated region
        $region37: #{lstm_head_forward.3} parent=11 // pred_check
          %p453 = pneg %p279
        $region38: #{lstm_head_forward.3} parent=11 // pred_check_branch
          %455 = sbr.rel (%p453) target = $region40
        $region39: #{lstm_head_forward.3} parent=11 // pred_region
          _
        $region40: #{lstm_head_forward.3} parent=11 // pred_fallthru
          _
        // Predicated region
        $region41: #{lstm_head_forward.3} parent=11 // pred_check
          %p456 = pneg %p300
        $region42: #{lstm_head_forward.3} parent=11 // pred_check_branch
          %458 = sbr.rel (%p456) target = $region44
        $region43: #{lstm_head_forward.3} parent=11 // pred_region
          %460 = vsyncadd [#allocation17], 0
          %s462 = sshll.u32 %s11, 4
          %s463 = int_to_ptr.hbm [resolvable:$true] %s462
          %s464 = sshll.u32 [#allocation18], 4
          %s465 = int_to_ptr.vmem [resolvable:$true] %s464
          %467 = dma.hbm_to_vmem [thread:$0]  %s463, 64, %s465, [#allocation17]
        $region44: #{lstm_head_forward.3} parent=11 // pred_fallthru
          _
      $region12: #{lstm_head_forward.3} parent=5 // pred_fallthru
        _
      %p468 = scmp.lt.s32.totalorder %s24, 2
      // Predicated region
      $region45: #{lstm_head_forward.3} parent=5 // pred_check
        %p469 = pneg %p468
      $region46: #{lstm_head_forward.3} parent=5 // pred_check_branch
        %471 = sbr.rel (%p469) target = $region48
      $region47: #{lstm_head_forward.3} parent=5 // pred_region
        // Predicated region
        $region49: #{lstm_head_forward.3} parent=47 // pred_check
          %p472 = pneg %p44
        $region50: #{lstm_head_forward.3} parent=47 // pred_check_branch
          %474 = sbr.rel (%p472) target = $region52
        $region51: #{lstm_head_forward.3} parent=47 // pred_region
          %s475 = smul.u32 4, %s24
          %p476 = scmp.lt.s32.totalorder %s475, 7
          %s477 = scalar_select %p476, %s475, 7
          %s478 = smul.addr %s477, 4
          %s479 = scalar_lea.vmem %s0, %s478
          %s480 = smul.u32 4, %s24
        $region52: #{lstm_head_forward.3} parent=47 // pred_fallthru
          _
        // Predicated region
        $region53: #{lstm_head_forward.3} parent=47 // pred_check
          %p481 = pneg %p70
        $region54: #{lstm_head_forward.3} parent=47 // pred_check_branch
          %483 = sbr.rel (%p481) target = $region56
        $region55: #{lstm_head_forward.3} parent=47 // pred_region
          %s484 = smul.u32 4, %s24
          %p485 = scmp.lt.s32.totalorder %s484, 7
          %s486 = scalar_select %p485, %s484, 7
          %s487 = smul.addr %s486, 4
          %s488 = scalar_lea.vmem %s1, %s487
          %s489 = smul.u32 4, %s24
        $region56: #{lstm_head_forward.3} parent=47 // pred_fallthru
          _
        // Predicated region
        $region57: #{lstm_head_forward.3} parent=47 // pred_check
          %p490 = pneg %p98
        $region58: #{lstm_head_forward.3} parent=47 // pred_check_branch
          %492 = sbr.rel (%p490) target = $region60
        $region59: #{lstm_head_forward.3} parent=47 // pred_region
          %s493 = ssub.s32 1, %s24
          %s494 = smul.u32 4, %s493
          %p495 = scmp.lt.s32.totalorder %s494, 7
          %s496 = scalar_select %p495, %s494, 7
          %s497 = smul.addr %s496, 4
          %s498 = scalar_lea.vmem %s2, %s497
          %s499 = ssub.s32 1, %s24
          %s500 = smul.u32 4, %s499
        $region60: #{lstm_head_forward.3} parent=47 // pred_fallthru
          _
        // Predicated region
        $region61: #{lstm_head_forward.3} parent=47 // pred_check
          %p501 = pneg %p126
        $region62: #{lstm_head_forward.3} parent=47 // pred_check_branch
          %503 = sbr.rel (%p501) target = $region64
        $region63: #{lstm_head_forward.3} parent=47 // pred_region
          %s504 = ssub.s32 1, %s24
          %s505 = smul.u32 4, %s504
          %p506 = scmp.lt.s32.totalorder %s505, 7
          %s507 = scalar_select %p506, %s505, 7
          %s508 = smul.addr %s507, 4
          %s509 = scalar_lea.vmem %s3, %s508
          %s510 = ssub.s32 1, %s24
          %s511 = smul.u32 4, %s510
        $region64: #{lstm_head_forward.3} parent=47 // pred_fallthru
          _
      $region48: #{lstm_head_forward.3} parent=5 // pred_fallthru
        _
      %p512 = scmp.le.s32.totalorder 1, %s24
      %p513 = scmp.lt.s32.totalorder %s24, 3
      %p514 = pnand %p512, %p513
      %p515 = pneg %p514
      // Predicated region
      $region65: #{lstm_head_forward.3} parent=5 // pred_check
        _
      $region66: #{lstm_head_forward.3} parent=5 // pred_check_branch
        %517 = sbr.rel (%p514) target = $region68
      $region67: #{lstm_head_forward.3} parent=5 // pred_region
        %s518 = ssub.s32 %s24, 1
        // Predicated region
        $region69: #{lstm_head_forward.3} parent=67 // pred_check
          %p519 = pneg %p153
        $region70: #{lstm_head_forward.3} parent=67 // pred_check_branch
          %521 = sbr.rel (%p519) target = $region72
        $region71: #{lstm_head_forward.3} parent=67 // pred_region
          %523 = dma.done [#allocation9], 4096
        $region72: #{lstm_head_forward.3} parent=67 // pred_fallthru
          _
        // Predicated region
        $region73: #{lstm_head_forward.3} parent=67 // pred_check
          %p524 = pneg %p174
        $region74: #{lstm_head_forward.3} parent=67 // pred_check_branch
          %526 = sbr.rel (%p524) target = $region76
        $region75: #{lstm_head_forward.3} parent=67 // pred_region
          %528 = dma.done [#allocation11], 4096
        $region76: #{lstm_head_forward.3} parent=67 // pred_fallthru
          _
        // Predicated region
        $region77: #{lstm_head_forward.3} parent=67 // pred_check
          %p529 = pneg %p195
        $region78: #{lstm_head_forward.3} parent=67 // pred_check_branch
          %531 = sbr.rel (%p529) target = $region80
        $region79: #{lstm_head_forward.3} parent=67 // pred_region
          %533 = dma.done [#allocation11], 4096
        $region80: #{lstm_head_forward.3} parent=67 // pred_fallthru
          _
        // Predicated region
        $region81: #{lstm_head_forward.3} parent=67 // pred_check
          %p534 = pneg %p216
        $region82: #{lstm_head_forward.3} parent=67 // pred_check_branch
          %536 = sbr.rel (%p534) target = $region84
        $region83: #{lstm_head_forward.3} parent=67 // pred_region
          %538 = dma.done [#allocation14], 4096
        $region84: #{lstm_head_forward.3} parent=67 // pred_fallthru
          _
        // Predicated region
        $region85: #{lstm_head_forward.3} parent=67 // pred_check
          %p539 = pneg %p237
        $region86: #{lstm_head_forward.3} parent=67 // pred_check_branch
          %541 = sbr.rel (%p539) target = $region88
        $region87: #{lstm_head_forward.3} parent=67 // pred_region
          %543 = dma.done [#allocation14], 4096
        $region88: #{lstm_head_forward.3} parent=67 // pred_fallthru
          _
        // Predicated region
        $region89: #{lstm_head_forward.3} parent=67 // pred_check
          %p544 = pneg %p258
        $region90: #{lstm_head_forward.3} parent=67 // pred_check_branch
          %546 = sbr.rel (%p544) target = $region92
        $region91: #{lstm_head_forward.3} parent=67 // pred_region
          %548 = dma.done [#allocation17], 4096
        $region92: #{lstm_head_forward.3} parent=67 // pred_fallthru
          _
        // Predicated region
        $region93: #{lstm_head_forward.3} parent=67 // pred_check
          %p549 = pneg %p300
        $region94: #{lstm_head_forward.3} parent=67 // pred_check_branch
          %551 = sbr.rel (%p549) target = $region96
        $region95: #{lstm_head_forward.3} parent=67 // pred_region
          %553 = dma.done [#allocation17], 64
        $region96: #{lstm_head_forward.3} parent=67 // pred_fallthru
          _
        %s554 = smul.u32 4, %s29
        %p555 = scmp.lt.s32.totalorder %s554, 7
        %s556 = scalar_select %p555, %s554, 7
        %s557 = smul.addr %s556, 4
        %s558 = scalar_lea.vmem %s0, %s557
        %p559 = pneg %p50
        %p560 = pneg %p47
        %s561 = smul.u32 4, %s29
        %p562 = scmp.lt.s32.totalorder %s561, 7
        %s563 = scalar_select %p562, %s561, 7
        %s564 = smul.addr %s563, 4
        %s565 = scalar_lea.vmem %s1, %s564
        %p566 = pneg %p76
        %p567 = pneg %p73
        %s568 = ssub.s32 1, %s29
        %s569 = smul.u32 4, %s568
        %p570 = scmp.lt.s32.totalorder %s569, 7
        %s571 = scalar_select %p570, %s569, 7
        %s572 = smul.addr %s571, 4
        %s573 = scalar_lea.vmem %s2, %s572
        %p574 = pneg %p104
        %p575 = pneg %p101
        %s576 = ssub.s32 1, %s29
        %s577 = smul.u32 4, %s576
        %p578 = scmp.lt.s32.totalorder %s577, 7
        %s579 = scalar_select %p578, %s577, 7
        %s580 = smul.addr %s579, 4
        %s581 = scalar_lea.vmem %s3, %s580
        %p582 = pneg %p132
        %p583 = pneg %p129
        %p584 = pneg %p153
        %p585 = pneg %p150
        %p586 = pneg %p174
        %p587 = pneg %p171
        %p588 = pneg %p195
        %p589 = pneg %p192
        %p590 = pneg %p216
        %p591 = pneg %p213
        %p592 = pneg %p237
        %p593 = pneg %p234
        %p594 = pneg %p258
        %p595 = pneg %p255
        %p596 = pneg %p279
        %p597 = pneg %p276
        %p598 = pneg %p300
        %p599 = pneg %p297
        %p600 = pneg %p326
        %p601 = pneg %p323
        %s602 = smul.u32 4, %s29
        %p603 = scmp.lt.s32.totalorder %s602, 7
        %s604 = scalar_select %p603, %s602, 7
        %s605 = smul.addr %s604, 4
        %s606 = scalar_lea.vmem %s12, %s605
        %p607 = pneg %p354
        %p608 = pneg %p351
        %s609 = ssub.s32 1, %s29
        %s610 = smul.u32 4, %s609
        %p611 = scmp.lt.s32.totalorder %s610, 7
        %s612 = scalar_select %p611, %s610, 7
        %s613 = smul.addr %s612, 4
        %s614 = scalar_lea.vmem %s13, %s613
        %s615 = smul.u32 4, %s29
        %p616 = scmp.lt.s32.totalorder %s615, 7
        %s617 = scalar_select %p616, %s615, 7
        %s618 = smul.addr %s617, 4
        %s619 = scalar_lea.vmem %s0, %s618
        %s620 = smul.u32 4, %s29
        %s621 = smul.u32 4, %s29
        %p622 = scmp.lt.s32.totalorder %s621, 7
        %s623 = scalar_select %p622, %s621, 7
        %s624 = smul.addr %s623, 4
        %s625 = scalar_lea.vmem %s1, %s624
        %s626 = smul.u32 4, %s29
        %s627 = ssub.s32 1, %s29
        %s628 = smul.u32 4, %s627
        %p629 = scmp.lt.s32.totalorder %s628, 7
        %s630 = scalar_select %p629, %s628, 7
        %s631 = smul.addr %s630, 4
        %s632 = scalar_lea.vmem %s2, %s631
        %s633 = ssub.s32 1, %s29
        %s634 = smul.u32 4, %s633
        %s635 = ssub.s32 1, %s29
        %s636 = smul.u32 4, %s635
        %p637 = scmp.lt.s32.totalorder %s636, 7
        %s638 = scalar_select %p637, %s636, 7
        %s639 = smul.addr %s638, 4
        %s640 = scalar_lea.vmem %s3, %s639
        %s641 = ssub.s32 1, %s29
        %s642 = smul.u32 4, %s641
        %s643 = smul.u32 4, %s29
        %p644 = scmp.lt.s32.totalorder %s643, 7
        %s645 = scalar_select %p644, %s643, 7
        %s646 = smul.addr %s645, 4
        %s647 = scalar_lea.vmem %s12, %s646
        %s648 = smul.u32 4, %s29
        %s649 = ssub.s32 1, %s29
        %s650 = smul.u32 4, %s649
        %p651 = scmp.lt.s32.totalorder %s650, 7
        %s652 = scalar_select %p651, %s650, 7
        %s653 = smul.addr %s652, 4
        %s654 = scalar_lea.vmem %s13, %s653
        %s655 = ssub.s32 1, %s29
        %s656 = smul.u32 4, %s655
        %p657 = scmp.eq.s32.totalorder %s29, 0
        // Predicated region
        $region97: #{lstm_head_forward.3} parent=67 // pred_check
          %p658 = pneg %p657
        $region98: #{lstm_head_forward.3} parent=67 // pred_check_branch
          %660 = sbr.rel (%p658) target = $region100
        $region99: #{lstm_head_forward.3} parent=67 // pred_region
          %661 = vst [vmem:[#allocation4] sm:$0xff] 0.0
          %662 = vst [vmem:[#allocation5] sm:$0xff] 0.0
          %663 = vst [vmem:[#allocation6] sm:$0xff] 0.0
          %664 = vst [vmem:[#allocation7] sm:$0xff] 0.0
        $region100: #{lstm_head_forward.3} parent=67 // pred_fallthru
          _
        %v665 = vld [vmem:[%s619] sm:$0xf]
        %v666 = vld [vmem:[%s619 + $0x4] sm:$0xf]
        %v667 = vld [vmem:[%s619 + $0x8] sm:$0xf]
        %v668 = vld [vmem:[%s619 + $0xc] sm:$0xf]
        %v669 = vld [vmem:[#allocation8] sm:$0xff]
        %v670 = vld [vmem:[#allocation8 + $0x8] sm:$0xff]
        %v671 = vld [vmem:[#allocation8 + $0x10] sm:$0xff]
        %v672 = vld [vmem:[#allocation8 + $0x18] sm:$0xff]
        %v673 = vld [vmem:[#allocation8 + $0x20] sm:$0xff]
        %v674 = vld [vmem:[#allocation8 + $0x28] sm:$0xff]
        %v675 = vld [vmem:[#allocation8 + $0x30] sm:$0xff]
        %v676 = vld [vmem:[#allocation8 + $0x38] sm:$0xff]
        %v677 = vld [vmem:[#allocation8 + $0x40] sm:$0xff]
        %v678 = vld [vmem:[#allocation8 + $0x48] sm:$0xff]
        %v679 = vld [vmem:[#allocation8 + $0x50] sm:$0xff]
        %v680 = vld [vmem:[#allocation8 + $0x58] sm:$0xff]
        %v681 = vld [vmem:[#allocation8 + $0x60] sm:$0xff]
        %v682 = vld [vmem:[#allocation8 + $0x68] sm:$0xff]
        %v683 = vld [vmem:[#allocation8 + $0x70] sm:$0xff]
        %v684 = vld [vmem:[#allocation8 + $0x78] sm:$0xff]
        %v685 = vld [vmem:[#allocation8 + $0x80] sm:$0xff]
        %v686 = vld [vmem:[#allocation8 + $0x88] sm:$0xff]
        %v687 = vld [vmem:[#allocation8 + $0x90] sm:$0xff]
        %v688 = vld [vmem:[#allocation8 + $0x98] sm:$0xff]
        %v689 = vld [vmem:[#allocation8 + $0xa0] sm:$0xff]
        %v690 = vld [vmem:[#allocation8 + $0xa8] sm:$0xff]
        %v691 = vld [vmem:[#allocation8 + $0xb0] sm:$0xff]
        %v692 = vld [vmem:[#allocation8 + $0xb8] sm:$0xff]
        %v693 = vld [vmem:[#allocation8 + $0xc0] sm:$0xff]
        %v694 = vld [vmem:[#allocation8 + $0xc8] sm:$0xff]
        %v695 = vld [vmem:[#allocation8 + $0xd0] sm:$0xff]
        %v696 = vld [vmem:[#allocation8 + $0xd8] sm:$0xff]
        %v697 = vld [vmem:[#allocation8 + $0xe0] sm:$0xff]
        %v698 = vld [vmem:[#allocation8 + $0xe8] sm:$0xff]
        %v699 = vld [vmem:[#allocation8 + $0xf0] sm:$0xff]
        %v700 = vld [vmem:[#allocation8 + $0xf8] sm:$0xff]
        %v701 = vld [vmem:[%s625] sm:$0xf]
        %v702 = vld [vmem:[%s625 + $0x4] sm:$0xf]
        %v703 = vld [vmem:[%s625 + $0x8] sm:$0xf]
        %v704 = vld [vmem:[%s625 + $0xc] sm:$0xf]
        %v705 = vld [vmem:[#allocation10] sm:$0xff]
        %v706 = vld [vmem:[#allocation10 + $0x8] sm:$0xff]
        %v707 = vld [vmem:[#allocation10 + $0x10] sm:$0xff]
        %v708 = vld [vmem:[#allocation10 + $0x18] sm:$0xff]
        %v709 = vld [vmem:[#allocation10 + $0x20] sm:$0xff]
        %v710 = vld [vmem:[#allocation10 + $0x28] sm:$0xff]
        %v711 = vld [vmem:[#allocation10 + $0x30] sm:$0xff]
        %v712 = vld [vmem:[#allocation10 + $0x38] sm:$0xff]
        %v713 = vld [vmem:[#allocation10 + $0x40] sm:$0xff]
        %v714 = vld [vmem:[#allocation10 + $0x48] sm:$0xff]
        %v715 = vld [vmem:[#allocation10 + $0x50] sm:$0xff]
        %v716 = vld [vmem:[#allocation10 + $0x58] sm:$0xff]
        %v717 = vld [vmem:[#allocation10 + $0x60] sm:$0xff]
        %v718 = vld [vmem:[#allocation10 + $0x68] sm:$0xff]
        %v719 = vld [vmem:[#allocation10 + $0x70] sm:$0xff]
        %v720 = vld [vmem:[#allocation10 + $0x78] sm:$0xff]
        %v721 = vld [vmem:[#allocation10 + $0x80] sm:$0xff]
        %v722 = vld [vmem:[#allocation10 + $0x88] sm:$0xff]
        %v723 = vld [vmem:[#allocation10 + $0x90] sm:$0xff]
        %v724 = vld [vmem:[#allocation10 + $0x98] sm:$0xff]
        %v725 = vld [vmem:[#allocation10 + $0xa0] sm:$0xff]
        %v726 = vld [vmem:[#allocation10 + $0xa8] sm:$0xff]
        %v727 = vld [vmem:[#allocation10 + $0xb0] sm:$0xff]
        %v728 = vld [vmem:[#allocation10 + $0xb8] sm:$0xff]
        %v729 = vld [vmem:[#allocation10 + $0xc0] sm:$0xff]
        %v730 = vld [vmem:[#allocation10 + $0xc8] sm:$0xff]
        %v731 = vld [vmem:[#allocation10 + $0xd0] sm:$0xff]
        %v732 = vld [vmem:[#allocation10 + $0xd8] sm:$0xff]
        %v733 = vld [vmem:[#allocation10 + $0xe0] sm:$0xff]
        %v734 = vld [vmem:[#allocation10 + $0xe8] sm:$0xff]
        %v735 = vld [vmem:[#allocation10 + $0xf0] sm:$0xff]
        %v736 = vld [vmem:[#allocation10 + $0xf8] sm:$0xff]
        %v741 = vunpack.c.l.b16 %v701
        %v742 = vunpack.c.l.b16 %v702
        %v743 = vunpack.c.l.b16 %v703
        %v744 = vunpack.c.l.b16 %v704
        %v745 = vpack.c.b16 %v742, %v741
        %v746 = vpack.c.b16 %v744, %v743
        %v781 = vunpack.c.l.b16 %v705
        %v782 = vunpack.c.h.b16 %v705
        %v783 = vunpack.c.l.b16 %v706
        %v784 = vunpack.c.h.b16 %v706
        %v785 = vunpack.c.l.b16 %v707
        %v786 = vunpack.c.h.b16 %v707
        %v787 = vunpack.c.l.b16 %v708
        %v788 = vunpack.c.h.b16 %v708
        %v789 = vunpack.c.l.b16 %v709
        %v790 = vunpack.c.h.b16 %v709
        %v791 = vunpack.c.l.b16 %v710
        %v792 = vunpack.c.h.b16 %v710
        %v793 = vunpack.c.l.b16 %v711
        %v794 = vunpack.c.h.b16 %v711
        %v795 = vunpack.c.l.b16 %v712
        %v796 = vunpack.c.h.b16 %v712
        %v797 = vunpack.c.l.b16 %v713
        %v798 = vunpack.c.h.b16 %v713
        %v799 = vunpack.c.l.b16 %v714
        %v800 = vunpack.c.h.b16 %v714
        %v801 = vunpack.c.l.b16 %v715
        %v802 = vunpack.c.h.b16 %v715
        %v803 = vunpack.c.l.b16 %v716
        %v804 = vunpack.c.h.b16 %v716
        %v805 = vunpack.c.l.b16 %v717
        %v806 = vunpack.c.h.b16 %v717
        %v807 = vunpack.c.l.b16 %v718
        %v808 = vunpack.c.h.b16 %v718
        %v809 = vunpack.c.l.b16 %v719
        %v810 = vunpack.c.h.b16 %v719
        %v811 = vunpack.c.l.b16 %v720
        %v812 = vunpack.c.h.b16 %v720
        %v813 = vunpack.c.l.b16 %v721
        %v814 = vunpack.c.h.b16 %v721
        %v815 = vunpack.c.l.b16 %v722
        %v816 = vunpack.c.h.b16 %v722
        %v817 = vunpack.c.l.b16 %v723
        %v818 = vunpack.c.h.b16 %v723
        %v819 = vunpack.c.l.b16 %v724
        %v820 = vunpack.c.h.b16 %v724
        %v821 = vunpack.c.l.b16 %v725
        %v822 = vunpack.c.h.b16 %v725
        %v823 = vunpack.c.l.b16 %v726
        %v824 = vunpack.c.h.b16 %v726
        %v825 = vunpack.c.l.b16 %v727
        %v826 = vunpack.c.h.b16 %v727
        %v827 = vunpack.c.l.b16 %v728
        %v828 = vunpack.c.h.b16 %v728
        %v829 = vunpack.c.l.b16 %v729
        %v830 = vunpack.c.h.b16 %v729
        %v831 = vunpack.c.l.b16 %v730
        %v832 = vunpack.c.h.b16 %v730
        %v833 = vunpack.c.l.b16 %v731
        %v834 = vunpack.c.h.b16 %v731
        %v835 = vunpack.c.l.b16 %v732
        %v836 = vunpack.c.h.b16 %v732
        %v837 = vunpack.c.l.b16 %v733
        %v838 = vunpack.c.h.b16 %v733
        %v839 = vunpack.c.l.b16 %v734
        %v840 = vunpack.c.h.b16 %v734
        %v841 = vunpack.c.l.b16 %v735
        %v842 = vunpack.c.h.b16 %v735
        %v843 = vunpack.c.l.b16 %v736
        %v844 = vunpack.c.h.b16 %v736
        %v845 = vpack.c.b16 %v785, %v781
        %v846 = vpack.c.b16 %v786, %v782
        %v847 = vpack.c.b16 %v787, %v783
        %v848 = vpack.c.b16 %v788, %v784
        %v849 = vpack.c.b16 %v793, %v789
        %v850 = vpack.c.b16 %v794, %v790
        %v851 = vpack.c.b16 %v795, %v791
        %v852 = vpack.c.b16 %v796, %v792
        %v853 = vpack.c.b16 %v801, %v797
        %v854 = vpack.c.b16 %v802, %v798
        %v855 = vpack.c.b16 %v803, %v799
        %v856 = vpack.c.b16 %v804, %v800
        %v857 = vpack.c.b16 %v809, %v805
        %v858 = vpack.c.b16 %v810, %v806
        %v859 = vpack.c.b16 %v811, %v807
        %v860 = vpack.c.b16 %v812, %v808
        %v861 = vpack.c.b16 %v817, %v813
        %v862 = vpack.c.b16 %v818, %v814
        %v863 = vpack.c.b16 %v819, %v815
        %v864 = vpack.c.b16 %v820, %v816
        %v865 = vpack.c.b16 %v825, %v821
        %v866 = vpack.c.b16 %v826, %v822
        %v867 = vpack.c.b16 %v827, %v823
        %v868 = vpack.c.b16 %v828, %v824
        %v869 = vpack.c.b16 %v833, %v829
        %v870 = vpack.c.b16 %v834, %v830
        %v871 = vpack.c.b16 %v835, %v831
        %v872 = vpack.c.b16 %v836, %v832
        %v873 = vpack.c.b16 %v841, %v837
        %v874 = vpack.c.b16 %v842, %v838
        %v875 = vpack.c.b16 %v843, %v839
        %v876 = vpack.c.b16 %v844, %v840
        %909 = vmatpush.bf16.msra.mxu0 %v873
        %910 = vmatpush.bf16.msra.mxu0 %v869
        %911 = vmatpush.bf16.msra.mxu0 %v865
        %912 = vmatpush.bf16.msra.mxu0 %v861
        %913 = vmatpush.bf16.msra.mxu0 %v857
        %914 = vmatpush.bf16.msra.mxu0 %v853
        %915 = vmatpush.bf16.msra.mxu0 %v849
        %916 = vmatpush.bf16.msra.mxu0 %v845
        %917 = vmatmul.bf16.gmra.mxu0 %v745
        %v918 = vpop.f32.mrf.mxu0
        %v919 = vadd.f32 0.0, %v918
        %v920 = vpop.f32.mrf.mxu0
        %v921 = vadd.f32 0.0, %v920
        %922 = vmatmul.bf16.gmra.mxu0 %v746
        %v923 = vpop.f32.mrf.mxu0
        %v924 = vadd.f32 0.0, %v923
        %v925 = vpop.f32.mrf.mxu0
        %v926 = vadd.f32 0.0, %v925
        %927 = vdwg.mxu0
        %928 = vmatpush.bf16.msra.mxu0 %v874
        %929 = vmatpush.bf16.msra.mxu0 %v870
        %930 = vmatpush.bf16.msra.mxu0 %v866
        %931 = vmatpush.bf16.msra.mxu0 %v862
        %932 = vmatpush.bf16.msra.mxu0 %v858
        %933 = vmatpush.bf16.msra.mxu0 %v854
        %934 = vmatpush.bf16.msra.mxu0 %v850
        %935 = vmatpush.bf16.msra.mxu0 %v846
        %936 = vmatmul.bf16.gmra.mxu0 %v745
        %v937 = vpop.f32.mrf.mxu0
        %v938 = vadd.f32 0.0, %v937
        %v939 = vpop.f32.mrf.mxu0
        %v940 = vadd.f32 0.0, %v939
        %941 = vmatmul.bf16.gmra.mxu0 %v746
        %v942 = vpop.f32.mrf.mxu0
        %v943 = vadd.f32 0.0, %v942
        %v944 = vpop.f32.mrf.mxu0
        %v945 = vadd.f32 0.0, %v944
        %946 = vdwg.mxu0
        %947 = vmatpush.bf16.msra.mxu0 %v875
        %948 = vmatpush.bf16.msra.mxu0 %v871
        %949 = vmatpush.bf16.msra.mxu0 %v867
        %950 = vmatpush.bf16.msra.mxu0 %v863
        %951 = vmatpush.bf16.msra.mxu0 %v859
        %952 = vmatpush.bf16.msra.mxu0 %v855
        %953 = vmatpush.bf16.msra.mxu0 %v851
        %954 = vmatpush.bf16.msra.mxu0 %v847
        %955 = vmatmul.bf16.gmra.mxu0 %v745
        %v956 = vpop.f32.mrf.mxu0
        %v957 = vadd.f32 0.0, %v956
        %v958 = vpop.f32.mrf.mxu0
        %v959 = vadd.f32 0.0, %v958
        %960 = vmatmul.bf16.gmra.mxu0 %v746
        %v961 = vpop.f32.mrf.mxu0
        %v962 = vadd.f32 0.0, %v961
        %v963 = vpop.f32.mrf.mxu0
        %v964 = vadd.f32 0.0, %v963
        %965 = vdwg.mxu0
        %966 = vmatpush.bf16.msra.mxu0 %v876
        %967 = vmatpush.bf16.msra.mxu0 %v872
        %968 = vmatpush.bf16.msra.mxu0 %v868
        %969 = vmatpush.bf16.msra.mxu0 %v864
        %970 = vmatpush.bf16.msra.mxu0 %v860
        %971 = vmatpush.bf16.msra.mxu0 %v856
        %972 = vmatpush.bf16.msra.mxu0 %v852
        %973 = vmatpush.bf16.msra.mxu0 %v848
        %974 = vmatmul.bf16.gmra.mxu0 %v745
        %v975 = vpop.f32.mrf.mxu0
        %v976 = vadd.f32 0.0, %v975
        %v977 = vpop.f32.mrf.mxu0
        %v978 = vadd.f32 0.0, %v977
        %979 = vmatmul.bf16.gmra.mxu0 %v746
        %v980 = vpop.f32.mrf.mxu0
        %v981 = vadd.f32 0.0, %v980
        %v982 = vpop.f32.mrf.mxu0
        %v983 = vadd.f32 0.0, %v982
        %984 = vdwg.mxu0
        %v989 = vunpack.c.l.b16 %v665
        %v990 = vunpack.c.l.b16 %v666
        %v991 = vunpack.c.l.b16 %v667
        %v992 = vunpack.c.l.b16 %v668
        %v993 = vpack.c.b16 %v990, %v989
        %v994 = vpack.c.b16 %v992, %v991
        %v1029 = vunpack.c.l.b16 %v669
        %v1030 = vunpack.c.h.b16 %v669
        %v1031 = vunpack.c.l.b16 %v670
        %v1032 = vunpack.c.h.b16 %v670
        %v1033 = vunpack.c.l.b16 %v671
        %v1034 = vunpack.c.h.b16 %v671
        %v1035 = vunpack.c.l.b16 %v672
        %v1036 = vunpack.c.h.b16 %v672
        %v1037 = vunpack.c.l.b16 %v673
        %v1038 = vunpack.c.h.b16 %v673
        %v1039 = vunpack.c.l.b16 %v674
        %v1040 = vunpack.c.h.b16 %v674
        %v1041 = vunpack.c.l.b16 %v675
        %v1042 = vunpack.c.h.b16 %v675
        %v1043 = vunpack.c.l.b16 %v676
        %v1044 = vunpack.c.h.b16 %v676
        %v1045 = vunpack.c.l.b16 %v677
        %v1046 = vunpack.c.h.b16 %v677
        %v1047 = vunpack.c.l.b16 %v678
        %v1048 = vunpack.c.h.b16 %v678
        %v1049 = vunpack.c.l.b16 %v679
        %v1050 = vunpack.c.h.b16 %v679
        %v1051 = vunpack.c.l.b16 %v680
        %v1052 = vunpack.c.h.b16 %v680
        %v1053 = vunpack.c.l.b16 %v681
        %v1054 = vunpack.c.h.b16 %v681
        %v1055 = vunpack.c.l.b16 %v682
        %v1056 = vunpack.c.h.b16 %v682
        %v1057 = vunpack.c.l.b16 %v683
        %v1058 = vunpack.c.h.b16 %v683
        %v1059 = vunpack.c.l.b16 %v684
        %v1060 = vunpack.c.h.b16 %v684
        %v1061 = vunpack.c.l.b16 %v685
        %v1062 = vunpack.c.h.b16 %v685
        %v1063 = vunpack.c.l.b16 %v686
        %v1064 = vunpack.c.h.b16 %v686
        %v1065 = vunpack.c.l.b16 %v687
        %v1066 = vunpack.c.h.b16 %v687
        %v1067 = vunpack.c.l.b16 %v688
        %v1068 = vunpack.c.h.b16 %v688
        %v1069 = vunpack.c.l.b16 %v689
        %v1070 = vunpack.c.h.b16 %v689
        %v1071 = vunpack.c.l.b16 %v690
        %v1072 = vunpack.c.h.b16 %v690
        %v1073 = vunpack.c.l.b16 %v691
        %v1074 = vunpack.c.h.b16 %v691
        %v1075 = vunpack.c.l.b16 %v692
        %v1076 = vunpack.c.h.b16 %v692
        %v1077 = vunpack.c.l.b16 %v693
        %v1078 = vunpack.c.h.b16 %v693
        %v1079 = vunpack.c.l.b16 %v694
        %v1080 = vunpack.c.h.b16 %v694
        %v1081 = vunpack.c.l.b16 %v695
        %v1082 = vunpack.c.h.b16 %v695
        %v1083 = vunpack.c.l.b16 %v696
        %v1084 = vunpack.c.h.b16 %v696
        %v1085 = vunpack.c.l.b16 %v697
        %v1086 = vunpack.c.h.b16 %v697
        %v1087 = vunpack.c.l.b16 %v698
        %v1088 = vunpack.c.h.b16 %v698
        %v1089 = vunpack.c.l.b16 %v699
        %v1090 = vunpack.c.h.b16 %v699
        %v1091 = vunpack.c.l.b16 %v700
        %v1092 = vunpack.c.h.b16 %v700
        %v1093 = vpack.c.b16 %v1033, %v1029
        %v1094 = vpack.c.b16 %v1034, %v1030
        %v1095 = vpack.c.b16 %v1035, %v1031
        %v1096 = vpack.c.b16 %v1036, %v1032
        %v1097 = vpack.c.b16 %v1041, %v1037
        %v1098 = vpack.c.b16 %v1042, %v1038
        %v1099 = vpack.c.b16 %v1043, %v1039
        %v1100 = vpack.c.b16 %v1044, %v1040
        %v1101 = vpack.c.b16 %v1049, %v1045
        %v1102 = vpack.c.b16 %v1050, %v1046
        %v1103 = vpack.c.b16 %v1051, %v1047
        %v1104 = vpack.c.b16 %v1052, %v1048
        %v1105 = vpack.c.b16 %v1057, %v1053
        %v1106 = vpack.c.b16 %v1058, %v1054
        %v1107 = vpack.c.b16 %v1059, %v1055
        %v1108 = vpack.c.b16 %v1060, %v1056
        %v1109 = vpack.c.b16 %v1065, %v1061
        %v1110 = vpack.c.b16 %v1066, %v1062
        %v1111 = vpack.c.b16 %v1067, %v1063
        %v1112 = vpack.c.b16 %v1068, %v1064
        %v1113 = vpack.c.b16 %v1073, %v1069
        %v1114 = vpack.c.b16 %v1074, %v1070
        %v1115 = vpack.c.b16 %v1075, %v1071
        %v1116 = vpack.c.b16 %v1076, %v1072
        %v1117 = vpack.c.b16 %v1081, %v1077
        %v1118 = vpack.c.b16 %v1082, %v1078
        %v1119 = vpack.c.b16 %v1083, %v1079
        %v1120 = vpack.c.b16 %v1084, %v1080
        %v1121 = vpack.c.b16 %v1089, %v1085
        %v1122 = vpack.c.b16 %v1090, %v1086
        %v1123 = vpack.c.b16 %v1091, %v1087
        %v1124 = vpack.c.b16 %v1092, %v1088
        %1157 = vmatpush.bf16.msra.mxu0 %v1121
        %1158 = vmatpush.bf16.msra.mxu0 %v1117
        %1159 = vmatpush.bf16.msra.mxu0 %v1113
        %1160 = vmatpush.bf16.msra.mxu0 %v1109
        %1161 = vmatpush.bf16.msra.mxu0 %v1105
        %1162 = vmatpush.bf16.msra.mxu0 %v1101
        %1163 = vmatpush.bf16.msra.mxu0 %v1097
        %1164 = vmatpush.bf16.msra.mxu0 %v1093
        %1165 = vmatmul.bf16.gmra.mxu0 %v993
        %v1166 = vpop.f32.mrf.mxu0
        %v1167 = vadd.f32 %v919, %v1166
        %v1168 = vpop.f32.mrf.mxu0
        %v1169 = vadd.f32 %v921, %v1168
        %1170 = vmatmul.bf16.gmra.mxu0 %v994
        %v1171 = vpop.f32.mrf.mxu0
        %v1172 = vadd.f32 %v924, %v1171
        %v1173 = vpop.f32.mrf.mxu0
        %v1174 = vadd.f32 %v926, %v1173
        %1175 = vdwg.mxu0
        %1176 = vmatpush.bf16.msra.mxu0 %v1122
        %1177 = vmatpush.bf16.msra.mxu0 %v1118
        %1178 = vmatpush.bf16.msra.mxu0 %v1114
        %1179 = vmatpush.bf16.msra.mxu0 %v1110
        %1180 = vmatpush.bf16.msra.mxu0 %v1106
        %1181 = vmatpush.bf16.msra.mxu0 %v1102
        %1182 = vmatpush.bf16.msra.mxu0 %v1098
        %1183 = vmatpush.bf16.msra.mxu0 %v1094
        %1184 = vmatmul.bf16.gmra.mxu0 %v993
        %v1185 = vpop.f32.mrf.mxu0
        %v1186 = vadd.f32 %v938, %v1185
        %v1187 = vpop.f32.mrf.mxu0
        %v1188 = vadd.f32 %v940, %v1187
        %1189 = vmatmul.bf16.gmra.mxu0 %v994
        %v1190 = vpop.f32.mrf.mxu0
        %v1191 = vadd.f32 %v943, %v1190
        %v1192 = vpop.f32.mrf.mxu0
        %v1193 = vadd.f32 %v945, %v1192
        %1194 = vdwg.mxu0
        %1195 = vmatpush.bf16.msra.mxu0 %v1123
        %1196 = vmatpush.bf16.msra.mxu0 %v1119
        %1197 = vmatpush.bf16.msra.mxu0 %v1115
        %1198 = vmatpush.bf16.msra.mxu0 %v1111
        %1199 = vmatpush.bf16.msra.mxu0 %v1107
        %1200 = vmatpush.bf16.msra.mxu0 %v1103
        %1201 = vmatpush.bf16.msra.mxu0 %v1099
        %1202 = vmatpush.bf16.msra.mxu0 %v1095
        %1203 = vmatmul.bf16.gmra.mxu0 %v993
        %v1204 = vpop.f32.mrf.mxu0
        %v1205 = vadd.f32 %v957, %v1204
        %v1206 = vpop.f32.mrf.mxu0
        %v1207 = vadd.f32 %v959, %v1206
        %1208 = vmatmul.bf16.gmra.mxu0 %v994
        %v1209 = vpop.f32.mrf.mxu0
        %v1210 = vadd.f32 %v962, %v1209
        %v1211 = vpop.f32.mrf.mxu0
        %v1212 = vadd.f32 %v964, %v1211
        %1213 = vdwg.mxu0
        %1214 = vmatpush.bf16.msra.mxu0 %v1124
        %1215 = vmatpush.bf16.msra.mxu0 %v1120
        %1216 = vmatpush.bf16.msra.mxu0 %v1116
        %1217 = vmatpush.bf16.msra.mxu0 %v1112
        %1218 = vmatpush.bf16.msra.mxu0 %v1108
        %1219 = vmatpush.bf16.msra.mxu0 %v1104
        %1220 = vmatpush.bf16.msra.mxu0 %v1100
        %1221 = vmatpush.bf16.msra.mxu0 %v1096
        %1222 = vmatmul.bf16.gmra.mxu0 %v993
        %v1223 = vpop.f32.mrf.mxu0
        %v1224 = vadd.f32 %v976, %v1223
        %v1225 = vpop.f32.mrf.mxu0
        %v1226 = vadd.f32 %v978, %v1225
        %1227 = vmatmul.bf16.gmra.mxu0 %v994
        %v1228 = vpop.f32.mrf.mxu0
        %v1229 = vadd.f32 %v981, %v1228
        %v1230 = vpop.f32.mrf.mxu0
        %v1231 = vadd.f32 %v983, %v1230
        %1232 = vdwg.mxu0
        %v1233 = vld [vmem:[%s10] sm:$0xf]
        %v1235 = vperm.slane %v1233, 0
        %v1236 = vperm.slane %v1233, 1
        %v1237 = vperm.slane %v1233, 2
        %v1238 = vperm.slane %v1233, 3
        %v1243 = vadd.f32 %v1167, %v1235
        %v1244 = vadd.f32 %v1186, %v1236
        %v1245 = vadd.f32 %v1205, %v1237
        %v1246 = vadd.f32 %v1224, %v1238
        %v1247 = vadd.f32 %v1169, %v1235
        %v1248 = vadd.f32 %v1188, %v1236
        %v1249 = vadd.f32 %v1207, %v1237
        %v1250 = vadd.f32 %v1226, %v1238
        %v1251 = vadd.f32 %v1172, %v1235
        %v1252 = vadd.f32 %v1191, %v1236
        %v1253 = vadd.f32 %v1210, %v1237
        %v1254 = vadd.f32 %v1229, %v1238
        %v1255 = vadd.f32 %v1174, %v1235
        %v1256 = vadd.f32 %v1193, %v1236
        %v1257 = vadd.f32 %v1212, %v1237
        %v1258 = vadd.f32 %v1231, %v1238
        %1259 = vst [vmem:[#allocation2] sm:$0xff] %v1243
        %1260 = vst [vmem:[#allocation2 + $0x8] sm:$0xff] %v1244
        %1261 = vst [vmem:[#allocation2 + $0x10] sm:$0xff] %v1245
        %1262 = vst [vmem:[#allocation2 + $0x18] sm:$0xff] %v1246
        %1263 = vst [vmem:[#allocation2 + $0x20] sm:$0xff] %v1247
        %1264 = vst [vmem:[#allocation2 + $0x28] sm:$0xff] %v1248
        %1265 = vst [vmem:[#allocation2 + $0x30] sm:$0xff] %v1249
        %1266 = vst [vmem:[#allocation2 + $0x38] sm:$0xff] %v1250
        %1267 = vst [vmem:[#allocation2 + $0x40] sm:$0xff] %v1251
        %1268 = vst [vmem:[#allocation2 + $0x48] sm:$0xff] %v1252
        %1269 = vst [vmem:[#allocation2 + $0x50] sm:$0xff] %v1253
        %1270 = vst [vmem:[#allocation2 + $0x58] sm:$0xff] %v1254
        %1271 = vst [vmem:[#allocation2 + $0x60] sm:$0xff] %v1255
        %1272 = vst [vmem:[#allocation2 + $0x68] sm:$0xff] %v1256
        %1273 = vst [vmem:[#allocation2 + $0x70] sm:$0xff] %v1257
        %1274 = vst [vmem:[#allocation2 + $0x78] sm:$0xff] %v1258
        %v1275 = vld [vmem:[%s632] sm:$0xf]
        %v1276 = vld [vmem:[%s632 + $0x4] sm:$0xf]
        %v1277 = vld [vmem:[%s632 + $0x8] sm:$0xf]
        %v1278 = vld [vmem:[%s632 + $0xc] sm:$0xf]
        %v1279 = vld [vmem:[#allocation12] sm:$0xff]
        %v1280 = vld [vmem:[#allocation12 + $0x8] sm:$0xff]
        %v1281 = vld [vmem:[#allocation12 + $0x10] sm:$0xff]
        %v1282 = vld [vmem:[#allocation12 + $0x18] sm:$0xff]
        %v1283 = vld [vmem:[#allocation12 + $0x20] sm:$0xff]
        %v1284 = vld [vmem:[#allocation12 + $0x28] sm:$0xff]
        %v1285 = vld [vmem:[#allocation12 + $0x30] sm:$0xff]
        %v1286 = vld [vmem:[#allocation12 + $0x38] sm:$0xff]
        %v1287 = vld [vmem:[#allocation12 + $0x40] sm:$0xff]
        %v1288 = vld [vmem:[#allocation12 + $0x48] sm:$0xff]
        %v1289 = vld [vmem:[#allocation12 + $0x50] sm:$0xff]
        %v1290 = vld [vmem:[#allocation12 + $0x58] sm:$0xff]
        %v1291 = vld [vmem:[#allocation12 + $0x60] sm:$0xff]
        %v1292 = vld [vmem:[#allocation12 + $0x68] sm:$0xff]
        %v1293 = vld [vmem:[#allocation12 + $0x70] sm:$0xff]
        %v1294 = vld [vmem:[#allocation12 + $0x78] sm:$0xff]
        %v1295 = vld [vmem:[#allocation12 + $0x80] sm:$0xff]
        %v1296 = vld [vmem:[#allocation12 + $0x88] sm:$0xff]
        %v1297 = vld [vmem:[#allocation12 + $0x90] sm:$0xff]
        %v1298 = vld [vmem:[#allocation12 + $0x98] sm:$0xff]
        %v1299 = vld [vmem:[#allocation12 + $0xa0] sm:$0xff]
        %v1300 = vld [vmem:[#allocation12 + $0xa8] sm:$0xff]
        %v1301 = vld [vmem:[#allocation12 + $0xb0] sm:$0xff]
        %v1302 = vld [vmem:[#allocation12 + $0xb8] sm:$0xff]
        %v1303 = vld [vmem:[#allocation12 + $0xc0] sm:$0xff]
        %v1304 = vld [vmem:[#allocation12 + $0xc8] sm:$0xff]
        %v1305 = vld [vmem:[#allocation12 + $0xd0] sm:$0xff]
        %v1306 = vld [vmem:[#allocation12 + $0xd8] sm:$0xff]
        %v1307 = vld [vmem:[#allocation12 + $0xe0] sm:$0xff]
        %v1308 = vld [vmem:[#allocation12 + $0xe8] sm:$0xff]
        %v1309 = vld [vmem:[#allocation12 + $0xf0] sm:$0xff]
        %v1310 = vld [vmem:[#allocation12 + $0xf8] sm:$0xff]
        %v1311 = vld [vmem:[%s640] sm:$0xf]
        %v1312 = vld [vmem:[%s640 + $0x4] sm:$0xf]
        %v1313 = vld [vmem:[%s640 + $0x8] sm:$0xf]
        %v1314 = vld [vmem:[%s640 + $0xc] sm:$0xf]
        %v1315 = vld [vmem:[#allocation13] sm:$0xff]
        %v1316 = vld [vmem:[#allocation13 + $0x8] sm:$0xff]
        %v1317 = vld [vmem:[#allocation13 + $0x10] sm:$0xff]
        %v1318 = vld [vmem:[#allocation13 + $0x18] sm:$0xff]
        %v1319 = vld [vmem:[#allocation13 + $0x20] sm:$0xff]
        %v1320 = vld [vmem:[#allocation13 + $0x28] sm:$0xff]
        %v1321 = vld [vmem:[#allocation13 + $0x30] sm:$0xff]
        %v1322 = vld [vmem:[#allocation13 + $0x38] sm:$0xff]
        %v1323 = vld [vmem:[#allocation13 + $0x40] sm:$0xff]
        %v1324 = vld [vmem:[#allocation13 + $0x48] sm:$0xff]
        %v1325 = vld [vmem:[#allocation13 + $0x50] sm:$0xff]
        %v1326 = vld [vmem:[#allocation13 + $0x58] sm:$0xff]
        %v1327 = vld [vmem:[#allocation13 + $0x60] sm:$0xff]
        %v1328 = vld [vmem:[#allocation13 + $0x68] sm:$0xff]
        %v1329 = vld [vmem:[#allocation13 + $0x70] sm:$0xff]
        %v1330 = vld [vmem:[#allocation13 + $0x78] sm:$0xff]
        %v1331 = vld [vmem:[#allocation13 + $0x80] sm:$0xff]
        %v1332 = vld [vmem:[#allocation13 + $0x88] sm:$0xff]
        %v1333 = vld [vmem:[#allocation13 + $0x90] sm:$0xff]
        %v1334 = vld [vmem:[#allocation13 + $0x98] sm:$0xff]
        %v1335 = vld [vmem:[#allocation13 + $0xa0] sm:$0xff]
        %v1336 = vld [vmem:[#allocation13 + $0xa8] sm:$0xff]
        %v1337 = vld [vmem:[#allocation13 + $0xb0] sm:$0xff]
        %v1338 = vld [vmem:[#allocation13 + $0xb8] sm:$0xff]
        %v1339 = vld [vmem:[#allocation13 + $0xc0] sm:$0xff]
        %v1340 = vld [vmem:[#allocation13 + $0xc8] sm:$0xff]
        %v1341 = vld [vmem:[#allocation13 + $0xd0] sm:$0xff]
        %v1342 = vld [vmem:[#allocation13 + $0xd8] sm:$0xff]
        %v1343 = vld [vmem:[#allocation13 + $0xe0] sm:$0xff]
        %v1344 = vld [vmem:[#allocation13 + $0xe8] sm:$0xff]
        %v1345 = vld [vmem:[#allocation13 + $0xf0] sm:$0xff]
        %v1346 = vld [vmem:[#allocation13 + $0xf8] sm:$0xff]
        %v1351 = vunpack.c.l.b16 %v1311
        %v1352 = vunpack.c.l.b16 %v1312
        %v1353 = vunpack.c.l.b16 %v1313
        %v1354 = vunpack.c.l.b16 %v1314
        %v1355 = vpack.c.b16 %v1352, %v1351
        %v1356 = vpack.c.b16 %v1354, %v1353
        %v1391 = vunpack.c.l.b16 %v1315
        %v1392 = vunpack.c.h.b16 %v1315
        %v1393 = vunpack.c.l.b16 %v1316
        %v1394 = vunpack.c.h.b16 %v1316
        %v1395 = vunpack.c.l.b16 %v1317
        %v1396 = vunpack.c.h.b16 %v1317
        %v1397 = vunpack.c.l.b16 %v1318
        %v1398 = vunpack.c.h.b16 %v1318
        %v1399 = vunpack.c.l.b16 %v1319
        %v1400 = vunpack.c.h.b16 %v1319
        %v1401 = vunpack.c.l.b16 %v1320
        %v1402 = vunpack.c.h.b16 %v1320
        %v1403 = vunpack.c.l.b16 %v1321
        %v1404 = vunpack.c.h.b16 %v1321
        %v1405 = vunpack.c.l.b16 %v1322
        %v1406 = vunpack.c.h.b16 %v1322
        %v1407 = vunpack.c.l.b16 %v1323
        %v1408 = vunpack.c.h.b16 %v1323
        %v1409 = vunpack.c.l.b16 %v1324
        %v1410 = vunpack.c.h.b16 %v1324
        %v1411 = vunpack.c.l.b16 %v1325
        %v1412 = vunpack.c.h.b16 %v1325
        %v1413 = vunpack.c.l.b16 %v1326
        %v1414 = vunpack.c.h.b16 %v1326
        %v1415 = vunpack.c.l.b16 %v1327
        %v1416 = vunpack.c.h.b16 %v1327
        %v1417 = vunpack.c.l.b16 %v1328
        %v1418 = vunpack.c.h.b16 %v1328
        %v1419 = vunpack.c.l.b16 %v1329
        %v1420 = vunpack.c.h.b16 %v1329
        %v1421 = vunpack.c.l.b16 %v1330
        %v1422 = vunpack.c.h.b16 %v1330
        %v1423 = vunpack.c.l.b16 %v1331
        %v1424 = vunpack.c.h.b16 %v1331
        %v1425 = vunpack.c.l.b16 %v1332
        %v1426 = vunpack.c.h.b16 %v1332
        %v1427 = vunpack.c.l.b16 %v1333
        %v1428 = vunpack.c.h.b16 %v1333
        %v1429 = vunpack.c.l.b16 %v1334
        %v1430 = vunpack.c.h.b16 %v1334
        %v1431 = vunpack.c.l.b16 %v1335
        %v1432 = vunpack.c.h.b16 %v1335
        %v1433 = vunpack.c.l.b16 %v1336
        %v1434 = vunpack.c.h.b16 %v1336
        %v1435 = vunpack.c.l.b16 %v1337
        %v1436 = vunpack.c.h.b16 %v1337
        %v1437 = vunpack.c.l.b16 %v1338
        %v1438 = vunpack.c.h.b16 %v1338
        %v1439 = vunpack.c.l.b16 %v1339
        %v1440 = vunpack.c.h.b16 %v1339
        %v1441 = vunpack.c.l.b16 %v1340
        %v1442 = vunpack.c.h.b16 %v1340
        %v1443 = vunpack.c.l.b16 %v1341
        %v1444 = vunpack.c.h.b16 %v1341
        %v1445 = vunpack.c.l.b16 %v1342
        %v1446 = vunpack.c.h.b16 %v1342
        %v1447 = vunpack.c.l.b16 %v1343
        %v1448 = vunpack.c.h.b16 %v1343
        %v1449 = vunpack.c.l.b16 %v1344
        %v1450 = vunpack.c.h.b16 %v1344
        %v1451 = vunpack.c.l.b16 %v1345
        %v1452 = vunpack.c.h.b16 %v1345
        %v1453 = vunpack.c.l.b16 %v1346
        %v1454 = vunpack.c.h.b16 %v1346
        %v1455 = vpack.c.b16 %v1395, %v1391
        %v1456 = vpack.c.b16 %v1396, %v1392
        %v1457 = vpack.c.b16 %v1397, %v1393
        %v1458 = vpack.c.b16 %v1398, %v1394
        %v1459 = vpack.c.b16 %v1403, %v1399
        %v1460 = vpack.c.b16 %v1404, %v1400
        %v1461 = vpack.c.b16 %v1405, %v1401
        %v1462 = vpack.c.b16 %v1406, %v1402
        %v1463 = vpack.c.b16 %v1411, %v1407
        %v1464 = vpack.c.b16 %v1412, %v1408
        %v1465 = vpack.c.b16 %v1413, %v1409
        %v1466 = vpack.c.b16 %v1414, %v1410
        %v1467 = vpack.c.b16 %v1419, %v1415
        %v1468 = vpack.c.b16 %v1420, %v1416
        %v1469 = vpack.c.b16 %v1421, %v1417
        %v1470 = vpack.c.b16 %v1422, %v1418
        %v1471 = vpack.c.b16 %v1427, %v1423
        %v1472 = vpack.c.b16 %v1428, %v1424
        %v1473 = vpack.c.b16 %v1429, %v1425
        %v1474 = vpack.c.b16 %v1430, %v1426
        %v1475 = vpack.c.b16 %v1435, %v1431
        %v1476 = vpack.c.b16 %v1436, %v1432
        %v1477 = vpack.c.b16 %v1437, %v1433
        %v1478 = vpack.c.b16 %v1438, %v1434
        %v1479 = vpack.c.b16 %v1443, %v1439
        %v1480 = vpack.c.b16 %v1444, %v1440
        %v1481 = vpack.c.b16 %v1445, %v1441
        %v1482 = vpack.c.b16 %v1446, %v1442
        %v1483 = vpack.c.b16 %v1451, %v1447
        %v1484 = vpack.c.b16 %v1452, %v1448
        %v1485 = vpack.c.b16 %v1453, %v1449
        %v1486 = vpack.c.b16 %v1454, %v1450
        %1519 = vmatpush.bf16.msra.mxu0 %v1483
        %1520 = vmatpush.bf16.msra.mxu0 %v1479
        %1521 = vmatpush.bf16.msra.mxu0 %v1475
        %1522 = vmatpush.bf16.msra.mxu0 %v1471
        %1523 = vmatpush.bf16.msra.mxu0 %v1467
        %1524 = vmatpush.bf16.msra.mxu0 %v1463
        %1525 = vmatpush.bf16.msra.mxu0 %v1459
        %1526 = vmatpush.bf16.msra.mxu0 %v1455
        %1527 = vmatmul.bf16.gmra.mxu0 %v1355
        %v1528 = vpop.f32.mrf.mxu0
        %v1529 = vadd.f32 0.0, %v1528
        %v1530 = vpop.f32.mrf.mxu0
        %v1531 = vadd.f32 0.0, %v1530
        %1532 = vmatmul.bf16.gmra.mxu0 %v1356
        %v1533 = vpop.f32.mrf.mxu0
        %v1534 = vadd.f32 0.0, %v1533
        %v1535 = vpop.f32.mrf.mxu0
        %v1536 = vadd.f32 0.0, %v1535
        %1537 = vdwg.mxu0
        %1538 = vmatpush.bf16.msra.mxu0 %v1484
        %1539 = vmatpush.bf16.msra.mxu0 %v1480
        %1540 = vmatpush.bf16.msra.mxu0 %v1476
        %1541 = vmatpush.bf16.msra.mxu0 %v1472
        %1542 = vmatpush.bf16.msra.mxu0 %v1468
        %1543 = vmatpush.bf16.msra.mxu0 %v1464
        %1544 = vmatpush.bf16.msra.mxu0 %v1460
        %1545 = vmatpush.bf16.msra.mxu0 %v1456
        %1546 = vmatmul.bf16.gmra.mxu0 %v1355
        %v1547 = vpop.f32.mrf.mxu0
        %v1548 = vadd.f32 0.0, %v1547
        %v1549 = vpop.f32.mrf.mxu0
        %v1550 = vadd.f32 0.0, %v1549
        %1551 = vmatmul.bf16.gmra.mxu0 %v1356
        %v1552 = vpop.f32.mrf.mxu0
        %v1553 = vadd.f32 0.0, %v1552
        %v1554 = vpop.f32.mrf.mxu0
        %v1555 = vadd.f32 0.0, %v1554
        %1556 = vdwg.mxu0
        %1557 = vmatpush.bf16.msra.mxu0 %v1485
        %1558 = vmatpush.bf16.msra.mxu0 %v1481
        %1559 = vmatpush.bf16.msra.mxu0 %v1477
        %1560 = vmatpush.bf16.msra.mxu0 %v1473
        %1561 = vmatpush.bf16.msra.mxu0 %v1469
        %1562 = vmatpush.bf16.msra.mxu0 %v1465
        %1563 = vmatpush.bf16.msra.mxu0 %v1461
        %1564 = vmatpush.bf16.msra.mxu0 %v1457
        %1565 = vmatmul.bf16.gmra.mxu0 %v1355
        %v1566 = vpop.f32.mrf.mxu0
        %v1567 = vadd.f32 0.0, %v1566
        %v1568 = vpop.f32.mrf.mxu0
        %v1569 = vadd.f32 0.0, %v1568
        %1570 = vmatmul.bf16.gmra.mxu0 %v1356
        %v1571 = vpop.f32.mrf.mxu0
        %v1572 = vadd.f32 0.0, %v1571
        %v1573 = vpop.f32.mrf.mxu0
        %v1574 = vadd.f32 0.0, %v1573
        %1575 = vdwg.mxu0
        %1576 = vmatpush.bf16.msra.mxu0 %v1486
        %1577 = vmatpush.bf16.msra.mxu0 %v1482
        %1578 = vmatpush.bf16.msra.mxu0 %v1478
        %1579 = vmatpush.bf16.msra.mxu0 %v1474
        %1580 = vmatpush.bf16.msra.mxu0 %v1470
        %1581 = vmatpush.bf16.msra.mxu0 %v1466
        %1582 = vmatpush.bf16.msra.mxu0 %v1462
        %1583 = vmatpush.bf16.msra.mxu0 %v1458
        %1584 = vmatmul.bf16.gmra.mxu0 %v1355
        %v1585 = vpop.f32.mrf.mxu0
        %v1586 = vadd.f32 0.0, %v1585
        %v1587 = vpop.f32.mrf.mxu0
        %v1588 = vadd.f32 0.0, %v1587
        %1589 = vmatmul.bf16.gmra.mxu0 %v1356
        %v1590 = vpop.f32.mrf.mxu0
        %v1591 = vadd.f32 0.0, %v1590
        %v1592 = vpop.f32.mrf.mxu0
        %v1593 = vadd.f32 0.0, %v1592
        %1594 = vdwg.mxu0
        %v1599 = vunpack.c.l.b16 %v1275
        %v1600 = vunpack.c.l.b16 %v1276
        %v1601 = vunpack.c.l.b16 %v1277
        %v1602 = vunpack.c.l.b16 %v1278
        %v1603 = vpack.c.b16 %v1600, %v1599
        %v1604 = vpack.c.b16 %v1602, %v1601
        %v1639 = vunpack.c.l.b16 %v1279
        %v1640 = vunpack.c.h.b16 %v1279
        %v1641 = vunpack.c.l.b16 %v1280
        %v1642 = vunpack.c.h.b16 %v1280
        %v1643 = vunpack.c.l.b16 %v1281
        %v1644 = vunpack.c.h.b16 %v1281
        %v1645 = vunpack.c.l.b16 %v1282
        %v1646 = vunpack.c.h.b16 %v1282
        %v1647 = vunpack.c.l.b16 %v1283
        %v1648 = vunpack.c.h.b16 %v1283
        %v1649 = vunpack.c.l.b16 %v1284
        %v1650 = vunpack.c.h.b16 %v1284
        %v1651 = vunpack.c.l.b16 %v1285
        %v1652 = vunpack.c.h.b16 %v1285
        %v1653 = vunpack.c.l.b16 %v1286
        %v1654 = vunpack.c.h.b16 %v1286
        %v1655 = vunpack.c.l.b16 %v1287
        %v1656 = vunpack.c.h.b16 %v1287
        %v1657 = vunpack.c.l.b16 %v1288
        %v1658 = vunpack.c.h.b16 %v1288
        %v1659 = vunpack.c.l.b16 %v1289
        %v1660 = vunpack.c.h.b16 %v1289
        %v1661 = vunpack.c.l.b16 %v1290
        %v1662 = vunpack.c.h.b16 %v1290
        %v1663 = vunpack.c.l.b16 %v1291
        %v1664 = vunpack.c.h.b16 %v1291
        %v1665 = vunpack.c.l.b16 %v1292
        %v1666 = vunpack.c.h.b16 %v1292
        %v1667 = vunpack.c.l.b16 %v1293
        %v1668 = vunpack.c.h.b16 %v1293
        %v1669 = vunpack.c.l.b16 %v1294
        %v1670 = vunpack.c.h.b16 %v1294
        %v1671 = vunpack.c.l.b16 %v1295
        %v1672 = vunpack.c.h.b16 %v1295
        %v1673 = vunpack.c.l.b16 %v1296
        %v1674 = vunpack.c.h.b16 %v1296
        %v1675 = vunpack.c.l.b16 %v1297
        %v1676 = vunpack.c.h.b16 %v1297
        %v1677 = vunpack.c.l.b16 %v1298
        %v1678 = vunpack.c.h.b16 %v1298
        %v1679 = vunpack.c.l.b16 %v1299
        %v1680 = vunpack.c.h.b16 %v1299
        %v1681 = vunpack.c.l.b16 %v1300
        %v1682 = vunpack.c.h.b16 %v1300
        %v1683 = vunpack.c.l.b16 %v1301
        %v1684 = vunpack.c.h.b16 %v1301
        %v1685 = vunpack.c.l.b16 %v1302
        %v1686 = vunpack.c.h.b16 %v1302
        %v1687 = vunpack.c.l.b16 %v1303
        %v1688 = vunpack.c.h.b16 %v1303
        %v1689 = vunpack.c.l.b16 %v1304
        %v1690 = vunpack.c.h.b16 %v1304
        %v1691 = vunpack.c.l.b16 %v1305
        %v1692 = vunpack.c.h.b16 %v1305
        %v1693 = vunpack.c.l.b16 %v1306
        %v1694 = vunpack.c.h.b16 %v1306
        %v1695 = vunpack.c.l.b16 %v1307
        %v1696 = vunpack.c.h.b16 %v1307
        %v1697 = vunpack.c.l.b16 %v1308
        %v1698 = vunpack.c.h.b16 %v1308
        %v1699 = vunpack.c.l.b16 %v1309
        %v1700 = vunpack.c.h.b16 %v1309
        %v1701 = vunpack.c.l.b16 %v1310
        %v1702 = vunpack.c.h.b16 %v1310
        %v1703 = vpack.c.b16 %v1643, %v1639
        %v1704 = vpack.c.b16 %v1644, %v1640
        %v1705 = vpack.c.b16 %v1645, %v1641
        %v1706 = vpack.c.b16 %v1646, %v1642
        %v1707 = vpack.c.b16 %v1651, %v1647
        %v1708 = vpack.c.b16 %v1652, %v1648
        %v1709 = vpack.c.b16 %v1653, %v1649
        %v1710 = vpack.c.b16 %v1654, %v1650
        %v1711 = vpack.c.b16 %v1659, %v1655
        %v1712 = vpack.c.b16 %v1660, %v1656
        %v1713 = vpack.c.b16 %v1661, %v1657
        %v1714 = vpack.c.b16 %v1662, %v1658
        %v1715 = vpack.c.b16 %v1667, %v1663
        %v1716 = vpack.c.b16 %v1668, %v1664
        %v1717 = vpack.c.b16 %v1669, %v1665
        %v1718 = vpack.c.b16 %v1670, %v1666
        %v1719 = vpack.c.b16 %v1675, %v1671
        %v1720 = vpack.c.b16 %v1676, %v1672
        %v1721 = vpack.c.b16 %v1677, %v1673
        %v1722 = vpack.c.b16 %v1678, %v1674
        %v1723 = vpack.c.b16 %v1683, %v1679
        %v1724 = vpack.c.b16 %v1684, %v1680
        %v1725 = vpack.c.b16 %v1685, %v1681
        %v1726 = vpack.c.b16 %v1686, %v1682
        %v1727 = vpack.c.b16 %v1691, %v1687
        %v1728 = vpack.c.b16 %v1692, %v1688
        %v1729 = vpack.c.b16 %v1693, %v1689
        %v1730 = vpack.c.b16 %v1694, %v1690
        %v1731 = vpack.c.b16 %v1699, %v1695
        %v1732 = vpack.c.b16 %v1700, %v1696
        %v1733 = vpack.c.b16 %v1701, %v1697
        %v1734 = vpack.c.b16 %v1702, %v1698
        %1767 = vmatpush.bf16.msra.mxu0 %v1731
        %1768 = vmatpush.bf16.msra.mxu0 %v1727
        %1769 = vmatpush.bf16.msra.mxu0 %v1723
        %1770 = vmatpush.bf16.msra.mxu0 %v1719
        %1771 = vmatpush.bf16.msra.mxu0 %v1715
        %1772 = vmatpush.bf16.msra.mxu0 %v1711
        %1773 = vmatpush.bf16.msra.mxu0 %v1707
        %1774 = vmatpush.bf16.msra.mxu0 %v1703
        %1775 = vmatmul.bf16.gmra.mxu0 %v1603
        %v1776 = vpop.f32.mrf.mxu0
        %v1777 = vadd.f32 %v1529, %v1776
        %v1778 = vpop.f32.mrf.mxu0
        %v1779 = vadd.f32 %v1531, %v1778
        %1780 = vmatmul.bf16.gmra.mxu0 %v1604
        %v1781 = vpop.f32.mrf.mxu0
        %v1782 = vadd.f32 %v1534, %v1781
        %v1783 = vpop.f32.mrf.mxu0
        %v1784 = vadd.f32 %v1536, %v1783
        %1785 = vdwg.mxu0
        %1786 = vmatpush.bf16.msra.mxu0 %v1732
        %1787 = vmatpush.bf16.msra.mxu0 %v1728
        %1788 = vmatpush.bf16.msra.mxu0 %v1724
        %1789 = vmatpush.bf16.msra.mxu0 %v1720
        %1790 = vmatpush.bf16.msra.mxu0 %v1716
        %1791 = vmatpush.bf16.msra.mxu0 %v1712
        %1792 = vmatpush.bf16.msra.mxu0 %v1708
        %1793 = vmatpush.bf16.msra.mxu0 %v1704
        %1794 = vmatmul.bf16.gmra.mxu0 %v1603
        %v1795 = vpop.f32.mrf.mxu0
        %v1796 = vadd.f32 %v1548, %v1795
        %v1797 = vpop.f32.mrf.mxu0
        %v1798 = vadd.f32 %v1550, %v1797
        %1799 = vmatmul.bf16.gmra.mxu0 %v1604
        %v1800 = vpop.f32.mrf.mxu0
        %v1801 = vadd.f32 %v1553, %v1800
        %v1802 = vpop.f32.mrf.mxu0
        %v1803 = vadd.f32 %v1555, %v1802
        %1804 = vdwg.mxu0
        %1805 = vmatpush.bf16.msra.mxu0 %v1733
        %1806 = vmatpush.bf16.msra.mxu0 %v1729
        %1807 = vmatpush.bf16.msra.mxu0 %v1725
        %1808 = vmatpush.bf16.msra.mxu0 %v1721
        %1809 = vmatpush.bf16.msra.mxu0 %v1717
        %1810 = vmatpush.bf16.msra.mxu0 %v1713
        %1811 = vmatpush.bf16.msra.mxu0 %v1709
        %1812 = vmatpush.bf16.msra.mxu0 %v1705
        %1813 = vmatmul.bf16.gmra.mxu0 %v1603
        %v1814 = vpop.f32.mrf.mxu0
        %v1815 = vadd.f32 %v1567, %v1814
        %v1816 = vpop.f32.mrf.mxu0
        %v1817 = vadd.f32 %v1569, %v1816
        %1818 = vmatmul.bf16.gmra.mxu0 %v1604
        %v1819 = vpop.f32.mrf.mxu0
        %v1820 = vadd.f32 %v1572, %v1819
        %v1821 = vpop.f32.mrf.mxu0
        %v1822 = vadd.f32 %v1574, %v1821
        %1823 = vdwg.mxu0
        %1824 = vmatpush.bf16.msra.mxu0 %v1734
        %1825 = vmatpush.bf16.msra.mxu0 %v1730
        %1826 = vmatpush.bf16.msra.mxu0 %v1726
        %1827 = vmatpush.bf16.msra.mxu0 %v1722
        %1828 = vmatpush.bf16.msra.mxu0 %v1718
        %1829 = vmatpush.bf16.msra.mxu0 %v1714
        %1830 = vmatpush.bf16.msra.mxu0 %v1710
        %1831 = vmatpush.bf16.msra.mxu0 %v1706
        %1832 = vmatmul.bf16.gmra.mxu0 %v1603
        %v1833 = vpop.f32.mrf.mxu0
        %v1834 = vadd.f32 %v1586, %v1833
        %v1835 = vpop.f32.mrf.mxu0
        %v1836 = vadd.f32 %v1588, %v1835
        %1837 = vmatmul.bf16.gmra.mxu0 %v1604
        %v1838 = vpop.f32.mrf.mxu0
        %v1839 = vadd.f32 %v1591, %v1838
        %v1840 = vpop.f32.mrf.mxu0
        %v1841 = vadd.f32 %v1593, %v1840
        %1842 = vdwg.mxu0
        %v1843 = vld [vmem:[#allocation18] sm:$0xf]
        %v1845 = vperm.slane %v1843, 0
        %v1846 = vperm.slane %v1843, 1
        %v1847 = vperm.slane %v1843, 2
        %v1848 = vperm.slane %v1843, 3
        %v1853 = vadd.f32 %v1777, %v1845
        %v1854 = vadd.f32 %v1796, %v1846
        %v1855 = vadd.f32 %v1815, %v1847
        %v1856 = vadd.f32 %v1834, %v1848
        %v1857 = vadd.f32 %v1779, %v1845
        %v1858 = vadd.f32 %v1798, %v1846
        %v1859 = vadd.f32 %v1817, %v1847
        %v1860 = vadd.f32 %v1836, %v1848
        %v1861 = vadd.f32 %v1782, %v1845
        %v1862 = vadd.f32 %v1801, %v1846
        %v1863 = vadd.f32 %v1820, %v1847
        %v1864 = vadd.f32 %v1839, %v1848
        %v1865 = vadd.f32 %v1784, %v1845
        %v1866 = vadd.f32 %v1803, %v1846
        %v1867 = vadd.f32 %v1822, %v1847
        %v1868 = vadd.f32 %v1841, %v1848
        %1869 = vst [vmem:[#allocation3] sm:$0xff] %v1853
        %1870 = vst [vmem:[#allocation3 + $0x8] sm:$0xff] %v1854
        %1871 = vst [vmem:[#allocation3 + $0x10] sm:$0xff] %v1855
        %1872 = vst [vmem:[#allocation3 + $0x18] sm:$0xff] %v1856
        %1873 = vst [vmem:[#allocation3 + $0x20] sm:$0xff] %v1857
        %1874 = vst [vmem:[#allocation3 + $0x28] sm:$0xff] %v1858
        %1875 = vst [vmem:[#allocation3 + $0x30] sm:$0xff] %v1859
        %1876 = vst [vmem:[#allocation3 + $0x38] sm:$0xff] %v1860
        %1877 = vst [vmem:[#allocation3 + $0x40] sm:$0xff] %v1861
        %1878 = vst [vmem:[#allocation3 + $0x48] sm:$0xff] %v1862
        %1879 = vst [vmem:[#allocation3 + $0x50] sm:$0xff] %v1863
        %1880 = vst [vmem:[#allocation3 + $0x58] sm:$0xff] %v1864
        %1881 = vst [vmem:[#allocation3 + $0x60] sm:$0xff] %v1865
        %1882 = vst [vmem:[#allocation3 + $0x68] sm:$0xff] %v1866
        %1883 = vst [vmem:[#allocation3 + $0x70] sm:$0xff] %v1867
        %1884 = vst [vmem:[#allocation3 + $0x78] sm:$0xff] %v1868
        %v1885 = vld [vmem:[#allocation15] sm:$0xff]
        %v1886 = vld [vmem:[#allocation15 + $0x8] sm:$0xff]
        %v1887 = vld [vmem:[#allocation15 + $0x10] sm:$0xff]
        %v1888 = vld [vmem:[#allocation15 + $0x18] sm:$0xff]
        %v1889 = vld [vmem:[#allocation15 + $0x20] sm:$0xff]
        %v1890 = vld [vmem:[#allocation15 + $0x28] sm:$0xff]
        %v1891 = vld [vmem:[#allocation15 + $0x30] sm:$0xff]
        %v1892 = vld [vmem:[#allocation15 + $0x38] sm:$0xff]
        %v1893 = vld [vmem:[#allocation15 + $0x40] sm:$0xff]
        %v1894 = vld [vmem:[#allocation15 + $0x48] sm:$0xff]
        %v1895 = vld [vmem:[#allocation15 + $0x50] sm:$0xff]
        %v1896 = vld [vmem:[#allocation15 + $0x58] sm:$0xff]
        %v1897 = vld [vmem:[#allocation15 + $0x60] sm:$0xff]
        %v1898 = vld [vmem:[#allocation15 + $0x68] sm:$0xff]
        %v1899 = vld [vmem:[#allocation15 + $0x70] sm:$0xff]
        %v1900 = vld [vmem:[#allocation15 + $0x78] sm:$0xff]
        %v1901 = vld [vmem:[#allocation15 + $0x80] sm:$0xff]
        %v1902 = vld [vmem:[#allocation15 + $0x88] sm:$0xff]
        %v1903 = vld [vmem:[#allocation15 + $0x90] sm:$0xff]
        %v1904 = vld [vmem:[#allocation15 + $0x98] sm:$0xff]
        %v1905 = vld [vmem:[#allocation15 + $0xa0] sm:$0xff]
        %v1906 = vld [vmem:[#allocation15 + $0xa8] sm:$0xff]
        %v1907 = vld [vmem:[#allocation15 + $0xb0] sm:$0xff]
        %v1908 = vld [vmem:[#allocation15 + $0xb8] sm:$0xff]
        %v1909 = vld [vmem:[#allocation15 + $0xc0] sm:$0xff]
        %v1910 = vld [vmem:[#allocation15 + $0xc8] sm:$0xff]
        %v1911 = vld [vmem:[#allocation15 + $0xd0] sm:$0xff]
        %v1912 = vld [vmem:[#allocation15 + $0xd8] sm:$0xff]
        %v1913 = vld [vmem:[#allocation15 + $0xe0] sm:$0xff]
        %v1914 = vld [vmem:[#allocation15 + $0xe8] sm:$0xff]
        %v1915 = vld [vmem:[#allocation15 + $0xf0] sm:$0xff]
        %v1916 = vld [vmem:[#allocation15 + $0xf8] sm:$0xff]
        %v1917 = vld [vmem:[#allocation16] sm:$0xff]
        %v1918 = vld [vmem:[#allocation16 + $0x8] sm:$0xff]
        %v1919 = vld [vmem:[#allocation16 + $0x10] sm:$0xff]
        %v1920 = vld [vmem:[#allocation16 + $0x18] sm:$0xff]
        %v1921 = vld [vmem:[#allocation16 + $0x20] sm:$0xff]
        %v1922 = vld [vmem:[#allocation16 + $0x28] sm:$0xff]
        %v1923 = vld [vmem:[#allocation16 + $0x30] sm:$0xff]
        %v1924 = vld [vmem:[#allocation16 + $0x38] sm:$0xff]
        %v1925 = vld [vmem:[#allocation16 + $0x40] sm:$0xff]
        %v1926 = vld [vmem:[#allocation16 + $0x48] sm:$0xff]
        %v1927 = vld [vmem:[#allocation16 + $0x50] sm:$0xff]
        %v1928 = vld [vmem:[#allocation16 + $0x58] sm:$0xff]
        %v1929 = vld [vmem:[#allocation16 + $0x60] sm:$0xff]
        %v1930 = vld [vmem:[#allocation16 + $0x68] sm:$0xff]
        %v1931 = vld [vmem:[#allocation16 + $0x70] sm:$0xff]
        %v1932 = vld [vmem:[#allocation16 + $0x78] sm:$0xff]
        %v1933 = vld [vmem:[#allocation16 + $0x80] sm:$0xff]
        %v1934 = vld [vmem:[#allocation16 + $0x88] sm:$0xff]
        %v1935 = vld [vmem:[#allocation16 + $0x90] sm:$0xff]
        %v1936 = vld [vmem:[#allocation16 + $0x98] sm:$0xff]
        %v1937 = vld [vmem:[#allocation16 + $0xa0] sm:$0xff]
        %v1938 = vld [vmem:[#allocation16 + $0xa8] sm:$0xff]
        %v1939 = vld [vmem:[#allocation16 + $0xb0] sm:$0xff]
        %v1940 = vld [vmem:[#allocation16 + $0xb8] sm:$0xff]
        %v1941 = vld [vmem:[#allocation16 + $0xc0] sm:$0xff]
        %v1942 = vld [vmem:[#allocation16 + $0xc8] sm:$0xff]
        %v1943 = vld [vmem:[#allocation16 + $0xd0] sm:$0xff]
        %v1944 = vld [vmem:[#allocation16 + $0xd8] sm:$0xff]
        %v1945 = vld [vmem:[#allocation16 + $0xe0] sm:$0xff]
        %v1946 = vld [vmem:[#allocation16 + $0xe8] sm:$0xff]
        %v1947 = vld [vmem:[#allocation16 + $0xf0] sm:$0xff]
        %v1948 = vld [vmem:[#allocation16 + $0xf8] sm:$0xff]
        %v1949 = vld [vmem:[#allocation4] sm:$0xff]
        %v1950 = vld [vmem:[#allocation5] sm:$0xff]
        %v1951 = vld [vmem:[#allocation6] sm:$0xff]
        %v1952 = vld [vmem:[#allocation7] sm:$0xff]
        %v1953 = vld [vmem:[#allocation2] sm:$0xff]
        %v1954 = vld [vmem:[#allocation2 + $0x8] sm:$0xff]
        %v1955 = vld [vmem:[#allocation2 + $0x10] sm:$0xff]
        %v1956 = vld [vmem:[#allocation2 + $0x18] sm:$0xff]
        %v1957 = vpack.c.bf16 %v1949, %v1949
        %v1990 = vunpack.c.l.b16 %v1885
        %v1991 = vunpack.c.h.b16 %v1885
        %v1992 = vunpack.c.l.b16 %v1886
        %v1993 = vunpack.c.h.b16 %v1886
        %v1994 = vunpack.c.l.b16 %v1887
        %v1995 = vunpack.c.h.b16 %v1887
        %v1996 = vunpack.c.l.b16 %v1888
        %v1997 = vunpack.c.h.b16 %v1888
        %v1998 = vunpack.c.l.b16 %v1889
        %v1999 = vunpack.c.h.b16 %v1889
        %v2000 = vunpack.c.l.b16 %v1890
        %v2001 = vunpack.c.h.b16 %v1890
        %v2002 = vunpack.c.l.b16 %v1891
        %v2003 = vunpack.c.h.b16 %v1891
        %v2004 = vunpack.c.l.b16 %v1892
        %v2005 = vunpack.c.h.b16 %v1892
        %v2006 = vunpack.c.l.b16 %v1893
        %v2007 = vunpack.c.h.b16 %v1893
        %v2008 = vunpack.c.l.b16 %v1894
        %v2009 = vunpack.c.h.b16 %v1894
        %v2010 = vunpack.c.l.b16 %v1895
        %v2011 = vunpack.c.h.b16 %v1895
        %v2012 = vunpack.c.l.b16 %v1896
        %v2013 = vunpack.c.h.b16 %v1896
        %v2014 = vunpack.c.l.b16 %v1897
        %v2015 = vunpack.c.h.b16 %v1897
        %v2016 = vunpack.c.l.b16 %v1898
        %v2017 = vunpack.c.h.b16 %v1898
        %v2018 = vunpack.c.l.b16 %v1899
        %v2019 = vunpack.c.h.b16 %v1899
        %v2020 = vunpack.c.l.b16 %v1900
        %v2021 = vunpack.c.h.b16 %v1900
        %v2022 = vunpack.c.l.b16 %v1901
        %v2023 = vunpack.c.h.b16 %v1901
        %v2024 = vunpack.c.l.b16 %v1902
        %v2025 = vunpack.c.h.b16 %v1902
        %v2026 = vunpack.c.l.b16 %v1903
        %v2027 = vunpack.c.h.b16 %v1903
        %v2028 = vunpack.c.l.b16 %v1904
        %v2029 = vunpack.c.h.b16 %v1904
        %v2030 = vunpack.c.l.b16 %v1905
        %v2031 = vunpack.c.h.b16 %v1905
        %v2032 = vunpack.c.l.b16 %v1906
        %v2033 = vunpack.c.h.b16 %v1906
        %v2034 = vunpack.c.l.b16 %v1907
        %v2035 = vunpack.c.h.b16 %v1907
        %v2036 = vunpack.c.l.b16 %v1908
        %v2037 = vunpack.c.h.b16 %v1908
        %v2038 = vunpack.c.l.b16 %v1909
        %v2039 = vunpack.c.h.b16 %v1909
        %v2040 = vunpack.c.l.b16 %v1910
        %v2041 = vunpack.c.h.b16 %v1910
        %v2042 = vunpack.c.l.b16 %v1911
        %v2043 = vunpack.c.h.b16 %v1911
        %v2044 = vunpack.c.l.b16 %v1912
        %v2045 = vunpack.c.h.b16 %v1912
        %v2046 = vunpack.c.l.b16 %v1913
        %v2047 = vunpack.c.h.b16 %v1913
        %v2048 = vunpack.c.l.b16 %v1914
        %v2049 = vunpack.c.h.b16 %v1914
        %v2050 = vunpack.c.l.b16 %v1915
        %v2051 = vunpack.c.h.b16 %v1915
        %v2052 = vunpack.c.l.b16 %v1916
        %v2053 = vunpack.c.h.b16 %v1916
        %v2054 = vpack.c.b16 %v1994, %v1990
        %v2055 = vpack.c.b16 %v1995, %v1991
        %v2056 = vpack.c.b16 %v1996, %v1992
        %v2057 = vpack.c.b16 %v1997, %v1993
        %v2058 = vpack.c.b16 %v2002, %v1998
        %v2059 = vpack.c.b16 %v2003, %v1999
        %v2060 = vpack.c.b16 %v2004, %v2000
        %v2061 = vpack.c.b16 %v2005, %v2001
        %v2062 = vpack.c.b16 %v2010, %v2006
        %v2063 = vpack.c.b16 %v2011, %v2007
        %v2064 = vpack.c.b16 %v2012, %v2008
        %v2065 = vpack.c.b16 %v2013, %v2009
        %v2066 = vpack.c.b16 %v2018, %v2014
        %v2067 = vpack.c.b16 %v2019, %v2015
        %v2068 = vpack.c.b16 %v2020, %v2016
        %v2069 = vpack.c.b16 %v2021, %v2017
        %v2070 = vpack.c.b16 %v2026, %v2022
        %v2071 = vpack.c.b16 %v2027, %v2023
        %v2072 = vpack.c.b16 %v2028, %v2024
        %v2073 = vpack.c.b16 %v2029, %v2025
        %v2074 = vpack.c.b16 %v2034, %v2030
        %v2075 = vpack.c.b16 %v2035, %v2031
        %v2076 = vpack.c.b16 %v2036, %v2032
        %v2077 = vpack.c.b16 %v2037, %v2033
        %v2078 = vpack.c.b16 %v2042, %v2038
        %v2079 = vpack.c.b16 %v2043, %v2039
        %v2080 = vpack.c.b16 %v2044, %v2040
        %v2081 = vpack.c.b16 %v2045, %v2041
        %v2082 = vpack.c.b16 %v2050, %v2046
        %v2083 = vpack.c.b16 %v2051, %v2047
        %v2084 = vpack.c.b16 %v2052, %v2048
        %v2085 = vpack.c.b16 %v2053, %v2049
        %2118 = vmatpush.bf16.msra.mxu0 %v2082
        %2119 = vmatpush.bf16.msra.mxu0 %v2078
        %2120 = vmatpush.bf16.msra.mxu0 %v2074
        %2121 = vmatpush.bf16.msra.mxu0 %v2070
        %2122 = vmatpush.bf16.msra.mxu0 %v2066
        %2123 = vmatpush.bf16.msra.mxu0 %v2062
        %2124 = vmatpush.bf16.msra.mxu0 %v2058
        %2125 = vmatpush.bf16.msra.mxu0 %v2054
        %2126 = vmatmul.bf16.gmra.mxu0 %v1957
        %v2127 = vpop.f32.mrf.mxu0
        %v2128 = vadd.f32 0.0, %v2127
        %v2129 = vpop.f32.mrf.mxu0
        %2130 = vdwg.mxu0
        %2131 = vmatpush.bf16.msra.mxu0 %v2083
        %2132 = vmatpush.bf16.msra.mxu0 %v2079
        %2133 = vmatpush.bf16.msra.mxu0 %v2075
        %2134 = vmatpush.bf16.msra.mxu0 %v2071
        %2135 = vmatpush.bf16.msra.mxu0 %v2067
        %2136 = vmatpush.bf16.msra.mxu0 %v2063
        %2137 = vmatpush.bf16.msra.mxu0 %v2059
        %2138 = vmatpush.bf16.msra.mxu0 %v2055
        %2139 = vmatmul.bf16.gmra.mxu0 %v1957
        %v2140 = vpop.f32.mrf.mxu0
        %v2141 = vadd.f32 0.0, %v2140
        %v2142 = vpop.f32.mrf.mxu0
        %2143 = vdwg.mxu0
        %2144 = vmatpush.bf16.msra.mxu0 %v2084
        %2145 = vmatpush.bf16.msra.mxu0 %v2080
        %2146 = vmatpush.bf16.msra.mxu0 %v2076
        %2147 = vmatpush.bf16.msra.mxu0 %v2072
        %2148 = vmatpush.bf16.msra.mxu0 %v2068
        %2149 = vmatpush.bf16.msra.mxu0 %v2064
        %2150 = vmatpush.bf16.msra.mxu0 %v2060
        %2151 = vmatpush.bf16.msra.mxu0 %v2056
        %2152 = vmatmul.bf16.gmra.mxu0 %v1957
        %v2153 = vpop.f32.mrf.mxu0
        %v2154 = vadd.f32 0.0, %v2153
        %v2155 = vpop.f32.mrf.mxu0
        %2156 = vdwg.mxu0
        %2157 = vmatpush.bf16.msra.mxu0 %v2085
        %2158 = vmatpush.bf16.msra.mxu0 %v2081
        %2159 = vmatpush.bf16.msra.mxu0 %v2077
        %2160 = vmatpush.bf16.msra.mxu0 %v2073
        %2161 = vmatpush.bf16.msra.mxu0 %v2069
        %2162 = vmatpush.bf16.msra.mxu0 %v2065
        %2163 = vmatpush.bf16.msra.mxu0 %v2061
        %2164 = vmatpush.bf16.msra.mxu0 %v2057
        %2165 = vmatmul.bf16.gmra.mxu0 %v1957
        %v2166 = vpop.f32.mrf.mxu0
        %v2167 = vadd.f32 0.0, %v2166
        %v2168 = vpop.f32.mrf.mxu0
        %2169 = vdwg.mxu0
        %v2170 = vadd.f32 %v1953, %v2128
        %v2171 = vadd.f32 %v1954, %v2141
        %v2172 = vadd.f32 %v1955, %v2154
        %v2173 = vadd.f32 %v1956, %v2167
        %v2174 = vmul.f32 %v2170, 0.5
        %v2175 = vtanh.pop %v2174
        %v2176 = vadd.f32 %v2175, 1.0
        %v2177 = vmul.f32 %v2176, 0.5
        %v2178 = vmul.f32 %v2171, 0.5
        %v2179 = vtanh.pop %v2178
        %v2180 = vadd.f32 %v2179, 1.0
        %v2181 = vmul.f32 %v2180, 0.5
        %v2182 = vtanh.pop %v2172
        %v2183 = vmul.f32 %v2173, 0.5
        %v2184 = vtanh.pop %v2183
        %v2185 = vadd.f32 %v2184, 1.0
        %v2186 = vmul.f32 %v2185, 0.5
        %v2187 = vmul.f32 %v2181, %v1950
        %v2188 = vmul.f32 %v2177, %v2182
        %v2189 = vadd.f32 %v2187, %v2188
        %v2190 = vtanh.pop %v2189
        %v2191 = vmul.f32 %v2186, %v2190
        %v2192 = vpack.c.bf16 %v2191, %v2191
        %2193 = vst [vmem:[%s647] sm:$0xf] %v2192
        %s2194 = scalar_lea.vmem [#allocation3], 96
        %v2195 = vld [vmem:[%s2194] sm:$0xff]
        %v2196 = vld [vmem:[%s2194 + $0x8] sm:$0xff]
        %v2197 = vld [vmem:[%s2194 + $0x10] sm:$0xff]
        %v2198 = vld [vmem:[%s2194 + $0x18] sm:$0xff]
        %v2199 = vpack.c.bf16 %v1951, %v1951
        %v2232 = vunpack.c.l.b16 %v1917
        %v2233 = vunpack.c.h.b16 %v1917
        %v2234 = vunpack.c.l.b16 %v1918
        %v2235 = vunpack.c.h.b16 %v1918
        %v2236 = vunpack.c.l.b16 %v1919
        %v2237 = vunpack.c.h.b16 %v1919
        %v2238 = vunpack.c.l.b16 %v1920
        %v2239 = vunpack.c.h.b16 %v1920
        %v2240 = vunpack.c.l.b16 %v1921
        %v2241 = vunpack.c.h.b16 %v1921
        %v2242 = vunpack.c.l.b16 %v1922
        %v2243 = vunpack.c.h.b16 %v1922
        %v2244 = vunpack.c.l.b16 %v1923
        %v2245 = vunpack.c.h.b16 %v1923
        %v2246 = vunpack.c.l.b16 %v1924
        %v2247 = vunpack.c.h.b16 %v1924
        %v2248 = vunpack.c.l.b16 %v1925
        %v2249 = vunpack.c.h.b16 %v1925
        %v2250 = vunpack.c.l.b16 %v1926
        %v2251 = vunpack.c.h.b16 %v1926
        %v2252 = vunpack.c.l.b16 %v1927
        %v2253 = vunpack.c.h.b16 %v1927
        %v2254 = vunpack.c.l.b16 %v1928
        %v2255 = vunpack.c.h.b16 %v1928
        %v2256 = vunpack.c.l.b16 %v1929
        %v2257 = vunpack.c.h.b16 %v1929
        %v2258 = vunpack.c.l.b16 %v1930
        %v2259 = vunpack.c.h.b16 %v1930
        %v2260 = vunpack.c.l.b16 %v1931
        %v2261 = vunpack.c.h.b16 %v1931
        %v2262 = vunpack.c.l.b16 %v1932
        %v2263 = vunpack.c.h.b16 %v1932
        %v2264 = vunpack.c.l.b16 %v1933
        %v2265 = vunpack.c.h.b16 %v1933
        %v2266 = vunpack.c.l.b16 %v1934
        %v2267 = vunpack.c.h.b16 %v1934
        %v2268 = vunpack.c.l.b16 %v1935
        %v2269 = vunpack.c.h.b16 %v1935
        %v2270 = vunpack.c.l.b16 %v1936
        %v2271 = vunpack.c.h.b16 %v1936
        %v2272 = vunpack.c.l.b16 %v1937
        %v2273 = vunpack.c.h.b16 %v1937
        %v2274 = vunpack.c.l.b16 %v1938
        %v2275 = vunpack.c.h.b16 %v1938
        %v2276 = vunpack.c.l.b16 %v1939
        %v2277 = vunpack.c.h.b16 %v1939
        %v2278 = vunpack.c.l.b16 %v1940
        %v2279 = vunpack.c.h.b16 %v1940
        %v2280 = vunpack.c.l.b16 %v1941
        %v2281 = vunpack.c.h.b16 %v1941
        %v2282 = vunpack.c.l.b16 %v1942
        %v2283 = vunpack.c.h.b16 %v1942
        %v2284 = vunpack.c.l.b16 %v1943
        %v2285 = vunpack.c.h.b16 %v1943
        %v2286 = vunpack.c.l.b16 %v1944
        %v2287 = vunpack.c.h.b16 %v1944
        %v2288 = vunpack.c.l.b16 %v1945
        %v2289 = vunpack.c.h.b16 %v1945
        %v2290 = vunpack.c.l.b16 %v1946
        %v2291 = vunpack.c.h.b16 %v1946
        %v2292 = vunpack.c.l.b16 %v1947
        %v2293 = vunpack.c.h.b16 %v1947
        %v2294 = vunpack.c.l.b16 %v1948
        %v2295 = vunpack.c.h.b16 %v1948
        %v2296 = vpack.c.b16 %v2236, %v2232
        %v2297 = vpack.c.b16 %v2237, %v2233
        %v2298 = vpack.c.b16 %v2238, %v2234
        %v2299 = vpack.c.b16 %v2239, %v2235
        %v2300 = vpack.c.b16 %v2244, %v2240
        %v2301 = vpack.c.b16 %v2245, %v2241
        %v2302 = vpack.c.b16 %v2246, %v2242
        %v2303 = vpack.c.b16 %v2247, %v2243
        %v2304 = vpack.c.b16 %v2252, %v2248
        %v2305 = vpack.c.b16 %v2253, %v2249
        %v2306 = vpack.c.b16 %v2254, %v2250
        %v2307 = vpack.c.b16 %v2255, %v2251
        %v2308 = vpack.c.b16 %v2260, %v2256
        %v2309 = vpack.c.b16 %v2261, %v2257
        %v2310 = vpack.c.b16 %v2262, %v2258
        %v2311 = vpack.c.b16 %v2263, %v2259
        %v2312 = vpack.c.b16 %v2268, %v2264
        %v2313 = vpack.c.b16 %v2269, %v2265
        %v2314 = vpack.c.b16 %v2270, %v2266
        %v2315 = vpack.c.b16 %v2271, %v2267
        %v2316 = vpack.c.b16 %v2276, %v2272
        %v2317 = vpack.c.b16 %v2277, %v2273
        %v2318 = vpack.c.b16 %v2278, %v2274
        %v2319 = vpack.c.b16 %v2279, %v2275
        %v2320 = vpack.c.b16 %v2284, %v2280
        %v2321 = vpack.c.b16 %v2285, %v2281
        %v2322 = vpack.c.b16 %v2286, %v2282
        %v2323 = vpack.c.b16 %v2287, %v2283
        %v2324 = vpack.c.b16 %v2292, %v2288
        %v2325 = vpack.c.b16 %v2293, %v2289
        %v2326 = vpack.c.b16 %v2294, %v2290
        %v2327 = vpack.c.b16 %v2295, %v2291
        %2360 = vmatpush.bf16.msra.mxu0 %v2324
        %2361 = vmatpush.bf16.msra.mxu0 %v2320
        %2362 = vmatpush.bf16.msra.mxu0 %v2316
        %2363 = vmatpush.bf16.msra.mxu0 %v2312
        %2364 = vmatpush.bf16.msra.mxu0 %v2308
        %2365 = vmatpush.bf16.msra.mxu0 %v2304
        %2366 = vmatpush.bf16.msra.mxu0 %v2300
        %2367 = vmatpush.bf16.msra.mxu0 %v2296
        %2368 = vmatmul.bf16.gmra.mxu0 %v2199
        %v2369 = vpop.f32.mrf.mxu0
        %v2370 = vadd.f32 0.0, %v2369
        %v2371 = vpop.f32.mrf.mxu0
        %2372 = vdwg.mxu0
        %2373 = vmatpush.bf16.msra.mxu0 %v2325
        %2374 = vmatpush.bf16.msra.mxu0 %v2321
        %2375 = vmatpush.bf16.msra.mxu0 %v2317
        %2376 = vmatpush.bf16.msra.mxu0 %v2313
        %2377 = vmatpush.bf16.msra.mxu0 %v2309
        %2378 = vmatpush.bf16.msra.mxu0 %v2305
        %2379 = vmatpush.bf16.msra.mxu0 %v2301
        %2380 = vmatpush.bf16.msra.mxu0 %v2297
        %2381 = vmatmul.bf16.gmra.mxu0 %v2199
        %v2382 = vpop.f32.mrf.mxu0
        %v2383 = vadd.f32 0.0, %v2382
        %v2384 = vpop.f32.mrf.mxu0
        %2385 = vdwg.mxu0
        %2386 = vmatpush.bf16.msra.mxu0 %v2326
        %2387 = vmatpush.bf16.msra.mxu0 %v2322
        %2388 = vmatpush.bf16.msra.mxu0 %v2318
        %2389 = vmatpush.bf16.msra.mxu0 %v2314
        %2390 = vmatpush.bf16.msra.mxu0 %v2310
        %2391 = vmatpush.bf16.msra.mxu0 %v2306
        %2392 = vmatpush.bf16.msra.mxu0 %v2302
        %2393 = vmatpush.bf16.msra.mxu0 %v2298
        %2394 = vmatmul.bf16.gmra.mxu0 %v2199
        %v2395 = vpop.f32.mrf.mxu0
        %v2396 = vadd.f32 0.0, %v2395
        %v2397 = vpop.f32.mrf.mxu0
        %2398 = vdwg.mxu0
        %2399 = vmatpush.bf16.msra.mxu0 %v2327
        %2400 = vmatpush.bf16.msra.mxu0 %v2323
        %2401 = vmatpush.bf16.msra.mxu0 %v2319
        %2402 = vmatpush.bf16.msra.mxu0 %v2315
        %2403 = vmatpush.bf16.msra.mxu0 %v2311
        %2404 = vmatpush.bf16.msra.mxu0 %v2307
        %2405 = vmatpush.bf16.msra.mxu0 %v2303
        %2406 = vmatpush.bf16.msra.mxu0 %v2299
        %2407 = vmatmul.bf16.gmra.mxu0 %v2199
        %v2408 = vpop.f32.mrf.mxu0
        %v2409 = vadd.f32 0.0, %v2408
        %v2410 = vpop.f32.mrf.mxu0
        %2411 = vdwg.mxu0
        %v2412 = vadd.f32 %v2195, %v2370
        %v2413 = vadd.f32 %v2196, %v2383
        %v2414 = vadd.f32 %v2197, %v2396
        %v2415 = vadd.f32 %v2198, %v2409
        %v2416 = vmul.f32 %v2412, 0.5
        %v2417 = vtanh.pop %v2416
        %v2418 = vadd.f32 %v2417, 1.0
        %v2419 = vmul.f32 %v2418, 0.5
        %v2420 = vmul.f32 %v2413, 0.5
        %v2421 = vtanh.pop %v2420
        %v2422 = vadd.f32 %v2421, 1.0
        %v2423 = vmul.f32 %v2422, 0.5
        %v2424 = vtanh.pop %v2414
        %v2425 = vmul.f32 %v2415, 0.5
        %v2426 = vtanh.pop %v2425
        %v2427 = vadd.f32 %v2426, 1.0
        %v2428 = vmul.f32 %v2427, 0.5
        %v2429 = vmul.f32 %v2423, %v1952
        %v2430 = vmul.f32 %v2419, %v2424
        %v2431 = vadd.f32 %v2429, %v2430
        %v2432 = vtanh.pop %v2431
        %v2433 = vmul.f32 %v2428, %v2432
        %v2434 = vpack.c.bf16 %v2433, %v2433
        %s2435 = scalar_lea.vmem %s654, 12
        %2436 = vst [vmem:[%s2435] sm:$0xf] %v2434
        %s2437 = scalar_lea.vmem [#allocation2], 32
        %v2438 = vld [vmem:[%s2437] sm:$0xff]
        %v2439 = vld [vmem:[%s2437 + $0x8] sm:$0xff]
        %v2440 = vld [vmem:[%s2437 + $0x10] sm:$0xff]
        %v2441 = vld [vmem:[%s2437 + $0x18] sm:$0xff]
        %2442 = vmatpush.bf16.msra.mxu0 %v2082
        %2443 = vmatpush.bf16.msra.mxu0 %v2078
        %2444 = vmatpush.bf16.msra.mxu0 %v2074
        %2445 = vmatpush.bf16.msra.mxu0 %v2070
        %2446 = vmatpush.bf16.msra.mxu0 %v2066
        %2447 = vmatpush.bf16.msra.mxu0 %v2062
        %2448 = vmatpush.bf16.msra.mxu0 %v2058
        %2449 = vmatpush.bf16.msra.mxu0 %v2054
        %2450 = vmatmul.bf16.gmra.mxu0 %v2192
        %v2451 = vpop.f32.mrf.mxu0
        %v2452 = vadd.f32 0.0, %v2451
        %v2453 = vpop.f32.mrf.mxu0
        %2454 = vdwg.mxu0
        %2455 = vmatpush.bf16.msra.mxu0 %v2083
        %2456 = vmatpush.bf16.msra.mxu0 %v2079
        %2457 = vmatpush.bf16.msra.mxu0 %v2075
        %2458 = vmatpush.bf16.msra.mxu0 %v2071
        %2459 = vmatpush.bf16.msra.mxu0 %v2067
        %2460 = vmatpush.bf16.msra.mxu0 %v2063
        %2461 = vmatpush.bf16.msra.mxu0 %v2059
        %2462 = vmatpush.bf16.msra.mxu0 %v2055
        %2463 = vmatmul.bf16.gmra.mxu0 %v2192
        %v2464 = vpop.f32.mrf.mxu0
        %v2465 = vadd.f32 0.0, %v2464
        %v2466 = vpop.f32.mrf.mxu0
        %2467 = vdwg.mxu0
        %2468 = vmatpush.bf16.msra.mxu0 %v2084
        %2469 = vmatpush.bf16.msra.mxu0 %v2080
        %2470 = vmatpush.bf16.msra.mxu0 %v2076
        %2471 = vmatpush.bf16.msra.mxu0 %v2072
        %2472 = vmatpush.bf16.msra.mxu0 %v2068
        %2473 = vmatpush.bf16.msra.mxu0 %v2064
        %2474 = vmatpush.bf16.msra.mxu0 %v2060
        %2475 = vmatpush.bf16.msra.mxu0 %v2056
        %2476 = vmatmul.bf16.gmra.mxu0 %v2192
        %v2477 = vpop.f32.mrf.mxu0
        %v2478 = vadd.f32 0.0, %v2477
        %v2479 = vpop.f32.mrf.mxu0
        %2480 = vdwg.mxu0
        %2481 = vmatpush.bf16.msra.mxu0 %v2085
        %2482 = vmatpush.bf16.msra.mxu0 %v2081
        %2483 = vmatpush.bf16.msra.mxu0 %v2077
        %2484 = vmatpush.bf16.msra.mxu0 %v2073
        %2485 = vmatpush.bf16.msra.mxu0 %v2069
        %2486 = vmatpush.bf16.msra.mxu0 %v2065
        %2487 = vmatpush.bf16.msra.mxu0 %v2061
        %2488 = vmatpush.bf16.msra.mxu0 %v2057
        %2489 = vmatmul.bf16.gmra.mxu0 %v2192
        %v2490 = vpop.f32.mrf.mxu0
        %v2491 = vadd.f32 0.0, %v2490
        %v2492 = vpop.f32.mrf.mxu0
        %2493 = vdwg.mxu0
        %v2494 = vadd.f32 %v2438, %v2452
        %v2495 = vadd.f32 %v2439, %v2465
        %v2496 = vadd.f32 %v2440, %v2478
        %v2497 = vadd.f32 %v2441, %v2491
        %v2498 = vmul.f32 %v2494, 0.5
        %v2499 = vtanh.pop %v2498
        %v2500 = vadd.f32 %v2499, 1.0
        %v2501 = vmul.f32 %v2500, 0.5
        %v2502 = vmul.f32 %v2495, 0.5
        %v2503 = vtanh.pop %v2502
        %v2504 = vadd.f32 %v2503, 1.0
        %v2505 = vmul.f32 %v2504, 0.5
        %v2506 = vtanh.pop %v2496
        %v2507 = vmul.f32 %v2497, 0.5
        %v2508 = vtanh.pop %v2507
        %v2509 = vadd.f32 %v2508, 1.0
        %v2510 = vmul.f32 %v2509, 0.5
        %v2511 = vmul.f32 %v2505, %v2189
        %v2512 = vmul.f32 %v2501, %v2506
        %v2513 = vadd.f32 %v2511, %v2512
        %v2514 = vtanh.pop %v2513
        %v2515 = vmul.f32 %v2510, %v2514
        %v2516 = vpack.c.bf16 %v2515, %v2515
        %s2517 = scalar_lea.vmem %s647, 4
        %2518 = vst [vmem:[%s2517] sm:$0xf] %v2516
        %s2519 = scalar_lea.vmem [#allocation3], 64
        %v2520 = vld [vmem:[%s2519] sm:$0xff]
        %v2521 = vld [vmem:[%s2519 + $0x8] sm:$0xff]
        %v2522 = vld [vmem:[%s2519 + $0x10] sm:$0xff]
        %v2523 = vld [vmem:[%s2519 + $0x18] sm:$0xff]
        %2524 = vmatpush.bf16.msra.mxu0 %v2324
        %2525 = vmatpush.bf16.msra.mxu0 %v2320
        %2526 = vmatpush.bf16.msra.mxu0 %v2316
        %2527 = vmatpush.bf16.msra.mxu0 %v2312
        %2528 = vmatpush.bf16.msra.mxu0 %v2308
        %2529 = vmatpush.bf16.msra.mxu0 %v2304
        %2530 = vmatpush.bf16.msra.mxu0 %v2300
        %2531 = vmatpush.bf16.msra.mxu0 %v2296
        %2532 = vmatmul.bf16.gmra.mxu0 %v2434
        %v2533 = vpop.f32.mrf.mxu0
        %v2534 = vadd.f32 0.0, %v2533
        %v2535 = vpop.f32.mrf.mxu0
        %2536 = vdwg.mxu0
        %2537 = vmatpush.bf16.msra.mxu0 %v2325
        %2538 = vmatpush.bf16.msra.mxu0 %v2321
        %2539 = vmatpush.bf16.msra.mxu0 %v2317
        %2540 = vmatpush.bf16.msra.mxu0 %v2313
        %2541 = vmatpush.bf16.msra.mxu0 %v2309
        %2542 = vmatpush.bf16.msra.mxu0 %v2305
        %2543 = vmatpush.bf16.msra.mxu0 %v2301
        %2544 = vmatpush.bf16.msra.mxu0 %v2297
        %2545 = vmatmul.bf16.gmra.mxu0 %v2434
        %v2546 = vpop.f32.mrf.mxu0
        %v2547 = vadd.f32 0.0, %v2546
        %v2548 = vpop.f32.mrf.mxu0
        %2549 = vdwg.mxu0
        %2550 = vmatpush.bf16.msra.mxu0 %v2326
        %2551 = vmatpush.bf16.msra.mxu0 %v2322
        %2552 = vmatpush.bf16.msra.mxu0 %v2318
        %2553 = vmatpush.bf16.msra.mxu0 %v2314
        %2554 = vmatpush.bf16.msra.mxu0 %v2310
        %2555 = vmatpush.bf16.msra.mxu0 %v2306
        %2556 = vmatpush.bf16.msra.mxu0 %v2302
        %2557 = vmatpush.bf16.msra.mxu0 %v2298
        %2558 = vmatmul.bf16.gmra.mxu0 %v2434
        %v2559 = vpop.f32.mrf.mxu0
        %v2560 = vadd.f32 0.0, %v2559
        %v2561 = vpop.f32.mrf.mxu0
        %2562 = vdwg.mxu0
        %2563 = vmatpush.bf16.msra.mxu0 %v2327
        %2564 = vmatpush.bf16.msra.mxu0 %v2323
        %2565 = vmatpush.bf16.msra.mxu0 %v2319
        %2566 = vmatpush.bf16.msra.mxu0 %v2315
        %2567 = vmatpush.bf16.msra.mxu0 %v2311
        %2568 = vmatpush.bf16.msra.mxu0 %v2307
        %2569 = vmatpush.bf16.msra.mxu0 %v2303
        %2570 = vmatpush.bf16.msra.mxu0 %v2299
        %2571 = vmatmul.bf16.gmra.mxu0 %v2434
        %v2572 = vpop.f32.mrf.mxu0
        %v2573 = vadd.f32 0.0, %v2572
        %v2574 = vpop.f32.mrf.mxu0
        %2575 = vdwg.mxu0
        %v2576 = vadd.f32 %v2520, %v2534
        %v2577 = vadd.f32 %v2521, %v2547
        %v2578 = vadd.f32 %v2522, %v2560
        %v2579 = vadd.f32 %v2523, %v2573
        %v2580 = vmul.f32 %v2576, 0.5
        %v2581 = vtanh.pop %v2580
        %v2582 = vadd.f32 %v2581, 1.0
        %v2583 = vmul.f32 %v2582, 0.5
        %v2584 = vmul.f32 %v2577, 0.5
        %v2585 = vtanh.pop %v2584
        %v2586 = vadd.f32 %v2585, 1.0
        %v2587 = vmul.f32 %v2586, 0.5
        %v2588 = vtanh.pop %v2578
        %v2589 = vmul.f32 %v2579, 0.5
        %v2590 = vtanh.pop %v2589
        %v2591 = vadd.f32 %v2590, 1.0
        %v2592 = vmul.f32 %v2591, 0.5
        %v2593 = vmul.f32 %v2587, %v2431
        %v2594 = vmul.f32 %v2583, %v2588
        %v2595 = vadd.f32 %v2593, %v2594
        %v2596 = vtanh.pop %v2595
        %v2597 = vmul.f32 %v2592, %v2596
        %v2598 = vpack.c.bf16 %v2597, %v2597
        %s2599 = scalar_lea.vmem %s654, 8
        %2600 = vst [vmem:[%s2599] sm:$0xf] %v2598
        %s2601 = scalar_lea.vmem [#allocation2], 64
        %v2602 = vld [vmem:[%s2601] sm:$0xff]
        %v2603 = vld [vmem:[%s2601 + $0x8] sm:$0xff]
        %v2604 = vld [vmem:[%s2601 + $0x10] sm:$0xff]
        %v2605 = vld [vmem:[%s2601 + $0x18] sm:$0xff]
        %2606 = vmatpush.bf16.msra.mxu0 %v2082
        %2607 = vmatpush.bf16.msra.mxu0 %v2078
        %2608 = vmatpush.bf16.msra.mxu0 %v2074
        %2609 = vmatpush.bf16.msra.mxu0 %v2070
        %2610 = vmatpush.bf16.msra.mxu0 %v2066
        %2611 = vmatpush.bf16.msra.mxu0 %v2062
        %2612 = vmatpush.bf16.msra.mxu0 %v2058
        %2613 = vmatpush.bf16.msra.mxu0 %v2054
        %2614 = vmatmul.bf16.gmra.mxu0 %v2516
        %v2615 = vpop.f32.mrf.mxu0
        %v2616 = vadd.f32 0.0, %v2615
        %v2617 = vpop.f32.mrf.mxu0
        %2618 = vdwg.mxu0
        %2619 = vmatpush.bf16.msra.mxu0 %v2083
        %2620 = vmatpush.bf16.msra.mxu0 %v2079
        %2621 = vmatpush.bf16.msra.mxu0 %v2075
        %2622 = vmatpush.bf16.msra.mxu0 %v2071
        %2623 = vmatpush.bf16.msra.mxu0 %v2067
        %2624 = vmatpush.bf16.msra.mxu0 %v2063
        %2625 = vmatpush.bf16.msra.mxu0 %v2059
        %2626 = vmatpush.bf16.msra.mxu0 %v2055
        %2627 = vmatmul.bf16.gmra.mxu0 %v2516
        %v2628 = vpop.f32.mrf.mxu0
        %v2629 = vadd.f32 0.0, %v2628
        %v2630 = vpop.f32.mrf.mxu0
        %2631 = vdwg.mxu0
        %2632 = vmatpush.bf16.msra.mxu0 %v2084
        %2633 = vmatpush.bf16.msra.mxu0 %v2080
        %2634 = vmatpush.bf16.msra.mxu0 %v2076
        %2635 = vmatpush.bf16.msra.mxu0 %v2072
        %2636 = vmatpush.bf16.msra.mxu0 %v2068
        %2637 = vmatpush.bf16.msra.mxu0 %v2064
        %2638 = vmatpush.bf16.msra.mxu0 %v2060
        %2639 = vmatpush.bf16.msra.mxu0 %v2056
        %2640 = vmatmul.bf16.gmra.mxu0 %v2516
        %v2641 = vpop.f32.mrf.mxu0
        %v2642 = vadd.f32 0.0, %v2641
        %v2643 = vpop.f32.mrf.mxu0
        %2644 = vdwg.mxu0
        %2645 = vmatpush.bf16.msra.mxu0 %v2085
        %2646 = vmatpush.bf16.msra.mxu0 %v2081
        %2647 = vmatpush.bf16.msra.mxu0 %v2077
        %2648 = vmatpush.bf16.msra.mxu0 %v2073
        %2649 = vmatpush.bf16.msra.mxu0 %v2069
        %2650 = vmatpush.bf16.msra.mxu0 %v2065
        %2651 = vmatpush.bf16.msra.mxu0 %v2061
        %2652 = vmatpush.bf16.msra.mxu0 %v2057
        %2653 = vmatmul.bf16.gmra.mxu0 %v2516
        %v2654 = vpop.f32.mrf.mxu0
        %v2655 = vadd.f32 0.0, %v2654
        %v2656 = vpop.f32.mrf.mxu0
        %2657 = vdwg.mxu0
        %v2658 = vadd.f32 %v2602, %v2616
        %v2659 = vadd.f32 %v2603, %v2629
        %v2660 = vadd.f32 %v2604, %v2642
        %v2661 = vadd.f32 %v2605, %v2655
        %v2662 = vmul.f32 %v2658, 0.5
        %v2663 = vtanh.pop %v2662
        %v2664 = vadd.f32 %v2663, 1.0
        %v2665 = vmul.f32 %v2664, 0.5
        %v2666 = vmul.f32 %v2659, 0.5
        %v2667 = vtanh.pop %v2666
        %v2668 = vadd.f32 %v2667, 1.0
        %v2669 = vmul.f32 %v2668, 0.5
        %v2670 = vtanh.pop %v2660
        %v2671 = vmul.f32 %v2661, 0.5
        %v2672 = vtanh.pop %v2671
        %v2673 = vadd.f32 %v2672, 1.0
        %v2674 = vmul.f32 %v2673, 0.5
        %v2675 = vmul.f32 %v2669, %v2513
        %v2676 = vmul.f32 %v2665, %v2670
        %v2677 = vadd.f32 %v2675, %v2676
        %v2678 = vtanh.pop %v2677
        %v2679 = vmul.f32 %v2674, %v2678
        %v2680 = vpack.c.bf16 %v2679, %v2679
        %s2681 = scalar_lea.vmem %s647, 8
        %2682 = vst [vmem:[%s2681] sm:$0xf] %v2680
        %s2683 = scalar_lea.vmem [#allocation3], 32
        %v2684 = vld [vmem:[%s2683] sm:$0xff]
        %v2685 = vld [vmem:[%s2683 + $0x8] sm:$0xff]
        %v2686 = vld [vmem:[%s2683 + $0x10] sm:$0xff]
        %v2687 = vld [vmem:[%s2683 + $0x18] sm:$0xff]
        %2688 = vmatpush.bf16.msra.mxu0 %v2324
        %2689 = vmatpush.bf16.msra.mxu0 %v2320
        %2690 = vmatpush.bf16.msra.mxu0 %v2316
        %2691 = vmatpush.bf16.msra.mxu0 %v2312
        %2692 = vmatpush.bf16.msra.mxu0 %v2308
        %2693 = vmatpush.bf16.msra.mxu0 %v2304
        %2694 = vmatpush.bf16.msra.mxu0 %v2300
        %2695 = vmatpush.bf16.msra.mxu0 %v2296
        %2696 = vmatmul.bf16.gmra.mxu0 %v2598
        %v2697 = vpop.f32.mrf.mxu0
        %v2698 = vadd.f32 0.0, %v2697
        %v2699 = vpop.f32.mrf.mxu0
        %2700 = vdwg.mxu0
        %2701 = vmatpush.bf16.msra.mxu0 %v2325
        %2702 = vmatpush.bf16.msra.mxu0 %v2321
        %2703 = vmatpush.bf16.msra.mxu0 %v2317
        %2704 = vmatpush.bf16.msra.mxu0 %v2313
        %2705 = vmatpush.bf16.msra.mxu0 %v2309
        %2706 = vmatpush.bf16.msra.mxu0 %v2305
        %2707 = vmatpush.bf16.msra.mxu0 %v2301
        %2708 = vmatpush.bf16.msra.mxu0 %v2297
        %2709 = vmatmul.bf16.gmra.mxu0 %v2598
        %v2710 = vpop.f32.mrf.mxu0
        %v2711 = vadd.f32 0.0, %v2710
        %v2712 = vpop.f32.mrf.mxu0
        %2713 = vdwg.mxu0
        %2714 = vmatpush.bf16.msra.mxu0 %v2326
        %2715 = vmatpush.bf16.msra.mxu0 %v2322
        %2716 = vmatpush.bf16.msra.mxu0 %v2318
        %2717 = vmatpush.bf16.msra.mxu0 %v2314
        %2718 = vmatpush.bf16.msra.mxu0 %v2310
        %2719 = vmatpush.bf16.msra.mxu0 %v2306
        %2720 = vmatpush.bf16.msra.mxu0 %v2302
        %2721 = vmatpush.bf16.msra.mxu0 %v2298
        %2722 = vmatmul.bf16.gmra.mxu0 %v2598
        %v2723 = vpop.f32.mrf.mxu0
        %v2724 = vadd.f32 0.0, %v2723
        %v2725 = vpop.f32.mrf.mxu0
        %2726 = vdwg.mxu0
        %2727 = vmatpush.bf16.msra.mxu0 %v2327
        %2728 = vmatpush.bf16.msra.mxu0 %v2323
        %2729 = vmatpush.bf16.msra.mxu0 %v2319
        %2730 = vmatpush.bf16.msra.mxu0 %v2315
        %2731 = vmatpush.bf16.msra.mxu0 %v2311
        %2732 = vmatpush.bf16.msra.mxu0 %v2307
        %2733 = vmatpush.bf16.msra.mxu0 %v2303
        %2734 = vmatpush.bf16.msra.mxu0 %v2299
        %2735 = vmatmul.bf16.gmra.mxu0 %v2598
        %v2736 = vpop.f32.mrf.mxu0
        %v2737 = vadd.f32 0.0, %v2736
        %v2738 = vpop.f32.mrf.mxu0
        %2739 = vdwg.mxu0
        %v2740 = vadd.f32 %v2684, %v2698
        %v2741 = vadd.f32 %v2685, %v2711
        %v2742 = vadd.f32 %v2686, %v2724
        %v2743 = vadd.f32 %v2687, %v2737
        %v2744 = vmul.f32 %v2740, 0.5
        %v2745 = vtanh.pop %v2744
        %v2746 = vadd.f32 %v2745, 1.0
        %v2747 = vmul.f32 %v2746, 0.5
        %v2748 = vmul.f32 %v2741, 0.5
        %v2749 = vtanh.pop %v2748
        %v2750 = vadd.f32 %v2749, 1.0
        %v2751 = vmul.f32 %v2750, 0.5
        %v2752 = vtanh.pop %v2742
        %v2753 = vmul.f32 %v2743, 0.5
        %v2754 = vtanh.pop %v2753
        %v2755 = vadd.f32 %v2754, 1.0
        %v2756 = vmul.f32 %v2755, 0.5
        %v2757 = vmul.f32 %v2751, %v2595
        %v2758 = vmul.f32 %v2747, %v2752
        %v2759 = vadd.f32 %v2757, %v2758
        %v2760 = vtanh.pop %v2759
        %v2761 = vmul.f32 %v2756, %v2760
        %v2762 = vpack.c.bf16 %v2761, %v2761
        %s2763 = scalar_lea.vmem %s654, 4
        %2764 = vst [vmem:[%s2763] sm:$0xf] %v2762
        %s2765 = scalar_lea.vmem [#allocation2], 96
        %v2766 = vld [vmem:[%s2765] sm:$0xff]
        %v2767 = vld [vmem:[%s2765 + $0x8] sm:$0xff]
        %v2768 = vld [vmem:[%s2765 + $0x10] sm:$0xff]
        %v2769 = vld [vmem:[%s2765 + $0x18] sm:$0xff]
        %2770 = vmatpush.bf16.msra.mxu0 %v2082
        %2771 = vmatpush.bf16.msra.mxu0 %v2078
        %2772 = vmatpush.bf16.msra.mxu0 %v2074
        %2773 = vmatpush.bf16.msra.mxu0 %v2070
        %2774 = vmatpush.bf16.msra.mxu0 %v2066
        %2775 = vmatpush.bf16.msra.mxu0 %v2062
        %2776 = vmatpush.bf16.msra.mxu0 %v2058
        %2777 = vmatpush.bf16.msra.mxu0 %v2054
        %2778 = vmatmul.bf16.gmra.mxu0 %v2680
        %v2779 = vpop.f32.mrf.mxu0
        %v2780 = vadd.f32 0.0, %v2779
        %v2781 = vpop.f32.mrf.mxu0
        %2782 = vdwg.mxu0
        %2783 = vmatpush.bf16.msra.mxu0 %v2083
        %2784 = vmatpush.bf16.msra.mxu0 %v2079
        %2785 = vmatpush.bf16.msra.mxu0 %v2075
        %2786 = vmatpush.bf16.msra.mxu0 %v2071
        %2787 = vmatpush.bf16.msra.mxu0 %v2067
        %2788 = vmatpush.bf16.msra.mxu0 %v2063
        %2789 = vmatpush.bf16.msra.mxu0 %v2059
        %2790 = vmatpush.bf16.msra.mxu0 %v2055
        %2791 = vmatmul.bf16.gmra.mxu0 %v2680
        %v2792 = vpop.f32.mrf.mxu0
        %v2793 = vadd.f32 0.0, %v2792
        %v2794 = vpop.f32.mrf.mxu0
        %2795 = vdwg.mxu0
        %2796 = vmatpush.bf16.msra.mxu0 %v2084
        %2797 = vmatpush.bf16.msra.mxu0 %v2080
        %2798 = vmatpush.bf16.msra.mxu0 %v2076
        %2799 = vmatpush.bf16.msra.mxu0 %v2072
        %2800 = vmatpush.bf16.msra.mxu0 %v2068
        %2801 = vmatpush.bf16.msra.mxu0 %v2064
        %2802 = vmatpush.bf16.msra.mxu0 %v2060
        %2803 = vmatpush.bf16.msra.mxu0 %v2056
        %2804 = vmatmul.bf16.gmra.mxu0 %v2680
        %v2805 = vpop.f32.mrf.mxu0
        %v2806 = vadd.f32 0.0, %v2805
        %v2807 = vpop.f32.mrf.mxu0
        %2808 = vdwg.mxu0
        %2809 = vmatpush.bf16.msra.mxu0 %v2085
        %2810 = vmatpush.bf16.msra.mxu0 %v2081
        %2811 = vmatpush.bf16.msra.mxu0 %v2077
        %2812 = vmatpush.bf16.msra.mxu0 %v2073
        %2813 = vmatpush.bf16.msra.mxu0 %v2069
        %2814 = vmatpush.bf16.msra.mxu0 %v2065
        %2815 = vmatpush.bf16.msra.mxu0 %v2061
        %2816 = vmatpush.bf16.msra.mxu0 %v2057
        %2817 = vmatmul.bf16.gmra.mxu0 %v2680
        %v2818 = vpop.f32.mrf.mxu0
        %v2819 = vadd.f32 0.0, %v2818
        %v2820 = vpop.f32.mrf.mxu0
        %2821 = vdwg.mxu0
        %v2822 = vadd.f32 %v2766, %v2780
        %v2823 = vadd.f32 %v2767, %v2793
        %v2824 = vadd.f32 %v2768, %v2806
        %v2825 = vadd.f32 %v2769, %v2819
        %v2826 = vmul.f32 %v2822, 0.5
        %v2827 = vtanh.pop %v2826
        %v2828 = vadd.f32 %v2827, 1.0
        %v2829 = vmul.f32 %v2828, 0.5
        %v2830 = vmul.f32 %v2823, 0.5
        %v2831 = vtanh.pop %v2830
        %v2832 = vadd.f32 %v2831, 1.0
        %v2833 = vmul.f32 %v2832, 0.5
        %v2834 = vtanh.pop %v2824
        %v2835 = vmul.f32 %v2825, 0.5
        %v2836 = vtanh.pop %v2835
        %v2837 = vadd.f32 %v2836, 1.0
        %v2838 = vmul.f32 %v2837, 0.5
        %v2839 = vmul.f32 %v2833, %v2677
        %v2840 = vmul.f32 %v2829, %v2834
        %v2841 = vadd.f32 %v2839, %v2840
        %v2842 = vtanh.pop %v2841
        %v2843 = vmul.f32 %v2838, %v2842
        %v2844 = vpack.c.bf16 %v2843, %v2843
        %s2845 = scalar_lea.vmem %s647, 12
        %2846 = vst [vmem:[%s2845] sm:$0xf] %v2844
        %v2847 = vld [vmem:[#allocation3] sm:$0xff]
        %v2848 = vld [vmem:[#allocation3 + $0x8] sm:$0xff]
        %v2849 = vld [vmem:[#allocation3 + $0x10] sm:$0xff]
        %v2850 = vld [vmem:[#allocation3 + $0x18] sm:$0xff]
        %2851 = vmatpush.bf16.msra.mxu0 %v2324
        %2852 = vmatpush.bf16.msra.mxu0 %v2320
        %2853 = vmatpush.bf16.msra.mxu0 %v2316
        %2854 = vmatpush.bf16.msra.mxu0 %v2312
        %2855 = vmatpush.bf16.msra.mxu0 %v2308
        %2856 = vmatpush.bf16.msra.mxu0 %v2304
        %2857 = vmatpush.bf16.msra.mxu0 %v2300
        %2858 = vmatpush.bf16.msra.mxu0 %v2296
        %2859 = vmatmul.bf16.gmra.mxu0 %v2762
        %v2860 = vpop.f32.mrf.mxu0
        %v2861 = vadd.f32 0.0, %v2860
        %v2862 = vpop.f32.mrf.mxu0
        %2863 = vdwg.mxu0
        %2864 = vmatpush.bf16.msra.mxu0 %v2325
        %2865 = vmatpush.bf16.msra.mxu0 %v2321
        %2866 = vmatpush.bf16.msra.mxu0 %v2317
        %2867 = vmatpush.bf16.msra.mxu0 %v2313
        %2868 = vmatpush.bf16.msra.mxu0 %v2309
        %2869 = vmatpush.bf16.msra.mxu0 %v2305
        %2870 = vmatpush.bf16.msra.mxu0 %v2301
        %2871 = vmatpush.bf16.msra.mxu0 %v2297
        %2872 = vmatmul.bf16.gmra.mxu0 %v2762
        %v2873 = vpop.f32.mrf.mxu0
        %v2874 = vadd.f32 0.0, %v2873
        %v2875 = vpop.f32.mrf.mxu0
        %2876 = vdwg.mxu0
        %2877 = vmatpush.bf16.msra.mxu0 %v2326
        %2878 = vmatpush.bf16.msra.mxu0 %v2322
        %2879 = vmatpush.bf16.msra.mxu0 %v2318
        %2880 = vmatpush.bf16.msra.mxu0 %v2314
        %2881 = vmatpush.bf16.msra.mxu0 %v2310
        %2882 = vmatpush.bf16.msra.mxu0 %v2306
        %2883 = vmatpush.bf16.msra.mxu0 %v2302
        %2884 = vmatpush.bf16.msra.mxu0 %v2298
        %2885 = vmatmul.bf16.gmra.mxu0 %v2762
        %v2886 = vpop.f32.mrf.mxu0
        %v2887 = vadd.f32 0.0, %v2886
        %v2888 = vpop.f32.mrf.mxu0
        %2889 = vdwg.mxu0
        %2890 = vmatpush.bf16.msra.mxu0 %v2327
        %2891 = vmatpush.bf16.msra.mxu0 %v2323
        %2892 = vmatpush.bf16.msra.mxu0 %v2319
        %2893 = vmatpush.bf16.msra.mxu0 %v2315
        %2894 = vmatpush.bf16.msra.mxu0 %v2311
        %2895 = vmatpush.bf16.msra.mxu0 %v2307
        %2896 = vmatpush.bf16.msra.mxu0 %v2303
        %2897 = vmatpush.bf16.msra.mxu0 %v2299
        %2898 = vmatmul.bf16.gmra.mxu0 %v2762
        %v2899 = vpop.f32.mrf.mxu0
        %v2900 = vadd.f32 0.0, %v2899
        %v2901 = vpop.f32.mrf.mxu0
        %2902 = vdwg.mxu0
        %v2903 = vadd.f32 %v2847, %v2861
        %v2904 = vadd.f32 %v2848, %v2874
        %v2905 = vadd.f32 %v2849, %v2887
        %v2906 = vadd.f32 %v2850, %v2900
        %v2907 = vmul.f32 %v2903, 0.5
        %v2908 = vtanh.pop %v2907
        %v2909 = vadd.f32 %v2908, 1.0
        %v2910 = vmul.f32 %v2909, 0.5
        %v2911 = vmul.f32 %v2904, 0.5
        %v2912 = vtanh.pop %v2911
        %v2913 = vadd.f32 %v2912, 1.0
        %v2914 = vmul.f32 %v2913, 0.5
        %v2915 = vtanh.pop %v2905
        %v2916 = vmul.f32 %v2906, 0.5
        %v2917 = vtanh.pop %v2916
        %v2918 = vadd.f32 %v2917, 1.0
        %v2919 = vmul.f32 %v2918, 0.5
        %v2920 = vmul.f32 %v2914, %v2759
        %v2921 = vmul.f32 %v2910, %v2915
        %v2922 = vadd.f32 %v2920, %v2921
        %v2923 = vtanh.pop %v2922
        %v2924 = vmul.f32 %v2919, %v2923
        %v2925 = vpack.c.bf16 %v2924, %v2924
        %2926 = vst [vmem:[%s654] sm:$0xf] %v2925
        %2927 = vst [vmem:[#allocation4] sm:$0xff] %v2843
        %2928 = vst [vmem:[#allocation5] sm:$0xff] %v2841
        %2929 = vst [vmem:[#allocation6] sm:$0xff] %v2924
        %2930 = vst [vmem:[#allocation7] sm:$0xff] %v2922
        %s2931 = smul.u32 4, %s29
        %p2932 = scmp.lt.s32.totalorder %s2931, 7
        %s2933 = scalar_select %p2932, %s2931, 7
        %s2934 = smul.addr %s2933, 4
        %s2935 = scalar_lea.vmem %s12, %s2934
        %s2936 = ssub.s32 1, %s29
        %s2937 = smul.u32 4, %s2936
        %p2938 = scmp.lt.s32.totalorder %s2937, 7
        %s2939 = scalar_select %p2938, %s2937, 7
        %s2940 = smul.addr %s2939, 4
        %s2941 = scalar_lea.vmem %s13, %s2940
        // Predicated region
        $region101: #{lstm_head_forward.3} parent=67 // pred_check
          %p2942 = pneg %p323
        $region102: #{lstm_head_forward.3} parent=67 // pred_check_branch
          %2944 = sbr.rel (%p2942) target = $region104
        $region103: #{lstm_head_forward.3} parent=67 // pred_region
          %s2945 = smul.u32 4, %s29
        $region104: #{lstm_head_forward.3} parent=67 // pred_fallthru
          _
        // Predicated region
        $region105: #{lstm_head_forward.3} parent=67 // pred_check
          %p2946 = pneg %p351
        $region106: #{lstm_head_forward.3} parent=67 // pred_check_branch
          %2948 = sbr.rel (%p2946) target = $region108
        $region107: #{lstm_head_forward.3} parent=67 // pred_region
          %s2949 = ssub.s32 1, %s29
          %s2950 = smul.u32 4, %s2949
        $region108: #{lstm_head_forward.3} parent=67 // pred_fallthru
          _
      $region68: #{lstm_head_forward.3} parent=5 // pred_fallthru
        _
      %p2951 = scmp.le.s32.totalorder 2, %s24
      // Predicated region
      $region109: #{lstm_head_forward.3} parent=5 // pred_check
        %p2952 = pneg %p2951
      $region110: #{lstm_head_forward.3} parent=5 // pred_check_branch
        %2954 = sbr.rel (%p2952) target = $region112
      $region111: #{lstm_head_forward.3} parent=5 // pred_region
        %s2955 = ssub.s32 %s24, 2
        // Predicated region
        $region113: #{lstm_head_forward.3} parent=111 // pred_check
          %p2956 = pneg %p329
        $region114: #{lstm_head_forward.3} parent=111 // pred_check_branch
          %2958 = sbr.rel (%p2956) target = $region116
        $region115: #{lstm_head_forward.3} parent=111 // pred_region
          %s2959 = smul.u32 4, %s30
          %p2960 = scmp.lt.s32.totalorder %s2959, 7
          %s2961 = scalar_select %p2960, %s2959, 7
          %s2962 = smul.addr %s2961, 4
          %s2963 = scalar_lea.vmem %s12, %s2962
        $region116: #{lstm_head_forward.3} parent=111 // pred_fallthru
          _
        // Predicated region
        $region117: #{lstm_head_forward.3} parent=111 // pred_check
          %p2964 = pneg %p357
        $region118: #{lstm_head_forward.3} parent=111 // pred_check_branch
          %2966 = sbr.rel (%p2964) target = $region120
        $region119: #{lstm_head_forward.3} parent=111 // pred_region
          %s2967 = ssub.s32 1, %s30
          %s2968 = smul.u32 4, %s2967
          %p2969 = scmp.lt.s32.totalorder %s2968, 7
          %s2970 = scalar_select %p2969, %s2968, 7
          %s2971 = smul.addr %s2970, 4
          %s2972 = scalar_lea.vmem %s13, %s2971
        $region120: #{lstm_head_forward.3} parent=111 // pred_fallthru
          _
      $region112: #{lstm_head_forward.3} parent=5 // pred_fallthru
        _
    $region6: #{lstm_head_forward.3} parent=1 // loop_footer
      %s28 = sadd.s32 1, %s24
    $region7: #{lstm_head_forward.3} parent=1 // loop_footer_branch
      %23 = sbr.rel target = $region3
    $region8: #{lstm_head_forward.3} parent=1 // loop_exit
      _
    %2973 = vsyncpa [#allocation9], 1
    %s2974 = scalar_lea.sflag [#allocation9], 1
    %2975 = vsyncpa %s2974, 1
    %2976 = vsyncpa [#allocation11], 1
    %2977 = vsyncpa [#allocation14], 1
    %2978 = vsyncpa [#allocation17], 1

</llo_original>
